<compile_context>
chip_gen: v6e
topology: v6e:2x2x1
jax: 0.10.0
libtpu: 0.0.40
codegen_flags: <defaults>
</compile_context>

<pallas_src>
import functools

import jax
import jax.numpy as jnp
from jax.experimental import pallas as pl
from jax.experimental.pallas import tpu as pltpu

# ----------------------------- config (small, synthetic) --------------------
BATCH = 2
CHANNELS = 3          # CLIP vision towers take RGB
IMAGE_SIZE = 16
PATCH_SIZE = 4
HIDDEN = 32
HEADS = 4
INTERMEDIATE = 64
NUM_LAYERS = 3
SELECT_LAYER = -2     # args.mm_vision_select_layer (LLaVA default)
SELECT_FEATURE = "patch"
LN_EPS = 1e-5

NUM_PATCHES = (IMAGE_SIZE // PATCH_SIZE) ** 2          # 16
SEQ = NUM_PATCHES + 1                                  # 17 (patches + CLS)
NUM_TOWERS = 2                                         # main + derma


def _layers_needed():
    # hidden_states = (embeddings, layer_0, ..., layer_{L-1}); entry j needs j layers.
    entry = SELECT_LAYER if SELECT_LAYER >= 0 else NUM_LAYERS + 1 + SELECT_LAYER
    return entry                                       # = NUM_LAYERS - 1 for -2


# ----------------------------- the fused Pallas kernel ------------------------
def tower_kernel(patches_ref, patch_w_ref, cls_ref, pos_ref, pre_g_ref, pre_b_ref,
                 ln1g_ref, ln1b_ref, wqkv_ref, bqkv_ref, wo_ref, bo_ref,
                 ln2g_ref, ln2b_ref, w1_ref, b1_ref, w2_ref, b2_ref,
                 out_ref, emb_ref,
                 *, batch, num_patches, num_heads, head_dim, num_layers_run):
    """Whole CLIP vision tower for one grid step (= one tower)."""
    seq = num_patches + 1
    d = num_heads * head_dim

    def ln(v, g, b):
        mu = jnp.mean(v, axis=-1, keepdims=True)
        var = jnp.mean((v - mu) ** 2, axis=-1, keepdims=True)
        return (v - mu) * jax.lax.rsqrt(var + LN_EPS) * g + b

    # Patch embedding (conv stride=patch, bias=False) for the whole batch in one
    # MXU push: (B*NP, C*P*P) @ (C*P*P, D).
    pe = jnp.dot(patches_ref[0], patch_w_ref[0], preferred_element_type=jnp.float32)

    pos = pos_ref[0]          # (SEQ, D), already permuted to [patch positions..., CLS]
    pre_g = pre_g_ref[0]
    pre_b = pre_b_ref[0]

    for b in range(batch):                                   # static unroll, B=2
        # Assemble [patches..., CLS] in VMEM scratch (all stores sublane-aligned).
        emb_ref[0:num_patches, :] = pe[b * num_patches:(b + 1) * num_patches, :]
        emb_ref[num_patches:seq, :] = cls_ref[0]
        x = emb_ref[...] + pos
        x = ln(x, pre_g, pre_b)                              # pre_layrnorm

        for li in range(num_layers_run):                     # static unroll; last layer skipped
            # ---- self-attention (pre-LN, fused QKV, q-scale folded into Wq/bq) ----
            residual = x
            h = ln(x, ln1g_ref[0, li], ln1b_ref[0, li])
            qkv = (jnp.dot(h, wqkv_ref[0, li], preferred_element_type=jnp.float32)
                   + bqkv_ref[0, li])                        # (S, 3D)
            wo = wo_ref[0, li]                               # (D, D)
            attn = None
            for hh in range(num_heads):                      # static unroll, 4 heads
                lo = hh * head_dim
                qh = qkv[:, lo:lo + head_dim]
                kh = qkv[:, d + lo:d + lo + head_dim]
                vh = qkv[:, 2 * d + lo:2 * d + lo + head_dim]
                s = jax.lax.dot_general(qh, kh, (((1,), (1,)), ((), ())),
                                        preferred_element_type=jnp.float32)  # (S, S)
                s = s - jnp.max(s, axis=-1, keepdims=True)
                p = jnp.exp(s)
                p = p * pl.reciprocal(jnp.sum(p, axis=-1, keepdims=True), approx=True)
                ctx = jnp.dot(p, vh, preferred_element_type=jnp.float32)      # (S, hd)
                # Fold the output projection into the head loop: sum_h ctx_h @ Wo[h]
                # == concat(heads) @ Wo, so no concatenate is needed.
                part = jnp.dot(ctx, wo[lo:lo + head_dim, :],
                               preferred_element_type=jnp.float32)            # (S, D)
                attn = part if attn is None else attn + part
            x = residual + attn + bo_ref[0, li]

            # ---- MLP (quick_gelu, HF CLIP default) ----
            residual = x
            h = ln(x, ln2g_ref[0, li], ln2b_ref[0, li])
            h = jnp.dot(h, w1_ref[0, li], preferred_element_type=jnp.float32) + b1_ref[0, li]
            h = h * jax.nn.sigmoid(1.702 * h)
            h = jnp.dot(h, w2_ref[0, li], preferred_element_type=jnp.float32) + b2_ref[0, li]
            x = residual + h

        # feature_select: hidden_states[SELECT_LAYER], select_feature='patch'
        # (CLS lives in the last row here, so the patch rows are the aligned prefix).
        out_ref[0, b] = x[:num_patches, :]


# ----------------------------- Pallas wrapper ---------------------------------
def towers_forward_fused(patches, sp):
    """patches: (T, B*NP, K); sp: dict of tower-stacked params. Returns (T, B, NP, D)."""
    t = patches.shape[0]
    d = HIDDEN

    def spec(shape):
        nd = len(shape)
        return pl.BlockSpec((1,) + tuple(shape[1:]),
                            lambda ti, nd=nd: (ti,) + (0,) * (nd - 1))

    args = [patches, sp["patch_w"], sp["cls"], sp["pos"], sp["pre_g"], sp["pre_b"],
            sp["ln1_g"], sp["ln1_b"], sp["wqkv"], sp["bqkv"], sp["wo"], sp["bo"],
            sp["ln2_g"], sp["ln2_b"], sp["w1"], sp["b1"], sp["w2"], sp["b2"]]
    in_specs = [spec(a.shape) for a in args]

    kern = functools.partial(
        tower_kernel, batch=BATCH, num_patches=NUM_PATCHES,
        num_heads=HEADS, head_dim=d // HEADS,
        num_layers_run=sp["wqkv"].shape[1])

    return pl.pallas_call(
        kern,
        out_shape=jax.ShapeDtypeStruct((t, BATCH, NUM_PATCHES, d), jnp.float32),
        grid=(t,),                                  # one grid step per tower
        in_specs=in_specs,
        out_specs=pl.BlockSpec((1, BATCH, NUM_PATCHES, d),
                               lambda ti: (ti, 0, 0, 0)),
        scratch_shapes=[pltpu.VMEM((SEQ, d), jnp.float32)],
        compiler_params=pltpu.CompilerParams(
            # "parallel": on v7x each TensorCore executes one tower concurrently;
            # on v5e/v6e it is a 2-iteration serial loop inside one dispatch.
            dimension_semantics=("parallel",)),
    )(*args)


# ----------------------------- parameter prep (JAX glue) ----------------------
def init_tower_params(key):
    d, f, c, p = HIDDEN, INTERMEDIATE, CHANNELS, PATCH_SIZE
    keys = jax.random.split(key, 4 + NUM_LAYERS)
    params = {
        "patch_w": 0.02 * jax.random.normal(keys[0], (c * p * p, d), jnp.float32),
        "cls": 0.02 * jax.random.normal(keys[1], (d,), jnp.float32),
        "pos": 0.02 * jax.random.normal(keys[2], (SEQ, d), jnp.float32),
        "pre_ln_g": jnp.ones((d,), jnp.float32),
        "pre_ln_b": jnp.zeros((d,), jnp.float32),
        "layers": [],
    }
    for li in range(NUM_LAYERS):
        lk = jax.random.split(keys[4 + li], 6)
        params["layers"].append({
            "ln1_g": jnp.ones((d,), jnp.float32), "ln1_b": jnp.zeros((d,), jnp.float32),
            "wq": 0.02 * jax.random.normal(lk[0], (d, d), jnp.float32), "bq": jnp.zeros((d,), jnp.float32),
            "wk": 0.02 * jax.random.normal(lk[1], (d, d), jnp.float32), "bk": jnp.zeros((d,), jnp.float32),
            "wv": 0.02 * jax.random.normal(lk[2], (d, d), jnp.float32), "bv": jnp.zeros((d,), jnp.float32),
            "wo": 0.02 * jax.random.normal(lk[3], (d, d), jnp.float32), "bo": jnp.zeros((d,), jnp.float32),
            "ln2_g": jnp.ones((d,), jnp.float32), "ln2_b": jnp.zeros((d,), jnp.float32),
            "w1": 0.02 * jax.random.normal(lk[4], (d, f), jnp.float32), "b1": jnp.zeros((f,), jnp.float32),
            "w2": 0.02 * jax.random.normal(lk[5], (f, d), jnp.float32), "b2": jnp.zeros((d,), jnp.float32),
        })
    return params


def _stack_tower_params(params_list, num_layers_run):
    """Fuse QKV (scale folded into Q), permute positions to [patches..., CLS],
    stack only the layers that are actually executed, and stack over towers."""
    d = HIDDEN
    scale = (d // HEADS) ** -0.5

    def per_tower(p):
        lyr = p["layers"][:num_layers_run]
        st = lambda fn: jnp.stack([fn(l) for l in lyr], axis=0)
        pos = p["pos"]
        pos_perm = jnp.concatenate([pos[1:], pos[0:1]], axis=0)   # CLS position last
        return {
            "patch_w": p["patch_w"],
            "cls": p["cls"].reshape(1, d),
            "pos": pos_perm,
            "pre_g": p["pre_ln_g"].reshape(1, d),
            "pre_b": p["pre_ln_b"].reshape(1, d),
            "ln1_g": st(lambda l: l["ln1_g"].reshape(1, d)),
            "ln1_b": st(lambda l: l["ln1_b"].reshape(1, d)),
            "wqkv": st(lambda l: jnp.concatenate(
                [l["wq"] * scale, l["wk"], l["wv"]], axis=1)),
            "bqkv": st(lambda l: jnp.concatenate(
                [l["bq"] * scale, l["bk"], l["bv"]], axis=0).reshape(1, 3 * d)),
            "wo": st(lambda l: l["wo"]),
            "bo": st(lambda l: l["bo"].reshape(1, d)),
            "ln2_g": st(lambda l: l["ln2_g"].reshape(1, d)),
            "ln2_b": st(lambda l: l["ln2_b"].reshape(1, d)),
            "w1": st(lambda l: l["w1"]),
            "b1": st(lambda l: l["b1"].reshape(1, -1)),
            "w2": st(lambda l: l["w2"]),
            "b2": st(lambda l: l["b2"].reshape(1, d)),
        }

    towers = [per_tower(p) for p in params_list]
    return {k: jnp.stack([tw[k] for tw in towers], axis=0) for k in towers[0]}


def _extract_patches(pixel_values):
    b, c, h, w = pixel_values.shape
    p = PATCH_SIZE
    hp, wp = h // p, w // p
    return (pixel_values.reshape(b, c, hp, p, wp, p)
            .transpose(0, 2, 4, 1, 3, 5)
            .reshape(b * hp * wp, c * p * p))


def clip_vision_tower2_forward(images, images_derma, params_main, params_derma):
    assert SELECT_FEATURE == "patch"
    num_layers_run = _layers_needed()     # layers after this never influence hidden_states[-2]
    patches = jnp.stack([_extract_patches(images), _extract_patches(images_derma)], axis=0)
    stacked = _stack_tower_params([params_main, params_derma], num_layers_run)
    feats = towers_forward_fused(patches, stacked)           # (2, B, NP, D)
    return feats[0].astype(images.dtype), feats[1].astype(images.dtype)


# TODO(synk): HF checkpoint loading / CLIPImageProcessor preprocessing has no
# Pallas equivalent; towers use deterministic synthetic weights instead.

if __name__ == "__main__":
    key = jax.random.PRNGKey(0)
    k_img, k_derma, k_p1, k_p2 = jax.random.split(key, 4)
    images = jax.random.normal(k_img, (BATCH, CHANNELS, IMAGE_SIZE, IMAGE_SIZE), jnp.float32)
    images_derma = jax.random.normal(k_derma, (BATCH, CHANNELS, IMAGE_SIZE, IMAGE_SIZE), jnp.float32)

    params_main = init_tower_params(k_p1)
    params_derma = init_tower_params(k_p2)

    fwd = jax.jit(clip_vision_tower2_forward)
    feats, feats_derma = fwd(images, images_derma, params_main, params_derma)
    jax.block_until_ready((feats, feats_derma))
    assert feats.shape == (BATCH, NUM_PATCHES, HIDDEN), feats.shape
    assert feats_derma.shape == (BATCH, NUM_PATCHES, HIDDEN), feats_derma.shape
    assert jnp.all(jnp.isfinite(feats)) and jnp.all(jnp.isfinite(feats_derma))
    print("KERNEL_OK")
</pallas_src>

<mosaic_0001>
module attributes {stable_mosaic.version = 11 : i64} {
  func.func @tower_kernel(%arg0: i32, %arg1: memref<1x32x48xf32, #tpu.memory_space<vmem>>, %arg2: memref<1x48x32xf32, #tpu.memory_space<vmem>>, %arg3: memref<1x1x32xf32, #tpu.memory_space<vmem>>, %arg4: memref<1x17x32xf32, #tpu.memory_space<vmem>>, %arg5: memref<1x1x32xf32, #tpu.memory_space<vmem>>, %arg6: memref<1x1x32xf32, #tpu.memory_space<vmem>>, %arg7: memref<1x2x1x32xf32, #tpu.memory_space<vmem>>, %arg8: memref<1x2x1x32xf32, #tpu.memory_space<vmem>>, %arg9: memref<1x2x32x96xf32, #tpu.memory_space<vmem>>, %arg10: memref<1x2x1x96xf32, #tpu.memory_space<vmem>>, %arg11: memref<1x2x32x32xf32, #tpu.memory_space<vmem>>, %arg12: memref<1x2x1x32xf32, #tpu.memory_space<vmem>>, %arg13: memref<1x2x1x32xf32, #tpu.memory_space<vmem>>, %arg14: memref<1x2x1x32xf32, #tpu.memory_space<vmem>>, %arg15: memref<1x2x32x64xf32, #tpu.memory_space<vmem>>, %arg16: memref<1x2x1x64xf32, #tpu.memory_space<vmem>>, %arg17: memref<1x2x64x32xf32, #tpu.memory_space<vmem>>, %arg18: memref<1x2x1x32xf32, #tpu.memory_space<vmem>>, %arg19: memref<1x2x16x32xf32, #tpu.memory_space<vmem>>, %arg20: memref<17x32xf32, #tpu.memory_space<vmem>>) attributes {dimension_semantics = [#tpu.dimension_semantics<parallel>], iteration_bounds = array<i64: 2>, scalar_prefetch = 0 : i64, scratch_operands = 1 : i64, tpu.core_type = #tpu.core_type<tc>, window_params = [{transform_indices = @transform_0, window_bounds = array<i64: 1, 32, 48>}, {transform_indices = @transform_1, window_bounds = array<i64: 1, 48, 32>}, {transform_indices = @transform_2, window_bounds = array<i64: 1, 1, 32>}, {transform_indices = @transform_3, window_bounds = array<i64: 1, 17, 32>}, {transform_indices = @transform_4, window_bounds = array<i64: 1, 1, 32>}, {transform_indices = @transform_5, window_bounds = array<i64: 1, 1, 32>}, {transform_indices = @transform_6, window_bounds = array<i64: 1, 2, 1, 32>}, {transform_indices = @transform_7, window_bounds = array<i64: 1, 2, 1, 32>}, {transform_indices = @transform_8, window_bounds = array<i64: 1, 2, 32, 96>}, {transform_indices = @transform_9, window_bounds = array<i64: 1, 2, 1, 96>}, {transform_indices = @transform_10, window_bounds = array<i64: 1, 2, 32, 32>}, {transform_indices = @transform_11, window_bounds = array<i64: 1, 2, 1, 32>}, {transform_indices = @transform_12, window_bounds = array<i64: 1, 2, 1, 32>}, {transform_indices = @transform_13, window_bounds = array<i64: 1, 2, 1, 32>}, {transform_indices = @transform_14, window_bounds = array<i64: 1, 2, 32, 64>}, {transform_indices = @transform_15, window_bounds = array<i64: 1, 2, 1, 64>}, {transform_indices = @transform_16, window_bounds = array<i64: 1, 2, 64, 32>}, {transform_indices = @transform_17, window_bounds = array<i64: 1, 2, 1, 32>}, {transform_indices = @transform_18, window_bounds = array<i64: 1, 2, 16, 32>}]} {
    %c0 = arith.constant 0 : index
    %c0_0 = arith.constant 0 : index
    %c0_1 = arith.constant 0 : index
    %0 = vector.load %arg1[%c0, %c0_0, %c0_1] : memref<1x32x48xf32, #tpu.memory_space<vmem>>, vector<1x32x48xf32>
    %1 = vector.shape_cast %0 : vector<1x32x48xf32> to vector<32x48xf32>
    %c0_2 = arith.constant 0 : index
    %c0_3 = arith.constant 0 : index
    %c0_4 = arith.constant 0 : index
    %2 = vector.load %arg2[%c0_2, %c0_3, %c0_4] : memref<1x48x32xf32, #tpu.memory_space<vmem>>, vector<1x48x32xf32>
    %3 = vector.shape_cast %2 : vector<1x48x32xf32> to vector<48x32xf32>
    %cst = arith.constant dense<0.000000e+00> : vector<32x32xf32>
    %4 = tpu.matmul %1, %3, %cst {dimension_numbers = #tpu.dot_dimension_numbers<[1], [0], [0], [1], [0, 0, 1, 1], [], []>} : vector<32x48xf32>, vector<48x32xf32>, vector<32x32xf32> -> vector<32x32xf32>
    %c0_5 = arith.constant 0 : index
    %c0_6 = arith.constant 0 : index
    %c0_7 = arith.constant 0 : index
    %5 = vector.load %arg4[%c0_5, %c0_6, %c0_7] : memref<1x17x32xf32, #tpu.memory_space<vmem>>, vector<1x17x32xf32>
    %6 = vector.shape_cast %5 : vector<1x17x32xf32> to vector<17x32xf32>
    %c0_8 = arith.constant 0 : index
    %c0_9 = arith.constant 0 : index
    %c0_10 = arith.constant 0 : index
    %7 = vector.load %arg5[%c0_8, %c0_9, %c0_10] : memref<1x1x32xf32, #tpu.memory_space<vmem>>, vector<1x1x32xf32>
    %8 = vector.shape_cast %7 : vector<1x1x32xf32> to vector<1x32xf32>
    %c0_11 = arith.constant 0 : index
    %c0_12 = arith.constant 0 : index
    %c0_13 = arith.constant 0 : index
    %9 = vector.load %arg6[%c0_11, %c0_12, %c0_13] : memref<1x1x32xf32, #tpu.memory_space<vmem>>, vector<1x1x32xf32>
    %10 = vector.shape_cast %9 : vector<1x1x32xf32> to vector<1x32xf32>
    %11 = vector.extract_strided_slice %4 {offsets = [0, 0], sizes = [16, 32], strides = [1, 1]} : vector<32x32xf32> to vector<16x32xf32>
    %c0_14 = arith.constant 0 : index
    %c0_15 = arith.constant 0 : index
    %12 = vector.load %arg20[%c0_14, %c0_15] : memref<17x32xf32, #tpu.memory_space<vmem>>, vector<16x32xf32>
    tpu.vector_store %arg20[%c0_14, %c0_15], %11 {strides = array<i32>} : memref<17x32xf32, #tpu.memory_space<vmem>>, vector<16x32xf32>,
    %c0_16 = arith.constant 0 : index
    %c0_17 = arith.constant 0 : index
    %c0_18 = arith.constant 0 : index
    %13 = vector.load %arg3[%c0_16, %c0_17, %c0_18] : memref<1x1x32xf32, #tpu.memory_space<vmem>>, vector<1x1x32xf32>
    %14 = vector.shape_cast %13 : vector<1x1x32xf32> to vector<1x32xf32>
    %c16 = arith.constant 16 : index
    %c0_19 = arith.constant 0 : index
    %15 = vector.load %arg20[%c16, %c0_19] : memref<17x32xf32, #tpu.memory_space<vmem>>, vector<1x32xf32>
    tpu.vector_store %arg20[%c16, %c0_19], %14 {strides = array<i32>} : memref<17x32xf32, #tpu.memory_space<vmem>>, vector<1x32xf32>,
    %c0_20 = arith.constant 0 : index
    %c0_21 = arith.constant 0 : index
    %16 = vector.load %arg20[%c0_20, %c0_21] : memref<17x32xf32, #tpu.memory_space<vmem>>, vector<17x32xf32>
    %17 = arith.addf %16, %6 : vector<17x32xf32>
    %cst_22 = arith.constant dense<0.000000e+00> : vector<17xf32>
    %18 = vector.multi_reduction <add>, %17, %cst_22 [1] : vector<17x32xf32> to vector<17xf32>
    %19 = vector.shape_cast %18 : vector<17xf32> to vector<17x1xf32>
    %cst_23 = arith.constant 3.200000e+01 : f32
    %20 = vector.broadcast %cst_23 : f32 to vector<17x1xf32>
    %21 = arith.divf %19, %20 : vector<17x1xf32>
    %22 = vector.broadcast %21 : vector<17x1xf32> to vector<17x32xf32>
    %23 = arith.subf %17, %22 : vector<17x32xf32>
    %24 = arith.mulf %23, %23 : vector<17x32xf32>
    %cst_24 = arith.constant dense<0.000000e+00> : vector<17xf32>
    %25 = vector.multi_reduction <add>, %24, %cst_24 [1] : vector<17x32xf32> to vector<17xf32>
    %26 = vector.shape_cast %25 : vector<17xf32> to vector<17x1xf32>
    %cst_25 = arith.constant 3.200000e+01 : f32
    %27 = vector.broadcast %cst_25 : f32 to vector<17x1xf32>
    %28 = arith.divf %26, %27 : vector<17x1xf32>
    %29 = vector.broadcast %21 : vector<17x1xf32> to vector<17x32xf32>
    %30 = arith.subf %17, %29 : vector<17x32xf32>
    %cst_26 = arith.constant 9.99999974E-6 : f32
    %31 = vector.broadcast %cst_26 : f32 to vector<17x1xf32>
    %32 = arith.addf %28, %31 : vector<17x1xf32>
    %33 = math.rsqrt %32 : vector<17x1xf32>
    %34 = vector.broadcast %33 : vector<17x1xf32> to vector<17x32xf32>
    %35 = arith.mulf %30, %34 : vector<17x32xf32>
    %36 = vector.broadcast %8 : vector<1x32xf32> to vector<17x32xf32>
    %37 = arith.mulf %35, %36 : vector<17x32xf32>
    %38 = vector.broadcast %10 : vector<1x32xf32> to vector<17x32xf32>
    %39 = arith.addf %37, %38 : vector<17x32xf32>
    %c0_27 = arith.constant 0 : index
    %c0_28 = arith.constant 0 : index
    %c0_29 = arith.constant 0 : index
    %c0_30 = arith.constant 0 : index
    %40 = vector.load %arg7[%c0_27, %c0_28, %c0_29, %c0_30] : memref<1x2x1x32xf32, #tpu.memory_space<vmem>>, vector<1x1x1x32xf32>
    %41 = vector.shape_cast %40 : vector<1x1x1x32xf32> to vector<1x32xf32>
    %c0_31 = arith.constant 0 : index
    %c0_32 = arith.constant 0 : index
    %c0_33 = arith.constant 0 : index
    %c0_34 = arith.constant 0 : index
    %42 = vector.load %arg8[%c0_31, %c0_32, %c0_33, %c0_34] : memref<1x2x1x32xf32, #tpu.memory_space<vmem>>, vector<1x1x1x32xf32>
    %43 = vector.shape_cast %42 : vector<1x1x1x32xf32> to vector<1x32xf32>
    %cst_35 = arith.constant dense<0.000000e+00> : vector<17xf32>
    %44 = vector.multi_reduction <add>, %39, %cst_35 [1] : vector<17x32xf32> to vector<17xf32>
    %45 = vector.shape_cast %44 : vector<17xf32> to vector<17x1xf32>
    %cst_36 = arith.constant 3.200000e+01 : f32
    %46 = vector.broadcast %cst_36 : f32 to vector<17x1xf32>
    %47 = arith.divf %45, %46 : vector<17x1xf32>
    %48 = vector.broadcast %47 : vector<17x1xf32> to vector<17x32xf32>
    %49 = arith.subf %39, %48 : vector<17x32xf32>
    %50 = arith.mulf %49, %49 : vector<17x32xf32>
    %cst_37 = arith.constant dense<0.000000e+00> : vector<17xf32>
    %51 = vector.multi_reduction <add>, %50, %cst_37 [1] : vector<17x32xf32> to vector<17xf32>
    %52 = vector.shape_cast %51 : vector<17xf32> to vector<17x1xf32>
    %cst_38 = arith.constant 3.200000e+01 : f32
    %53 = vector.broadcast %cst_38 : f32 to vector<17x1xf32>
    %54 = arith.divf %52, %53 : vector<17x1xf32>
    %55 = vector.broadcast %47 : vector<17x1xf32> to vector<17x32xf32>
    %56 = arith.subf %39, %55 : vector<17x32xf32>
    %cst_39 = arith.constant 9.99999974E-6 : f32
    %57 = vector.broadcast %cst_39 : f32 to vector<17x1xf32>
    %58 = arith.addf %54, %57 : vector<17x1xf32>
    %59 = math.rsqrt %58 : vector<17x1xf32>
    %60 = vector.broadcast %59 : vector<17x1xf32> to vector<17x32xf32>
    %61 = arith.mulf %56, %60 : vector<17x32xf32>
    %62 = vector.broadcast %41 : vector<1x32xf32> to vector<17x32xf32>
    %63 = arith.mulf %61, %62 : vector<17x32xf32>
    %64 = vector.broadcast %43 : vector<1x32xf32> to vector<17x32xf32>
    %65 = arith.addf %63, %64 : vector<17x32xf32>
    %c0_40 = arith.constant 0 : index
    %c0_41 = arith.constant 0 : index
    %c0_42 = arith.constant 0 : index
    %c0_43 = arith.constant 0 : index
    %66 = vector.load %arg9[%c0_40, %c0_41, %c0_42, %c0_43] : memref<1x2x32x96xf32, #tpu.memory_space<vmem>>, vector<1x1x32x96xf32>
    %67 = vector.shape_cast %66 : vector<1x1x32x96xf32> to vector<32x96xf32>
    %cst_44 = arith.constant dense<0.000000e+00> : vector<17x96xf32>
    %68 = tpu.matmul %65, %67, %cst_44 {dimension_numbers = #tpu.dot_dimension_numbers<[1], [0], [0], [1], [0, 0, 1, 1], [], []>} : vector<17x32xf32>, vector<32x96xf32>, vector<17x96xf32> -> vector<17x96xf32>
    %c0_45 = arith.constant 0 : index
    %c0_46 = arith.constant 0 : index
    %c0_47 = arith.constant 0 : index
    %c0_48 = arith.constant 0 : index
    %69 = vector.load %arg10[%c0_45, %c0_46, %c0_47, %c0_48] : memref<1x2x1x96xf32, #tpu.memory_space<vmem>>, vector<1x1x1x96xf32>
    %70 = vector.shape_cast %69 : vector<1x1x1x96xf32> to vector<1x96xf32>
    %71 = vector.broadcast %70 : vector<1x96xf32> to vector<17x96xf32>
    %72 = arith.addf %68, %71 : vector<17x96xf32>
    %c0_49 = arith.constant 0 : index
    %c0_50 = arith.constant 0 : index
    %c0_51 = arith.constant 0 : index
    %c0_52 = arith.constant 0 : index
    %73 = vector.load %arg11[%c0_49, %c0_50, %c0_51, %c0_52] : memref<1x2x32x32xf32, #tpu.memory_space<vmem>>, vector<1x1x32x32xf32>
    %74 = vector.shape_cast %73 : vector<1x1x32x32xf32> to vector<32x32xf32>
    %75 = vector.extract_strided_slice %72 {offsets = [0, 0], sizes = [17, 8], strides = [1, 1]} : vector<17x96xf32> to vector<17x8xf32>
    %76 = vector.extract_strided_slice %72 {offsets = [0, 32], sizes = [17, 8], strides = [1, 1]} : vector<17x96xf32> to vector<17x8xf32>
    %77 = vector.extract_strided_slice %72 {offsets = [0, 64], sizes = [17, 8], strides = [1, 1]} : vector<17x96xf32> to vector<17x8xf32>
    %cst_53 = arith.constant dense<0.000000e+00> : vector<17x17xf32>
    %78 = tpu.matmul %75, %76, %cst_53 {dimension_numbers = #tpu.dot_dimension_numbers<[1], [1], [0], [0], [0, 0, 1, 0], [], []>} : vector<17x8xf32>, vector<17x8xf32>, vector<17x17xf32> -> vector<17x17xf32>
    %cst_54 = arith.constant dense<0xFF800000> : vector<17xf32>
    %79 = vector.multi_reduction <maximumf>, %78, %cst_54 [1] : vector<17x17xf32> to vector<17xf32>
    %80 = vector.shape_cast %79 : vector<17xf32> to vector<17x1xf32>
    %81 = vector.broadcast %80 : vector<17x1xf32> to vector<17x17xf32>
    %82 = arith.subf %78, %81 : vector<17x17xf32>
    %83 = math.exp %82 : vector<17x17xf32>
    %cst_55 = arith.constant dense<0.000000e+00> : vector<17xf32>
    %84 = vector.multi_reduction <add>, %83, %cst_55 [1] : vector<17x17xf32> to vector<17xf32>
    %85 = vector.shape_cast %84 : vector<17xf32> to vector<17x1xf32>
    %86 = tpu.reciprocal %85 {approx = true} : vector<17x1xf32> -> vector<17x1xf32>
    %87 = vector.broadcast %86 : vector<17x1xf32> to vector<17x17xf32>
    %88 = arith.mulf %83, %87 : vector<17x17xf32>
    %cst_56 = arith.constant dense<0.000000e+00> : vector<17x8xf32>
    %89 = tpu.matmul %88, %77, %cst_56 {dimension_numbers = #tpu.dot_dimension_numbers<[1], [0], [0], [1], [0, 0, 1, 1], [], []>} : vector<17x17xf32>, vector<17x8xf32>, vector<17x8xf32> -> vector<17x8xf32>
    %90 = vector.extract_strided_slice %74 {offsets = [0, 0], sizes = [8, 32], strides = [1, 1]} : vector<32x32xf32> to vector<8x32xf32>
    %cst_57 = arith.constant dense<0.000000e+00> : vector<17x32xf32>
    %91 = tpu.matmul %89, %90, %cst_57 {dimension_numbers = #tpu.dot_dimension_numbers<[1], [0], [0], [1], [0, 0, 1, 1], [], []>} : vector<17x8xf32>, vector<8x32xf32>, vector<17x32xf32> -> vector<17x32xf32>
    %92 = vector.extract_strided_slice %72 {offsets = [0, 8], sizes = [17, 8], strides = [1, 1]} : vector<17x96xf32> to vector<17x8xf32>
    %93 = vector.extract_strided_slice %72 {offsets = [0, 40], sizes = [17, 8], strides = [1, 1]} : vector<17x96xf32> to vector<17x8xf32>
    %94 = vector.extract_strided_slice %72 {offsets = [0, 72], sizes = [17, 8], strides = [1, 1]} : vector<17x96xf32> to vector<17x8xf32>
    %cst_58 = arith.constant dense<0.000000e+00> : vector<17x17xf32>
    %95 = tpu.matmul %92, %93, %cst_58 {dimension_numbers = #tpu.dot_dimension_numbers<[1], [1], [0], [0], [0, 0, 1, 0], [], []>} : vector<17x8xf32>, vector<17x8xf32>, vector<17x17xf32> -> vector<17x17xf32>
    %cst_59 = arith.constant dense<0xFF800000> : vector<17xf32>
    %96 = vector.multi_reduction <maximumf>, %95, %cst_59 [1] : vector<17x17xf32> to vector<17xf32>
    %97 = vector.shape_cast %96 : vector<17xf32> to vector<17x1xf32>
    %98 = vector.broadcast %97 : vector<17x1xf32> to vector<17x17xf32>
    %99 = arith.subf %95, %98 : vector<17x17xf32>
    %100 = math.exp %99 : vector<17x17xf32>
    %cst_60 = arith.constant dense<0.000000e+00> : vector<17xf32>
    %101 = vector.multi_reduction <add>, %100, %cst_60 [1] : vector<17x17xf32> to vector<17xf32>
    %102 = vector.shape_cast %101 : vector<17xf32> to vector<17x1xf32>
    %103 = tpu.reciprocal %102 {approx = true} : vector<17x1xf32> -> vector<17x1xf32>
    %104 = vector.broadcast %103 : vector<17x1xf32> to vector<17x17xf32>
    %105 = arith.mulf %100, %104 : vector<17x17xf32>
    %cst_61 = arith.constant dense<0.000000e+00> : vector<17x8xf32>
    %106 = tpu.matmul %105, %94, %cst_61 {dimension_numbers = #tpu.dot_dimension_numbers<[1], [0], [0], [1], [0, 0, 1, 1], [], []>} : vector<17x17xf32>, vector<17x8xf32>, vector<17x8xf32> -> vector<17x8xf32>
    %107 = vector.extract_strided_slice %74 {offsets = [8, 0], sizes = [8, 32], strides = [1, 1]} : vector<32x32xf32> to vector<8x32xf32>
    %cst_62 = arith.constant dense<0.000000e+00> : vector<17x32xf32>
    %108 = tpu.matmul %106, %107, %cst_62 {dimension_numbers = #tpu.dot_dimension_numbers<[1], [0], [0], [1], [0, 0, 1, 1], [], []>} : vector<17x8xf32>, vector<8x32xf32>, vector<17x32xf32> -> vector<17x32xf32>
    %109 = arith.addf %91, %108 : vector<17x32xf32>
    %110 = vector.extract_strided_slice %72 {offsets = [0, 16], sizes = [17, 8], strides = [1, 1]} : vector<17x96xf32> to vector<17x8xf32>
    %111 = vector.extract_strided_slice %72 {offsets = [0, 48], sizes = [17, 8], strides = [1, 1]} : vector<17x96xf32> to vector<17x8xf32>
    %112 = vector.extract_strided_slice %72 {offsets = [0, 80], sizes = [17, 8], strides = [1, 1]} : vector<17x96xf32> to vector<17x8xf32>
    %cst_63 = arith.constant dense<0.000000e+00> : vector<17x17xf32>
    %113 = tpu.matmul %110, %111, %cst_63 {dimension_numbers = #tpu.dot_dimension_numbers<[1], [1], [0], [0], [0, 0, 1, 0], [], []>} : vector<17x8xf32>, vector<17x8xf32>, vector<17x17xf32> -> vector<17x17xf32>
    %cst_64 = arith.constant dense<0xFF800000> : vector<17xf32>
    %114 = vector.multi_reduction <maximumf>, %113, %cst_64 [1] : vector<17x17xf32> to vector<17xf32>
    %115 = vector.shape_cast %114 : vector<17xf32> to vector<17x1xf32>
    %116 = vector.broadcast %115 : vector<17x1xf32> to vector<17x17xf32>
    %117 = arith.subf %113, %116 : vector<17x17xf32>
    %118 = math.exp %117 : vector<17x17xf32>
    %cst_65 = arith.constant dense<0.000000e+00> : vector<17xf32>
    %119 = vector.multi_reduction <add>, %118, %cst_65 [1] : vector<17x17xf32> to vector<17xf32>
    %120 = vector.shape_cast %119 : vector<17xf32> to vector<17x1xf32>
    %121 = tpu.reciprocal %120 {approx = true} : vector<17x1xf32> -> vector<17x1xf32>
    %122 = vector.broadcast %121 : vector<17x1xf32> to vector<17x17xf32>
    %123 = arith.mulf %118, %122 : vector<17x17xf32>
    %cst_66 = arith.constant dense<0.000000e+00> : vector<17x8xf32>
    %124 = tpu.matmul %123, %112, %cst_66 {dimension_numbers = #tpu.dot_dimension_numbers<[1], [0], [0], [1], [0, 0, 1, 1], [], []>} : vector<17x17xf32>, vector<17x8xf32>, vector<17x8xf32> -> vector<17x8xf32>
    %125 = vector.extract_strided_slice %74 {offsets = [16, 0], sizes = [8, 32], strides = [1, 1]} : vector<32x32xf32> to vector<8x32xf32>
    %cst_67 = arith.constant dense<0.000000e+00> : vector<17x32xf32>
    %126 = tpu.matmul %124, %125, %cst_67 {dimension_numbers = #tpu.dot_dimension_numbers<[1], [0], [0], [1], [0, 0, 1, 1], [], []>} : vector<17x8xf32>, vector<8x32xf32>, vector<17x32xf32> -> vector<17x32xf32>
    %127 = arith.addf %109, %126 : vector<17x32xf32>
    %128 = vector.extract_strided_slice %72 {offsets = [0, 24], sizes = [17, 8], strides = [1, 1]} : vector<17x96xf32> to vector<17x8xf32>
    %129 = vector.extract_strided_slice %72 {offsets = [0, 56], sizes = [17, 8], strides = [1, 1]} : vector<17x96xf32> to vector<17x8xf32>
    %130 = vector.extract_strided_slice %72 {offsets = [0, 88], sizes = [17, 8], strides = [1, 1]} : vector<17x96xf32> to vector<17x8xf32>
    %cst_68 = arith.constant dense<0.000000e+00> : vector<17x17xf32>
    %131 = tpu.matmul %128, %129, %cst_68 {dimension_numbers = #tpu.dot_dimension_numbers<[1], [1], [0], [0], [0, 0, 1, 0], [], []>} : vector<17x8xf32>, vector<17x8xf32>, vector<17x17xf32> -> vector<17x17xf32>
    %cst_69 = arith.constant dense<0xFF800000> : vector<17xf32>
    %132 = vector.multi_reduction <maximumf>, %131, %cst_69 [1] : vector<17x17xf32> to vector<17xf32>
    %133 = vector.shape_cast %132 : vector<17xf32> to vector<17x1xf32>
    %134 = vector.broadcast %133 : vector<17x1xf32> to vector<17x17xf32>
    %135 = arith.subf %131, %134 : vector<17x17xf32>
    %136 = math.exp %135 : vector<17x17xf32>
    %cst_70 = arith.constant dense<0.000000e+00> : vector<17xf32>
    %137 = vector.multi_reduction <add>, %136, %cst_70 [1] : vector<17x17xf32> to vector<17xf32>
    %138 = vector.shape_cast %137 : vector<17xf32> to vector<17x1xf32>
    %139 = tpu.reciprocal %138 {approx = true} : vector<17x1xf32> -> vector<17x1xf32>
    %140 = vector.broadcast %139 : vector<17x1xf32> to vector<17x17xf32>
    %141 = arith.mulf %136, %140 : vector<17x17xf32>
    %cst_71 = arith.constant dense<0.000000e+00> : vector<17x8xf32>
    %142 = tpu.matmul %141, %130, %cst_71 {dimension_numbers = #tpu.dot_dimension_numbers<[1], [0], [0], [1], [0, 0, 1, 1], [], []>} : vector<17x17xf32>, vector<17x8xf32>, vector<17x8xf32> -> vector<17x8xf32>
    %143 = vector.extract_strided_slice %74 {offsets = [24, 0], sizes = [8, 32], strides = [1, 1]} : vector<32x32xf32> to vector<8x32xf32>
    %cst_72 = arith.constant dense<0.000000e+00> : vector<17x32xf32>
    %144 = tpu.matmul %142, %143, %cst_72 {dimension_numbers = #tpu.dot_dimension_numbers<[1], [0], [0], [1], [0, 0, 1, 1], [], []>} : vector<17x8xf32>, vector<8x32xf32>, vector<17x32xf32> -> vector<17x32xf32>
    %145 = arith.addf %127, %144 : vector<17x32xf32>
    %146 = arith.addf %39, %145 : vector<17x32xf32>
    %c0_73 = arith.constant 0 : index
    %c0_74 = arith.constant 0 : index
    %c0_75 = arith.constant 0 : index
    %c0_76 = arith.constant 0 : index
    %147 = vector.load %arg12[%c0_73, %c0_74, %c0_75, %c0_76] : memref<1x2x1x32xf32, #tpu.memory_space<vmem>>, vector<1x1x1x32xf32>
    %148 = vector.shape_cast %147 : vector<1x1x1x32xf32> to vector<1x32xf32>
    %149 = vector.broadcast %148 : vector<1x32xf32> to vector<17x32xf32>
    %150 = arith.addf %146, %149 : vector<17x32xf32>
    %c0_77 = arith.constant 0 : index
    %c0_78 = arith.constant 0 : index
    %c0_79 = arith.constant 0 : index
    %c0_80 = arith.constant 0 : index
    %151 = vector.load %arg13[%c0_77, %c0_78, %c0_79, %c0_80] : memref<1x2x1x32xf32, #tpu.memory_space<vmem>>, vector<1x1x1x32xf32>
    %152 = vector.shape_cast %151 : vector<1x1x1x32xf32> to vector<1x32xf32>
    %c0_81 = arith.constant 0 : index
    %c0_82 = arith.constant 0 : index
    %c0_83 = arith.constant 0 : index
    %c0_84 = arith.constant 0 : index
    %153 = vector.load %arg14[%c0_81, %c0_82, %c0_83, %c0_84] : memref<1x2x1x32xf32, #tpu.memory_space<vmem>>, vector<1x1x1x32xf32>
    %154 = vector.shape_cast %153 : vector<1x1x1x32xf32> to vector<1x32xf32>
    %cst_85 = arith.constant dense<0.000000e+00> : vector<17xf32>
    %155 = vector.multi_reduction <add>, %150, %cst_85 [1] : vector<17x32xf32> to vector<17xf32>
    %156 = vector.shape_cast %155 : vector<17xf32> to vector<17x1xf32>
    %cst_86 = arith.constant 3.200000e+01 : f32
    %157 = vector.broadcast %cst_86 : f32 to vector<17x1xf32>
    %158 = arith.divf %156, %157 : vector<17x1xf32>
    %159 = vector.broadcast %158 : vector<17x1xf32> to vector<17x32xf32>
    %160 = arith.subf %150, %159 : vector<17x32xf32>
    %161 = arith.mulf %160, %160 : vector<17x32xf32>
    %cst_87 = arith.constant dense<0.000000e+00> : vector<17xf32>
    %162 = vector.multi_reduction <add>, %161, %cst_87 [1] : vector<17x32xf32> to vector<17xf32>
    %163 = vector.shape_cast %162 : vector<17xf32> to vector<17x1xf32>
    %cst_88 = arith.constant 3.200000e+01 : f32
    %164 = vector.broadcast %cst_88 : f32 to vector<17x1xf32>
    %165 = arith.divf %163, %164 : vector<17x1xf32>
    %166 = vector.broadcast %158 : vector<17x1xf32> to vector<17x32xf32>
    %167 = arith.subf %150, %166 : vector<17x32xf32>
    %cst_89 = arith.constant 9.99999974E-6 : f32
    %168 = vector.broadcast %cst_89 : f32 to vector<17x1xf32>
    %169 = arith.addf %165, %168 : vector<17x1xf32>
    %170 = math.rsqrt %169 : vector<17x1xf32>
    %171 = vector.broadcast %170 : vector<17x1xf32> to vector<17x32xf32>
    %172 = arith.mulf %167, %171 : vector<17x32xf32>
    %173 = vector.broadcast %152 : vector<1x32xf32> to vector<17x32xf32>
    %174 = arith.mulf %172, %173 : vector<17x32xf32>
    %175 = vector.broadcast %154 : vector<1x32xf32> to vector<17x32xf32>
    %176 = arith.addf %174, %175 : vector<17x32xf32>
    %c0_90 = arith.constant 0 : index
    %c0_91 = arith.constant 0 : index
    %c0_92 = arith.constant 0 : index
    %c0_93 = arith.constant 0 : index
    %177 = vector.load %arg15[%c0_90, %c0_91, %c0_92, %c0_93] : memref<1x2x32x64xf32, #tpu.memory_space<vmem>>, vector<1x1x32x64xf32>
    %178 = vector.shape_cast %177 : vector<1x1x32x64xf32> to vector<32x64xf32>
    %cst_94 = arith.constant dense<0.000000e+00> : vector<17x64xf32>
    %179 = tpu.matmul %176, %178, %cst_94 {dimension_numbers = #tpu.dot_dimension_numbers<[1], [0], [0], [1], [0, 0, 1, 1], [], []>} : vector<17x32xf32>, vector<32x64xf32>, vector<17x64xf32> -> vector<17x64xf32>
    %c0_95 = arith.constant 0 : index
    %c0_96 = arith.constant 0 : index
    %c0_97 = arith.constant 0 : index
    %c0_98 = arith.constant 0 : index
    %180 = vector.load %arg16[%c0_95, %c0_96, %c0_97, %c0_98] : memref<1x2x1x64xf32, #tpu.memory_space<vmem>>, vector<1x1x1x64xf32>
    %181 = vector.shape_cast %180 : vector<1x1x1x64xf32> to vector<1x64xf32>
    %182 = vector.broadcast %181 : vector<1x64xf32> to vector<17x64xf32>
    %183 = arith.addf %179, %182 : vector<17x64xf32>
    %cst_99 = arith.constant 1.702000e+00 : f32
    %184 = vector.broadcast %cst_99 : f32 to vector<17x64xf32>
    %185 = arith.mulf %184, %183 : vector<17x64xf32>
    %186 = arith.negf %185 : vector<17x64xf32>
    %187 = math.exp %186 : vector<17x64xf32>
    %cst_100 = arith.constant 1.000000e+00 : f32
    %188 = vector.broadcast %cst_100 : f32 to vector<17x64xf32>
    %189 = arith.addf %188, %187 : vector<17x64xf32>
    %190 = arith.divf %188, %189 : vector<17x64xf32>
    %191 = arith.mulf %183, %190 : vector<17x64xf32>
    %c0_101 = arith.constant 0 : index
    %c0_102 = arith.constant 0 : index
    %c0_103 = arith.constant 0 : index
    %c0_104 = arith.constant 0 : index
    %192 = vector.load %arg17[%c0_101, %c0_102, %c0_103, %c0_104] : memref<1x2x64x32xf32, #tpu.memory_space<vmem>>, vector<1x1x64x32xf32>
    %193 = vector.shape_cast %192 : vector<1x1x64x32xf32> to vector<64x32xf32>
    %cst_105 = arith.constant dense<0.000000e+00> : vector<17x32xf32>
    %194 = tpu.matmul %191, %193, %cst_105 {dimension_numbers = #tpu.dot_dimension_numbers<[1], [0], [0], [1], [0, 0, 1, 1], [], []>} : vector<17x64xf32>, vector<64x32xf32>, vector<17x32xf32> -> vector<17x32xf32>
    %c0_106 = arith.constant 0 : index
    %c0_107 = arith.constant 0 : index
    %c0_108 = arith.constant 0 : index
    %c0_109 = arith.constant 0 : index
    %195 = vector.load %arg18[%c0_106, %c0_107, %c0_108, %c0_109] : memref<1x2x1x32xf32, #tpu.memory_space<vmem>>, vector<1x1x1x32xf32>
    %196 = vector.shape_cast %195 : vector<1x1x1x32xf32> to vector<1x32xf32>
    %197 = vector.broadcast %196 : vector<1x32xf32> to vector<17x32xf32>
    %198 = arith.addf %194, %197 : vector<17x32xf32>
    %199 = arith.addf %150, %198 : vector<17x32xf32>
    %c0_110 = arith.constant 0 : index
    %c1 = arith.constant 1 : index
    %c0_111 = arith.constant 0 : index
    %c0_112 = arith.constant 0 : index
    %200 = vector.load %arg7[%c0_110, %c1, %c0_111, %c0_112] : memref<1x2x1x32xf32, #tpu.memory_space<vmem>>, vector<1x1x1x32xf32>
    %201 = vector.shape_cast %200 : vector<1x1x1x32xf32> to vector<1x32xf32>
    %c0_113 = arith.constant 0 : index
    %c1_114 = arith.constant 1 : index
    %c0_115 = arith.constant 0 : index
    %c0_116 = arith.constant 0 : index
    %202 = vector.load %arg8[%c0_113, %c1_114, %c0_115, %c0_116] : memref<1x2x1x32xf32, #tpu.memory_space<vmem>>, vector<1x1x1x32xf32>
    %203 = vector.shape_cast %202 : vector<1x1x1x32xf32> to vector<1x32xf32>
    %cst_117 = arith.constant dense<0.000000e+00> : vector<17xf32>
    %204 = vector.multi_reduction <add>, %199, %cst_117 [1] : vector<17x32xf32> to vector<17xf32>
    %205 = vector.shape_cast %204 : vector<17xf32> to vector<17x1xf32>
    %cst_118 = arith.constant 3.200000e+01 : f32
    %206 = vector.broadcast %cst_118 : f32 to vector<17x1xf32>
    %207 = arith.divf %205, %206 : vector<17x1xf32>
    %208 = vector.broadcast %207 : vector<17x1xf32> to vector<17x32xf32>
    %209 = arith.subf %199, %208 : vector<17x32xf32>
    %210 = arith.mulf %209, %209 : vector<17x32xf32>
    %cst_119 = arith.constant dense<0.000000e+00> : vector<17xf32>
    %211 = vector.multi_reduction <add>, %210, %cst_119 [1] : vector<17x32xf32> to vector<17xf32>
    %212 = vector.shape_cast %211 : vector<17xf32> to vector<17x1xf32>
    %cst_120 = arith.constant 3.200000e+01 : f32
    %213 = vector.broadcast %cst_120 : f32 to vector<17x1xf32>
    %214 = arith.divf %212, %213 : vector<17x1xf32>
    %215 = vector.broadcast %207 : vector<17x1xf32> to vector<17x32xf32>
    %216 = arith.subf %199, %215 : vector<17x32xf32>
    %cst_121 = arith.constant 9.99999974E-6 : f32
    %217 = vector.broadcast %cst_121 : f32 to vector<17x1xf32>
    %218 = arith.addf %214, %217 : vector<17x1xf32>
    %219 = math.rsqrt %218 : vector<17x1xf32>
    %220 = vector.broadcast %219 : vector<17x1xf32> to vector<17x32xf32>
    %221 = arith.mulf %216, %220 : vector<17x32xf32>
    %222 = vector.broadcast %201 : vector<1x32xf32> to vector<17x32xf32>
    %223 = arith.mulf %221, %222 : vector<17x32xf32>
    %224 = vector.broadcast %203 : vector<1x32xf32> to vector<17x32xf32>
    %225 = arith.addf %223, %224 : vector<17x32xf32>
    %c0_122 = arith.constant 0 : index
    %c1_123 = arith.constant 1 : index
    %c0_124 = arith.constant 0 : index
    %c0_125 = arith.constant 0 : index
    %226 = vector.load %arg9[%c0_122, %c1_123, %c0_124, %c0_125] : memref<1x2x32x96xf32, #tpu.memory_space<vmem>>, vector<1x1x32x96xf32>
    %227 = vector.shape_cast %226 : vector<1x1x32x96xf32> to vector<32x96xf32>
    %cst_126 = arith.constant dense<0.000000e+00> : vector<17x96xf32>
    %228 = tpu.matmul %225, %227, %cst_126 {dimension_numbers = #tpu.dot_dimension_numbers<[1], [0], [0], [1], [0, 0, 1, 1], [], []>} : vector<17x32xf32>, vector<32x96xf32>, vector<17x96xf32> -> vector<17x96xf32>
    %c0_127 = arith.constant 0 : index
    %c1_128 = arith.constant 1 : index
    %c0_129 = arith.constant 0 : index
    %c0_130 = arith.constant 0 : index
    %229 = vector.load %arg10[%c0_127, %c1_128, %c0_129, %c0_130] : memref<1x2x1x96xf32, #tpu.memory_space<vmem>>, vector<1x1x1x96xf32>
    %230 = vector.shape_cast %229 : vector<1x1x1x96xf32> to vector<1x96xf32>
    %231 = vector.broadcast %230 : vector<1x96xf32> to vector<17x96xf32>
    %232 = arith.addf %228, %231 : vector<17x96xf32>
    %c0_131 = arith.constant 0 : index
    %c1_132 = arith.constant 1 : index
    %c0_133 = arith.constant 0 : index
    %c0_134 = arith.constant 0 : index
    %233 = vector.load %arg11[%c0_131, %c1_132, %c0_133, %c0_134] : memref<1x2x32x32xf32, #tpu.memory_space<vmem>>, vector<1x1x32x32xf32>
    %234 = vector.shape_cast %233 : vector<1x1x32x32xf32> to vector<32x32xf32>
    %235 = vector.extract_strided_slice %232 {offsets = [0, 0], sizes = [17, 8], strides = [1, 1]} : vector<17x96xf32> to vector<17x8xf32>
    %236 = vector.extract_strided_slice %232 {offsets = [0, 32], sizes = [17, 8], strides = [1, 1]} : vector<17x96xf32> to vector<17x8xf32>
    %237 = vector.extract_strided_slice %232 {offsets = [0, 64], sizes = [17, 8], strides = [1, 1]} : vector<17x96xf32> to vector<17x8xf32>
    %cst_135 = arith.constant dense<0.000000e+00> : vector<17x17xf32>
    %238 = tpu.matmul %235, %236, %cst_135 {dimension_numbers = #tpu.dot_dimension_numbers<[1], [1], [0], [0], [0, 0, 1, 0], [], []>} : vector<17x8xf32>, vector<17x8xf32>, vector<17x17xf32> -> vector<17x17xf32>
    %cst_136 = arith.constant dense<0xFF800000> : vector<17xf32>
    %239 = vector.multi_reduction <maximumf>, %238, %cst_136 [1] : vector<17x17xf32> to vector<17xf32>
    %240 = vector.shape_cast %239 : vector<17xf32> to vector<17x1xf32>
    %241 = vector.broadcast %240 : vector<17x1xf32> to vector<17x17xf32>
    %242 = arith.subf %238, %241 : vector<17x17xf32>
    %243 = math.exp %242 : vector<17x17xf32>
    %cst_137 = arith.constant dense<0.000000e+00> : vector<17xf32>
    %244 = vector.multi_reduction <add>, %243, %cst_137 [1] : vector<17x17xf32> to vector<17xf32>
    %245 = vector.shape_cast %244 : vector<17xf32> to vector<17x1xf32>
    %246 = tpu.reciprocal %245 {approx = true} : vector<17x1xf32> -> vector<17x1xf32>
    %247 = vector.broadcast %246 : vector<17x1xf32> to vector<17x17xf32>
    %248 = arith.mulf %243, %247 : vector<17x17xf32>
    %cst_138 = arith.constant dense<0.000000e+00> : vector<17x8xf32>
    %249 = tpu.matmul %248, %237, %cst_138 {dimension_numbers = #tpu.dot_dimension_numbers<[1], [0], [0], [1], [0, 0, 1, 1], [], []>} : vector<17x17xf32>, vector<17x8xf32>, vector<17x8xf32> -> vector<17x8xf32>
    %250 = vector.extract_strided_slice %234 {offsets = [0, 0], sizes = [8, 32], strides = [1, 1]} : vector<32x32xf32> to vector<8x32xf32>
    %cst_139 = arith.constant dense<0.000000e+00> : vector<17x32xf32>
    %251 = tpu.matmul %249, %250, %cst_139 {dimension_numbers = #tpu.dot_dimension_numbers<[1], [0], [0], [1], [0, 0, 1, 1], [], []>} : vector<17x8xf32>, vector<8x32xf32>, vector<17x32xf32> -> vector<17x32xf32>
    %252 = vector.extract_strided_slice %232 {offsets = [0, 8], sizes = [17, 8], strides = [1, 1]} : vector<17x96xf32> to vector<17x8xf32>
    %253 = vector.extract_strided_slice %232 {offsets = [0, 40], sizes = [17, 8], strides = [1, 1]} : vector<17x96xf32> to vector<17x8xf32>
    %254 = vector.extract_strided_slice %232 {offsets = [0, 72], sizes = [17, 8], strides = [1, 1]} : vector<17x96xf32> to vector<17x8xf32>
    %cst_140 = arith.constant dense<0.000000e+00> : vector<17x17xf32>
    %255 = tpu.matmul %252, %253, %cst_140 {dimension_numbers = #tpu.dot_dimension_numbers<[1], [1], [0], [0], [0, 0, 1, 0], [], []>} : vector<17x8xf32>, vector<17x8xf32>, vector<17x17xf32> -> vector<17x17xf32>
    %cst_141 = arith.constant dense<0xFF800000> : vector<17xf32>
    %256 = vector.multi_reduction <maximumf>, %255, %cst_141 [1] : vector<17x17xf32> to vector<17xf32>
    %257 = vector.shape_cast %256 : vector<17xf32> to vector<17x1xf32>
    %258 = vector.broadcast %257 : vector<17x1xf32> to vector<17x17xf32>
    %259 = arith.subf %255, %258 : vector<17x17xf32>
    %260 = math.exp %259 : vector<17x17xf32>
    %cst_142 = arith.constant dense<0.000000e+00> : vector<17xf32>
    %261 = vector.multi_reduction <add>, %260, %cst_142 [1] : vector<17x17xf32> to vector<17xf32>
    %262 = vector.shape_cast %261 : vector<17xf32> to vector<17x1xf32>
    %263 = tpu.reciprocal %262 {approx = true} : vector<17x1xf32> -> vector<17x1xf32>
    %264 = vector.broadcast %263 : vector<17x1xf32> to vector<17x17xf32>
    %265 = arith.mulf %260, %264 : vector<17x17xf32>
    %cst_143 = arith.constant dense<0.000000e+00> : vector<17x8xf32>
    %266 = tpu.matmul %265, %254, %cst_143 {dimension_numbers = #tpu.dot_dimension_numbers<[1], [0], [0], [1], [0, 0, 1, 1], [], []>} : vector<17x17xf32>, vector<17x8xf32>, vector<17x8xf32> -> vector<17x8xf32>
    %267 = vector.extract_strided_slice %234 {offsets = [8, 0], sizes = [8, 32], strides = [1, 1]} : vector<32x32xf32> to vector<8x32xf32>
    %cst_144 = arith.constant dense<0.000000e+00> : vector<17x32xf32>
    %268 = tpu.matmul %266, %267, %cst_144 {dimension_numbers = #tpu.dot_dimension_numbers<[1], [0], [0], [1], [0, 0, 1, 1], [], []>} : vector<17x8xf32>, vector<8x32xf32>, vector<17x32xf32> -> vector<17x32xf32>
    %269 = arith.addf %251, %268 : vector<17x32xf32>
    %270 = vector.extract_strided_slice %232 {offsets = [0, 16], sizes = [17, 8], strides = [1, 1]} : vector<17x96xf32> to vector<17x8xf32>
    %271 = vector.extract_strided_slice %232 {offsets = [0, 48], sizes = [17, 8], strides = [1, 1]} : vector<17x96xf32> to vector<17x8xf32>
    %272 = vector.extract_strided_slice %232 {offsets = [0, 80], sizes = [17, 8], strides = [1, 1]} : vector<17x96xf32> to vector<17x8xf32>
    %cst_145 = arith.constant dense<0.000000e+00> : vector<17x17xf32>
    %273 = tpu.matmul %270, %271, %cst_145 {dimension_numbers = #tpu.dot_dimension_numbers<[1], [1], [0], [0], [0, 0, 1, 0], [], []>} : vector<17x8xf32>, vector<17x8xf32>, vector<17x17xf32> -> vector<17x17xf32>
    %cst_146 = arith.constant dense<0xFF800000> : vector<17xf32>
    %274 = vector.multi_reduction <maximumf>, %273, %cst_146 [1] : vector<17x17xf32> to vector<17xf32>
    %275 = vector.shape_cast %274 : vector<17xf32> to vector<17x1xf32>
    %276 = vector.broadcast %275 : vector<17x1xf32> to vector<17x17xf32>
    %277 = arith.subf %273, %276 : vector<17x17xf32>
    %278 = math.exp %277 : vector<17x17xf32>
    %cst_147 = arith.constant dense<0.000000e+00> : vector<17xf32>
    %279 = vector.multi_reduction <add>, %278, %cst_147 [1] : vector<17x17xf32> to vector<17xf32>
    %280 = vector.shape_cast %279 : vector<17xf32> to vector<17x1xf32>
    %281 = tpu.reciprocal %280 {approx = true} : vector<17x1xf32> -> vector<17x1xf32>
    %282 = vector.broadcast %281 : vector<17x1xf32> to vector<17x17xf32>
    %283 = arith.mulf %278, %282 : vector<17x17xf32>
    %cst_148 = arith.constant dense<0.000000e+00> : vector<17x8xf32>
    %284 = tpu.matmul %283, %272, %cst_148 {dimension_numbers = #tpu.dot_dimension_numbers<[1], [0], [0], [1], [0, 0, 1, 1], [], []>} : vector<17x17xf32>, vector<17x8xf32>, vector<17x8xf32> -> vector<17x8xf32>
    %285 = vector.extract_strided_slice %234 {offsets = [16, 0], sizes = [8, 32], strides = [1, 1]} : vector<32x32xf32> to vector<8x32xf32>
    %cst_149 = arith.constant dense<0.000000e+00> : vector<17x32xf32>
    %286 = tpu.matmul %284, %285, %cst_149 {dimension_numbers = #tpu.dot_dimension_numbers<[1], [0], [0], [1], [0, 0, 1, 1], [], []>} : vector<17x8xf32>, vector<8x32xf32>, vector<17x32xf32> -> vector<17x32xf32>
    %287 = arith.addf %269, %286 : vector<17x32xf32>
    %288 = vector.extract_strided_slice %232 {offsets = [0, 24], sizes = [17, 8], strides = [1, 1]} : vector<17x96xf32> to vector<17x8xf32>
    %289 = vector.extract_strided_slice %232 {offsets = [0, 56], sizes = [17, 8], strides = [1, 1]} : vector<17x96xf32> to vector<17x8xf32>
    %290 = vector.extract_strided_slice %232 {offsets = [0, 88], sizes = [17, 8], strides = [1, 1]} : vector<17x96xf32> to vector<17x8xf32>
    %cst_150 = arith.constant dense<0.000000e+00> : vector<17x17xf32>
    %291 = tpu.matmul %288, %289, %cst_150 {dimension_numbers = #tpu.dot_dimension_numbers<[1], [1], [0], [0], [0, 0, 1, 0], [], []>} : vector<17x8xf32>, vector<17x8xf32>, vector<17x17xf32> -> vector<17x17xf32>
    %cst_151 = arith.constant dense<0xFF800000> : vector<17xf32>
    %292 = vector.multi_reduction <maximumf>, %291, %cst_151 [1] : vector<17x17xf32> to vector<17xf32>
    %293 = vector.shape_cast %292 : vector<17xf32> to vector<17x1xf32>
    %294 = vector.broadcast %293 : vector<17x1xf32> to vector<17x17xf32>
    %295 = arith.subf %291, %294 : vector<17x17xf32>
    %296 = math.exp %295 : vector<17x17xf32>
    %cst_152 = arith.constant dense<0.000000e+00> : vector<17xf32>
    %297 = vector.multi_reduction <add>, %296, %cst_152 [1] : vector<17x17xf32> to vector<17xf32>
    %298 = vector.shape_cast %297 : vector<17xf32> to vector<17x1xf32>
    %299 = tpu.reciprocal %298 {approx = true} : vector<17x1xf32> -> vector<17x1xf32>
    %300 = vector.broadcast %299 : vector<17x1xf32> to vector<17x17xf32>
    %301 = arith.mulf %296, %300 : vector<17x17xf32>
    %cst_153 = arith.constant dense<0.000000e+00> : vector<17x8xf32>
    %302 = tpu.matmul %301, %290, %cst_153 {dimension_numbers = #tpu.dot_dimension_numbers<[1], [0], [0], [1], [0, 0, 1, 1], [], []>} : vector<17x17xf32>, vector<17x8xf32>, vector<17x8xf32> -> vector<17x8xf32>
    %303 = vector.extract_strided_slice %234 {offsets = [24, 0], sizes = [8, 32], strides = [1, 1]} : vector<32x32xf32> to vector<8x32xf32>
    %cst_154 = arith.constant dense<0.000000e+00> : vector<17x32xf32>
    %304 = tpu.matmul %302, %303, %cst_154 {dimension_numbers = #tpu.dot_dimension_numbers<[1], [0], [0], [1], [0, 0, 1, 1], [], []>} : vector<17x8xf32>, vector<8x32xf32>, vector<17x32xf32> -> vector<17x32xf32>
    %305 = arith.addf %287, %304 : vector<17x32xf32>
    %306 = arith.addf %199, %305 : vector<17x32xf32>
    %c0_155 = arith.constant 0 : index
    %c1_156 = arith.constant 1 : index
    %c0_157 = arith.constant 0 : index
    %c0_158 = arith.constant 0 : index
    %307 = vector.load %arg12[%c0_155, %c1_156, %c0_157, %c0_158] : memref<1x2x1x32xf32, #tpu.memory_space<vmem>>, vector<1x1x1x32xf32>
    %308 = vector.shape_cast %307 : vector<1x1x1x32xf32> to vector<1x32xf32>
    %309 = vector.broadcast %308 : vector<1x32xf32> to vector<17x32xf32>
    %310 = arith.addf %306, %309 : vector<17x32xf32>
    %c0_159 = arith.constant 0 : index
    %c1_160 = arith.constant 1 : index
    %c0_161 = arith.constant 0 : index
    %c0_162 = arith.constant 0 : index
    %311 = vector.load %arg13[%c0_159, %c1_160, %c0_161, %c0_162] : memref<1x2x1x32xf32, #tpu.memory_space<vmem>>, vector<1x1x1x32xf32>
    %312 = vector.shape_cast %311 : vector<1x1x1x32xf32> to vector<1x32xf32>
    %c0_163 = arith.constant 0 : index
    %c1_164 = arith.constant 1 : index
    %c0_165 = arith.constant 0 : index
    %c0_166 = arith.constant 0 : index
    %313 = vector.load %arg14[%c0_163, %c1_164, %c0_165, %c0_166] : memref<1x2x1x32xf32, #tpu.memory_space<vmem>>, vector<1x1x1x32xf32>
    %314 = vector.shape_cast %313 : vector<1x1x1x32xf32> to vector<1x32xf32>
    %cst_167 = arith.constant dense<0.000000e+00> : vector<17xf32>
    %315 = vector.multi_reduction <add>, %310, %cst_167 [1] : vector<17x32xf32> to vector<17xf32>
    %316 = vector.shape_cast %315 : vector<17xf32> to vector<17x1xf32>
    %cst_168 = arith.constant 3.200000e+01 : f32
    %317 = vector.broadcast %cst_168 : f32 to vector<17x1xf32>
    %318 = arith.divf %316, %317 : vector<17x1xf32>
    %319 = vector.broadcast %318 : vector<17x1xf32> to vector<17x32xf32>
    %320 = arith.subf %310, %319 : vector<17x32xf32>
    %321 = arith.mulf %320, %320 : vector<17x32xf32>
    %cst_169 = arith.constant dense<0.000000e+00> : vector<17xf32>
    %322 = vector.multi_reduction <add>, %321, %cst_169 [1] : vector<17x32xf32> to vector<17xf32>
    %323 = vector.shape_cast %322 : vector<17xf32> to vector<17x1xf32>
    %cst_170 = arith.constant 3.200000e+01 : f32
    %324 = vector.broadcast %cst_170 : f32 to vector<17x1xf32>
    %325 = arith.divf %323, %324 : vector<17x1xf32>
    %326 = vector.broadcast %318 : vector<17x1xf32> to vector<17x32xf32>
    %327 = arith.subf %310, %326 : vector<17x32xf32>
    %cst_171 = arith.constant 9.99999974E-6 : f32
    %328 = vector.broadcast %cst_171 : f32 to vector<17x1xf32>
    %329 = arith.addf %325, %328 : vector<17x1xf32>
    %330 = math.rsqrt %329 : vector<17x1xf32>
    %331 = vector.broadcast %330 : vector<17x1xf32> to vector<17x32xf32>
    %332 = arith.mulf %327, %331 : vector<17x32xf32>
    %333 = vector.broadcast %312 : vector<1x32xf32> to vector<17x32xf32>
    %334 = arith.mulf %332, %333 : vector<17x32xf32>
    %335 = vector.broadcast %314 : vector<1x32xf32> to vector<17x32xf32>
    %336 = arith.addf %334, %335 : vector<17x32xf32>
    %c0_172 = arith.constant 0 : index
    %c1_173 = arith.constant 1 : index
    %c0_174 = arith.constant 0 : index
    %c0_175 = arith.constant 0 : index
    %337 = vector.load %arg15[%c0_172, %c1_173, %c0_174, %c0_175] : memref<1x2x32x64xf32, #tpu.memory_space<vmem>>, vector<1x1x32x64xf32>
    %338 = vector.shape_cast %337 : vector<1x1x32x64xf32> to vector<32x64xf32>
    %cst_176 = arith.constant dense<0.000000e+00> : vector<17x64xf32>
    %339 = tpu.matmul %336, %338, %cst_176 {dimension_numbers = #tpu.dot_dimension_numbers<[1], [0], [0], [1], [0, 0, 1, 1], [], []>} : vector<17x32xf32>, vector<32x64xf32>, vector<17x64xf32> -> vector<17x64xf32>
    %c0_177 = arith.constant 0 : index
    %c1_178 = arith.constant 1 : index
    %c0_179 = arith.constant 0 : index
    %c0_180 = arith.constant 0 : index
    %340 = vector.load %arg16[%c0_177, %c1_178, %c0_179, %c0_180] : memref<1x2x1x64xf32, #tpu.memory_space<vmem>>, vector<1x1x1x64xf32>
    %341 = vector.shape_cast %340 : vector<1x1x1x64xf32> to vector<1x64xf32>
    %342 = vector.broadcast %341 : vector<1x64xf32> to vector<17x64xf32>
    %343 = arith.addf %339, %342 : vector<17x64xf32>
    %cst_181 = arith.constant 1.702000e+00 : f32
    %344 = vector.broadcast %cst_181 : f32 to vector<17x64xf32>
    %345 = arith.mulf %344, %343 : vector<17x64xf32>
    %346 = arith.negf %345 : vector<17x64xf32>
    %347 = math.exp %346 : vector<17x64xf32>
    %cst_182 = arith.constant 1.000000e+00 : f32
    %348 = vector.broadcast %cst_182 : f32 to vector<17x64xf32>
    %349 = arith.addf %348, %347 : vector<17x64xf32>
    %350 = arith.divf %348, %349 : vector<17x64xf32>
    %351 = arith.mulf %343, %350 : vector<17x64xf32>
    %c0_183 = arith.constant 0 : index
    %c1_184 = arith.constant 1 : index
    %c0_185 = arith.constant 0 : index
    %c0_186 = arith.constant 0 : index
    %352 = vector.load %arg17[%c0_183, %c1_184, %c0_185, %c0_186] : memref<1x2x64x32xf32, #tpu.memory_space<vmem>>, vector<1x1x64x32xf32>
    %353 = vector.shape_cast %352 : vector<1x1x64x32xf32> to vector<64x32xf32>
    %cst_187 = arith.constant dense<0.000000e+00> : vector<17x32xf32>
    %354 = tpu.matmul %351, %353, %cst_187 {dimension_numbers = #tpu.dot_dimension_numbers<[1], [0], [0], [1], [0, 0, 1, 1], [], []>} : vector<17x64xf32>, vector<64x32xf32>, vector<17x32xf32> -> vector<17x32xf32>
    %c0_188 = arith.constant 0 : index
    %c1_189 = arith.constant 1 : index
    %c0_190 = arith.constant 0 : index
    %c0_191 = arith.constant 0 : index
    %355 = vector.load %arg18[%c0_188, %c1_189, %c0_190, %c0_191] : memref<1x2x1x32xf32, #tpu.memory_space<vmem>>, vector<1x1x1x32xf32>
    %356 = vector.shape_cast %355 : vector<1x1x1x32xf32> to vector<1x32xf32>
    %357 = vector.broadcast %356 : vector<1x32xf32> to vector<17x32xf32>
    %358 = arith.addf %354, %357 : vector<17x32xf32>
    %359 = arith.addf %310, %358 : vector<17x32xf32>
    %360 = vector.extract_strided_slice %359 {offsets = [0, 0], sizes = [16, 32], strides = [1, 1]} : vector<17x32xf32> to vector<16x32xf32>
    %c0_192 = arith.constant 0 : index
    %c0_193 = arith.constant 0 : index
    %c0_194 = arith.constant 0 : index
    %c0_195 = arith.constant 0 : index
    %361 = vector.load %arg19[%c0_192, %c0_193, %c0_194, %c0_195] : memref<1x2x16x32xf32, #tpu.memory_space<vmem>>, vector<1x1x16x32xf32>
    %362 = vector.shape_cast %361 : vector<1x1x16x32xf32> to vector<16x32xf32>
    %363 = vector.shape_cast %360 : vector<16x32xf32> to vector<1x1x16x32xf32>
    tpu.vector_store %arg19[%c0_192, %c0_193, %c0_194, %c0_195], %363 {strides = array<i32>} : memref<1x2x16x32xf32, #tpu.memory_space<vmem>>, vector<1x1x16x32xf32>,
    %364 = vector.extract_strided_slice %4 {offsets = [16, 0], sizes = [16, 32], strides = [1, 1]} : vector<32x32xf32> to vector<16x32xf32>
    %c0_196 = arith.constant 0 : index
    %c0_197 = arith.constant 0 : index
    %365 = vector.load %arg20[%c0_196, %c0_197] : memref<17x32xf32, #tpu.memory_space<vmem>>, vector<16x32xf32>
    tpu.vector_store %arg20[%c0_196, %c0_197], %364 {strides = array<i32>} : memref<17x32xf32, #tpu.memory_space<vmem>>, vector<16x32xf32>,
    %c0_198 = arith.constant 0 : index
    %c0_199 = arith.constant 0 : index
    %c0_200 = arith.constant 0 : index
    %366 = vector.load %arg3[%c0_198, %c0_199, %c0_200] : memref<1x1x32xf32, #tpu.memory_space<vmem>>, vector<1x1x32xf32>
    %367 = vector.shape_cast %366 : vector<1x1x32xf32> to vector<1x32xf32>
    %c16_201 = arith.constant 16 : index
    %c0_202 = arith.constant 0 : index
    %368 = vector.load %arg20[%c16_201, %c0_202] : memref<17x32xf32, #tpu.memory_space<vmem>>, vector<1x32xf32>
    tpu.vector_store %arg20[%c16_201, %c0_202], %367 {strides = array<i32>} : memref<17x32xf32, #tpu.memory_space<vmem>>, vector<1x32xf32>,
    %c0_203 = arith.constant 0 : index
    %c0_204 = arith.constant 0 : index
    %369 = vector.load %arg20[%c0_203, %c0_204] : memref<17x32xf32, #tpu.memory_space<vmem>>, vector<17x32xf32>
    %370 = arith.addf %369, %6 : vector<17x32xf32>
    %cst_205 = arith.constant dense<0.000000e+00> : vector<17xf32>
    %371 = vector.multi_reduction <add>, %370, %cst_205 [1] : vector<17x32xf32> to vector<17xf32>
    %372 = vector.shape_cast %371 : vector<17xf32> to vector<17x1xf32>
    %cst_206 = arith.constant 3.200000e+01 : f32
    %373 = vector.broadcast %cst_206 : f32 to vector<17x1xf32>
    %374 = arith.divf %372, %373 : vector<17x1xf32>
    %375 = vector.broadcast %374 : vector<17x1xf32> to vector<17x32xf32>
    %376 = arith.subf %370, %375 : vector<17x32xf32>
    %377 = arith.mulf %376, %376 : vector<17x32xf32>
    %cst_207 = arith.constant dense<0.000000e+00> : vector<17xf32>
    %378 = vector.multi_reduction <add>, %377, %cst_207 [1] : vector<17x32xf32> to vector<17xf32>
    %379 = vector.shape_cast %378 : vector<17xf32> to vector<17x1xf32>
    %cst_208 = arith.constant 3.200000e+01 : f32
    %380 = vector.broadcast %cst_208 : f32 to vector<17x1xf32>
    %381 = arith.divf %379, %380 : vector<17x1xf32>
    %382 = vector.broadcast %374 : vector<17x1xf32> to vector<17x32xf32>
    %383 = arith.subf %370, %382 : vector<17x32xf32>
    %cst_209 = arith.constant 9.99999974E-6 : f32
    %384 = vector.broadcast %cst_209 : f32 to vector<17x1xf32>
    %385 = arith.addf %381, %384 : vector<17x1xf32>
    %386 = math.rsqrt %385 : vector<17x1xf32>
    %387 = vector.broadcast %386 : vector<17x1xf32> to vector<17x32xf32>
    %388 = arith.mulf %383, %387 : vector<17x32xf32>
    %389 = vector.broadcast %8 : vector<1x32xf32> to vector<17x32xf32>
    %390 = arith.mulf %388, %389 : vector<17x32xf32>
    %391 = vector.broadcast %10 : vector<1x32xf32> to vector<17x32xf32>
    %392 = arith.addf %390, %391 : vector<17x32xf32>
    %c0_210 = arith.constant 0 : index
    %c0_211 = arith.constant 0 : index
    %c0_212 = arith.constant 0 : index
    %c0_213 = arith.constant 0 : index
    %393 = vector.load %arg7[%c0_210, %c0_211, %c0_212, %c0_213] : memref<1x2x1x32xf32, #tpu.memory_space<vmem>>, vector<1x1x1x32xf32>
    %394 = vector.shape_cast %393 : vector<1x1x1x32xf32> to vector<1x32xf32>
    %c0_214 = arith.constant 0 : index
    %c0_215 = arith.constant 0 : index
    %c0_216 = arith.constant 0 : index
    %c0_217 = arith.constant 0 : index
    %395 = vector.load %arg8[%c0_214, %c0_215, %c0_216, %c0_217] : memref<1x2x1x32xf32, #tpu.memory_space<vmem>>, vector<1x1x1x32xf32>
    %396 = vector.shape_cast %395 : vector<1x1x1x32xf32> to vector<1x32xf32>
    %cst_218 = arith.constant dense<0.000000e+00> : vector<17xf32>
    %397 = vector.multi_reduction <add>, %392, %cst_218 [1] : vector<17x32xf32> to vector<17xf32>
    %398 = vector.shape_cast %397 : vector<17xf32> to vector<17x1xf32>
    %cst_219 = arith.constant 3.200000e+01 : f32
    %399 = vector.broadcast %cst_219 : f32 to vector<17x1xf32>
    %400 = arith.divf %398, %399 : vector<17x1xf32>
    %401 = vector.broadcast %400 : vector<17x1xf32> to vector<17x32xf32>
    %402 = arith.subf %392, %401 : vector<17x32xf32>
    %403 = arith.mulf %402, %402 : vector<17x32xf32>
    %cst_220 = arith.constant dense<0.000000e+00> : vector<17xf32>
    %404 = vector.multi_reduction <add>, %403, %cst_220 [1] : vector<17x32xf32> to vector<17xf32>
    %405 = vector.shape_cast %404 : vector<17xf32> to vector<17x1xf32>
    %cst_221 = arith.constant 3.200000e+01 : f32
    %406 = vector.broadcast %cst_221 : f32 to vector<17x1xf32>
    %407 = arith.divf %405, %406 : vector<17x1xf32>
    %408 = vector.broadcast %400 : vector<17x1xf32> to vector<17x32xf32>
    %409 = arith.subf %392, %408 : vector<17x32xf32>
    %cst_222 = arith.constant 9.99999974E-6 : f32
    %410 = vector.broadcast %cst_222 : f32 to vector<17x1xf32>
    %411 = arith.addf %407, %410 : vector<17x1xf32>
    %412 = math.rsqrt %411 : vector<17x1xf32>
    %413 = vector.broadcast %412 : vector<17x1xf32> to vector<17x32xf32>
    %414 = arith.mulf %409, %413 : vector<17x32xf32>
    %415 = vector.broadcast %394 : vector<1x32xf32> to vector<17x32xf32>
    %416 = arith.mulf %414, %415 : vector<17x32xf32>
    %417 = vector.broadcast %396 : vector<1x32xf32> to vector<17x32xf32>
    %418 = arith.addf %416, %417 : vector<17x32xf32>
    %c0_223 = arith.constant 0 : index
    %c0_224 = arith.constant 0 : index
    %c0_225 = arith.constant 0 : index
    %c0_226 = arith.constant 0 : index
    %419 = vector.load %arg9[%c0_223, %c0_224, %c0_225, %c0_226] : memref<1x2x32x96xf32, #tpu.memory_space<vmem>>, vector<1x1x32x96xf32>
    %420 = vector.shape_cast %419 : vector<1x1x32x96xf32> to vector<32x96xf32>
    %cst_227 = arith.constant dense<0.000000e+00> : vector<17x96xf32>
    %421 = tpu.matmul %418, %420, %cst_227 {dimension_numbers = #tpu.dot_dimension_numbers<[1], [0], [0], [1], [0, 0, 1, 1], [], []>} : vector<17x32xf32>, vector<32x96xf32>, vector<17x96xf32> -> vector<17x96xf32>
    %c0_228 = arith.constant 0 : index
    %c0_229 = arith.constant 0 : index
    %c0_230 = arith.constant 0 : index
    %c0_231 = arith.constant 0 : index
    %422 = vector.load %arg10[%c0_228, %c0_229, %c0_230, %c0_231] : memref<1x2x1x96xf32, #tpu.memory_space<vmem>>, vector<1x1x1x96xf32>
    %423 = vector.shape_cast %422 : vector<1x1x1x96xf32> to vector<1x96xf32>
    %424 = vector.broadcast %423 : vector<1x96xf32> to vector<17x96xf32>
    %425 = arith.addf %421, %424 : vector<17x96xf32>
    %c0_232 = arith.constant 0 : index
    %c0_233 = arith.constant 0 : index
    %c0_234 = arith.constant 0 : index
    %c0_235 = arith.constant 0 : index
    %426 = vector.load %arg11[%c0_232, %c0_233, %c0_234, %c0_235] : memref<1x2x32x32xf32, #tpu.memory_space<vmem>>, vector<1x1x32x32xf32>
    %427 = vector.shape_cast %426 : vector<1x1x32x32xf32> to vector<32x32xf32>
    %428 = vector.extract_strided_slice %425 {offsets = [0, 0], sizes = [17, 8], strides = [1, 1]} : vector<17x96xf32> to vector<17x8xf32>
    %429 = vector.extract_strided_slice %425 {offsets = [0, 32], sizes = [17, 8], strides = [1, 1]} : vector<17x96xf32> to vector<17x8xf32>
    %430 = vector.extract_strided_slice %425 {offsets = [0, 64], sizes = [17, 8], strides = [1, 1]} : vector<17x96xf32> to vector<17x8xf32>
    %cst_236 = arith.constant dense<0.000000e+00> : vector<17x17xf32>
    %431 = tpu.matmul %428, %429, %cst_236 {dimension_numbers = #tpu.dot_dimension_numbers<[1], [1], [0], [0], [0, 0, 1, 0], [], []>} : vector<17x8xf32>, vector<17x8xf32>, vector<17x17xf32> -> vector<17x17xf32>
    %cst_237 = arith.constant dense<0xFF800000> : vector<17xf32>
    %432 = vector.multi_reduction <maximumf>, %431, %cst_237 [1] : vector<17x17xf32> to vector<17xf32>
    %433 = vector.shape_cast %432 : vector<17xf32> to vector<17x1xf32>
    %434 = vector.broadcast %433 : vector<17x1xf32> to vector<17x17xf32>
    %435 = arith.subf %431, %434 : vector<17x17xf32>
    %436 = math.exp %435 : vector<17x17xf32>
    %cst_238 = arith.constant dense<0.000000e+00> : vector<17xf32>
    %437 = vector.multi_reduction <add>, %436, %cst_238 [1] : vector<17x17xf32> to vector<17xf32>
    %438 = vector.shape_cast %437 : vector<17xf32> to vector<17x1xf32>
    %439 = tpu.reciprocal %438 {approx = true} : vector<17x1xf32> -> vector<17x1xf32>
    %440 = vector.broadcast %439 : vector<17x1xf32> to vector<17x17xf32>
    %441 = arith.mulf %436, %440 : vector<17x17xf32>
    %cst_239 = arith.constant dense<0.000000e+00> : vector<17x8xf32>
    %442 = tpu.matmul %441, %430, %cst_239 {dimension_numbers = #tpu.dot_dimension_numbers<[1], [0], [0], [1], [0, 0, 1, 1], [], []>} : vector<17x17xf32>, vector<17x8xf32>, vector<17x8xf32> -> vector<17x8xf32>
    %443 = vector.extract_strided_slice %427 {offsets = [0, 0], sizes = [8, 32], strides = [1, 1]} : vector<32x32xf32> to vector<8x32xf32>
    %cst_240 = arith.constant dense<0.000000e+00> : vector<17x32xf32>
    %444 = tpu.matmul %442, %443, %cst_240 {dimension_numbers = #tpu.dot_dimension_numbers<[1], [0], [0], [1], [0, 0, 1, 1], [], []>} : vector<17x8xf32>, vector<8x32xf32>, vector<17x32xf32> -> vector<17x32xf32>
    %445 = vector.extract_strided_slice %425 {offsets = [0, 8], sizes = [17, 8], strides = [1, 1]} : vector<17x96xf32> to vector<17x8xf32>
    %446 = vector.extract_strided_slice %425 {offsets = [0, 40], sizes = [17, 8], strides = [1, 1]} : vector<17x96xf32> to vector<17x8xf32>
    %447 = vector.extract_strided_slice %425 {offsets = [0, 72], sizes = [17, 8], strides = [1, 1]} : vector<17x96xf32> to vector<17x8xf32>
    %cst_241 = arith.constant dense<0.000000e+00> : vector<17x17xf32>
    %448 = tpu.matmul %445, %446, %cst_241 {dimension_numbers = #tpu.dot_dimension_numbers<[1], [1], [0], [0], [0, 0, 1, 0], [], []>} : vector<17x8xf32>, vector<17x8xf32>, vector<17x17xf32> -> vector<17x17xf32>
    %cst_242 = arith.constant dense<0xFF800000> : vector<17xf32>
    %449 = vector.multi_reduction <maximumf>, %448, %cst_242 [1] : vector<17x17xf32> to vector<17xf32>
    %450 = vector.shape_cast %449 : vector<17xf32> to vector<17x1xf32>
    %451 = vector.broadcast %450 : vector<17x1xf32> to vector<17x17xf32>
    %452 = arith.subf %448, %451 : vector<17x17xf32>
    %453 = math.exp %452 : vector<17x17xf32>
    %cst_243 = arith.constant dense<0.000000e+00> : vector<17xf32>
    %454 = vector.multi_reduction <add>, %453, %cst_243 [1] : vector<17x17xf32> to vector<17xf32>
    %455 = vector.shape_cast %454 : vector<17xf32> to vector<17x1xf32>
    %456 = tpu.reciprocal %455 {approx = true} : vector<17x1xf32> -> vector<17x1xf32>
    %457 = vector.broadcast %456 : vector<17x1xf32> to vector<17x17xf32>
    %458 = arith.mulf %453, %457 : vector<17x17xf32>
    %cst_244 = arith.constant dense<0.000000e+00> : vector<17x8xf32>
    %459 = tpu.matmul %458, %447, %cst_244 {dimension_numbers = #tpu.dot_dimension_numbers<[1], [0], [0], [1], [0, 0, 1, 1], [], []>} : vector<17x17xf32>, vector<17x8xf32>, vector<17x8xf32> -> vector<17x8xf32>
    %460 = vector.extract_strided_slice %427 {offsets = [8, 0], sizes = [8, 32], strides = [1, 1]} : vector<32x32xf32> to vector<8x32xf32>
    %cst_245 = arith.constant dense<0.000000e+00> : vector<17x32xf32>
    %461 = tpu.matmul %459, %460, %cst_245 {dimension_numbers = #tpu.dot_dimension_numbers<[1], [0], [0], [1], [0, 0, 1, 1], [], []>} : vector<17x8xf32>, vector<8x32xf32>, vector<17x32xf32> -> vector<17x32xf32>
    %462 = arith.addf %444, %461 : vector<17x32xf32>
    %463 = vector.extract_strided_slice %425 {offsets = [0, 16], sizes = [17, 8], strides = [1, 1]} : vector<17x96xf32> to vector<17x8xf32>
    %464 = vector.extract_strided_slice %425 {offsets = [0, 48], sizes = [17, 8], strides = [1, 1]} : vector<17x96xf32> to vector<17x8xf32>
    %465 = vector.extract_strided_slice %425 {offsets = [0, 80], sizes = [17, 8], strides = [1, 1]} : vector<17x96xf32> to vector<17x8xf32>
    %cst_246 = arith.constant dense<0.000000e+00> : vector<17x17xf32>
    %466 = tpu.matmul %463, %464, %cst_246 {dimension_numbers = #tpu.dot_dimension_numbers<[1], [1], [0], [0], [0, 0, 1, 0], [], []>} : vector<17x8xf32>, vector<17x8xf32>, vector<17x17xf32> -> vector<17x17xf32>
    %cst_247 = arith.constant dense<0xFF800000> : vector<17xf32>
    %467 = vector.multi_reduction <maximumf>, %466, %cst_247 [1] : vector<17x17xf32> to vector<17xf32>
    %468 = vector.shape_cast %467 : vector<17xf32> to vector<17x1xf32>
    %469 = vector.broadcast %468 : vector<17x1xf32> to vector<17x17xf32>
    %470 = arith.subf %466, %469 : vector<17x17xf32>
    %471 = math.exp %470 : vector<17x17xf32>
    %cst_248 = arith.constant dense<0.000000e+00> : vector<17xf32>
    %472 = vector.multi_reduction <add>, %471, %cst_248 [1] : vector<17x17xf32> to vector<17xf32>
    %473 = vector.shape_cast %472 : vector<17xf32> to vector<17x1xf32>
    %474 = tpu.reciprocal %473 {approx = true} : vector<17x1xf32> -> vector<17x1xf32>
    %475 = vector.broadcast %474 : vector<17x1xf32> to vector<17x17xf32>
    %476 = arith.mulf %471, %475 : vector<17x17xf32>
    %cst_249 = arith.constant dense<0.000000e+00> : vector<17x8xf32>
    %477 = tpu.matmul %476, %465, %cst_249 {dimension_numbers = #tpu.dot_dimension_numbers<[1], [0], [0], [1], [0, 0, 1, 1], [], []>} : vector<17x17xf32>, vector<17x8xf32>, vector<17x8xf32> -> vector<17x8xf32>
    %478 = vector.extract_strided_slice %427 {offsets = [16, 0], sizes = [8, 32], strides = [1, 1]} : vector<32x32xf32> to vector<8x32xf32>
    %cst_250 = arith.constant dense<0.000000e+00> : vector<17x32xf32>
    %479 = tpu.matmul %477, %478, %cst_250 {dimension_numbers = #tpu.dot_dimension_numbers<[1], [0], [0], [1], [0, 0, 1, 1], [], []>} : vector<17x8xf32>, vector<8x32xf32>, vector<17x32xf32> -> vector<17x32xf32>
    %480 = arith.addf %462, %479 : vector<17x32xf32>
    %481 = vector.extract_strided_slice %425 {offsets = [0, 24], sizes = [17, 8], strides = [1, 1]} : vector<17x96xf32> to vector<17x8xf32>
    %482 = vector.extract_strided_slice %425 {offsets = [0, 56], sizes = [17, 8], strides = [1, 1]} : vector<17x96xf32> to vector<17x8xf32>
    %483 = vector.extract_strided_slice %425 {offsets = [0, 88], sizes = [17, 8], strides = [1, 1]} : vector<17x96xf32> to vector<17x8xf32>
    %cst_251 = arith.constant dense<0.000000e+00> : vector<17x17xf32>
    %484 = tpu.matmul %481, %482, %cst_251 {dimension_numbers = #tpu.dot_dimension_numbers<[1], [1], [0], [0], [0, 0, 1, 0], [], []>} : vector<17x8xf32>, vector<17x8xf32>, vector<17x17xf32> -> vector<17x17xf32>
    %cst_252 = arith.constant dense<0xFF800000> : vector<17xf32>
    %485 = vector.multi_reduction <maximumf>, %484, %cst_252 [1] : vector<17x17xf32> to vector<17xf32>
    %486 = vector.shape_cast %485 : vector<17xf32> to vector<17x1xf32>
    %487 = vector.broadcast %486 : vector<17x1xf32> to vector<17x17xf32>
    %488 = arith.subf %484, %487 : vector<17x17xf32>
    %489 = math.exp %488 : vector<17x17xf32>
    %cst_253 = arith.constant dense<0.000000e+00> : vector<17xf32>
    %490 = vector.multi_reduction <add>, %489, %cst_253 [1] : vector<17x17xf32> to vector<17xf32>
    %491 = vector.shape_cast %490 : vector<17xf32> to vector<17x1xf32>
    %492 = tpu.reciprocal %491 {approx = true} : vector<17x1xf32> -> vector<17x1xf32>
    %493 = vector.broadcast %492 : vector<17x1xf32> to vector<17x17xf32>
    %494 = arith.mulf %489, %493 : vector<17x17xf32>
    %cst_254 = arith.constant dense<0.000000e+00> : vector<17x8xf32>
    %495 = tpu.matmul %494, %483, %cst_254 {dimension_numbers = #tpu.dot_dimension_numbers<[1], [0], [0], [1], [0, 0, 1, 1], [], []>} : vector<17x17xf32>, vector<17x8xf32>, vector<17x8xf32> -> vector<17x8xf32>
    %496 = vector.extract_strided_slice %427 {offsets = [24, 0], sizes = [8, 32], strides = [1, 1]} : vector<32x32xf32> to vector<8x32xf32>
    %cst_255 = arith.constant dense<0.000000e+00> : vector<17x32xf32>
    %497 = tpu.matmul %495, %496, %cst_255 {dimension_numbers = #tpu.dot_dimension_numbers<[1], [0], [0], [1], [0, 0, 1, 1], [], []>} : vector<17x8xf32>, vector<8x32xf32>, vector<17x32xf32> -> vector<17x32xf32>
    %498 = arith.addf %480, %497 : vector<17x32xf32>
    %499 = arith.addf %392, %498 : vector<17x32xf32>
    %c0_256 = arith.constant 0 : index
    %c0_257 = arith.constant 0 : index
    %c0_258 = arith.constant 0 : index
    %c0_259 = arith.constant 0 : index
    %500 = vector.load %arg12[%c0_256, %c0_257, %c0_258, %c0_259] : memref<1x2x1x32xf32, #tpu.memory_space<vmem>>, vector<1x1x1x32xf32>
    %501 = vector.shape_cast %500 : vector<1x1x1x32xf32> to vector<1x32xf32>
    %502 = vector.broadcast %501 : vector<1x32xf32> to vector<17x32xf32>
    %503 = arith.addf %499, %502 : vector<17x32xf32>
    %c0_260 = arith.constant 0 : index
    %c0_261 = arith.constant 0 : index
    %c0_262 = arith.constant 0 : index
    %c0_263 = arith.constant 0 : index
    %504 = vector.load %arg13[%c0_260, %c0_261, %c0_262, %c0_263] : memref<1x2x1x32xf32, #tpu.memory_space<vmem>>, vector<1x1x1x32xf32>
    %505 = vector.shape_cast %504 : vector<1x1x1x32xf32> to vector<1x32xf32>
    %c0_264 = arith.constant 0 : index
    %c0_265 = arith.constant 0 : index
    %c0_266 = arith.constant 0 : index
    %c0_267 = arith.constant 0 : index
    %506 = vector.load %arg14[%c0_264, %c0_265, %c0_266, %c0_267] : memref<1x2x1x32xf32, #tpu.memory_space<vmem>>, vector<1x1x1x32xf32>
    %507 = vector.shape_cast %506 : vector<1x1x1x32xf32> to vector<1x32xf32>
    %cst_268 = arith.constant dense<0.000000e+00> : vector<17xf32>
    %508 = vector.multi_reduction <add>, %503, %cst_268 [1] : vector<17x32xf32> to vector<17xf32>
    %509 = vector.shape_cast %508 : vector<17xf32> to vector<17x1xf32>
    %cst_269 = arith.constant 3.200000e+01 : f32
    %510 = vector.broadcast %cst_269 : f32 to vector<17x1xf32>
    %511 = arith.divf %509, %510 : vector<17x1xf32>
    %512 = vector.broadcast %511 : vector<17x1xf32> to vector<17x32xf32>
    %513 = arith.subf %503, %512 : vector<17x32xf32>
    %514 = arith.mulf %513, %513 : vector<17x32xf32>
    %cst_270 = arith.constant dense<0.000000e+00> : vector<17xf32>
    %515 = vector.multi_reduction <add>, %514, %cst_270 [1] : vector<17x32xf32> to vector<17xf32>
    %516 = vector.shape_cast %515 : vector<17xf32> to vector<17x1xf32>
    %cst_271 = arith.constant 3.200000e+01 : f32
    %517 = vector.broadcast %cst_271 : f32 to vector<17x1xf32>
    %518 = arith.divf %516, %517 : vector<17x1xf32>
    %519 = vector.broadcast %511 : vector<17x1xf32> to vector<17x32xf32>
    %520 = arith.subf %503, %519 : vector<17x32xf32>
    %cst_272 = arith.constant 9.99999974E-6 : f32
    %521 = vector.broadcast %cst_272 : f32 to vector<17x1xf32>
    %522 = arith.addf %518, %521 : vector<17x1xf32>
    %523 = math.rsqrt %522 : vector<17x1xf32>
    %524 = vector.broadcast %523 : vector<17x1xf32> to vector<17x32xf32>
    %525 = arith.mulf %520, %524 : vector<17x32xf32>
    %526 = vector.broadcast %505 : vector<1x32xf32> to vector<17x32xf32>
    %527 = arith.mulf %525, %526 : vector<17x32xf32>
    %528 = vector.broadcast %507 : vector<1x32xf32> to vector<17x32xf32>
    %529 = arith.addf %527, %528 : vector<17x32xf32>
    %c0_273 = arith.constant 0 : index
    %c0_274 = arith.constant 0 : index
    %c0_275 = arith.constant 0 : index
    %c0_276 = arith.constant 0 : index
    %530 = vector.load %arg15[%c0_273, %c0_274, %c0_275, %c0_276] : memref<1x2x32x64xf32, #tpu.memory_space<vmem>>, vector<1x1x32x64xf32>
    %531 = vector.shape_cast %530 : vector<1x1x32x64xf32> to vector<32x64xf32>
    %cst_277 = arith.constant dense<0.000000e+00> : vector<17x64xf32>
    %532 = tpu.matmul %529, %531, %cst_277 {dimension_numbers = #tpu.dot_dimension_numbers<[1], [0], [0], [1], [0, 0, 1, 1], [], []>} : vector<17x32xf32>, vector<32x64xf32>, vector<17x64xf32> -> vector<17x64xf32>
    %c0_278 = arith.constant 0 : index
    %c0_279 = arith.constant 0 : index
    %c0_280 = arith.constant 0 : index
    %c0_281 = arith.constant 0 : index
    %533 = vector.load %arg16[%c0_278, %c0_279, %c0_280, %c0_281] : memref<1x2x1x64xf32, #tpu.memory_space<vmem>>, vector<1x1x1x64xf32>
    %534 = vector.shape_cast %533 : vector<1x1x1x64xf32> to vector<1x64xf32>
    %535 = vector.broadcast %534 : vector<1x64xf32> to vector<17x64xf32>
    %536 = arith.addf %532, %535 : vector<17x64xf32>
    %cst_282 = arith.constant 1.702000e+00 : f32
    %537 = vector.broadcast %cst_282 : f32 to vector<17x64xf32>
    %538 = arith.mulf %537, %536 : vector<17x64xf32>
    %539 = arith.negf %538 : vector<17x64xf32>
    %540 = math.exp %539 : vector<17x64xf32>
    %cst_283 = arith.constant 1.000000e+00 : f32
    %541 = vector.broadcast %cst_283 : f32 to vector<17x64xf32>
    %542 = arith.addf %541, %540 : vector<17x64xf32>
    %543 = arith.divf %541, %542 : vector<17x64xf32>
    %544 = arith.mulf %536, %543 : vector<17x64xf32>
    %c0_284 = arith.constant 0 : index
    %c0_285 = arith.constant 0 : index
    %c0_286 = arith.constant 0 : index
    %c0_287 = arith.constant 0 : index
    %545 = vector.load %arg17[%c0_284, %c0_285, %c0_286, %c0_287] : memref<1x2x64x32xf32, #tpu.memory_space<vmem>>, vector<1x1x64x32xf32>
    %546 = vector.shape_cast %545 : vector<1x1x64x32xf32> to vector<64x32xf32>
    %cst_288 = arith.constant dense<0.000000e+00> : vector<17x32xf32>
    %547 = tpu.matmul %544, %546, %cst_288 {dimension_numbers = #tpu.dot_dimension_numbers<[1], [0], [0], [1], [0, 0, 1, 1], [], []>} : vector<17x64xf32>, vector<64x32xf32>, vector<17x32xf32> -> vector<17x32xf32>
    %c0_289 = arith.constant 0 : index
    %c0_290 = arith.constant 0 : index
    %c0_291 = arith.constant 0 : index
    %c0_292 = arith.constant 0 : index
    %548 = vector.load %arg18[%c0_289, %c0_290, %c0_291, %c0_292] : memref<1x2x1x32xf32, #tpu.memory_space<vmem>>, vector<1x1x1x32xf32>
    %549 = vector.shape_cast %548 : vector<1x1x1x32xf32> to vector<1x32xf32>
    %550 = vector.broadcast %549 : vector<1x32xf32> to vector<17x32xf32>
    %551 = arith.addf %547, %550 : vector<17x32xf32>
    %552 = arith.addf %503, %551 : vector<17x32xf32>
    %c0_293 = arith.constant 0 : index
    %c1_294 = arith.constant 1 : index
    %c0_295 = arith.constant 0 : index
    %c0_296 = arith.constant 0 : index
    %553 = vector.load %arg7[%c0_293, %c1_294, %c0_295, %c0_296] : memref<1x2x1x32xf32, #tpu.memory_space<vmem>>, vector<1x1x1x32xf32>
    %554 = vector.shape_cast %553 : vector<1x1x1x32xf32> to vector<1x32xf32>
    %c0_297 = arith.constant 0 : index
    %c1_298 = arith.constant 1 : index
    %c0_299 = arith.constant 0 : index
    %c0_300 = arith.constant 0 : index
    %555 = vector.load %arg8[%c0_297, %c1_298, %c0_299, %c0_300] : memref<1x2x1x32xf32, #tpu.memory_space<vmem>>, vector<1x1x1x32xf32>
    %556 = vector.shape_cast %555 : vector<1x1x1x32xf32> to vector<1x32xf32>
    %cst_301 = arith.constant dense<0.000000e+00> : vector<17xf32>
    %557 = vector.multi_reduction <add>, %552, %cst_301 [1] : vector<17x32xf32> to vector<17xf32>
    %558 = vector.shape_cast %557 : vector<17xf32> to vector<17x1xf32>
    %cst_302 = arith.constant 3.200000e+01 : f32
    %559 = vector.broadcast %cst_302 : f32 to vector<17x1xf32>
    %560 = arith.divf %558, %559 : vector<17x1xf32>
    %561 = vector.broadcast %560 : vector<17x1xf32> to vector<17x32xf32>
    %562 = arith.subf %552, %561 : vector<17x32xf32>
    %563 = arith.mulf %562, %562 : vector<17x32xf32>
    %cst_303 = arith.constant dense<0.000000e+00> : vector<17xf32>
    %564 = vector.multi_reduction <add>, %563, %cst_303 [1] : vector<17x32xf32> to vector<17xf32>
    %565 = vector.shape_cast %564 : vector<17xf32> to vector<17x1xf32>
    %cst_304 = arith.constant 3.200000e+01 : f32
    %566 = vector.broadcast %cst_304 : f32 to vector<17x1xf32>
    %567 = arith.divf %565, %566 : vector<17x1xf32>
    %568 = vector.broadcast %560 : vector<17x1xf32> to vector<17x32xf32>
    %569 = arith.subf %552, %568 : vector<17x32xf32>
    %cst_305 = arith.constant 9.99999974E-6 : f32
    %570 = vector.broadcast %cst_305 : f32 to vector<17x1xf32>
    %571 = arith.addf %567, %570 : vector<17x1xf32>
    %572 = math.rsqrt %571 : vector<17x1xf32>
    %573 = vector.broadcast %572 : vector<17x1xf32> to vector<17x32xf32>
    %574 = arith.mulf %569, %573 : vector<17x32xf32>
    %575 = vector.broadcast %554 : vector<1x32xf32> to vector<17x32xf32>
    %576 = arith.mulf %574, %575 : vector<17x32xf32>
    %577 = vector.broadcast %556 : vector<1x32xf32> to vector<17x32xf32>
    %578 = arith.addf %576, %577 : vector<17x32xf32>
    %c0_306 = arith.constant 0 : index
    %c1_307 = arith.constant 1 : index
    %c0_308 = arith.constant 0 : index
    %c0_309 = arith.constant 0 : index
    %579 = vector.load %arg9[%c0_306, %c1_307, %c0_308, %c0_309] : memref<1x2x32x96xf32, #tpu.memory_space<vmem>>, vector<1x1x32x96xf32>
    %580 = vector.shape_cast %579 : vector<1x1x32x96xf32> to vector<32x96xf32>
    %cst_310 = arith.constant dense<0.000000e+00> : vector<17x96xf32>
    %581 = tpu.matmul %578, %580, %cst_310 {dimension_numbers = #tpu.dot_dimension_numbers<[1], [0], [0], [1], [0, 0, 1, 1], [], []>} : vector<17x32xf32>, vector<32x96xf32>, vector<17x96xf32> -> vector<17x96xf32>
    %c0_311 = arith.constant 0 : index
    %c1_312 = arith.constant 1 : index
    %c0_313 = arith.constant 0 : index
    %c0_314 = arith.constant 0 : index
    %582 = vector.load %arg10[%c0_311, %c1_312, %c0_313, %c0_314] : memref<1x2x1x96xf32, #tpu.memory_space<vmem>>, vector<1x1x1x96xf32>
    %583 = vector.shape_cast %582 : vector<1x1x1x96xf32> to vector<1x96xf32>
    %584 = vector.broadcast %583 : vector<1x96xf32> to vector<17x96xf32>
    %585 = arith.addf %581, %584 : vector<17x96xf32>
    %c0_315 = arith.constant 0 : index
    %c1_316 = arith.constant 1 : index
    %c0_317 = arith.constant 0 : index
    %c0_318 = arith.constant 0 : index
    %586 = vector.load %arg11[%c0_315, %c1_316, %c0_317, %c0_318] : memref<1x2x32x32xf32, #tpu.memory_space<vmem>>, vector<1x1x32x32xf32>
    %587 = vector.shape_cast %586 : vector<1x1x32x32xf32> to vector<32x32xf32>
    %588 = vector.extract_strided_slice %585 {offsets = [0, 0], sizes = [17, 8], strides = [1, 1]} : vector<17x96xf32> to vector<17x8xf32>
    %589 = vector.extract_strided_slice %585 {offsets = [0, 32], sizes = [17, 8], strides = [1, 1]} : vector<17x96xf32> to vector<17x8xf32>
    %590 = vector.extract_strided_slice %585 {offsets = [0, 64], sizes = [17, 8], strides = [1, 1]} : vector<17x96xf32> to vector<17x8xf32>
    %cst_319 = arith.constant dense<0.000000e+00> : vector<17x17xf32>
    %591 = tpu.matmul %588, %589, %cst_319 {dimension_numbers = #tpu.dot_dimension_numbers<[1], [1], [0], [0], [0, 0, 1, 0], [], []>} : vector<17x8xf32>, vector<17x8xf32>, vector<17x17xf32> -> vector<17x17xf32>
    %cst_320 = arith.constant dense<0xFF800000> : vector<17xf32>
    %592 = vector.multi_reduction <maximumf>, %591, %cst_320 [1] : vector<17x17xf32> to vector<17xf32>
    %593 = vector.shape_cast %592 : vector<17xf32> to vector<17x1xf32>
    %594 = vector.broadcast %593 : vector<17x1xf32> to vector<17x17xf32>
    %595 = arith.subf %591, %594 : vector<17x17xf32>
    %596 = math.exp %595 : vector<17x17xf32>
    %cst_321 = arith.constant dense<0.000000e+00> : vector<17xf32>
    %597 = vector.multi_reduction <add>, %596, %cst_321 [1] : vector<17x17xf32> to vector<17xf32>
    %598 = vector.shape_cast %597 : vector<17xf32> to vector<17x1xf32>
    %599 = tpu.reciprocal %598 {approx = true} : vector<17x1xf32> -> vector<17x1xf32>
    %600 = vector.broadcast %599 : vector<17x1xf32> to vector<17x17xf32>
    %601 = arith.mulf %596, %600 : vector<17x17xf32>
    %cst_322 = arith.constant dense<0.000000e+00> : vector<17x8xf32>
    %602 = tpu.matmul %601, %590, %cst_322 {dimension_numbers = #tpu.dot_dimension_numbers<[1], [0], [0], [1], [0, 0, 1, 1], [], []>} : vector<17x17xf32>, vector<17x8xf32>, vector<17x8xf32> -> vector<17x8xf32>
    %603 = vector.extract_strided_slice %587 {offsets = [0, 0], sizes = [8, 32], strides = [1, 1]} : vector<32x32xf32> to vector<8x32xf32>
    %cst_323 = arith.constant dense<0.000000e+00> : vector<17x32xf32>
    %604 = tpu.matmul %602, %603, %cst_323 {dimension_numbers = #tpu.dot_dimension_numbers<[1], [0], [0], [1], [0, 0, 1, 1], [], []>} : vector<17x8xf32>, vector<8x32xf32>, vector<17x32xf32> -> vector<17x32xf32>
    %605 = vector.extract_strided_slice %585 {offsets = [0, 8], sizes = [17, 8], strides = [1, 1]} : vector<17x96xf32> to vector<17x8xf32>
    %606 = vector.extract_strided_slice %585 {offsets = [0, 40], sizes = [17, 8], strides = [1, 1]} : vector<17x96xf32> to vector<17x8xf32>
    %607 = vector.extract_strided_slice %585 {offsets = [0, 72], sizes = [17, 8], strides = [1, 1]} : vector<17x96xf32> to vector<17x8xf32>
    %cst_324 = arith.constant dense<0.000000e+00> : vector<17x17xf32>
    %608 = tpu.matmul %605, %606, %cst_324 {dimension_numbers = #tpu.dot_dimension_numbers<[1], [1], [0], [0], [0, 0, 1, 0], [], []>} : vector<17x8xf32>, vector<17x8xf32>, vector<17x17xf32> -> vector<17x17xf32>
    %cst_325 = arith.constant dense<0xFF800000> : vector<17xf32>
    %609 = vector.multi_reduction <maximumf>, %608, %cst_325 [1] : vector<17x17xf32> to vector<17xf32>
    %610 = vector.shape_cast %609 : vector<17xf32> to vector<17x1xf32>
    %611 = vector.broadcast %610 : vector<17x1xf32> to vector<17x17xf32>
    %612 = arith.subf %608, %611 : vector<17x17xf32>
    %613 = math.exp %612 : vector<17x17xf32>
    %cst_326 = arith.constant dense<0.000000e+00> : vector<17xf32>
    %614 = vector.multi_reduction <add>, %613, %cst_326 [1] : vector<17x17xf32> to vector<17xf32>
    %615 = vector.shape_cast %614 : vector<17xf32> to vector<17x1xf32>
    %616 = tpu.reciprocal %615 {approx = true} : vector<17x1xf32> -> vector<17x1xf32>
    %617 = vector.broadcast %616 : vector<17x1xf32> to vector<17x17xf32>
    %618 = arith.mulf %613, %617 : vector<17x17xf32>
    %cst_327 = arith.constant dense<0.000000e+00> : vector<17x8xf32>
    %619 = tpu.matmul %618, %607, %cst_327 {dimension_numbers = #tpu.dot_dimension_numbers<[1], [0], [0], [1], [0, 0, 1, 1], [], []>} : vector<17x17xf32>, vector<17x8xf32>, vector<17x8xf32> -> vector<17x8xf32>
    %620 = vector.extract_strided_slice %587 {offsets = [8, 0], sizes = [8, 32], strides = [1, 1]} : vector<32x32xf32> to vector<8x32xf32>
    %cst_328 = arith.constant dense<0.000000e+00> : vector<17x32xf32>
    %621 = tpu.matmul %619, %620, %cst_328 {dimension_numbers = #tpu.dot_dimension_numbers<[1], [0], [0], [1], [0, 0, 1, 1], [], []>} : vector<17x8xf32>, vector<8x32xf32>, vector<17x32xf32> -> vector<17x32xf32>
    %622 = arith.addf %604, %621 : vector<17x32xf32>
    %623 = vector.extract_strided_slice %585 {offsets = [0, 16], sizes = [17, 8], strides = [1, 1]} : vector<17x96xf32> to vector<17x8xf32>
    %624 = vector.extract_strided_slice %585 {offsets = [0, 48], sizes = [17, 8], strides = [1, 1]} : vector<17x96xf32> to vector<17x8xf32>
    %625 = vector.extract_strided_slice %585 {offsets = [0, 80], sizes = [17, 8], strides = [1, 1]} : vector<17x96xf32> to vector<17x8xf32>
    %cst_329 = arith.constant dense<0.000000e+00> : vector<17x17xf32>
    %626 = tpu.matmul %623, %624, %cst_329 {dimension_numbers = #tpu.dot_dimension_numbers<[1], [1], [0], [0], [0, 0, 1, 0], [], []>} : vector<17x8xf32>, vector<17x8xf32>, vector<17x17xf32> -> vector<17x17xf32>
    %cst_330 = arith.constant dense<0xFF800000> : vector<17xf32>
    %627 = vector.multi_reduction <maximumf>, %626, %cst_330 [1] : vector<17x17xf32> to vector<17xf32>
    %628 = vector.shape_cast %627 : vector<17xf32> to vector<17x1xf32>
    %629 = vector.broadcast %628 : vector<17x1xf32> to vector<17x17xf32>
    %630 = arith.subf %626, %629 : vector<17x17xf32>
    %631 = math.exp %630 : vector<17x17xf32>
    %cst_331 = arith.constant dense<0.000000e+00> : vector<17xf32>
    %632 = vector.multi_reduction <add>, %631, %cst_331 [1] : vector<17x17xf32> to vector<17xf32>
    %633 = vector.shape_cast %632 : vector<17xf32> to vector<17x1xf32>
    %634 = tpu.reciprocal %633 {approx = true} : vector<17x1xf32> -> vector<17x1xf32>
    %635 = vector.broadcast %634 : vector<17x1xf32> to vector<17x17xf32>
    %636 = arith.mulf %631, %635 : vector<17x17xf32>
    %cst_332 = arith.constant dense<0.000000e+00> : vector<17x8xf32>
    %637 = tpu.matmul %636, %625, %cst_332 {dimension_numbers = #tpu.dot_dimension_numbers<[1], [0], [0], [1], [0, 0, 1, 1], [], []>} : vector<17x17xf32>, vector<17x8xf32>, vector<17x8xf32> -> vector<17x8xf32>
    %638 = vector.extract_strided_slice %587 {offsets = [16, 0], sizes = [8, 32], strides = [1, 1]} : vector<32x32xf32> to vector<8x32xf32>
    %cst_333 = arith.constant dense<0.000000e+00> : vector<17x32xf32>
    %639 = tpu.matmul %637, %638, %cst_333 {dimension_numbers = #tpu.dot_dimension_numbers<[1], [0], [0], [1], [0, 0, 1, 1], [], []>} : vector<17x8xf32>, vector<8x32xf32>, vector<17x32xf32> -> vector<17x32xf32>
    %640 = arith.addf %622, %639 : vector<17x32xf32>
    %641 = vector.extract_strided_slice %585 {offsets = [0, 24], sizes = [17, 8], strides = [1, 1]} : vector<17x96xf32> to vector<17x8xf32>
    %642 = vector.extract_strided_slice %585 {offsets = [0, 56], sizes = [17, 8], strides = [1, 1]} : vector<17x96xf32> to vector<17x8xf32>
    %643 = vector.extract_strided_slice %585 {offsets = [0, 88], sizes = [17, 8], strides = [1, 1]} : vector<17x96xf32> to vector<17x8xf32>
    %cst_334 = arith.constant dense<0.000000e+00> : vector<17x17xf32>
    %644 = tpu.matmul %641, %642, %cst_334 {dimension_numbers = #tpu.dot_dimension_numbers<[1], [1], [0], [0], [0, 0, 1, 0], [], []>} : vector<17x8xf32>, vector<17x8xf32>, vector<17x17xf32> -> vector<17x17xf32>
    %cst_335 = arith.constant dense<0xFF800000> : vector<17xf32>
    %645 = vector.multi_reduction <maximumf>, %644, %cst_335 [1] : vector<17x17xf32> to vector<17xf32>
    %646 = vector.shape_cast %645 : vector<17xf32> to vector<17x1xf32>
    %647 = vector.broadcast %646 : vector<17x1xf32> to vector<17x17xf32>
    %648 = arith.subf %644, %647 : vector<17x17xf32>
    %649 = math.exp %648 : vector<17x17xf32>
    %cst_336 = arith.constant dense<0.000000e+00> : vector<17xf32>
    %650 = vector.multi_reduction <add>, %649, %cst_336 [1] : vector<17x17xf32> to vector<17xf32>
    %651 = vector.shape_cast %650 : vector<17xf32> to vector<17x1xf32>
    %652 = tpu.reciprocal %651 {approx = true} : vector<17x1xf32> -> vector<17x1xf32>
    %653 = vector.broadcast %652 : vector<17x1xf32> to vector<17x17xf32>
    %654 = arith.mulf %649, %653 : vector<17x17xf32>
    %cst_337 = arith.constant dense<0.000000e+00> : vector<17x8xf32>
    %655 = tpu.matmul %654, %643, %cst_337 {dimension_numbers = #tpu.dot_dimension_numbers<[1], [0], [0], [1], [0, 0, 1, 1], [], []>} : vector<17x17xf32>, vector<17x8xf32>, vector<17x8xf32> -> vector<17x8xf32>
    %656 = vector.extract_strided_slice %587 {offsets = [24, 0], sizes = [8, 32], strides = [1, 1]} : vector<32x32xf32> to vector<8x32xf32>
    %cst_338 = arith.constant dense<0.000000e+00> : vector<17x32xf32>
    %657 = tpu.matmul %655, %656, %cst_338 {dimension_numbers = #tpu.dot_dimension_numbers<[1], [0], [0], [1], [0, 0, 1, 1], [], []>} : vector<17x8xf32>, vector<8x32xf32>, vector<17x32xf32> -> vector<17x32xf32>
    %658 = arith.addf %640, %657 : vector<17x32xf32>
    %659 = arith.addf %552, %658 : vector<17x32xf32>
    %c0_339 = arith.constant 0 : index
    %c1_340 = arith.constant 1 : index
    %c0_341 = arith.constant 0 : index
    %c0_342 = arith.constant 0 : index
    %660 = vector.load %arg12[%c0_339, %c1_340, %c0_341, %c0_342] : memref<1x2x1x32xf32, #tpu.memory_space<vmem>>, vector<1x1x1x32xf32>
    %661 = vector.shape_cast %660 : vector<1x1x1x32xf32> to vector<1x32xf32>
    %662 = vector.broadcast %661 : vector<1x32xf32> to vector<17x32xf32>
    %663 = arith.addf %659, %662 : vector<17x32xf32>
    %c0_343 = arith.constant 0 : index
    %c1_344 = arith.constant 1 : index
    %c0_345 = arith.constant 0 : index
    %c0_346 = arith.constant 0 : index
    %664 = vector.load %arg13[%c0_343, %c1_344, %c0_345, %c0_346] : memref<1x2x1x32xf32, #tpu.memory_space<vmem>>, vector<1x1x1x32xf32>
    %665 = vector.shape_cast %664 : vector<1x1x1x32xf32> to vector<1x32xf32>
    %c0_347 = arith.constant 0 : index
    %c1_348 = arith.constant 1 : index
    %c0_349 = arith.constant 0 : index
    %c0_350 = arith.constant 0 : index
    %666 = vector.load %arg14[%c0_347, %c1_348, %c0_349, %c0_350] : memref<1x2x1x32xf32, #tpu.memory_space<vmem>>, vector<1x1x1x32xf32>
    %667 = vector.shape_cast %666 : vector<1x1x1x32xf32> to vector<1x32xf32>
    %cst_351 = arith.constant dense<0.000000e+00> : vector<17xf32>
    %668 = vector.multi_reduction <add>, %663, %cst_351 [1] : vector<17x32xf32> to vector<17xf32>
    %669 = vector.shape_cast %668 : vector<17xf32> to vector<17x1xf32>
    %cst_352 = arith.constant 3.200000e+01 : f32
    %670 = vector.broadcast %cst_352 : f32 to vector<17x1xf32>
    %671 = arith.divf %669, %670 : vector<17x1xf32>
    %672 = vector.broadcast %671 : vector<17x1xf32> to vector<17x32xf32>
    %673 = arith.subf %663, %672 : vector<17x32xf32>
    %674 = arith.mulf %673, %673 : vector<17x32xf32>
    %cst_353 = arith.constant dense<0.000000e+00> : vector<17xf32>
    %675 = vector.multi_reduction <add>, %674, %cst_353 [1] : vector<17x32xf32> to vector<17xf32>
    %676 = vector.shape_cast %675 : vector<17xf32> to vector<17x1xf32>
    %cst_354 = arith.constant 3.200000e+01 : f32
    %677 = vector.broadcast %cst_354 : f32 to vector<17x1xf32>
    %678 = arith.divf %676, %677 : vector<17x1xf32>
    %679 = vector.broadcast %671 : vector<17x1xf32> to vector<17x32xf32>
    %680 = arith.subf %663, %679 : vector<17x32xf32>
    %cst_355 = arith.constant 9.99999974E-6 : f32
    %681 = vector.broadcast %cst_355 : f32 to vector<17x1xf32>
    %682 = arith.addf %678, %681 : vector<17x1xf32>
    %683 = math.rsqrt %682 : vector<17x1xf32>
    %684 = vector.broadcast %683 : vector<17x1xf32> to vector<17x32xf32>
    %685 = arith.mulf %680, %684 : vector<17x32xf32>
    %686 = vector.broadcast %665 : vector<1x32xf32> to vector<17x32xf32>
    %687 = arith.mulf %685, %686 : vector<17x32xf32>
    %688 = vector.broadcast %667 : vector<1x32xf32> to vector<17x32xf32>
    %689 = arith.addf %687, %688 : vector<17x32xf32>
    %c0_356 = arith.constant 0 : index
    %c1_357 = arith.constant 1 : index
    %c0_358 = arith.constant 0 : index
    %c0_359 = arith.constant 0 : index
    %690 = vector.load %arg15[%c0_356, %c1_357, %c0_358, %c0_359] : memref<1x2x32x64xf32, #tpu.memory_space<vmem>>, vector<1x1x32x64xf32>
    %691 = vector.shape_cast %690 : vector<1x1x32x64xf32> to vector<32x64xf32>
    %cst_360 = arith.constant dense<0.000000e+00> : vector<17x64xf32>
    %692 = tpu.matmul %689, %691, %cst_360 {dimension_numbers = #tpu.dot_dimension_numbers<[1], [0], [0], [1], [0, 0, 1, 1], [], []>} : vector<17x32xf32>, vector<32x64xf32>, vector<17x64xf32> -> vector<17x64xf32>
    %c0_361 = arith.constant 0 : index
    %c1_362 = arith.constant 1 : index
    %c0_363 = arith.constant 0 : index
    %c0_364 = arith.constant 0 : index
    %693 = vector.load %arg16[%c0_361, %c1_362, %c0_363, %c0_364] : memref<1x2x1x64xf32, #tpu.memory_space<vmem>>, vector<1x1x1x64xf32>
    %694 = vector.shape_cast %693 : vector<1x1x1x64xf32> to vector<1x64xf32>
    %695 = vector.broadcast %694 : vector<1x64xf32> to vector<17x64xf32>
    %696 = arith.addf %692, %695 : vector<17x64xf32>
    %cst_365 = arith.constant 1.702000e+00 : f32
    %697 = vector.broadcast %cst_365 : f32 to vector<17x64xf32>
    %698 = arith.mulf %697, %696 : vector<17x64xf32>
    %699 = arith.negf %698 : vector<17x64xf32>
    %700 = math.exp %699 : vector<17x64xf32>
    %cst_366 = arith.constant 1.000000e+00 : f32
    %701 = vector.broadcast %cst_366 : f32 to vector<17x64xf32>
    %702 = arith.addf %701, %700 : vector<17x64xf32>
    %703 = arith.divf %701, %702 : vector<17x64xf32>
    %704 = arith.mulf %696, %703 : vector<17x64xf32>
    %c0_367 = arith.constant 0 : index
    %c1_368 = arith.constant 1 : index
    %c0_369 = arith.constant 0 : index
    %c0_370 = arith.constant 0 : index
    %705 = vector.load %arg17[%c0_367, %c1_368, %c0_369, %c0_370] : memref<1x2x64x32xf32, #tpu.memory_space<vmem>>, vector<1x1x64x32xf32>
    %706 = vector.shape_cast %705 : vector<1x1x64x32xf32> to vector<64x32xf32>
    %cst_371 = arith.constant dense<0.000000e+00> : vector<17x32xf32>
    %707 = tpu.matmul %704, %706, %cst_371 {dimension_numbers = #tpu.dot_dimension_numbers<[1], [0], [0], [1], [0, 0, 1, 1], [], []>} : vector<17x64xf32>, vector<64x32xf32>, vector<17x32xf32> -> vector<17x32xf32>
    %c0_372 = arith.constant 0 : index
    %c1_373 = arith.constant 1 : index
    %c0_374 = arith.constant 0 : index
    %c0_375 = arith.constant 0 : index
    %708 = vector.load %arg18[%c0_372, %c1_373, %c0_374, %c0_375] : memref<1x2x1x32xf32, #tpu.memory_space<vmem>>, vector<1x1x1x32xf32>
    %709 = vector.shape_cast %708 : vector<1x1x1x32xf32> to vector<1x32xf32>
    %710 = vector.broadcast %709 : vector<1x32xf32> to vector<17x32xf32>
    %711 = arith.addf %707, %710 : vector<17x32xf32>
    %712 = arith.addf %663, %711 : vector<17x32xf32>
    %713 = vector.extract_strided_slice %712 {offsets = [0, 0], sizes = [16, 32], strides = [1, 1]} : vector<17x32xf32> to vector<16x32xf32>
    %c0_376 = arith.constant 0 : index
    %c1_377 = arith.constant 1 : index
    %c0_378 = arith.constant 0 : index
    %c0_379 = arith.constant 0 : index
    %714 = vector.load %arg19[%c0_376, %c1_377, %c0_378, %c0_379] : memref<1x2x16x32xf32, #tpu.memory_space<vmem>>, vector<1x1x16x32xf32>
    %715 = vector.shape_cast %714 : vector<1x1x16x32xf32> to vector<16x32xf32>
    %716 = vector.shape_cast %713 : vector<16x32xf32> to vector<1x1x16x32xf32>
    tpu.vector_store %arg19[%c0_376, %c1_377, %c0_378, %c0_379], %716 {strides = array<i32>} : memref<1x2x16x32xf32, #tpu.memory_space<vmem>>, vector<1x1x16x32xf32>,
    return
  }
  func.func @transform_0(%arg0: i32) -> (i32, i32, i32) {
    %c0_i32 = arith.constant 0 : i32
    %c0_i32_0 = arith.constant 0 : i32
    %c0_i32_1 = arith.constant 0 : i32
    return %arg0, %c0_i32, %c0_i32_0 : i32, i32, i32
  }
  func.func @transform_1(%arg0: i32) -> (i32, i32, i32) {
    %c0_i32 = arith.constant 0 : i32
    %c0_i32_0 = arith.constant 0 : i32
    %c0_i32_1 = arith.constant 0 : i32
    return %arg0, %c0_i32, %c0_i32_0 : i32, i32, i32
  }
  func.func @transform_2(%arg0: i32) -> (i32, i32, i32) {
    %c0_i32 = arith.constant 0 : i32
    %c0_i32_0 = arith.constant 0 : i32
    %c0_i32_1 = arith.constant 0 : i32
    return %arg0, %c0_i32, %c0_i32_0 : i32, i32, i32
  }
  func.func @transform_3(%arg0: i32) -> (i32, i32, i32) {
    %c0_i32 = arith.constant 0 : i32
    %c0_i32_0 = arith.constant 0 : i32
    %c0_i32_1 = arith.constant 0 : i32
    return %arg0, %c0_i32, %c0_i32_0 : i32, i32, i32
  }
  func.func @transform_4(%arg0: i32) -> (i32, i32, i32) {
    %c0_i32 = arith.constant 0 : i32
    %c0_i32_0 = arith.constant 0 : i32
    %c0_i32_1 = arith.constant 0 : i32
    return %arg0, %c0_i32, %c0_i32_0 : i32, i32, i32
  }
  func.func @transform_5(%arg0: i32) -> (i32, i32, i32) {
    %c0_i32 = arith.constant 0 : i32
    %c0_i32_0 = arith.constant 0 : i32
    %c0_i32_1 = arith.constant 0 : i32
    return %arg0, %c0_i32, %c0_i32_0 : i32, i32, i32
  }
  func.func @transform_6(%arg0: i32) -> (i32, i32, i32, i32) {
    %c0_i32 = arith.constant 0 : i32
    %c0_i32_0 = arith.constant 0 : i32
    %c0_i32_1 = arith.constant 0 : i32
    %c0_i32_2 = arith.constant 0 : i32
    return %arg0, %c0_i32, %c0_i32_0, %c0_i32_1 : i32, i32, i32, i32
  }
  func.func @transform_7(%arg0: i32) -> (i32, i32, i32, i32) {
    %c0_i32 = arith.constant 0 : i32
    %c0_i32_0 = arith.constant 0 : i32
    %c0_i32_1 = arith.constant 0 : i32
    %c0_i32_2 = arith.constant 0 : i32
    return %arg0, %c0_i32, %c0_i32_0, %c0_i32_1 : i32, i32, i32, i32
  }
  func.func @transform_8(%arg0: i32) -> (i32, i32, i32, i32) {
    %c0_i32 = arith.constant 0 : i32
    %c0_i32_0 = arith.constant 0 : i32
    %c0_i32_1 = arith.constant 0 : i32
    %c0_i32_2 = arith.constant 0 : i32
    return %arg0, %c0_i32, %c0_i32_0, %c0_i32_1 : i32, i32, i32, i32
  }
  func.func @transform_9(%arg0: i32) -> (i32, i32, i32, i32) {
    %c0_i32 = arith.constant 0 : i32
    %c0_i32_0 = arith.constant 0 : i32
    %c0_i32_1 = arith.constant 0 : i32
    %c0_i32_2 = arith.constant 0 : i32
    return %arg0, %c0_i32, %c0_i32_0, %c0_i32_1 : i32, i32, i32, i32
  }
  func.func @transform_10(%arg0: i32) -> (i32, i32, i32, i32) {
    %c0_i32 = arith.constant 0 : i32
    %c0_i32_0 = arith.constant 0 : i32
    %c0_i32_1 = arith.constant 0 : i32
    %c0_i32_2 = arith.constant 0 : i32
    return %arg0, %c0_i32, %c0_i32_0, %c0_i32_1 : i32, i32, i32, i32
  }
  func.func @transform_11(%arg0: i32) -> (i32, i32, i32, i32) {
    %c0_i32 = arith.constant 0 : i32
    %c0_i32_0 = arith.constant 0 : i32
    %c0_i32_1 = arith.constant 0 : i32
    %c0_i32_2 = arith.constant 0 : i32
    return %arg0, %c0_i32, %c0_i32_0, %c0_i32_1 : i32, i32, i32, i32
  }
  func.func @transform_12(%arg0: i32) -> (i32, i32, i32, i32) {
    %c0_i32 = arith.constant 0 : i32
    %c0_i32_0 = arith.constant 0 : i32
    %c0_i32_1 = arith.constant 0 : i32
    %c0_i32_2 = arith.constant 0 : i32
    return %arg0, %c0_i32, %c0_i32_0, %c0_i32_1 : i32, i32, i32, i32
  }
  func.func @transform_13(%arg0: i32) -> (i32, i32, i32, i32) {
    %c0_i32 = arith.constant 0 : i32
    %c0_i32_0 = arith.constant 0 : i32
    %c0_i32_1 = arith.constant 0 : i32
    %c0_i32_2 = arith.constant 0 : i32
    return %arg0, %c0_i32, %c0_i32_0, %c0_i32_1 : i32, i32, i32, i32
  }
  func.func @transform_14(%arg0: i32) -> (i32, i32, i32, i32) {
    %c0_i32 = arith.constant 0 : i32
    %c0_i32_0 = arith.constant 0 : i32
    %c0_i32_1 = arith.constant 0 : i32
    %c0_i32_2 = arith.constant 0 : i32
    return %arg0, %c0_i32, %c0_i32_0, %c0_i32_1 : i32, i32, i32, i32
  }
  func.func @transform_15(%arg0: i32) -> (i32, i32, i32, i32) {
    %c0_i32 = arith.constant 0 : i32
    %c0_i32_0 = arith.constant 0 : i32
    %c0_i32_1 = arith.constant 0 : i32
    %c0_i32_2 = arith.constant 0 : i32
    return %arg0, %c0_i32, %c0_i32_0, %c0_i32_1 : i32, i32, i32, i32
  }
  func.func @transform_16(%arg0: i32) -> (i32, i32, i32, i32) {
    %c0_i32 = arith.constant 0 : i32
    %c0_i32_0 = arith.constant 0 : i32
    %c0_i32_1 = arith.constant 0 : i32
    %c0_i32_2 = arith.constant 0 : i32
    return %arg0, %c0_i32, %c0_i32_0, %c0_i32_1 : i32, i32, i32, i32
  }
  func.func @transform_17(%arg0: i32) -> (i32, i32, i32, i32) {
    %c0_i32 = arith.constant 0 : i32
    %c0_i32_0 = arith.constant 0 : i32
    %c0_i32_1 = arith.constant 0 : i32
    %c0_i32_2 = arith.constant 0 : i32
    return %arg0, %c0_i32, %c0_i32_0, %c0_i32_1 : i32, i32, i32, i32
  }
  func.func @transform_18(%arg0: i32) -> (i32, i32, i32, i32) {
    %c0_i32 = arith.constant 0 : i32
    %c0_i32_0 = arith.constant 0 : i32
    %c0_i32_1 = arith.constant 0 : i32
    %c0_i32_2 = arith.constant 0 : i32
    return %arg0, %c0_i32, %c0_i32_0, %c0_i32_1 : i32, i32, i32, i32
  }
}

</mosaic_0001>

<llo_original>
// kernel: clip_vision_tower2_forward.1
$region0: #{clip_vision_tower2_forward.1}
  #allocation0 [shape = 'u32[]', space=smem, size = 0x4, offset = 0x4, fixed_abs, tag = 'smem constant byte address 0x4 - core index']
  #allocation1 [shape = 'u32[144,128]{1,0:T(1,128)}', space=vmem, size = 0x12000, scoped, tag = 'internal scratch']
  #allocation2 [shape = 'f32[17,32]{1,0:T(8,128)}', space=vmem, size = 0x3000, scoped, tag = 'scratch operand']
  %s0 = inlined_call_operand.vmem [shape: f32[2,32,48], index: 0, kind: input, shape index: {}]
  %s1 = inlined_call_operand.vmem [shape: f32[2,48,32], index: 1, kind: input, shape index: {}]
  %s2 = inlined_call_operand.vmem [shape: f32[2,1,32], index: 2, kind: input, shape index: {}]
  %s3 = inlined_call_operand.vmem [shape: f32[2,17,32], index: 3, kind: input, shape index: {}]
  %s4 = inlined_call_operand.vmem [shape: f32[2,1,32], index: 4, kind: input, shape index: {}]
  %s5 = inlined_call_operand.vmem [shape: f32[2,1,32], index: 5, kind: input, shape index: {}]
  %s6 = inlined_call_operand.vmem [shape: f32[2,2,1,32], index: 6, kind: input, shape index: {}]
  %s7 = inlined_call_operand.vmem [shape: f32[2,2,1,32], index: 7, kind: input, shape index: {}]
  %s8 = inlined_call_operand.vmem [shape: f32[2,2,32,96], index: 8, kind: input, shape index: {}]
  %s9 = inlined_call_operand.vmem [shape: f32[2,2,1,96], index: 9, kind: input, shape index: {}]
  %s10 = inlined_call_operand.vmem [shape: f32[2,2,32,32], index: 10, kind: input, shape index: {}]
  %s11 = inlined_call_operand.vmem [shape: f32[2,2,1,32], index: 11, kind: input, shape index: {}]
  %s12 = inlined_call_operand.vmem [shape: f32[2,2,1,32], index: 12, kind: input, shape index: {}]
  %s13 = inlined_call_operand.vmem [shape: f32[2,2,1,32], index: 13, kind: input, shape index: {}]
  %s14 = inlined_call_operand.vmem [shape: f32[2,2,32,64], index: 14, kind: input, shape index: {}]
  %s15 = inlined_call_operand.vmem [shape: f32[2,2,1,64], index: 15, kind: input, shape index: {}]
  %s16 = inlined_call_operand.vmem [shape: f32[2,2,64,32], index: 16, kind: input, shape index: {}]
  %s17 = inlined_call_operand.vmem [shape: f32[2,2,1,32], index: 17, kind: input, shape index: {}]
  %s18 = inlined_call_operand.vmem [shape: f32[2,2,16,32], index: 18, kind: output, shape index: {}]
  %s19 = sld [smem:[#allocation0]]
  $region105: #{clip_vision_tower2_forward.1} parent=0
    _
  %s21 = ssub.s32 1, %s19
  %s22 = scalar_select 0, %s21, %s19
  loop: start=0, step=1, limit=4
  $region2: #{clip_vision_tower2_forward.1} parent=0 // loop_pre_header
    _
  $region3: #{clip_vision_tower2_forward.1} parent=0 // loop_header
    %s24 = sphi 0, %s28
    %p25 = scmp.ge.s32.totalorder %s24, 4
    %s34 = sphi 0, %s36
    %s37 = sphi 0, %s34
    %s38 = sphi 0, %s37
    %s54 = sphi 0, %s38
    %s60 = sphi 0, %s62
    %s63 = sphi 0, %s60
    %s64 = sphi 0, %s63
    %s80 = sphi 0, %s64
    %s86 = sphi 0, %s88
    %s89 = sphi 0, %s86
    %s90 = sphi 0, %s89
    %s106 = sphi 0, %s90
    %s112 = sphi 0, %s114
    %s115 = sphi 0, %s112
    %s116 = sphi 0, %s115
    %s132 = sphi 0, %s116
    %s138 = sphi 0, %s140
    %s141 = sphi 0, %s138
    %s142 = sphi 0, %s141
    %s158 = sphi 0, %s142
    %s164 = sphi 0, %s166
    %s167 = sphi 0, %s164
    %s168 = sphi 0, %s167
    %s184 = sphi 0, %s168
    %s190 = sphi 0, %s192
    %s193 = sphi 0, %s190
    %s194 = sphi 0, %s193
    %s210 = sphi 0, %s194
    %s216 = sphi 0, %s218
    %s219 = sphi 0, %s216
    %s220 = sphi 0, %s219
    %s236 = sphi 0, %s220
    %s242 = sphi 0, %s244
    %s245 = sphi 0, %s242
    %s246 = sphi 0, %s245
    %s262 = sphi 0, %s246
    %s268 = sphi 0, %s270
    %s271 = sphi 0, %s268
    %s272 = sphi 0, %s271
    %s288 = sphi 0, %s272
    %s294 = sphi 0, %s296
    %s297 = sphi 0, %s294
    %s298 = sphi 0, %s297
    %s314 = sphi 0, %s298
    %s320 = sphi 0, %s322
    %s323 = sphi 0, %s320
    %s324 = sphi 0, %s323
    %s340 = sphi 0, %s324
    %s346 = sphi 0, %s348
    %s349 = sphi 0, %s346
    %s350 = sphi 0, %s349
    %s366 = sphi 0, %s350
    %s372 = sphi 0, %s374
    %s375 = sphi 0, %s372
    %s376 = sphi 0, %s375
    %s392 = sphi 0, %s376
    %s398 = sphi 0, %s400
    %s401 = sphi 0, %s398
    %s402 = sphi 0, %s401
    %s418 = sphi 0, %s402
    %s424 = sphi 0, %s426
    %s427 = sphi 0, %s424
    %s428 = sphi 0, %s427
    %s444 = sphi 0, %s428
    %s450 = sphi 0, %s452
    %s453 = sphi 0, %s450
    %s454 = sphi 0, %s453
    %s470 = sphi 0, %s454
    %s476 = sphi 0, %s478
    %s479 = sphi 0, %s476
    %s480 = sphi 0, %s479
    %s496 = sphi 0, %s480
    %s502 = sphi 0, %s504
    %s505 = sphi 0, %s502
    %s506 = sphi 0, %s505
    %s522 = sphi 0, %s506
  $region4: #{clip_vision_tower2_forward.1} parent=0 // loop_header_branch
    %27 = sbr.rel (%p25) target = $region8
  $region5: #{clip_vision_tower2_forward.1} parent=0 // loop_body
    %s29 = ssub.s32 %s24, 1
    %s30 = ssub.s32 %s24, 2
    %s31 = sadd.s32 %s24, 1
    %s32 = ssub.s32 %s24, %s31
    %p33 = scmp.eq.s32.totalorder %s32, 0
    %s35 = sadd.s32 %s34, 1
    %s36 = scalar_select %p33, %s34, %s35
    %p39 = pneg %p33
    %p40 = scmp.eq.s32.totalorder %s24, 1
    %p41 = por %p39, %p40
    %p42 = scmp.ne.s32.totalorder %s34, %s37
    %p43 = scmp.eq.s32.totalorder %s24, 0
    %p44 = por %p42, %p43
    %p45 = scmp.ne.s32.totalorder %s34, %s37
    %p46 = scmp.eq.s32.totalorder %s29, 1
    %p47 = por %p45, %p46
    %p48 = scmp.ne.s32.totalorder %s37, %s38
    %p49 = scmp.eq.s32.totalorder %s29, 0
    %p50 = por %p48, %p49
    %p51 = scmp.ne.s32.totalorder %s37, %s38
    %p52 = scmp.eq.s32.totalorder %s30, 1
    %p53 = por %p51, %p52
    %p55 = scmp.ne.s32.totalorder %s38, %s54
    %p56 = scmp.eq.s32.totalorder %s30, 0
    %p57 = por %p55, %p56
    %s58 = ssub.s32 %s24, %s31
    %p59 = scmp.eq.s32.totalorder %s58, 0
    %s61 = sadd.s32 %s60, 1
    %s62 = scalar_select %p59, %s60, %s61
    %p65 = pneg %p59
    %p66 = scmp.eq.s32.totalorder %s24, 1
    %p67 = por %p65, %p66
    %p68 = scmp.ne.s32.totalorder %s60, %s63
    %p69 = scmp.eq.s32.totalorder %s24, 0
    %p70 = por %p68, %p69
    %p71 = scmp.ne.s32.totalorder %s60, %s63
    %p72 = scmp.eq.s32.totalorder %s29, 1
    %p73 = por %p71, %p72
    %p74 = scmp.ne.s32.totalorder %s63, %s64
    %p75 = scmp.eq.s32.totalorder %s29, 0
    %p76 = por %p74, %p75
    %p77 = scmp.ne.s32.totalorder %s63, %s64
    %p78 = scmp.eq.s32.totalorder %s30, 1
    %p79 = por %p77, %p78
    %p81 = scmp.ne.s32.totalorder %s64, %s80
    %p82 = scmp.eq.s32.totalorder %s30, 0
    %p83 = por %p81, %p82
    %s84 = ssub.s32 %s24, %s31
    %p85 = scmp.eq.s32.totalorder %s84, 0
    %s87 = sadd.s32 %s86, 1
    %s88 = scalar_select %p85, %s86, %s87
    %p91 = pneg %p85
    %p92 = scmp.eq.s32.totalorder %s24, 1
    %p93 = por %p91, %p92
    %p94 = scmp.ne.s32.totalorder %s86, %s89
    %p95 = scmp.eq.s32.totalorder %s24, 0
    %p96 = por %p94, %p95
    %p97 = scmp.ne.s32.totalorder %s86, %s89
    %p98 = scmp.eq.s32.totalorder %s29, 1
    %p99 = por %p97, %p98
    %p100 = scmp.ne.s32.totalorder %s89, %s90
    %p101 = scmp.eq.s32.totalorder %s29, 0
    %p102 = por %p100, %p101
    %p103 = scmp.ne.s32.totalorder %s89, %s90
    %p104 = scmp.eq.s32.totalorder %s30, 1
    %p105 = por %p103, %p104
    %p107 = scmp.ne.s32.totalorder %s90, %s106
    %p108 = scmp.eq.s32.totalorder %s30, 0
    %p109 = por %p107, %p108
    %s110 = ssub.s32 %s24, %s31
    %p111 = scmp.eq.s32.totalorder %s110, 0
    %s113 = sadd.s32 %s112, 1
    %s114 = scalar_select %p111, %s112, %s113
    %p117 = pneg %p111
    %p118 = scmp.eq.s32.totalorder %s24, 1
    %p119 = por %p117, %p118
    %p120 = scmp.ne.s32.totalorder %s112, %s115
    %p121 = scmp.eq.s32.totalorder %s24, 0
    %p122 = por %p120, %p121
    %p123 = scmp.ne.s32.totalorder %s112, %s115
    %p124 = scmp.eq.s32.totalorder %s29, 1
    %p125 = por %p123, %p124
    %p126 = scmp.ne.s32.totalorder %s115, %s116
    %p127 = scmp.eq.s32.totalorder %s29, 0
    %p128 = por %p126, %p127
    %p129 = scmp.ne.s32.totalorder %s115, %s116
    %p130 = scmp.eq.s32.totalorder %s30, 1
    %p131 = por %p129, %p130
    %p133 = scmp.ne.s32.totalorder %s116, %s132
    %p134 = scmp.eq.s32.totalorder %s30, 0
    %p135 = por %p133, %p134
    %s136 = ssub.s32 %s24, %s31
    %p137 = scmp.eq.s32.totalorder %s136, 0
    %s139 = sadd.s32 %s138, 1
    %s140 = scalar_select %p137, %s138, %s139
    %p143 = pneg %p137
    %p144 = scmp.eq.s32.totalorder %s24, 1
    %p145 = por %p143, %p144
    %p146 = scmp.ne.s32.totalorder %s138, %s141
    %p147 = scmp.eq.s32.totalorder %s24, 0
    %p148 = por %p146, %p147
    %p149 = scmp.ne.s32.totalorder %s138, %s141
    %p150 = scmp.eq.s32.totalorder %s29, 1
    %p151 = por %p149, %p150
    %p152 = scmp.ne.s32.totalorder %s141, %s142
    %p153 = scmp.eq.s32.totalorder %s29, 0
    %p154 = por %p152, %p153
    %p155 = scmp.ne.s32.totalorder %s141, %s142
    %p156 = scmp.eq.s32.totalorder %s30, 1
    %p157 = por %p155, %p156
    %p159 = scmp.ne.s32.totalorder %s142, %s158
    %p160 = scmp.eq.s32.totalorder %s30, 0
    %p161 = por %p159, %p160
    %s162 = ssub.s32 %s24, %s31
    %p163 = scmp.eq.s32.totalorder %s162, 0
    %s165 = sadd.s32 %s164, 1
    %s166 = scalar_select %p163, %s164, %s165
    %p169 = pneg %p163
    %p170 = scmp.eq.s32.totalorder %s24, 1
    %p171 = por %p169, %p170
    %p172 = scmp.ne.s32.totalorder %s164, %s167
    %p173 = scmp.eq.s32.totalorder %s24, 0
    %p174 = por %p172, %p173
    %p175 = scmp.ne.s32.totalorder %s164, %s167
    %p176 = scmp.eq.s32.totalorder %s29, 1
    %p177 = por %p175, %p176
    %p178 = scmp.ne.s32.totalorder %s167, %s168
    %p179 = scmp.eq.s32.totalorder %s29, 0
    %p180 = por %p178, %p179
    %p181 = scmp.ne.s32.totalorder %s167, %s168
    %p182 = scmp.eq.s32.totalorder %s30, 1
    %p183 = por %p181, %p182
    %p185 = scmp.ne.s32.totalorder %s168, %s184
    %p186 = scmp.eq.s32.totalorder %s30, 0
    %p187 = por %p185, %p186
    %s188 = ssub.s32 %s24, %s31
    %p189 = scmp.eq.s32.totalorder %s188, 0
    %s191 = sadd.s32 %s190, 1
    %s192 = scalar_select %p189, %s190, %s191
    %p195 = pneg %p189
    %p196 = scmp.eq.s32.totalorder %s24, 1
    %p197 = por %p195, %p196
    %p198 = scmp.ne.s32.totalorder %s190, %s193
    %p199 = scmp.eq.s32.totalorder %s24, 0
    %p200 = por %p198, %p199
    %p201 = scmp.ne.s32.totalorder %s190, %s193
    %p202 = scmp.eq.s32.totalorder %s29, 1
    %p203 = por %p201, %p202
    %p204 = scmp.ne.s32.totalorder %s193, %s194
    %p205 = scmp.eq.s32.totalorder %s29, 0
    %p206 = por %p204, %p205
    %p207 = scmp.ne.s32.totalorder %s193, %s194
    %p208 = scmp.eq.s32.totalorder %s30, 1
    %p209 = por %p207, %p208
    %p211 = scmp.ne.s32.totalorder %s194, %s210
    %p212 = scmp.eq.s32.totalorder %s30, 0
    %p213 = por %p211, %p212
    %s214 = ssub.s32 %s24, %s31
    %p215 = scmp.eq.s32.totalorder %s214, 0
    %s217 = sadd.s32 %s216, 1
    %s218 = scalar_select %p215, %s216, %s217
    %p221 = pneg %p215
    %p222 = scmp.eq.s32.totalorder %s24, 1
    %p223 = por %p221, %p222
    %p224 = scmp.ne.s32.totalorder %s216, %s219
    %p225 = scmp.eq.s32.totalorder %s24, 0
    %p226 = por %p224, %p225
    %p227 = scmp.ne.s32.totalorder %s216, %s219
    %p228 = scmp.eq.s32.totalorder %s29, 1
    %p229 = por %p227, %p228
    %p230 = scmp.ne.s32.totalorder %s219, %s220
    %p231 = scmp.eq.s32.totalorder %s29, 0
    %p232 = por %p230, %p231
    %p233 = scmp.ne.s32.totalorder %s219, %s220
    %p234 = scmp.eq.s32.totalorder %s30, 1
    %p235 = por %p233, %p234
    %p237 = scmp.ne.s32.totalorder %s220, %s236
    %p238 = scmp.eq.s32.totalorder %s30, 0
    %p239 = por %p237, %p238
    %s240 = ssub.s32 %s24, %s31
    %p241 = scmp.eq.s32.totalorder %s240, 0
    %s243 = sadd.s32 %s242, 1
    %s244 = scalar_select %p241, %s242, %s243
    %p247 = pneg %p241
    %p248 = scmp.eq.s32.totalorder %s24, 1
    %p249 = por %p247, %p248
    %p250 = scmp.ne.s32.totalorder %s242, %s245
    %p251 = scmp.eq.s32.totalorder %s24, 0
    %p252 = por %p250, %p251
    %p253 = scmp.ne.s32.totalorder %s242, %s245
    %p254 = scmp.eq.s32.totalorder %s29, 1
    %p255 = por %p253, %p254
    %p256 = scmp.ne.s32.totalorder %s245, %s246
    %p257 = scmp.eq.s32.totalorder %s29, 0
    %p258 = por %p256, %p257
    %p259 = scmp.ne.s32.totalorder %s245, %s246
    %p260 = scmp.eq.s32.totalorder %s30, 1
    %p261 = por %p259, %p260
    %p263 = scmp.ne.s32.totalorder %s246, %s262
    %p264 = scmp.eq.s32.totalorder %s30, 0
    %p265 = por %p263, %p264
    %s266 = ssub.s32 %s24, %s31
    %p267 = scmp.eq.s32.totalorder %s266, 0
    %s269 = sadd.s32 %s268, 1
    %s270 = scalar_select %p267, %s268, %s269
    %p273 = pneg %p267
    %p274 = scmp.eq.s32.totalorder %s24, 1
    %p275 = por %p273, %p274
    %p276 = scmp.ne.s32.totalorder %s268, %s271
    %p277 = scmp.eq.s32.totalorder %s24, 0
    %p278 = por %p276, %p277
    %p279 = scmp.ne.s32.totalorder %s268, %s271
    %p280 = scmp.eq.s32.totalorder %s29, 1
    %p281 = por %p279, %p280
    %p282 = scmp.ne.s32.totalorder %s271, %s272
    %p283 = scmp.eq.s32.totalorder %s29, 0
    %p284 = por %p282, %p283
    %p285 = scmp.ne.s32.totalorder %s271, %s272
    %p286 = scmp.eq.s32.totalorder %s30, 1
    %p287 = por %p285, %p286
    %p289 = scmp.ne.s32.totalorder %s272, %s288
    %p290 = scmp.eq.s32.totalorder %s30, 0
    %p291 = por %p289, %p290
    %s292 = ssub.s32 %s24, %s31
    %p293 = scmp.eq.s32.totalorder %s292, 0
    %s295 = sadd.s32 %s294, 1
    %s296 = scalar_select %p293, %s294, %s295
    %p299 = pneg %p293
    %p300 = scmp.eq.s32.totalorder %s24, 1
    %p301 = por %p299, %p300
    %p302 = scmp.ne.s32.totalorder %s294, %s297
    %p303 = scmp.eq.s32.totalorder %s24, 0
    %p304 = por %p302, %p303
    %p305 = scmp.ne.s32.totalorder %s294, %s297
    %p306 = scmp.eq.s32.totalorder %s29, 1
    %p307 = por %p305, %p306
    %p308 = scmp.ne.s32.totalorder %s297, %s298
    %p309 = scmp.eq.s32.totalorder %s29, 0
    %p310 = por %p308, %p309
    %p311 = scmp.ne.s32.totalorder %s297, %s298
    %p312 = scmp.eq.s32.totalorder %s30, 1
    %p313 = por %p311, %p312
    %p315 = scmp.ne.s32.totalorder %s298, %s314
    %p316 = scmp.eq.s32.totalorder %s30, 0
    %p317 = por %p315, %p316
    %s318 = ssub.s32 %s24, %s31
    %p319 = scmp.eq.s32.totalorder %s318, 0
    %s321 = sadd.s32 %s320, 1
    %s322 = scalar_select %p319, %s320, %s321
    %p325 = pneg %p319
    %p326 = scmp.eq.s32.totalorder %s24, 1
    %p327 = por %p325, %p326
    %p328 = scmp.ne.s32.totalorder %s320, %s323
    %p329 = scmp.eq.s32.totalorder %s24, 0
    %p330 = por %p328, %p329
    %p331 = scmp.ne.s32.totalorder %s320, %s323
    %p332 = scmp.eq.s32.totalorder %s29, 1
    %p333 = por %p331, %p332
    %p334 = scmp.ne.s32.totalorder %s323, %s324
    %p335 = scmp.eq.s32.totalorder %s29, 0
    %p336 = por %p334, %p335
    %p337 = scmp.ne.s32.totalorder %s323, %s324
    %p338 = scmp.eq.s32.totalorder %s30, 1
    %p339 = por %p337, %p338
    %p341 = scmp.ne.s32.totalorder %s324, %s340
    %p342 = scmp.eq.s32.totalorder %s30, 0
    %p343 = por %p341, %p342
    %s344 = ssub.s32 %s24, %s31
    %p345 = scmp.eq.s32.totalorder %s344, 0
    %s347 = sadd.s32 %s346, 1
    %s348 = scalar_select %p345, %s346, %s347
    %p351 = pneg %p345
    %p352 = scmp.eq.s32.totalorder %s24, 1
    %p353 = por %p351, %p352
    %p354 = scmp.ne.s32.totalorder %s346, %s349
    %p355 = scmp.eq.s32.totalorder %s24, 0
    %p356 = por %p354, %p355
    %p357 = scmp.ne.s32.totalorder %s346, %s349
    %p358 = scmp.eq.s32.totalorder %s29, 1
    %p359 = por %p357, %p358
    %p360 = scmp.ne.s32.totalorder %s349, %s350
    %p361 = scmp.eq.s32.totalorder %s29, 0
    %p362 = por %p360, %p361
    %p363 = scmp.ne.s32.totalorder %s349, %s350
    %p364 = scmp.eq.s32.totalorder %s30, 1
    %p365 = por %p363, %p364
    %p367 = scmp.ne.s32.totalorder %s350, %s366
    %p368 = scmp.eq.s32.totalorder %s30, 0
    %p369 = por %p367, %p368
    %s370 = ssub.s32 %s24, %s31
    %p371 = scmp.eq.s32.totalorder %s370, 0
    %s373 = sadd.s32 %s372, 1
    %s374 = scalar_select %p371, %s372, %s373
    %p377 = pneg %p371
    %p378 = scmp.eq.s32.totalorder %s24, 1
    %p379 = por %p377, %p378
    %p380 = scmp.ne.s32.totalorder %s372, %s375
    %p381 = scmp.eq.s32.totalorder %s24, 0
    %p382 = por %p380, %p381
    %p383 = scmp.ne.s32.totalorder %s372, %s375
    %p384 = scmp.eq.s32.totalorder %s29, 1
    %p385 = por %p383, %p384
    %p386 = scmp.ne.s32.totalorder %s375, %s376
    %p387 = scmp.eq.s32.totalorder %s29, 0
    %p388 = por %p386, %p387
    %p389 = scmp.ne.s32.totalorder %s375, %s376
    %p390 = scmp.eq.s32.totalorder %s30, 1
    %p391 = por %p389, %p390
    %p393 = scmp.ne.s32.totalorder %s376, %s392
    %p394 = scmp.eq.s32.totalorder %s30, 0
    %p395 = por %p393, %p394
    %s396 = ssub.s32 %s24, %s31
    %p397 = scmp.eq.s32.totalorder %s396, 0
    %s399 = sadd.s32 %s398, 1
    %s400 = scalar_select %p397, %s398, %s399
    %p403 = pneg %p397
    %p404 = scmp.eq.s32.totalorder %s24, 1
    %p405 = por %p403, %p404
    %p406 = scmp.ne.s32.totalorder %s398, %s401
    %p407 = scmp.eq.s32.totalorder %s24, 0
    %p408 = por %p406, %p407
    %p409 = scmp.ne.s32.totalorder %s398, %s401
    %p410 = scmp.eq.s32.totalorder %s29, 1
    %p411 = por %p409, %p410
    %p412 = scmp.ne.s32.totalorder %s401, %s402
    %p413 = scmp.eq.s32.totalorder %s29, 0
    %p414 = por %p412, %p413
    %p415 = scmp.ne.s32.totalorder %s401, %s402
    %p416 = scmp.eq.s32.totalorder %s30, 1
    %p417 = por %p415, %p416
    %p419 = scmp.ne.s32.totalorder %s402, %s418
    %p420 = scmp.eq.s32.totalorder %s30, 0
    %p421 = por %p419, %p420
    %s422 = ssub.s32 %s24, %s31
    %p423 = scmp.eq.s32.totalorder %s422, 0
    %s425 = sadd.s32 %s424, 1
    %s426 = scalar_select %p423, %s424, %s425
    %p429 = pneg %p423
    %p430 = scmp.eq.s32.totalorder %s24, 1
    %p431 = por %p429, %p430
    %p432 = scmp.ne.s32.totalorder %s424, %s427
    %p433 = scmp.eq.s32.totalorder %s24, 0
    %p434 = por %p432, %p433
    %p435 = scmp.ne.s32.totalorder %s424, %s427
    %p436 = scmp.eq.s32.totalorder %s29, 1
    %p437 = por %p435, %p436
    %p438 = scmp.ne.s32.totalorder %s427, %s428
    %p439 = scmp.eq.s32.totalorder %s29, 0
    %p440 = por %p438, %p439
    %p441 = scmp.ne.s32.totalorder %s427, %s428
    %p442 = scmp.eq.s32.totalorder %s30, 1
    %p443 = por %p441, %p442
    %p445 = scmp.ne.s32.totalorder %s428, %s444
    %p446 = scmp.eq.s32.totalorder %s30, 0
    %p447 = por %p445, %p446
    %s448 = ssub.s32 %s24, %s31
    %p449 = scmp.eq.s32.totalorder %s448, 0
    %s451 = sadd.s32 %s450, 1
    %s452 = scalar_select %p449, %s450, %s451
    %p455 = pneg %p449
    %p456 = scmp.eq.s32.totalorder %s24, 1
    %p457 = por %p455, %p456
    %p458 = scmp.ne.s32.totalorder %s450, %s453
    %p459 = scmp.eq.s32.totalorder %s24, 0
    %p460 = por %p458, %p459
    %p461 = scmp.ne.s32.totalorder %s450, %s453
    %p462 = scmp.eq.s32.totalorder %s29, 1
    %p463 = por %p461, %p462
    %p464 = scmp.ne.s32.totalorder %s453, %s454
    %p465 = scmp.eq.s32.totalorder %s29, 0
    %p466 = por %p464, %p465
    %p467 = scmp.ne.s32.totalorder %s453, %s454
    %p468 = scmp.eq.s32.totalorder %s30, 1
    %p469 = por %p467, %p468
    %p471 = scmp.ne.s32.totalorder %s454, %s470
    %p472 = scmp.eq.s32.totalorder %s30, 0
    %p473 = por %p471, %p472
    %s474 = ssub.s32 %s24, %s31
    %p475 = scmp.eq.s32.totalorder %s474, 0
    %s477 = sadd.s32 %s476, 1
    %s478 = scalar_select %p475, %s476, %s477
    %p481 = pneg %p475
    %p482 = scmp.eq.s32.totalorder %s24, 1
    %p483 = por %p481, %p482
    %p484 = scmp.ne.s32.totalorder %s476, %s479
    %p485 = scmp.eq.s32.totalorder %s24, 0
    %p486 = por %p484, %p485
    %p487 = scmp.ne.s32.totalorder %s476, %s479
    %p488 = scmp.eq.s32.totalorder %s29, 1
    %p489 = por %p487, %p488
    %p490 = scmp.ne.s32.totalorder %s479, %s480
    %p491 = scmp.eq.s32.totalorder %s29, 0
    %p492 = por %p490, %p491
    %p493 = scmp.ne.s32.totalorder %s479, %s480
    %p494 = scmp.eq.s32.totalorder %s30, 1
    %p495 = por %p493, %p494
    %p497 = scmp.ne.s32.totalorder %s480, %s496
    %p498 = scmp.eq.s32.totalorder %s30, 0
    %p499 = por %p497, %p498
    %s500 = ssub.s32 %s24, %s31
    %p501 = scmp.eq.s32.totalorder %s500, 0
    %s503 = sadd.s32 %s502, 1
    %s504 = scalar_select %p501, %s502, %s503
    %p507 = pneg %p501
    %p508 = scmp.eq.s32.totalorder %s24, 1
    %p509 = por %p507, %p508
    %p510 = scmp.ne.s32.totalorder %s502, %s505
    %p511 = scmp.eq.s32.totalorder %s24, 0
    %p512 = por %p510, %p511
    %p513 = scmp.ne.s32.totalorder %s502, %s505
    %p514 = scmp.eq.s32.totalorder %s29, 1
    %p515 = por %p513, %p514
    %p516 = scmp.ne.s32.totalorder %s505, %s506
    %p517 = scmp.eq.s32.totalorder %s29, 0
    %p518 = por %p516, %p517
    %p519 = scmp.ne.s32.totalorder %s505, %s506
    %p520 = scmp.eq.s32.totalorder %s30, 1
    %p521 = por %p519, %p520
    %p523 = scmp.ne.s32.totalorder %s506, %s522
    %p524 = scmp.eq.s32.totalorder %s30, 0
    %p525 = por %p523, %p524
    %p526 = scmp.le.s32.totalorder 1, %s24
    %p527 = scmp.lt.s32.totalorder %s24, 3
    %p528 = pnand %p526, %p527
    %p529 = pneg %p528
    // Predicated region
    $region9: #{clip_vision_tower2_forward.1} parent=5 // pred_check
      _
    $region10: #{clip_vision_tower2_forward.1} parent=5 // pred_check_branch
      %531 = sbr.rel (%p528) target = $region12
    $region11: #{clip_vision_tower2_forward.1} parent=5 // pred_region
      %s532 = ssub.s32 %s24, 1
    $region12: #{clip_vision_tower2_forward.1} parent=5 // pred_fallthru
      _
    %p533 = scmp.lt.s32.totalorder %s24, 2
    // Predicated region
    $region13: #{clip_vision_tower2_forward.1} parent=5 // pred_check
      %p534 = pneg %p533
    $region14: #{clip_vision_tower2_forward.1} parent=5 // pred_check_branch
      %536 = sbr.rel (%p534) target = $region16
    $region15: #{clip_vision_tower2_forward.1} parent=5 // pred_region
      // Predicated region
      $region17: #{clip_vision_tower2_forward.1} parent=15 // pred_check
        %p537 = pneg %p44
      $region18: #{clip_vision_tower2_forward.1} parent=15 // pred_check_branch
        %539 = sbr.rel (%p537) target = $region20
      $region19: #{clip_vision_tower2_forward.1} parent=15 // pred_region
        %p540 = scmp.lt.s32.totalorder %s24, 1
        %s541 = scalar_select %p540, %s24, 1
        %s542 = smul.addr %s541, 4
        %s543 = smul.addr %s542, 8
        %s544 = scalar_lea.vmem %s0, %s543
      $region20: #{clip_vision_tower2_forward.1} parent=15 // pred_fallthru
        _
      // Predicated region
      $region21: #{clip_vision_tower2_forward.1} parent=15 // pred_check
        %p545 = pneg %p70
      $region22: #{clip_vision_tower2_forward.1} parent=15 // pred_check_branch
        %547 = sbr.rel (%p545) target = $region24
      $region23: #{clip_vision_tower2_forward.1} parent=15 // pred_region
        %p548 = scmp.lt.s32.totalorder %s24, 1
        %s549 = scalar_select %p548, %s24, 1
        %s550 = smul.addr %s549, 6
        %s551 = smul.addr %s550, 8
        %s552 = scalar_lea.vmem %s1, %s551
      $region24: #{clip_vision_tower2_forward.1} parent=15 // pred_fallthru
        _
      // Predicated region
      $region25: #{clip_vision_tower2_forward.1} parent=15 // pred_check
        %p553 = pneg %p96
      $region26: #{clip_vision_tower2_forward.1} parent=15 // pred_check_branch
        %555 = sbr.rel (%p553) target = $region28
      $region27: #{clip_vision_tower2_forward.1} parent=15 // pred_region
        %p556 = scmp.lt.s32.totalorder %s24, 1
        %s557 = scalar_select %p556, %s24, 1
        %s558 = scalar_lea.vmem %s2, %s557
      $region28: #{clip_vision_tower2_forward.1} parent=15 // pred_fallthru
        _
      // Predicated region
      $region29: #{clip_vision_tower2_forward.1} parent=15 // pred_check
        %p559 = pneg %p122
      $region30: #{clip_vision_tower2_forward.1} parent=15 // pred_check_branch
        %561 = sbr.rel (%p559) target = $region32
      $region31: #{clip_vision_tower2_forward.1} parent=15 // pred_region
        %p562 = scmp.lt.s32.totalorder %s24, 1
        %s563 = scalar_select %p562, %s24, 1
        %s564 = smul.addr %s563, 3
        %s565 = smul.addr %s564, 8
        %s566 = scalar_lea.vmem %s3, %s565
      $region32: #{clip_vision_tower2_forward.1} parent=15 // pred_fallthru
        _
      // Predicated region
      $region33: #{clip_vision_tower2_forward.1} parent=15 // pred_check
        %p567 = pneg %p148
      $region34: #{clip_vision_tower2_forward.1} parent=15 // pred_check_branch
        %569 = sbr.rel (%p567) target = $region36
      $region35: #{clip_vision_tower2_forward.1} parent=15 // pred_region
        %p570 = scmp.lt.s32.totalorder %s24, 1
        %s571 = scalar_select %p570, %s24, 1
        %s572 = scalar_lea.vmem %s4, %s571
      $region36: #{clip_vision_tower2_forward.1} parent=15 // pred_fallthru
        _
      // Predicated region
      $region37: #{clip_vision_tower2_forward.1} parent=15 // pred_check
        %p573 = pneg %p174
      $region38: #{clip_vision_tower2_forward.1} parent=15 // pred_check_branch
        %575 = sbr.rel (%p573) target = $region40
      $region39: #{clip_vision_tower2_forward.1} parent=15 // pred_region
        %p576 = scmp.lt.s32.totalorder %s24, 1
        %s577 = scalar_select %p576, %s24, 1
        %s578 = scalar_lea.vmem %s5, %s577
      $region40: #{clip_vision_tower2_forward.1} parent=15 // pred_fallthru
        _
      // Predicated region
      $region41: #{clip_vision_tower2_forward.1} parent=15 // pred_check
        %p579 = pneg %p200
      $region42: #{clip_vision_tower2_forward.1} parent=15 // pred_check_branch
        %581 = sbr.rel (%p579) target = $region44
      $region43: #{clip_vision_tower2_forward.1} parent=15 // pred_region
        %p582 = scmp.lt.s32.totalorder %s24, 1
        %s583 = scalar_select %p582, %s24, 1
        %s584 = smul.addr %s583, 2
        %s585 = scalar_lea.vmem %s6, %s584
      $region44: #{clip_vision_tower2_forward.1} parent=15 // pred_fallthru
        _
      // Predicated region
      $region45: #{clip_vision_tower2_forward.1} parent=15 // pred_check
        %p586 = pneg %p226
      $region46: #{clip_vision_tower2_forward.1} parent=15 // pred_check_branch
        %588 = sbr.rel (%p586) target = $region48
      $region47: #{clip_vision_tower2_forward.1} parent=15 // pred_region
        %p589 = scmp.lt.s32.totalorder %s24, 1
        %s590 = scalar_select %p589, %s24, 1
        %s591 = smul.addr %s590, 2
        %s592 = scalar_lea.vmem %s7, %s591
      $region48: #{clip_vision_tower2_forward.1} parent=15 // pred_fallthru
        _
      // Predicated region
      $region49: #{clip_vision_tower2_forward.1} parent=15 // pred_check
        %p593 = pneg %p252
      $region50: #{clip_vision_tower2_forward.1} parent=15 // pred_check_branch
        %595 = sbr.rel (%p593) target = $region52
      $region51: #{clip_vision_tower2_forward.1} parent=15 // pred_region
        %p596 = scmp.lt.s32.totalorder %s24, 1
        %s597 = scalar_select %p596, %s24, 1
        %s598 = smul.addr %s597, 8
        %s599 = smul.addr %s598, 8
        %s600 = scalar_lea.vmem %s8, %s599
      $region52: #{clip_vision_tower2_forward.1} parent=15 // pred_fallthru
        _
      // Predicated region
      $region53: #{clip_vision_tower2_forward.1} parent=15 // pred_check
        %p601 = pneg %p278
      $region54: #{clip_vision_tower2_forward.1} parent=15 // pred_check_branch
        %603 = sbr.rel (%p601) target = $region56
      $region55: #{clip_vision_tower2_forward.1} parent=15 // pred_region
        %p604 = scmp.lt.s32.totalorder %s24, 1
        %s605 = scalar_select %p604, %s24, 1
        %s606 = smul.addr %s605, 2
        %s607 = scalar_lea.vmem %s9, %s606
      $region56: #{clip_vision_tower2_forward.1} parent=15 // pred_fallthru
        _
      // Predicated region
      $region57: #{clip_vision_tower2_forward.1} parent=15 // pred_check
        %p608 = pneg %p304
      $region58: #{clip_vision_tower2_forward.1} parent=15 // pred_check_branch
        %610 = sbr.rel (%p608) target = $region60
      $region59: #{clip_vision_tower2_forward.1} parent=15 // pred_region
        %p611 = scmp.lt.s32.totalorder %s24, 1
        %s612 = scalar_select %p611, %s24, 1
        %s613 = smul.addr %s612, 8
        %s614 = smul.addr %s613, 8
        %s615 = scalar_lea.vmem %s10, %s614
      $region60: #{clip_vision_tower2_forward.1} parent=15 // pred_fallthru
        _
      // Predicated region
      $region61: #{clip_vision_tower2_forward.1} parent=15 // pred_check
        %p616 = pneg %p330
      $region62: #{clip_vision_tower2_forward.1} parent=15 // pred_check_branch
        %618 = sbr.rel (%p616) target = $region64
      $region63: #{clip_vision_tower2_forward.1} parent=15 // pred_region
        %p619 = scmp.lt.s32.totalorder %s24, 1
        %s620 = scalar_select %p619, %s24, 1
        %s621 = smul.addr %s620, 2
        %s622 = scalar_lea.vmem %s11, %s621
      $region64: #{clip_vision_tower2_forward.1} parent=15 // pred_fallthru
        _
      // Predicated region
      $region65: #{clip_vision_tower2_forward.1} parent=15 // pred_check
        %p623 = pneg %p356
      $region66: #{clip_vision_tower2_forward.1} parent=15 // pred_check_branch
        %625 = sbr.rel (%p623) target = $region68
      $region67: #{clip_vision_tower2_forward.1} parent=15 // pred_region
        %p626 = scmp.lt.s32.totalorder %s24, 1
        %s627 = scalar_select %p626, %s24, 1
        %s628 = smul.addr %s627, 2
        %s629 = scalar_lea.vmem %s12, %s628
      $region68: #{clip_vision_tower2_forward.1} parent=15 // pred_fallthru
        _
      // Predicated region
      $region69: #{clip_vision_tower2_forward.1} parent=15 // pred_check
        %p630 = pneg %p382
      $region70: #{clip_vision_tower2_forward.1} parent=15 // pred_check_branch
        %632 = sbr.rel (%p630) target = $region72
      $region71: #{clip_vision_tower2_forward.1} parent=15 // pred_region
        %p633 = scmp.lt.s32.totalorder %s24, 1
        %s634 = scalar_select %p633, %s24, 1
        %s635 = smul.addr %s634, 2
        %s636 = scalar_lea.vmem %s13, %s635
      $region72: #{clip_vision_tower2_forward.1} parent=15 // pred_fallthru
        _
      // Predicated region
      $region73: #{clip_vision_tower2_forward.1} parent=15 // pred_check
        %p637 = pneg %p408
      $region74: #{clip_vision_tower2_forward.1} parent=15 // pred_check_branch
        %639 = sbr.rel (%p637) target = $region76
      $region75: #{clip_vision_tower2_forward.1} parent=15 // pred_region
        %p640 = scmp.lt.s32.totalorder %s24, 1
        %s641 = scalar_select %p640, %s24, 1
        %s642 = smul.addr %s641, 8
        %s643 = smul.addr %s642, 8
        %s644 = scalar_lea.vmem %s14, %s643
      $region76: #{clip_vision_tower2_forward.1} parent=15 // pred_fallthru
        _
      // Predicated region
      $region77: #{clip_vision_tower2_forward.1} parent=15 // pred_check
        %p645 = pneg %p434
      $region78: #{clip_vision_tower2_forward.1} parent=15 // pred_check_branch
        %647 = sbr.rel (%p645) target = $region80
      $region79: #{clip_vision_tower2_forward.1} parent=15 // pred_region
        %p648 = scmp.lt.s32.totalorder %s24, 1
        %s649 = scalar_select %p648, %s24, 1
        %s650 = smul.addr %s649, 2
        %s651 = scalar_lea.vmem %s15, %s650
      $region80: #{clip_vision_tower2_forward.1} parent=15 // pred_fallthru
        _
      // Predicated region
      $region81: #{clip_vision_tower2_forward.1} parent=15 // pred_check
        %p652 = pneg %p460
      $region82: #{clip_vision_tower2_forward.1} parent=15 // pred_check_branch
        %654 = sbr.rel (%p652) target = $region84
      $region83: #{clip_vision_tower2_forward.1} parent=15 // pred_region
        %p655 = scmp.lt.s32.totalorder %s24, 1
        %s656 = scalar_select %p655, %s24, 1
        %s657 = smul.addr %s656, 16
        %s658 = smul.addr %s657, 8
        %s659 = scalar_lea.vmem %s16, %s658
      $region84: #{clip_vision_tower2_forward.1} parent=15 // pred_fallthru
        _
      // Predicated region
      $region85: #{clip_vision_tower2_forward.1} parent=15 // pred_check
        %p660 = pneg %p486
      $region86: #{clip_vision_tower2_forward.1} parent=15 // pred_check_branch
        %662 = sbr.rel (%p660) target = $region88
      $region87: #{clip_vision_tower2_forward.1} parent=15 // pred_region
        %p663 = scmp.lt.s32.totalorder %s24, 1
        %s664 = scalar_select %p663, %s24, 1
        %s665 = smul.addr %s664, 2
        %s666 = scalar_lea.vmem %s17, %s665
      $region88: #{clip_vision_tower2_forward.1} parent=15 // pred_fallthru
        _
    $region16: #{clip_vision_tower2_forward.1} parent=5 // pred_fallthru
      _
    %p667 = scmp.le.s32.totalorder 1, %s24
    %p668 = scmp.lt.s32.totalorder %s24, 3
    %p669 = pnand %p667, %p668
    %p670 = pneg %p669
    // Predicated region
    $region89: #{clip_vision_tower2_forward.1} parent=5 // pred_check
      _
    $region90: #{clip_vision_tower2_forward.1} parent=5 // pred_check_branch
      %672 = sbr.rel (%p669) target = $region92
    $region91: #{clip_vision_tower2_forward.1} parent=5 // pred_region
      %s673 = ssub.s32 %s24, 1
      %p674 = scmp.lt.s32.totalorder %s29, 1
      %s675 = scalar_select %p674, %s29, 1
      %s676 = smul.addr %s675, 4
      %s677 = smul.addr %s676, 8
      %s678 = scalar_lea.vmem %s0, %s677
      %p679 = pneg %p50
      %p680 = pneg %p47
      %p681 = scmp.lt.s32.totalorder %s29, 1
      %s682 = scalar_select %p681, %s29, 1
      %s683 = smul.addr %s682, 6
      %s684 = smul.addr %s683, 8
      %s685 = scalar_lea.vmem %s1, %s684
      %p686 = pneg %p76
      %p687 = pneg %p73
      %p688 = scmp.lt.s32.totalorder %s29, 1
      %s689 = scalar_select %p688, %s29, 1
      %s690 = scalar_lea.vmem %s2, %s689
      %p691 = pneg %p102
      %p692 = pneg %p99
      %p693 = scmp.lt.s32.totalorder %s29, 1
      %s694 = scalar_select %p693, %s29, 1
      %s695 = smul.addr %s694, 3
      %s696 = smul.addr %s695, 8
      %s697 = scalar_lea.vmem %s3, %s696
      %p698 = pneg %p128
      %p699 = pneg %p125
      %p700 = scmp.lt.s32.totalorder %s29, 1
      %s701 = scalar_select %p700, %s29, 1
      %s702 = scalar_lea.vmem %s4, %s701
      %p703 = pneg %p154
      %p704 = pneg %p151
      %p705 = scmp.lt.s32.totalorder %s29, 1
      %s706 = scalar_select %p705, %s29, 1
      %s707 = scalar_lea.vmem %s5, %s706
      %p708 = pneg %p180
      %p709 = pneg %p177
      %p710 = scmp.lt.s32.totalorder %s29, 1
      %s711 = scalar_select %p710, %s29, 1
      %s712 = smul.addr %s711, 2
      %s713 = scalar_lea.vmem %s6, %s712
      %p714 = pneg %p206
      %p715 = pneg %p203
      %p716 = scmp.lt.s32.totalorder %s29, 1
      %s717 = scalar_select %p716, %s29, 1
      %s718 = smul.addr %s717, 2
      %s719 = scalar_lea.vmem %s7, %s718
      %p720 = pneg %p232
      %p721 = pneg %p229
      %p722 = scmp.lt.s32.totalorder %s29, 1
      %s723 = scalar_select %p722, %s29, 1
      %s724 = smul.addr %s723, 8
      %s725 = smul.addr %s724, 8
      %s726 = scalar_lea.vmem %s8, %s725
      %p727 = pneg %p258
      %p728 = pneg %p255
      %p729 = scmp.lt.s32.totalorder %s29, 1
      %s730 = scalar_select %p729, %s29, 1
      %s731 = smul.addr %s730, 2
      %s732 = scalar_lea.vmem %s9, %s731
      %p733 = pneg %p284
      %p734 = pneg %p281
      %p735 = scmp.lt.s32.totalorder %s29, 1
      %s736 = scalar_select %p735, %s29, 1
      %s737 = smul.addr %s736, 8
      %s738 = smul.addr %s737, 8
      %s739 = scalar_lea.vmem %s10, %s738
      %p740 = pneg %p310
      %p741 = pneg %p307
      %p742 = scmp.lt.s32.totalorder %s29, 1
      %s743 = scalar_select %p742, %s29, 1
      %s744 = smul.addr %s743, 2
      %s745 = scalar_lea.vmem %s11, %s744
      %p746 = pneg %p336
      %p747 = pneg %p333
      %p748 = scmp.lt.s32.totalorder %s29, 1
      %s749 = scalar_select %p748, %s29, 1
      %s750 = smul.addr %s749, 2
      %s751 = scalar_lea.vmem %s12, %s750
      %p752 = pneg %p362
      %p753 = pneg %p359
      %p754 = scmp.lt.s32.totalorder %s29, 1
      %s755 = scalar_select %p754, %s29, 1
      %s756 = smul.addr %s755, 2
      %s757 = scalar_lea.vmem %s13, %s756
      %p758 = pneg %p388
      %p759 = pneg %p385
      %p760 = scmp.lt.s32.totalorder %s29, 1
      %s761 = scalar_select %p760, %s29, 1
      %s762 = smul.addr %s761, 8
      %s763 = smul.addr %s762, 8
      %s764 = scalar_lea.vmem %s14, %s763
      %p765 = pneg %p414
      %p766 = pneg %p411
      %p767 = scmp.lt.s32.totalorder %s29, 1
      %s768 = scalar_select %p767, %s29, 1
      %s769 = smul.addr %s768, 2
      %s770 = scalar_lea.vmem %s15, %s769
      %p771 = pneg %p440
      %p772 = pneg %p437
      %p773 = scmp.lt.s32.totalorder %s29, 1
      %s774 = scalar_select %p773, %s29, 1
      %s775 = smul.addr %s774, 16
      %s776 = smul.addr %s775, 8
      %s777 = scalar_lea.vmem %s16, %s776
      %p778 = pneg %p466
      %p779 = pneg %p463
      %p780 = scmp.lt.s32.totalorder %s29, 1
      %s781 = scalar_select %p780, %s29, 1
      %s782 = smul.addr %s781, 2
      %s783 = scalar_lea.vmem %s17, %s782
      %p784 = pneg %p492
      %p785 = pneg %p489
      %p786 = pneg %p518
      %p787 = pneg %p515
      %p788 = scmp.lt.s32.totalorder %s29, 1
      %s789 = scalar_select %p788, %s29, 1
      %s790 = smul.addr %s789, 4
      %s791 = smul.addr %s790, 8
      %s792 = scalar_lea.vmem %s18, %s791
      %p793 = scmp.lt.s32.totalorder %s29, 1
      %s794 = scalar_select %p793, %s29, 1
      %s795 = smul.addr %s794, 4
      %s796 = smul.addr %s795, 8
      %s797 = scalar_lea.vmem %s0, %s796
      %p798 = scmp.lt.s32.totalorder %s29, 1
      %s799 = scalar_select %p798, %s29, 1
      %s800 = smul.addr %s799, 6
      %s801 = smul.addr %s800, 8
      %s802 = scalar_lea.vmem %s1, %s801
      %p803 = scmp.lt.s32.totalorder %s29, 1
      %s804 = scalar_select %p803, %s29, 1
      %s805 = scalar_lea.vmem %s2, %s804
      %p806 = scmp.lt.s32.totalorder %s29, 1
      %s807 = scalar_select %p806, %s29, 1
      %s808 = smul.addr %s807, 3
      %s809 = smul.addr %s808, 8
      %s810 = scalar_lea.vmem %s3, %s809
      %p811 = scmp.lt.s32.totalorder %s29, 1
      %s812 = scalar_select %p811, %s29, 1
      %s813 = scalar_lea.vmem %s4, %s812
      %p814 = scmp.lt.s32.totalorder %s29, 1
      %s815 = scalar_select %p814, %s29, 1
      %s816 = scalar_lea.vmem %s5, %s815
      %p817 = scmp.lt.s32.totalorder %s29, 1
      %s818 = scalar_select %p817, %s29, 1
      %s819 = smul.addr %s818, 2
      %s820 = scalar_lea.vmem %s6, %s819
      %p821 = scmp.lt.s32.totalorder %s29, 1
      %s822 = scalar_select %p821, %s29, 1
      %s823 = smul.addr %s822, 2
      %s824 = scalar_lea.vmem %s7, %s823
      %p825 = scmp.lt.s32.totalorder %s29, 1
      %s826 = scalar_select %p825, %s29, 1
      %s827 = smul.addr %s826, 8
      %s828 = smul.addr %s827, 8
      %s829 = scalar_lea.vmem %s8, %s828
      %p830 = scmp.lt.s32.totalorder %s29, 1
      %s831 = scalar_select %p830, %s29, 1
      %s832 = smul.addr %s831, 2
      %s833 = scalar_lea.vmem %s9, %s832
      %p834 = scmp.lt.s32.totalorder %s29, 1
      %s835 = scalar_select %p834, %s29, 1
      %s836 = smul.addr %s835, 8
      %s837 = smul.addr %s836, 8
      %s838 = scalar_lea.vmem %s10, %s837
      %p839 = scmp.lt.s32.totalorder %s29, 1
      %s840 = scalar_select %p839, %s29, 1
      %s841 = smul.addr %s840, 2
      %s842 = scalar_lea.vmem %s11, %s841
      %p843 = scmp.lt.s32.totalorder %s29, 1
      %s844 = scalar_select %p843, %s29, 1
      %s845 = smul.addr %s844, 2
      %s846 = scalar_lea.vmem %s12, %s845
      %p847 = scmp.lt.s32.totalorder %s29, 1
      %s848 = scalar_select %p847, %s29, 1
      %s849 = smul.addr %s848, 2
      %s850 = scalar_lea.vmem %s13, %s849
      %p851 = scmp.lt.s32.totalorder %s29, 1
      %s852 = scalar_select %p851, %s29, 1
      %s853 = smul.addr %s852, 8
      %s854 = smul.addr %s853, 8
      %s855 = scalar_lea.vmem %s14, %s854
      %p856 = scmp.lt.s32.totalorder %s29, 1
      %s857 = scalar_select %p856, %s29, 1
      %s858 = smul.addr %s857, 2
      %s859 = scalar_lea.vmem %s15, %s858
      %p860 = scmp.lt.s32.totalorder %s29, 1
      %s861 = scalar_select %p860, %s29, 1
      %s862 = smul.addr %s861, 16
      %s863 = smul.addr %s862, 8
      %s864 = scalar_lea.vmem %s16, %s863
      %p865 = scmp.lt.s32.totalorder %s29, 1
      %s866 = scalar_select %p865, %s29, 1
      %s867 = smul.addr %s866, 2
      %s868 = scalar_lea.vmem %s17, %s867
      %p869 = scmp.lt.s32.totalorder %s29, 1
      %s870 = scalar_select %p869, %s29, 1
      %s871 = smul.addr %s870, 4
      %s872 = smul.addr %s871, 8
      %s873 = scalar_lea.vmem %s18, %s872
      %v874 = vld [vmem:[%s797] sm:$0xff]
      %v875 = vld [vmem:[%s797 + $0x8] sm:$0xff]
      %v876 = vld [vmem:[%s797 + $0x10] sm:$0xff]
      %v877 = vld [vmem:[%s797 + $0x18] sm:$0xff]
      %v878 = vld [vmem:[%s802] sm:$0xff]
      %v879 = vld [vmem:[%s802 + $0x8] sm:$0xff]
      %v880 = vld [vmem:[%s802 + $0x10] sm:$0xff]
      %v881 = vld [vmem:[%s802 + $0x18] sm:$0xff]
      %v882 = vld [vmem:[%s802 + $0x20] sm:$0xff]
      %v883 = vld [vmem:[%s802 + $0x28] sm:$0xff]
      %vm884 = vcmask 392192
      %v886 = vsel %vm884, %v874, 0
      %v889 = vsel %vm884, %v875, 0
      %v892 = vsel %vm884, %v876, 0
      %v895 = vsel %vm884, %v877, 0
      %897 = vmatprep.subr.mxu0 0.0
      %898 = vmatpush1.msra.mxu0 0.0
      %899 = vmatprep.subr.mxu0 0.0
      %900 = vmatpush1.msra.mxu0 0.0
      %901 = vmatprep.subr.mxu0 0.0
      %902 = vmatpush1.msra.mxu0 0.0
      %903 = vmatprep.subr.mxu0 0.0
      %904 = vmatpush1.msra.mxu0 0.0
      %905 = vmatprep.subr.mxu0 0.0
      %906 = vmatpush1.msra.mxu0 0.0
      %907 = vmatprep.subr.mxu0 0.0
      %908 = vmatpush1.msra.mxu0 0.0
      %909 = vmatprep.subr.mxu0 0.0
      %910 = vmatpush1.msra.mxu0 0.0
      %911 = vmatprep.subr.mxu0 0.0
      %912 = vmatpush1.msra.mxu0 0.0
      %913 = vmatprep.subr.mxu0 0.0
      %914 = vmatpush1.msra.mxu0 0.0
      %915 = vmatprep.subr.mxu0 0.0
      %916 = vmatpush1.msra.mxu0 0.0
      %917 = vmatprep.subr.mxu0 0.0
      %918 = vmatpush1.msra.mxu0 %v883
      %919 = vmatprep.subr.mxu0 0.0
      %920 = vmatpush1.msra.mxu0 %v882
      %921 = vmatprep.subr.mxu0 0.0
      %922 = vmatpush1.msra.mxu0 %v881
      %923 = vmatprep.subr.mxu0 0.0
      %924 = vmatpush1.msra.mxu0 %v880
      %925 = vmatprep.subr.mxu0 0.0
      %926 = vmatpush1.msra.mxu0 %v879
      %927 = vmatprep.subr.mxu0 0.0
      %928 = vmatpush1.msra.mxu0 %v878
      %929 = vmatprep.subr.mxu0 0.0
      %930 = vmatpush2.msra.mxu0 0.0
      %931 = vmatprep.subr.mxu0 0.0
      %932 = vmatpush2.msra.mxu0 0.0
      %933 = vmatprep.subr.mxu0 0.0
      %934 = vmatpush2.msra.mxu0 0.0
      %935 = vmatprep.subr.mxu0 0.0
      %936 = vmatpush2.msra.mxu0 0.0
      %937 = vmatprep.subr.mxu0 0.0
      %938 = vmatpush2.msra.mxu0 0.0
      %939 = vmatprep.subr.mxu0 0.0
      %940 = vmatpush2.msra.mxu0 0.0
      %941 = vmatprep.subr.mxu0 0.0
      %942 = vmatpush2.msra.mxu0 0.0
      %943 = vmatprep.subr.mxu0 0.0
      %944 = vmatpush2.msra.mxu0 0.0
      %945 = vmatprep.subr.mxu0 0.0
      %946 = vmatpush2.msra.mxu0 0.0
      %947 = vmatprep.subr.mxu0 0.0
      %948 = vmatpush2.msra.mxu0 0.0
      %949 = vmatprep.subr.mxu0 0.0
      %950 = vmatpush2.msra.mxu0 0.0
      %951 = vmatprep.subr.mxu0 0.0
      %952 = vmatpush2.msra.mxu0 0.0
      %953 = vmatprep.subr.mxu0 0.0
      %954 = vmatpush2.msra.mxu0 0.0
      %955 = vmatprep.subr.mxu0 0.0
      %956 = vmatpush2.msra.mxu0 0.0
      %957 = vmatprep.subr.mxu0 0.0
      %958 = vmatpush2.msra.mxu0 0.0
      %959 = vmatprep.subr.mxu0 0.0
      %960 = vmatpush2.msra.mxu0 0.0
      %961 = vmatprep.mubr.f32.mxu0 0.0
      %962 = vmatmul.mubr.f32.gmra.mxu0 %v886
      %v963 = vpop.f32.mrf.mxu0
      %v964 = vadd.f32 0.0, %v963
      %v965 = vpop.f32.mrf.mxu0
      %966 = vmatprep.mubr.f32.mxu0 0.0
      %967 = vmatmul.mubr.f32.gmra.mxu0 %v889
      %v968 = vpop.f32.mrf.mxu0
      %v969 = vadd.f32 0.0, %v968
      %v970 = vpop.f32.mrf.mxu0
      %971 = vmatprep.mubr.f32.mxu0 0.0
      %972 = vmatmul.mubr.f32.gmra.mxu0 %v892
      %v973 = vpop.f32.mrf.mxu0
      %v974 = vadd.f32 0.0, %v973
      %v975 = vpop.f32.mrf.mxu0
      %976 = vmatprep.mubr.f32.mxu0 0.0
      %977 = vmatmul.mubr.f32.gmra.mxu0 %v895
      %v978 = vpop.f32.mrf.mxu0
      %v979 = vadd.f32 0.0, %v978
      %v980 = vpop.f32.mrf.mxu0
      %981 = vdwg.mxu0
      %v982 = vld [vmem:[%s810] sm:$0xff]
      %v983 = vld [vmem:[%s810 + $0x8] sm:$0xff]
      %v984 = vld [vmem:[%s810 + $0x10] sm:$0x1]
      %v985 = vld [vmem:[%s813] sm:$0x1]
      %v986 = vld [vmem:[%s816] sm:$0x1]
      %vm987 = vcmask 261120
      %988 = vst.msk [vmem:[#allocation2] sm:$0xff] %vm987, %v964
      %989 = vst.msk [vmem:[#allocation2 + $0x8] sm:$0xff] %vm987, %v969
      %v990 = vld [vmem:[%s805] sm:$0x1]
      %vm991 = vcmask 253952
      %992 = vst.msk [vmem:[#allocation2 + $0x10] sm:$0x1] %vm991, %v990
      %v993 = vld [vmem:[#allocation2] sm:$0xff]
      %v994 = vld [vmem:[#allocation2 + $0x8] sm:$0xff]
      %v995 = vld [vmem:[#allocation2 + $0x10] sm:$0x1]
      %v996 = vadd.f32 %v993, %v982
      %v997 = vadd.f32 %v994, %v983
      %v998 = vadd.f32 %v995, %v984
      %v999 = vsel %vm987, %v996, 0.0
      %1000 = vadd.xlane.f32.xlu0 %v999
      %v1001 = vpop.xlane.xlu0 %1000
      %v1002 = vsel %vm987, %v997, 0.0
      %1003 = vadd.xlane.f32.xlu0 %v1002
      %v1004 = vpop.xlane.xlu0 %1003
      %v1005 = vsel %vm991, %v998, 0.0
      %1006 = vadd.xlane.f32.xlu0 %v1005
      %v1007 = vpop.xlane.xlu0 %1006
      %v1008 = vrcp.pop 32.0
      %v1009 = vmul.f32 %v1001, %v1008
      %v1010 = vmul.f32 %v1004, %v1008
      %v1011 = vmul.f32 %v1007, %v1008
      %v1012 = vsub.f32 %v996, %v1009
      %v1013 = vsub.f32 %v997, %v1010
      %v1014 = vsub.f32 %v998, %v1011
      %v1015 = vmul.f32 %v1012, %v1012
      %v1016 = vmul.f32 %v1013, %v1013
      %v1017 = vmul.f32 %v1014, %v1014
      %v1018 = vsel %vm987, %v1015, 0.0
      %1019 = vadd.xlane.f32.xlu0 %v1018
      %v1020 = vpop.xlane.xlu0 %1019
      %v1021 = vsel %vm987, %v1016, 0.0
      %1022 = vadd.xlane.f32.xlu0 %v1021
      %v1023 = vpop.xlane.xlu0 %1022
      %v1024 = vsel %vm991, %v1017, 0.0
      %1025 = vadd.xlane.f32.xlu0 %v1024
      %v1026 = vpop.xlane.xlu0 %1025
      %v1027 = vmul.f32 %v1020, %v1008
      %v1028 = vmul.f32 %v1023, %v1008
      %v1029 = vmul.f32 %v1026, %v1008
      %v1030 = vadd.f32 %v1027, 1e-05
      %v1031 = vadd.f32 %v1028, 1e-05
      %v1032 = vadd.f32 %v1029, 1e-05
      %v1033 = vrsqrt.pop %v1030
      %v1034 = vrsqrt.pop %v1031
      %v1035 = vrsqrt.pop %v1032
      %v1036 = vmul.f32 %v1012, %v1033
      %v1037 = vmul.f32 %v1013, %v1034
      %v1038 = vmul.f32 %v1014, %v1035
      %v1040 = vlaneseq
      %v1041 = vshrl.u32 %v1040, 7
      %v1042 = vsub.s32 0, %v1041
      %v1043 = vrot.slane %v985, %v1042
      %v1045 = vmul.f32 %v1036, %v1043
      %v1046 = vmul.f32 %v1037, %v1043
      %v1047 = vmul.f32 %v1038, %v1043
      %v1049 = vlaneseq
      %v1050 = vshrl.u32 %v1049, 7
      %v1051 = vsub.s32 0, %v1050
      %v1052 = vrot.slane %v986, %v1051
      %v1054 = vadd.f32 %v1045, %v1052
      %v1055 = vadd.f32 %v1046, %v1052
      %v1056 = vadd.f32 %v1047, %v1052
      %v1057 = vld [vmem:[%s820] sm:$0x1]
      %v1058 = vld [vmem:[%s824] sm:$0x1]
      %v1059 = vsel %vm987, %v1054, 0.0
      %1060 = vadd.xlane.f32.xlu0 %v1059
      %v1061 = vpop.xlane.xlu0 %1060
      %v1062 = vsel %vm987, %v1055, 0.0
      %1063 = vadd.xlane.f32.xlu0 %v1062
      %v1064 = vpop.xlane.xlu0 %1063
      %v1065 = vsel %vm991, %v1056, 0.0
      %1066 = vadd.xlane.f32.xlu0 %v1065
      %v1067 = vpop.xlane.xlu0 %1066
      %v1068 = vmul.f32 %v1061, %v1008
      %v1069 = vmul.f32 %v1064, %v1008
      %v1070 = vmul.f32 %v1067, %v1008
      %v1071 = vsub.f32 %v1054, %v1068
      %v1072 = vsub.f32 %v1055, %v1069
      %v1073 = vsub.f32 %v1056, %v1070
      %v1074 = vmul.f32 %v1071, %v1071
      %v1075 = vmul.f32 %v1072, %v1072
      %v1076 = vmul.f32 %v1073, %v1073
      %v1077 = vsel %vm987, %v1074, 0.0
      %1078 = vadd.xlane.f32.xlu0 %v1077
      %v1079 = vpop.xlane.xlu0 %1078
      %v1080 = vsel %vm987, %v1075, 0.0
      %1081 = vadd.xlane.f32.xlu0 %v1080
      %v1082 = vpop.xlane.xlu0 %1081
      %v1083 = vsel %vm991, %v1076, 0.0
      %1084 = vadd.xlane.f32.xlu0 %v1083
      %v1085 = vpop.xlane.xlu0 %1084
      %v1086 = vmul.f32 %v1079, %v1008
      %v1087 = vmul.f32 %v1082, %v1008
      %v1088 = vmul.f32 %v1085, %v1008
      %v1089 = vadd.f32 %v1086, 1e-05
      %v1090 = vadd.f32 %v1087, 1e-05
      %v1091 = vadd.f32 %v1088, 1e-05
      %v1092 = vrsqrt.pop %v1089
      %v1093 = vrsqrt.pop %v1090
      %v1094 = vrsqrt.pop %v1091
      %v1095 = vmul.f32 %v1071, %v1092
      %v1096 = vmul.f32 %v1072, %v1093
      %v1097 = vmul.f32 %v1073, %v1094
      %v1099 = vlaneseq
      %v1100 = vshrl.u32 %v1099, 7
      %v1101 = vsub.s32 0, %v1100
      %v1102 = vrot.slane %v1057, %v1101
      %v1104 = vmul.f32 %v1095, %v1102
      %v1105 = vmul.f32 %v1096, %v1102
      %v1106 = vmul.f32 %v1097, %v1102
      %v1108 = vlaneseq
      %v1109 = vshrl.u32 %v1108, 7
      %v1110 = vsub.s32 0, %v1109
      %v1111 = vrot.slane %v1058, %v1110
      %v1113 = vadd.f32 %v1104, %v1111
      %v1114 = vadd.f32 %v1105, %v1111
      %v1115 = vadd.f32 %v1106, %v1111
      %v1116 = vld [vmem:[%s829] sm:$0xff]
      %v1117 = vld [vmem:[%s829 + $0x8] sm:$0xff]
      %v1118 = vld [vmem:[%s829 + $0x10] sm:$0xff]
      %v1119 = vld [vmem:[%s829 + $0x18] sm:$0xff]
      %v1120 = vld [vmem:[%s833] sm:$0x1]
      %v1122 = vlaneseq
      %v1123 = vshrl.u32 %v1122, 7
      %v1124 = vsub.s32 0, %v1123
      %v1125 = vrot.slane %v1120, %v1124
      %v1128 = vsel %vm987, %v1113, 0
      %v1131 = vsel %vm987, %v1114, 0
      %v1134 = vsel %vm987, %v1115, 0
      %1136 = vmatprep.subr.mxu0 0.0
      %1137 = vmatpush1.msra.mxu0 0.0
      %1138 = vmatprep.subr.mxu0 0.0
      %1139 = vmatpush1.msra.mxu0 0.0
      %1140 = vmatprep.subr.mxu0 0.0
      %1141 = vmatpush1.msra.mxu0 0.0
      %1142 = vmatprep.subr.mxu0 0.0
      %1143 = vmatpush1.msra.mxu0 0.0
      %1144 = vmatprep.subr.mxu0 0.0
      %1145 = vmatpush1.msra.mxu0 0.0
      %1146 = vmatprep.subr.mxu0 0.0
      %1147 = vmatpush1.msra.mxu0 0.0
      %1148 = vmatprep.subr.mxu0 0.0
      %1149 = vmatpush1.msra.mxu0 0.0
      %1150 = vmatprep.subr.mxu0 0.0
      %1151 = vmatpush1.msra.mxu0 0.0
      %1152 = vmatprep.subr.mxu0 0.0
      %1153 = vmatpush1.msra.mxu0 0.0
      %1154 = vmatprep.subr.mxu0 0.0
      %1155 = vmatpush1.msra.mxu0 0.0
      %1156 = vmatprep.subr.mxu0 0.0
      %1157 = vmatpush1.msra.mxu0 0.0
      %1158 = vmatprep.subr.mxu0 0.0
      %1159 = vmatpush1.msra.mxu0 0.0
      %1160 = vmatprep.subr.mxu0 0.0
      %1161 = vmatpush1.msra.mxu0 %v1119
      %1162 = vmatprep.subr.mxu0 0.0
      %1163 = vmatpush1.msra.mxu0 %v1118
      %1164 = vmatprep.subr.mxu0 0.0
      %1165 = vmatpush1.msra.mxu0 %v1117
      %1166 = vmatprep.subr.mxu0 0.0
      %1167 = vmatpush1.msra.mxu0 %v1116
      %1168 = vmatprep.subr.mxu0 0.0
      %1169 = vmatpush2.msra.mxu0 0.0
      %1170 = vmatprep.subr.mxu0 0.0
      %1171 = vmatpush2.msra.mxu0 0.0
      %1172 = vmatprep.subr.mxu0 0.0
      %1173 = vmatpush2.msra.mxu0 0.0
      %1174 = vmatprep.subr.mxu0 0.0
      %1175 = vmatpush2.msra.mxu0 0.0
      %1176 = vmatprep.subr.mxu0 0.0
      %1177 = vmatpush2.msra.mxu0 0.0
      %1178 = vmatprep.subr.mxu0 0.0
      %1179 = vmatpush2.msra.mxu0 0.0
      %1180 = vmatprep.subr.mxu0 0.0
      %1181 = vmatpush2.msra.mxu0 0.0
      %1182 = vmatprep.subr.mxu0 0.0
      %1183 = vmatpush2.msra.mxu0 0.0
      %1184 = vmatprep.subr.mxu0 0.0
      %1185 = vmatpush2.msra.mxu0 0.0
      %1186 = vmatprep.subr.mxu0 0.0
      %1187 = vmatpush2.msra.mxu0 0.0
      %1188 = vmatprep.subr.mxu0 0.0
      %1189 = vmatpush2.msra.mxu0 0.0
      %1190 = vmatprep.subr.mxu0 0.0
      %1191 = vmatpush2.msra.mxu0 0.0
      %1192 = vmatprep.subr.mxu0 0.0
      %1193 = vmatpush2.msra.mxu0 0.0
      %1194 = vmatprep.subr.mxu0 0.0
      %1195 = vmatpush2.msra.mxu0 0.0
      %1196 = vmatprep.subr.mxu0 0.0
      %1197 = vmatpush2.msra.mxu0 0.0
      %1198 = vmatprep.subr.mxu0 0.0
      %1199 = vmatpush2.msra.mxu0 0.0
      %1200 = vmatprep.mubr.f32.mxu0 0.0
      %1201 = vmatmul.mubr.f32.gmra.mxu0 %v1128
      %v1202 = vpop.f32.mrf.mxu0
      %v1203 = vadd.f32 %v1125, %v1202
      %v1204 = vpop.f32.mrf.mxu0
      %1205 = vmatprep.mubr.f32.mxu0 0.0
      %1206 = vmatmul.mubr.f32.gmra.mxu0 %v1131
      %v1207 = vpop.f32.mrf.mxu0
      %v1208 = vadd.f32 %v1125, %v1207
      %v1209 = vpop.f32.mrf.mxu0
      %1210 = vmatprep.mubr.f32.mxu0 0.0
      %1211 = vmatmul.mubr.f32.gmra.mxu0 %v1134
      %v1212 = vpop.f32.mrf.mxu0
      %v1213 = vadd.f32 %v1125, %v1212
      %v1214 = vpop.f32.mrf.mxu0
      %1215 = vdwg.mxu0
      %v1216 = vld [vmem:[%s838] sm:$0xff]
      %v1217 = vld [vmem:[%s838 + $0x8] sm:$0xff]
      %v1218 = vld [vmem:[%s838 + $0x10] sm:$0xff]
      %v1219 = vld [vmem:[%s838 + $0x18] sm:$0xff]
      %1223 = vrot.lane.b32.xlu0 %v1203, 96
      %v1224 = vpop.permute.xlu0 %1223
      %1225 = vrot.lane.b32.xlu0 %v1208, 96
      %v1226 = vpop.permute.xlu0 %1225
      %1227 = vrot.lane.b32.xlu0 %v1213, 96
      %v1228 = vpop.permute.xlu0 %1227
      %vm1229 = vcmask 64512
      %v1230 = vsel %vm1229, %v1203, 0
      %v1232 = vsel %vm1229, %v1208, 0
      %v1234 = vsel %vm1229, %v1213, 0
      %v1236 = vsel %vm1229, %v1224, 0
      %v1238 = vsel %vm1229, %v1226, 0
      %v1240 = vsel %vm1229, %v1228, 0
      %1242 = vmatprep.subr.mxu0 0.0
      %1243 = vmatpush1.xpose.msra.mxu0 0.0
      %1244 = vmatprep.subr.mxu0 0.0
      %1245 = vmatpush1.xpose.msra.mxu0 0.0
      %1246 = vmatprep.subr.mxu0 0.0
      %1247 = vmatpush1.xpose.msra.mxu0 0.0
      %1248 = vmatprep.subr.mxu0 0.0
      %1249 = vmatpush1.xpose.msra.mxu0 0.0
      %1250 = vmatprep.subr.mxu0 0.0
      %1251 = vmatpush1.xpose.msra.mxu0 0.0
      %1252 = vmatprep.subr.mxu0 0.0
      %1253 = vmatpush1.xpose.msra.mxu0 0.0
      %1254 = vmatprep.subr.mxu0 0.0
      %1255 = vmatpush1.xpose.msra.mxu0 0.0
      %1256 = vmatprep.subr.mxu0 0.0
      %1257 = vmatpush1.xpose.msra.mxu0 0.0
      %1258 = vmatprep.subr.mxu0 0.0
      %1259 = vmatpush1.xpose.msra.mxu0 0.0
      %1260 = vmatprep.subr.mxu0 0.0
      %1261 = vmatpush1.xpose.msra.mxu0 0.0
      %1262 = vmatprep.subr.mxu0 0.0
      %1263 = vmatpush1.xpose.msra.mxu0 0.0
      %1264 = vmatprep.subr.mxu0 0.0
      %1265 = vmatpush1.xpose.msra.mxu0 0.0
      %1266 = vmatprep.subr.mxu0 0.0
      %1267 = vmatpush1.xpose.msra.mxu0 0.0
      %1268 = vmatprep.subr.mxu0 0.0
      %1269 = vmatpush1.xpose.msra.mxu0 %v1240
      %1270 = vmatprep.subr.mxu0 0.0
      %1271 = vmatpush1.xpose.msra.mxu0 %v1238
      %1272 = vmatprep.subr.mxu0 0.0
      %1273 = vmatpush1.xpose.msra.mxu0 %v1236
      %1274 = vmatprep.subr.mxu0 0.0
      %1275 = vmatpush2.xpose.msra.mxu0 0.0
      %1276 = vmatprep.subr.mxu0 0.0
      %1277 = vmatpush2.xpose.msra.mxu0 0.0
      %1278 = vmatprep.subr.mxu0 0.0
      %1279 = vmatpush2.xpose.msra.mxu0 0.0
      %1280 = vmatprep.subr.mxu0 0.0
      %1281 = vmatpush2.xpose.msra.mxu0 0.0
      %1282 = vmatprep.subr.mxu0 0.0
      %1283 = vmatpush2.xpose.msra.mxu0 0.0
      %1284 = vmatprep.subr.mxu0 0.0
      %1285 = vmatpush2.xpose.msra.mxu0 0.0
      %1286 = vmatprep.subr.mxu0 0.0
      %1287 = vmatpush2.xpose.msra.mxu0 0.0
      %1288 = vmatprep.subr.mxu0 0.0
      %1289 = vmatpush2.xpose.msra.mxu0 0.0
      %1290 = vmatprep.subr.mxu0 0.0
      %1291 = vmatpush2.xpose.msra.mxu0 0.0
      %1292 = vmatprep.subr.mxu0 0.0
      %1293 = vmatpush2.xpose.msra.mxu0 0.0
      %1294 = vmatprep.subr.mxu0 0.0
      %1295 = vmatpush2.xpose.msra.mxu0 0.0
      %1296 = vmatprep.subr.mxu0 0.0
      %1297 = vmatpush2.xpose.msra.mxu0 0.0
      %1298 = vmatprep.subr.mxu0 0.0
      %1299 = vmatpush2.xpose.msra.mxu0 0.0
      %1300 = vmatprep.subr.mxu0 0.0
      %1301 = vmatpush2.xpose.msra.mxu0 0.0
      %1302 = vmatprep.subr.mxu0 0.0
      %1303 = vmatpush2.xpose.msra.mxu0 0.0
      %1304 = vmatprep.subr.mxu0 0.0
      %1305 = vmatpush2.xpose.msra.mxu0 0.0
      %1306 = vmatprep.mubr.f32.mxu0 0.0
      %1307 = vmatmul.mubr.f32.gmra.mxu0 %v1230
      %v1308 = vpop.f32.mrf.mxu0
      %v1309 = vadd.f32 0.0, %v1308
      %v1310 = vpop.f32.mrf.mxu0
      %1311 = vmatprep.mubr.f32.mxu0 0.0
      %1312 = vmatmul.mubr.f32.gmra.mxu0 %v1232
      %v1313 = vpop.f32.mrf.mxu0
      %v1314 = vadd.f32 0.0, %v1313
      %v1315 = vpop.f32.mrf.mxu0
      %1316 = vmatprep.mubr.f32.mxu0 0.0
      %1317 = vmatmul.mubr.f32.gmra.mxu0 %v1234
      %v1318 = vpop.f32.mrf.mxu0
      %v1319 = vadd.f32 0.0, %v1318
      %v1320 = vpop.f32.mrf.mxu0
      %1321 = vdwg.mxu0
      %vm1322 = vcmask 138240
      %v1323 = vsel %vm1322, %v1309, -inf
      %1324 = vmax.xlane.f32.xlu0 %v1323
      %v1325 = vpop.xlane.xlu0 %1324
      %v1326 = vsel %vm1322, %v1314, -inf
      %1327 = vmax.xlane.f32.xlu0 %v1326
      %v1328 = vpop.xlane.xlu0 %1327
      %vm1329 = vcmask 131072
      %v1330 = vsel %vm1329, %v1319, -inf
      %1331 = vmax.xlane.f32.xlu0 %v1330
      %v1332 = vpop.xlane.xlu0 %1331
      %v1333 = vsub.f32 %v1309, %v1325
      %v1334 = vsub.f32 %v1314, %v1328
      %v1335 = vsub.f32 %v1319, %v1332
      %v1336 = vmul.f32 %v1333, 1.442695
      %v1337 = vpow.pop %v1336
      %v1338 = vmul.f32 %v1334, 1.442695
      %v1339 = vpow.pop %v1338
      %v1340 = vmul.f32 %v1335, 1.442695
      %v1341 = vpow.pop %v1340
      %v1342 = vsel %vm1322, %v1337, 0.0
      %1343 = vadd.xlane.f32.xlu0 %v1342
      %v1344 = vpop.xlane.xlu0 %1343
      %v1345 = vsel %vm1322, %v1339, 0.0
      %1346 = vadd.xlane.f32.xlu0 %v1345
      %v1347 = vpop.xlane.xlu0 %1346
      %v1348 = vsel %vm1329, %v1341, 0.0
      %1349 = vadd.xlane.f32.xlu0 %v1348
      %v1350 = vpop.xlane.xlu0 %1349
      %v1351 = vrcp.pop %v1344
      %v1352 = vrcp.pop %v1347
      %v1353 = vrcp.pop %v1350
      %v1354 = vmul.f32 %v1337, %v1351
      %v1355 = vmul.f32 %v1339, %v1352
      %v1356 = vmul.f32 %v1341, %v1353
      %1357 = vrot.lane.b32.xlu0 %v1203, 64
      %v1358 = vpop.permute.xlu0 %1357
      %1359 = vrot.lane.b32.xlu0 %v1208, 64
      %v1360 = vpop.permute.xlu0 %1359
      %1361 = vrot.lane.b32.xlu0 %v1213, 64
      %v1362 = vpop.permute.xlu0 %1361
      %v1366 = vsel %vm1322, %v1354, 0
      %v1369 = vsel %vm1322, %v1355, 0
      %v1372 = vsel %vm1322, %v1356, 0
      %vm1374 = vcmask 1040384
      %v1375 = vsel %vm1374, %v1362, 0
      %1377 = vmatprep.subr.mxu0 0.0
      %1378 = vmatpush1.msra.mxu0 0.0
      %1379 = vmatprep.subr.mxu0 0.0
      %1380 = vmatpush1.msra.mxu0 0.0
      %1381 = vmatprep.subr.mxu0 0.0
      %1382 = vmatpush1.msra.mxu0 0.0
      %1383 = vmatprep.subr.mxu0 0.0
      %1384 = vmatpush1.msra.mxu0 0.0
      %1385 = vmatprep.subr.mxu0 0.0
      %1386 = vmatpush1.msra.mxu0 0.0
      %1387 = vmatprep.subr.mxu0 0.0
      %1388 = vmatpush1.msra.mxu0 0.0
      %1389 = vmatprep.subr.mxu0 0.0
      %1390 = vmatpush1.msra.mxu0 0.0
      %1391 = vmatprep.subr.mxu0 0.0
      %1392 = vmatpush1.msra.mxu0 0.0
      %1393 = vmatprep.subr.mxu0 0.0
      %1394 = vmatpush1.msra.mxu0 0.0
      %1395 = vmatprep.subr.mxu0 0.0
      %1396 = vmatpush1.msra.mxu0 0.0
      %1397 = vmatprep.subr.mxu0 0.0
      %1398 = vmatpush1.msra.mxu0 0.0
      %1399 = vmatprep.subr.mxu0 0.0
      %1400 = vmatpush1.msra.mxu0 0.0
      %1401 = vmatprep.subr.mxu0 0.0
      %1402 = vmatpush1.msra.mxu0 0.0
      %1403 = vmatprep.subr.mxu0 0.0
      %1404 = vmatpush1.msra.mxu0 %v1375
      %1405 = vmatprep.subr.mxu0 0.0
      %1406 = vmatpush1.msra.mxu0 %v1360
      %1407 = vmatprep.subr.mxu0 0.0
      %1408 = vmatpush1.msra.mxu0 %v1358
      %1409 = vmatprep.subr.mxu0 0.0
      %1410 = vmatpush2.msra.mxu0 0.0
      %1411 = vmatprep.subr.mxu0 0.0
      %1412 = vmatpush2.msra.mxu0 0.0
      %1413 = vmatprep.subr.mxu0 0.0
      %1414 = vmatpush2.msra.mxu0 0.0
      %1415 = vmatprep.subr.mxu0 0.0
      %1416 = vmatpush2.msra.mxu0 0.0
      %1417 = vmatprep.subr.mxu0 0.0
      %1418 = vmatpush2.msra.mxu0 0.0
      %1419 = vmatprep.subr.mxu0 0.0
      %1420 = vmatpush2.msra.mxu0 0.0
      %1421 = vmatprep.subr.mxu0 0.0
      %1422 = vmatpush2.msra.mxu0 0.0
      %1423 = vmatprep.subr.mxu0 0.0
      %1424 = vmatpush2.msra.mxu0 0.0
      %1425 = vmatprep.subr.mxu0 0.0
      %1426 = vmatpush2.msra.mxu0 0.0
      %1427 = vmatprep.subr.mxu0 0.0
      %1428 = vmatpush2.msra.mxu0 0.0
      %1429 = vmatprep.subr.mxu0 0.0
      %1430 = vmatpush2.msra.mxu0 0.0
      %1431 = vmatprep.subr.mxu0 0.0
      %1432 = vmatpush2.msra.mxu0 0.0
      %1433 = vmatprep.subr.mxu0 0.0
      %1434 = vmatpush2.msra.mxu0 0.0
      %1435 = vmatprep.subr.mxu0 0.0
      %1436 = vmatpush2.msra.mxu0 0.0
      %1437 = vmatprep.subr.mxu0 0.0
      %1438 = vmatpush2.msra.mxu0 0.0
      %1439 = vmatprep.subr.mxu0 0.0
      %1440 = vmatpush2.msra.mxu0 0.0
      %1441 = vmatprep.mubr.f32.mxu0 0.0
      %1442 = vmatmul.mubr.f32.gmra.mxu0 %v1366
      %v1443 = vpop.f32.mrf.mxu0
      %v1444 = vadd.f32 0.0, %v1443
      %v1445 = vpop.f32.mrf.mxu0
      %1446 = vmatprep.mubr.f32.mxu0 0.0
      %1447 = vmatmul.mubr.f32.gmra.mxu0 %v1369
      %v1448 = vpop.f32.mrf.mxu0
      %v1449 = vadd.f32 0.0, %v1448
      %v1450 = vpop.f32.mrf.mxu0
      %1451 = vmatprep.mubr.f32.mxu0 0.0
      %1452 = vmatmul.mubr.f32.gmra.mxu0 %v1372
      %v1453 = vpop.f32.mrf.mxu0
      %v1454 = vadd.f32 0.0, %v1453
      %v1455 = vpop.f32.mrf.mxu0
      %1456 = vdwg.mxu0
      %1457 = vrot.lane.b32.xlu0 %v1203, 120
      %v1458 = vpop.permute.xlu0 %1457
      %1459 = vrot.lane.b32.xlu0 %v1208, 120
      %v1460 = vpop.permute.xlu0 %1459
      %1461 = vrot.lane.b32.xlu0 %v1213, 120
      %v1462 = vpop.permute.xlu0 %1461
      %1463 = vrot.lane.b32.xlu0 %v1203, 88
      %v1464 = vpop.permute.xlu0 %1463
      %1465 = vrot.lane.b32.xlu0 %v1208, 88
      %v1466 = vpop.permute.xlu0 %1465
      %1467 = vrot.lane.b32.xlu0 %v1213, 88
      %v1468 = vpop.permute.xlu0 %1467
      %v1469 = vsel %vm1229, %v1458, 0
      %v1471 = vsel %vm1229, %v1460, 0
      %v1473 = vsel %vm1229, %v1462, 0
      %v1475 = vsel %vm1229, %v1464, 0
      %v1477 = vsel %vm1229, %v1466, 0
      %v1479 = vsel %vm1229, %v1468, 0
      %1481 = vmatprep.subr.mxu0 0.0
      %1482 = vmatpush1.xpose.msra.mxu0 0.0
      %1483 = vmatprep.subr.mxu0 0.0
      %1484 = vmatpush1.xpose.msra.mxu0 0.0
      %1485 = vmatprep.subr.mxu0 0.0
      %1486 = vmatpush1.xpose.msra.mxu0 0.0
      %1487 = vmatprep.subr.mxu0 0.0
      %1488 = vmatpush1.xpose.msra.mxu0 0.0
      %1489 = vmatprep.subr.mxu0 0.0
      %1490 = vmatpush1.xpose.msra.mxu0 0.0
      %1491 = vmatprep.subr.mxu0 0.0
      %1492 = vmatpush1.xpose.msra.mxu0 0.0
      %1493 = vmatprep.subr.mxu0 0.0
      %1494 = vmatpush1.xpose.msra.mxu0 0.0
      %1495 = vmatprep.subr.mxu0 0.0
      %1496 = vmatpush1.xpose.msra.mxu0 0.0
      %1497 = vmatprep.subr.mxu0 0.0
      %1498 = vmatpush1.xpose.msra.mxu0 0.0
      %1499 = vmatprep.subr.mxu0 0.0
      %1500 = vmatpush1.xpose.msra.mxu0 0.0
      %1501 = vmatprep.subr.mxu0 0.0
      %1502 = vmatpush1.xpose.msra.mxu0 0.0
      %1503 = vmatprep.subr.mxu0 0.0
      %1504 = vmatpush1.xpose.msra.mxu0 0.0
      %1505 = vmatprep.subr.mxu0 0.0
      %1506 = vmatpush1.xpose.msra.mxu0 0.0
      %1507 = vmatprep.subr.mxu0 0.0
      %1508 = vmatpush1.xpose.msra.mxu0 %v1479
      %1509 = vmatprep.subr.mxu0 0.0
      %1510 = vmatpush1.xpose.msra.mxu0 %v1477
      %1511 = vmatprep.subr.mxu0 0.0
      %1512 = vmatpush1.xpose.msra.mxu0 %v1475
      %1513 = vmatprep.subr.mxu0 0.0
      %1514 = vmatpush2.xpose.msra.mxu0 0.0
      %1515 = vmatprep.subr.mxu0 0.0
      %1516 = vmatpush2.xpose.msra.mxu0 0.0
      %1517 = vmatprep.subr.mxu0 0.0
      %1518 = vmatpush2.xpose.msra.mxu0 0.0
      %1519 = vmatprep.subr.mxu0 0.0
      %1520 = vmatpush2.xpose.msra.mxu0 0.0
      %1521 = vmatprep.subr.mxu0 0.0
      %1522 = vmatpush2.xpose.msra.mxu0 0.0
      %1523 = vmatprep.subr.mxu0 0.0
      %1524 = vmatpush2.xpose.msra.mxu0 0.0
      %1525 = vmatprep.subr.mxu0 0.0
      %1526 = vmatpush2.xpose.msra.mxu0 0.0
      %1527 = vmatprep.subr.mxu0 0.0
      %1528 = vmatpush2.xpose.msra.mxu0 0.0
      %1529 = vmatprep.subr.mxu0 0.0
      %1530 = vmatpush2.xpose.msra.mxu0 0.0
      %1531 = vmatprep.subr.mxu0 0.0
      %1532 = vmatpush2.xpose.msra.mxu0 0.0
      %1533 = vmatprep.subr.mxu0 0.0
      %1534 = vmatpush2.xpose.msra.mxu0 0.0
      %1535 = vmatprep.subr.mxu0 0.0
      %1536 = vmatpush2.xpose.msra.mxu0 0.0
      %1537 = vmatprep.subr.mxu0 0.0
      %1538 = vmatpush2.xpose.msra.mxu0 0.0
      %1539 = vmatprep.subr.mxu0 0.0
      %1540 = vmatpush2.xpose.msra.mxu0 0.0
      %1541 = vmatprep.subr.mxu0 0.0
      %1542 = vmatpush2.xpose.msra.mxu0 0.0
      %1543 = vmatprep.subr.mxu0 0.0
      %1544 = vmatpush2.xpose.msra.mxu0 0.0
      %1545 = vmatprep.mubr.f32.mxu0 0.0
      %1546 = vmatmul.mubr.f32.gmra.mxu0 %v1469
      %v1547 = vpop.f32.mrf.mxu0
      %v1548 = vadd.f32 0.0, %v1547
      %v1549 = vpop.f32.mrf.mxu0
      %1550 = vmatprep.mubr.f32.mxu0 0.0
      %1551 = vmatmul.mubr.f32.gmra.mxu0 %v1471
      %v1552 = vpop.f32.mrf.mxu0
      %v1553 = vadd.f32 0.0, %v1552
      %v1554 = vpop.f32.mrf.mxu0
      %1555 = vmatprep.mubr.f32.mxu0 0.0
      %1556 = vmatmul.mubr.f32.gmra.mxu0 %v1473
      %v1557 = vpop.f32.mrf.mxu0
      %v1558 = vadd.f32 0.0, %v1557
      %v1559 = vpop.f32.mrf.mxu0
      %1560 = vdwg.mxu0
      %v1561 = vsel %vm1322, %v1548, -inf
      %1562 = vmax.xlane.f32.xlu0 %v1561
      %v1563 = vpop.xlane.xlu0 %1562
      %v1564 = vsel %vm1322, %v1553, -inf
      %1565 = vmax.xlane.f32.xlu0 %v1564
      %v1566 = vpop.xlane.xlu0 %1565
      %v1567 = vsel %vm1329, %v1558, -inf
      %1568 = vmax.xlane.f32.xlu0 %v1567
      %v1569 = vpop.xlane.xlu0 %1568
      %v1570 = vsub.f32 %v1548, %v1563
      %v1571 = vsub.f32 %v1553, %v1566
      %v1572 = vsub.f32 %v1558, %v1569
      %v1573 = vmul.f32 %v1570, 1.442695
      %v1574 = vpow.pop %v1573
      %v1575 = vmul.f32 %v1571, 1.442695
      %v1576 = vpow.pop %v1575
      %v1577 = vmul.f32 %v1572, 1.442695
      %v1578 = vpow.pop %v1577
      %v1579 = vsel %vm1322, %v1574, 0.0
      %1580 = vadd.xlane.f32.xlu0 %v1579
      %v1581 = vpop.xlane.xlu0 %1580
      %v1582 = vsel %vm1322, %v1576, 0.0
      %1583 = vadd.xlane.f32.xlu0 %v1582
      %v1584 = vpop.xlane.xlu0 %1583
      %v1585 = vsel %vm1329, %v1578, 0.0
      %1586 = vadd.xlane.f32.xlu0 %v1585
      %v1587 = vpop.xlane.xlu0 %1586
      %v1588 = vrcp.pop %v1581
      %v1589 = vrcp.pop %v1584
      %v1590 = vrcp.pop %v1587
      %v1591 = vmul.f32 %v1574, %v1588
      %v1592 = vmul.f32 %v1576, %v1589
      %v1593 = vmul.f32 %v1578, %v1590
      %1594 = vrot.lane.b32.xlu0 %v1203, 56
      %v1595 = vpop.permute.xlu0 %1594
      %1596 = vrot.lane.b32.xlu0 %v1208, 56
      %v1597 = vpop.permute.xlu0 %1596
      %1598 = vrot.lane.b32.xlu0 %v1213, 56
      %v1599 = vpop.permute.xlu0 %1598
      %v1603 = vsel %vm1322, %v1591, 0
      %v1606 = vsel %vm1322, %v1592, 0
      %v1609 = vsel %vm1322, %v1593, 0
      %v1611 = vsel %vm1374, %v1599, 0
      %1613 = vmatprep.subr.mxu0 0.0
      %1614 = vmatpush1.msra.mxu0 0.0
      %1615 = vmatprep.subr.mxu0 0.0
      %1616 = vmatpush1.msra.mxu0 0.0
      %1617 = vmatprep.subr.mxu0 0.0
      %1618 = vmatpush1.msra.mxu0 0.0
      %1619 = vmatprep.subr.mxu0 0.0
      %1620 = vmatpush1.msra.mxu0 0.0
      %1621 = vmatprep.subr.mxu0 0.0
      %1622 = vmatpush1.msra.mxu0 0.0
      %1623 = vmatprep.subr.mxu0 0.0
      %1624 = vmatpush1.msra.mxu0 0.0
      %1625 = vmatprep.subr.mxu0 0.0
      %1626 = vmatpush1.msra.mxu0 0.0
      %1627 = vmatprep.subr.mxu0 0.0
      %1628 = vmatpush1.msra.mxu0 0.0
      %1629 = vmatprep.subr.mxu0 0.0
      %1630 = vmatpush1.msra.mxu0 0.0
      %1631 = vmatprep.subr.mxu0 0.0
      %1632 = vmatpush1.msra.mxu0 0.0
      %1633 = vmatprep.subr.mxu0 0.0
      %1634 = vmatpush1.msra.mxu0 0.0
      %1635 = vmatprep.subr.mxu0 0.0
      %1636 = vmatpush1.msra.mxu0 0.0
      %1637 = vmatprep.subr.mxu0 0.0
      %1638 = vmatpush1.msra.mxu0 0.0
      %1639 = vmatprep.subr.mxu0 0.0
      %1640 = vmatpush1.msra.mxu0 %v1611
      %1641 = vmatprep.subr.mxu0 0.0
      %1642 = vmatpush1.msra.mxu0 %v1597
      %1643 = vmatprep.subr.mxu0 0.0
      %1644 = vmatpush1.msra.mxu0 %v1595
      %1645 = vmatprep.subr.mxu0 0.0
      %1646 = vmatpush2.msra.mxu0 0.0
      %1647 = vmatprep.subr.mxu0 0.0
      %1648 = vmatpush2.msra.mxu0 0.0
      %1649 = vmatprep.subr.mxu0 0.0
      %1650 = vmatpush2.msra.mxu0 0.0
      %1651 = vmatprep.subr.mxu0 0.0
      %1652 = vmatpush2.msra.mxu0 0.0
      %1653 = vmatprep.subr.mxu0 0.0
      %1654 = vmatpush2.msra.mxu0 0.0
      %1655 = vmatprep.subr.mxu0 0.0
      %1656 = vmatpush2.msra.mxu0 0.0
      %1657 = vmatprep.subr.mxu0 0.0
      %1658 = vmatpush2.msra.mxu0 0.0
      %1659 = vmatprep.subr.mxu0 0.0
      %1660 = vmatpush2.msra.mxu0 0.0
      %1661 = vmatprep.subr.mxu0 0.0
      %1662 = vmatpush2.msra.mxu0 0.0
      %1663 = vmatprep.subr.mxu0 0.0
      %1664 = vmatpush2.msra.mxu0 0.0
      %1665 = vmatprep.subr.mxu0 0.0
      %1666 = vmatpush2.msra.mxu0 0.0
      %1667 = vmatprep.subr.mxu0 0.0
      %1668 = vmatpush2.msra.mxu0 0.0
      %1669 = vmatprep.subr.mxu0 0.0
      %1670 = vmatpush2.msra.mxu0 0.0
      %1671 = vmatprep.subr.mxu0 0.0
      %1672 = vmatpush2.msra.mxu0 0.0
      %1673 = vmatprep.subr.mxu0 0.0
      %1674 = vmatpush2.msra.mxu0 0.0
      %1675 = vmatprep.subr.mxu0 0.0
      %1676 = vmatpush2.msra.mxu0 0.0
      %1677 = vmatprep.mubr.f32.mxu0 0.0
      %1678 = vmatmul.mubr.f32.gmra.mxu0 %v1603
      %v1679 = vpop.f32.mrf.mxu0
      %v1680 = vadd.f32 0.0, %v1679
      %v1681 = vpop.f32.mrf.mxu0
      %1682 = vmatprep.mubr.f32.mxu0 0.0
      %1683 = vmatmul.mubr.f32.gmra.mxu0 %v1606
      %v1684 = vpop.f32.mrf.mxu0
      %v1685 = vadd.f32 0.0, %v1684
      %v1686 = vpop.f32.mrf.mxu0
      %1687 = vmatprep.mubr.f32.mxu0 0.0
      %1688 = vmatmul.mubr.f32.gmra.mxu0 %v1609
      %v1689 = vpop.f32.mrf.mxu0
      %v1690 = vadd.f32 0.0, %v1689
      %v1691 = vpop.f32.mrf.mxu0
      %1692 = vdwg.mxu0
      %v1694 = vsel %vm1229, %v1680, 0
      %v1697 = vsel %vm1229, %v1685, 0
      %v1700 = vsel %vm1229, %v1690, 0
      %1702 = vmatprep.subr.mxu0 0.0
      %1703 = vmatpush1.msra.mxu0 0.0
      %1704 = vmatprep.subr.mxu0 0.0
      %1705 = vmatpush1.msra.mxu0 0.0
      %1706 = vmatprep.subr.mxu0 0.0
      %1707 = vmatpush1.msra.mxu0 0.0
      %1708 = vmatprep.subr.mxu0 0.0
      %1709 = vmatpush1.msra.mxu0 0.0
      %1710 = vmatprep.subr.mxu0 0.0
      %1711 = vmatpush1.msra.mxu0 0.0
      %1712 = vmatprep.subr.mxu0 0.0
      %1713 = vmatpush1.msra.mxu0 0.0
      %1714 = vmatprep.subr.mxu0 0.0
      %1715 = vmatpush1.msra.mxu0 0.0
      %1716 = vmatprep.subr.mxu0 0.0
      %1717 = vmatpush1.msra.mxu0 0.0
      %1718 = vmatprep.subr.mxu0 0.0
      %1719 = vmatpush1.msra.mxu0 0.0
      %1720 = vmatprep.subr.mxu0 0.0
      %1721 = vmatpush1.msra.mxu0 0.0
      %1722 = vmatprep.subr.mxu0 0.0
      %1723 = vmatpush1.msra.mxu0 0.0
      %1724 = vmatprep.subr.mxu0 0.0
      %1725 = vmatpush1.msra.mxu0 0.0
      %1726 = vmatprep.subr.mxu0 0.0
      %1727 = vmatpush1.msra.mxu0 0.0
      %1728 = vmatprep.subr.mxu0 0.0
      %1729 = vmatpush1.msra.mxu0 0.0
      %1730 = vmatprep.subr.mxu0 0.0
      %1731 = vmatpush1.msra.mxu0 0.0
      %1732 = vmatprep.subr.mxu0 0.0
      %1733 = vmatpush1.msra.mxu0 %v1217
      %1734 = vmatprep.subr.mxu0 0.0
      %1735 = vmatpush2.msra.mxu0 0.0
      %1736 = vmatprep.subr.mxu0 0.0
      %1737 = vmatpush2.msra.mxu0 0.0
      %1738 = vmatprep.subr.mxu0 0.0
      %1739 = vmatpush2.msra.mxu0 0.0
      %1740 = vmatprep.subr.mxu0 0.0
      %1741 = vmatpush2.msra.mxu0 0.0
      %1742 = vmatprep.subr.mxu0 0.0
      %1743 = vmatpush2.msra.mxu0 0.0
      %1744 = vmatprep.subr.mxu0 0.0
      %1745 = vmatpush2.msra.mxu0 0.0
      %1746 = vmatprep.subr.mxu0 0.0
      %1747 = vmatpush2.msra.mxu0 0.0
      %1748 = vmatprep.subr.mxu0 0.0
      %1749 = vmatpush2.msra.mxu0 0.0
      %1750 = vmatprep.subr.mxu0 0.0
      %1751 = vmatpush2.msra.mxu0 0.0
      %1752 = vmatprep.subr.mxu0 0.0
      %1753 = vmatpush2.msra.mxu0 0.0
      %1754 = vmatprep.subr.mxu0 0.0
      %1755 = vmatpush2.msra.mxu0 0.0
      %1756 = vmatprep.subr.mxu0 0.0
      %1757 = vmatpush2.msra.mxu0 0.0
      %1758 = vmatprep.subr.mxu0 0.0
      %1759 = vmatpush2.msra.mxu0 0.0
      %1760 = vmatprep.subr.mxu0 0.0
      %1761 = vmatpush2.msra.mxu0 0.0
      %1762 = vmatprep.subr.mxu0 0.0
      %1763 = vmatpush2.msra.mxu0 0.0
      %1764 = vmatprep.subr.mxu0 0.0
      %1765 = vmatpush2.msra.mxu0 0.0
      %1766 = vmatprep.mubr.f32.mxu0 0.0
      %1767 = vmatmul.mubr.f32.gmra.mxu0 %v1694
      %v1768 = vpop.f32.mrf.mxu0
      %v1769 = vadd.f32 0.0, %v1768
      %v1770 = vpop.f32.mrf.mxu0
      %1771 = vmatprep.mubr.f32.mxu0 0.0
      %1772 = vmatmul.mubr.f32.gmra.mxu0 %v1697
      %v1773 = vpop.f32.mrf.mxu0
      %v1774 = vadd.f32 0.0, %v1773
      %v1775 = vpop.f32.mrf.mxu0
      %1776 = vmatprep.mubr.f32.mxu0 0.0
      %1777 = vmatmul.mubr.f32.gmra.mxu0 %v1700
      %v1778 = vpop.f32.mrf.mxu0
      %v1779 = vadd.f32 0.0, %v1778
      %v1780 = vpop.f32.mrf.mxu0
      %1781 = vdwg.mxu0
      %v1783 = vsel %vm1229, %v1444, 0
      %v1786 = vsel %vm1229, %v1449, 0
      %v1789 = vsel %vm1229, %v1454, 0
      %1791 = vmatprep.subr.mxu0 0.0
      %1792 = vmatpush1.msra.mxu0 0.0
      %1793 = vmatprep.subr.mxu0 0.0
      %1794 = vmatpush1.msra.mxu0 0.0
      %1795 = vmatprep.subr.mxu0 0.0
      %1796 = vmatpush1.msra.mxu0 0.0
      %1797 = vmatprep.subr.mxu0 0.0
      %1798 = vmatpush1.msra.mxu0 0.0
      %1799 = vmatprep.subr.mxu0 0.0
      %1800 = vmatpush1.msra.mxu0 0.0
      %1801 = vmatprep.subr.mxu0 0.0
      %1802 = vmatpush1.msra.mxu0 0.0
      %1803 = vmatprep.subr.mxu0 0.0
      %1804 = vmatpush1.msra.mxu0 0.0
      %1805 = vmatprep.subr.mxu0 0.0
      %1806 = vmatpush1.msra.mxu0 0.0
      %1807 = vmatprep.subr.mxu0 0.0
      %1808 = vmatpush1.msra.mxu0 0.0
      %1809 = vmatprep.subr.mxu0 0.0
      %1810 = vmatpush1.msra.mxu0 0.0
      %1811 = vmatprep.subr.mxu0 0.0
      %1812 = vmatpush1.msra.mxu0 0.0
      %1813 = vmatprep.subr.mxu0 0.0
      %1814 = vmatpush1.msra.mxu0 0.0
      %1815 = vmatprep.subr.mxu0 0.0
      %1816 = vmatpush1.msra.mxu0 0.0
      %1817 = vmatprep.subr.mxu0 0.0
      %1818 = vmatpush1.msra.mxu0 0.0
      %1819 = vmatprep.subr.mxu0 0.0
      %1820 = vmatpush1.msra.mxu0 0.0
      %1821 = vmatprep.subr.mxu0 0.0
      %1822 = vmatpush1.msra.mxu0 %v1216
      %1823 = vmatprep.subr.mxu0 0.0
      %1824 = vmatpush2.msra.mxu0 0.0
      %1825 = vmatprep.subr.mxu0 0.0
      %1826 = vmatpush2.msra.mxu0 0.0
      %1827 = vmatprep.subr.mxu0 0.0
      %1828 = vmatpush2.msra.mxu0 0.0
      %1829 = vmatprep.subr.mxu0 0.0
      %1830 = vmatpush2.msra.mxu0 0.0
      %1831 = vmatprep.subr.mxu0 0.0
      %1832 = vmatpush2.msra.mxu0 0.0
      %1833 = vmatprep.subr.mxu0 0.0
      %1834 = vmatpush2.msra.mxu0 0.0
      %1835 = vmatprep.subr.mxu0 0.0
      %1836 = vmatpush2.msra.mxu0 0.0
      %1837 = vmatprep.subr.mxu0 0.0
      %1838 = vmatpush2.msra.mxu0 0.0
      %1839 = vmatprep.subr.mxu0 0.0
      %1840 = vmatpush2.msra.mxu0 0.0
      %1841 = vmatprep.subr.mxu0 0.0
      %1842 = vmatpush2.msra.mxu0 0.0
      %1843 = vmatprep.subr.mxu0 0.0
      %1844 = vmatpush2.msra.mxu0 0.0
      %1845 = vmatprep.subr.mxu0 0.0
      %1846 = vmatpush2.msra.mxu0 0.0
      %1847 = vmatprep.subr.mxu0 0.0
      %1848 = vmatpush2.msra.mxu0 0.0
      %1849 = vmatprep.subr.mxu0 0.0
      %1850 = vmatpush2.msra.mxu0 0.0
      %1851 = vmatprep.subr.mxu0 0.0
      %1852 = vmatpush2.msra.mxu0 0.0
      %1853 = vmatprep.subr.mxu0 0.0
      %1854 = vmatpush2.msra.mxu0 0.0
      %1855 = vmatprep.mubr.f32.mxu0 0.0
      %1856 = vmatmul.mubr.f32.gmra.mxu0 %v1783
      %v1857 = vpop.f32.mrf.mxu0
      %v1858 = vadd.f32 %v1769, %v1857
      %v1859 = vpop.f32.mrf.mxu0
      %1860 = vmatprep.mubr.f32.mxu0 0.0
      %1861 = vmatmul.mubr.f32.gmra.mxu0 %v1786
      %v1862 = vpop.f32.mrf.mxu0
      %v1863 = vadd.f32 %v1774, %v1862
      %v1864 = vpop.f32.mrf.mxu0
      %1865 = vmatprep.mubr.f32.mxu0 0.0
      %1866 = vmatmul.mubr.f32.gmra.mxu0 %v1789
      %v1867 = vpop.f32.mrf.mxu0
      %v1868 = vadd.f32 %v1779, %v1867
      %v1869 = vpop.f32.mrf.mxu0
      %1870 = vdwg.mxu0
      %1871 = vrot.lane.b32.xlu0 %v1203, 112
      %v1872 = vpop.permute.xlu0 %1871
      %1873 = vrot.lane.b32.xlu0 %v1208, 112
      %v1874 = vpop.permute.xlu0 %1873
      %1875 = vrot.lane.b32.xlu0 %v1213, 112
      %v1876 = vpop.permute.xlu0 %1875
      %1877 = vrot.lane.b32.xlu0 %v1203, 80
      %v1878 = vpop.permute.xlu0 %1877
      %1879 = vrot.lane.b32.xlu0 %v1208, 80
      %v1880 = vpop.permute.xlu0 %1879
      %1881 = vrot.lane.b32.xlu0 %v1213, 80
      %v1882 = vpop.permute.xlu0 %1881
      %v1883 = vsel %vm1229, %v1872, 0
      %v1885 = vsel %vm1229, %v1874, 0
      %v1887 = vsel %vm1229, %v1876, 0
      %v1889 = vsel %vm1229, %v1878, 0
      %v1891 = vsel %vm1229, %v1880, 0
      %v1893 = vsel %vm1229, %v1882, 0
      %1895 = vmatprep.subr.mxu0 0.0
      %1896 = vmatpush1.xpose.msra.mxu0 0.0
      %1897 = vmatprep.subr.mxu0 0.0
      %1898 = vmatpush1.xpose.msra.mxu0 0.0
      %1899 = vmatprep.subr.mxu0 0.0
      %1900 = vmatpush1.xpose.msra.mxu0 0.0
      %1901 = vmatprep.subr.mxu0 0.0
      %1902 = vmatpush1.xpose.msra.mxu0 0.0
      %1903 = vmatprep.subr.mxu0 0.0
      %1904 = vmatpush1.xpose.msra.mxu0 0.0
      %1905 = vmatprep.subr.mxu0 0.0
      %1906 = vmatpush1.xpose.msra.mxu0 0.0
      %1907 = vmatprep.subr.mxu0 0.0
      %1908 = vmatpush1.xpose.msra.mxu0 0.0
      %1909 = vmatprep.subr.mxu0 0.0
      %1910 = vmatpush1.xpose.msra.mxu0 0.0
      %1911 = vmatprep.subr.mxu0 0.0
      %1912 = vmatpush1.xpose.msra.mxu0 0.0
      %1913 = vmatprep.subr.mxu0 0.0
      %1914 = vmatpush1.xpose.msra.mxu0 0.0
      %1915 = vmatprep.subr.mxu0 0.0
      %1916 = vmatpush1.xpose.msra.mxu0 0.0
      %1917 = vmatprep.subr.mxu0 0.0
      %1918 = vmatpush1.xpose.msra.mxu0 0.0
      %1919 = vmatprep.subr.mxu0 0.0
      %1920 = vmatpush1.xpose.msra.mxu0 0.0
      %1921 = vmatprep.subr.mxu0 0.0
      %1922 = vmatpush1.xpose.msra.mxu0 %v1893
      %1923 = vmatprep.subr.mxu0 0.0
      %1924 = vmatpush1.xpose.msra.mxu0 %v1891
      %1925 = vmatprep.subr.mxu0 0.0
      %1926 = vmatpush1.xpose.msra.mxu0 %v1889
      %1927 = vmatprep.subr.mxu0 0.0
      %1928 = vmatpush2.xpose.msra.mxu0 0.0
      %1929 = vmatprep.subr.mxu0 0.0
      %1930 = vmatpush2.xpose.msra.mxu0 0.0
      %1931 = vmatprep.subr.mxu0 0.0
      %1932 = vmatpush2.xpose.msra.mxu0 0.0
      %1933 = vmatprep.subr.mxu0 0.0
      %1934 = vmatpush2.xpose.msra.mxu0 0.0
      %1935 = vmatprep.subr.mxu0 0.0
      %1936 = vmatpush2.xpose.msra.mxu0 0.0
      %1937 = vmatprep.subr.mxu0 0.0
      %1938 = vmatpush2.xpose.msra.mxu0 0.0
      %1939 = vmatprep.subr.mxu0 0.0
      %1940 = vmatpush2.xpose.msra.mxu0 0.0
      %1941 = vmatprep.subr.mxu0 0.0
      %1942 = vmatpush2.xpose.msra.mxu0 0.0
      %1943 = vmatprep.subr.mxu0 0.0
      %1944 = vmatpush2.xpose.msra.mxu0 0.0
      %1945 = vmatprep.subr.mxu0 0.0
      %1946 = vmatpush2.xpose.msra.mxu0 0.0
      %1947 = vmatprep.subr.mxu0 0.0
      %1948 = vmatpush2.xpose.msra.mxu0 0.0
      %1949 = vmatprep.subr.mxu0 0.0
      %1950 = vmatpush2.xpose.msra.mxu0 0.0
      %1951 = vmatprep.subr.mxu0 0.0
      %1952 = vmatpush2.xpose.msra.mxu0 0.0
      %1953 = vmatprep.subr.mxu0 0.0
      %1954 = vmatpush2.xpose.msra.mxu0 0.0
      %1955 = vmatprep.subr.mxu0 0.0
      %1956 = vmatpush2.xpose.msra.mxu0 0.0
      %1957 = vmatprep.subr.mxu0 0.0
      %1958 = vmatpush2.xpose.msra.mxu0 0.0
      %1959 = vmatprep.mubr.f32.mxu0 0.0
      %1960 = vmatmul.mubr.f32.gmra.mxu0 %v1883
      %v1961 = vpop.f32.mrf.mxu0
      %v1962 = vadd.f32 0.0, %v1961
      %v1963 = vpop.f32.mrf.mxu0
      %1964 = vmatprep.mubr.f32.mxu0 0.0
      %1965 = vmatmul.mubr.f32.gmra.mxu0 %v1885
      %v1966 = vpop.f32.mrf.mxu0
      %v1967 = vadd.f32 0.0, %v1966
      %v1968 = vpop.f32.mrf.mxu0
      %1969 = vmatprep.mubr.f32.mxu0 0.0
      %1970 = vmatmul.mubr.f32.gmra.mxu0 %v1887
      %v1971 = vpop.f32.mrf.mxu0
      %v1972 = vadd.f32 0.0, %v1971
      %v1973 = vpop.f32.mrf.mxu0
      %1974 = vdwg.mxu0
      %v1975 = vsel %vm1322, %v1962, -inf
      %1976 = vmax.xlane.f32.xlu0 %v1975
      %v1977 = vpop.xlane.xlu0 %1976
      %v1978 = vsel %vm1322, %v1967, -inf
      %1979 = vmax.xlane.f32.xlu0 %v1978
      %v1980 = vpop.xlane.xlu0 %1979
      %v1981 = vsel %vm1329, %v1972, -inf
      %1982 = vmax.xlane.f32.xlu0 %v1981
      %v1983 = vpop.xlane.xlu0 %1982
      %v1984 = vsub.f32 %v1962, %v1977
      %v1985 = vsub.f32 %v1967, %v1980
      %v1986 = vsub.f32 %v1972, %v1983
      %v1987 = vmul.f32 %v1984, 1.442695
      %v1988 = vpow.pop %v1987
      %v1989 = vmul.f32 %v1985, 1.442695
      %v1990 = vpow.pop %v1989
      %v1991 = vmul.f32 %v1986, 1.442695
      %v1992 = vpow.pop %v1991
      %v1993 = vsel %vm1322, %v1988, 0.0
      %1994 = vadd.xlane.f32.xlu0 %v1993
      %v1995 = vpop.xlane.xlu0 %1994
      %v1996 = vsel %vm1322, %v1990, 0.0
      %1997 = vadd.xlane.f32.xlu0 %v1996
      %v1998 = vpop.xlane.xlu0 %1997
      %v1999 = vsel %vm1329, %v1992, 0.0
      %2000 = vadd.xlane.f32.xlu0 %v1999
      %v2001 = vpop.xlane.xlu0 %2000
      %v2002 = vrcp.pop %v1995
      %v2003 = vrcp.pop %v1998
      %v2004 = vrcp.pop %v2001
      %v2005 = vmul.f32 %v1988, %v2002
      %v2006 = vmul.f32 %v1990, %v2003
      %v2007 = vmul.f32 %v1992, %v2004
      %2008 = vrot.lane.b32.xlu0 %v1203, 48
      %v2009 = vpop.permute.xlu0 %2008
      %2010 = vrot.lane.b32.xlu0 %v1208, 48
      %v2011 = vpop.permute.xlu0 %2010
      %2012 = vrot.lane.b32.xlu0 %v1213, 48
      %v2013 = vpop.permute.xlu0 %2012
      %v2017 = vsel %vm1322, %v2005, 0
      %v2020 = vsel %vm1322, %v2006, 0
      %v2023 = vsel %vm1322, %v2007, 0
      %v2025 = vsel %vm1374, %v2013, 0
      %2027 = vmatprep.subr.mxu0 0.0
      %2028 = vmatpush1.msra.mxu0 0.0
      %2029 = vmatprep.subr.mxu0 0.0
      %2030 = vmatpush1.msra.mxu0 0.0
      %2031 = vmatprep.subr.mxu0 0.0
      %2032 = vmatpush1.msra.mxu0 0.0
      %2033 = vmatprep.subr.mxu0 0.0
      %2034 = vmatpush1.msra.mxu0 0.0
      %2035 = vmatprep.subr.mxu0 0.0
      %2036 = vmatpush1.msra.mxu0 0.0
      %2037 = vmatprep.subr.mxu0 0.0
      %2038 = vmatpush1.msra.mxu0 0.0
      %2039 = vmatprep.subr.mxu0 0.0
      %2040 = vmatpush1.msra.mxu0 0.0
      %2041 = vmatprep.subr.mxu0 0.0
      %2042 = vmatpush1.msra.mxu0 0.0
      %2043 = vmatprep.subr.mxu0 0.0
      %2044 = vmatpush1.msra.mxu0 0.0
      %2045 = vmatprep.subr.mxu0 0.0
      %2046 = vmatpush1.msra.mxu0 0.0
      %2047 = vmatprep.subr.mxu0 0.0
      %2048 = vmatpush1.msra.mxu0 0.0
      %2049 = vmatprep.subr.mxu0 0.0
      %2050 = vmatpush1.msra.mxu0 0.0
      %2051 = vmatprep.subr.mxu0 0.0
      %2052 = vmatpush1.msra.mxu0 0.0
      %2053 = vmatprep.subr.mxu0 0.0
      %2054 = vmatpush1.msra.mxu0 %v2025
      %2055 = vmatprep.subr.mxu0 0.0
      %2056 = vmatpush1.msra.mxu0 %v2011
      %2057 = vmatprep.subr.mxu0 0.0
      %2058 = vmatpush1.msra.mxu0 %v2009
      %2059 = vmatprep.subr.mxu0 0.0
      %2060 = vmatpush2.msra.mxu0 0.0
      %2061 = vmatprep.subr.mxu0 0.0
      %2062 = vmatpush2.msra.mxu0 0.0
      %2063 = vmatprep.subr.mxu0 0.0
      %2064 = vmatpush2.msra.mxu0 0.0
      %2065 = vmatprep.subr.mxu0 0.0
      %2066 = vmatpush2.msra.mxu0 0.0
      %2067 = vmatprep.subr.mxu0 0.0
      %2068 = vmatpush2.msra.mxu0 0.0
      %2069 = vmatprep.subr.mxu0 0.0
      %2070 = vmatpush2.msra.mxu0 0.0
      %2071 = vmatprep.subr.mxu0 0.0
      %2072 = vmatpush2.msra.mxu0 0.0
      %2073 = vmatprep.subr.mxu0 0.0
      %2074 = vmatpush2.msra.mxu0 0.0
      %2075 = vmatprep.subr.mxu0 0.0
      %2076 = vmatpush2.msra.mxu0 0.0
      %2077 = vmatprep.subr.mxu0 0.0
      %2078 = vmatpush2.msra.mxu0 0.0
      %2079 = vmatprep.subr.mxu0 0.0
      %2080 = vmatpush2.msra.mxu0 0.0
      %2081 = vmatprep.subr.mxu0 0.0
      %2082 = vmatpush2.msra.mxu0 0.0
      %2083 = vmatprep.subr.mxu0 0.0
      %2084 = vmatpush2.msra.mxu0 0.0
      %2085 = vmatprep.subr.mxu0 0.0
      %2086 = vmatpush2.msra.mxu0 0.0
      %2087 = vmatprep.subr.mxu0 0.0
      %2088 = vmatpush2.msra.mxu0 0.0
      %2089 = vmatprep.subr.mxu0 0.0
      %2090 = vmatpush2.msra.mxu0 0.0
      %2091 = vmatprep.mubr.f32.mxu0 0.0
      %2092 = vmatmul.mubr.f32.gmra.mxu0 %v2017
      %v2093 = vpop.f32.mrf.mxu0
      %v2094 = vadd.f32 0.0, %v2093
      %v2095 = vpop.f32.mrf.mxu0
      %2096 = vmatprep.mubr.f32.mxu0 0.0
      %2097 = vmatmul.mubr.f32.gmra.mxu0 %v2020
      %v2098 = vpop.f32.mrf.mxu0
      %v2099 = vadd.f32 0.0, %v2098
      %v2100 = vpop.f32.mrf.mxu0
      %2101 = vmatprep.mubr.f32.mxu0 0.0
      %2102 = vmatmul.mubr.f32.gmra.mxu0 %v2023
      %v2103 = vpop.f32.mrf.mxu0
      %v2104 = vadd.f32 0.0, %v2103
      %v2105 = vpop.f32.mrf.mxu0
      %2106 = vdwg.mxu0
      %v2108 = vsel %vm1229, %v2094, 0
      %v2111 = vsel %vm1229, %v2099, 0
      %v2114 = vsel %vm1229, %v2104, 0
      %2116 = vmatprep.subr.mxu0 0.0
      %2117 = vmatpush1.msra.mxu0 0.0
      %2118 = vmatprep.subr.mxu0 0.0
      %2119 = vmatpush1.msra.mxu0 0.0
      %2120 = vmatprep.subr.mxu0 0.0
      %2121 = vmatpush1.msra.mxu0 0.0
      %2122 = vmatprep.subr.mxu0 0.0
      %2123 = vmatpush1.msra.mxu0 0.0
      %2124 = vmatprep.subr.mxu0 0.0
      %2125 = vmatpush1.msra.mxu0 0.0
      %2126 = vmatprep.subr.mxu0 0.0
      %2127 = vmatpush1.msra.mxu0 0.0
      %2128 = vmatprep.subr.mxu0 0.0
      %2129 = vmatpush1.msra.mxu0 0.0
      %2130 = vmatprep.subr.mxu0 0.0
      %2131 = vmatpush1.msra.mxu0 0.0
      %2132 = vmatprep.subr.mxu0 0.0
      %2133 = vmatpush1.msra.mxu0 0.0
      %2134 = vmatprep.subr.mxu0 0.0
      %2135 = vmatpush1.msra.mxu0 0.0
      %2136 = vmatprep.subr.mxu0 0.0
      %2137 = vmatpush1.msra.mxu0 0.0
      %2138 = vmatprep.subr.mxu0 0.0
      %2139 = vmatpush1.msra.mxu0 0.0
      %2140 = vmatprep.subr.mxu0 0.0
      %2141 = vmatpush1.msra.mxu0 0.0
      %2142 = vmatprep.subr.mxu0 0.0
      %2143 = vmatpush1.msra.mxu0 0.0
      %2144 = vmatprep.subr.mxu0 0.0
      %2145 = vmatpush1.msra.mxu0 0.0
      %2146 = vmatprep.subr.mxu0 0.0
      %2147 = vmatpush1.msra.mxu0 %v1218
      %2148 = vmatprep.subr.mxu0 0.0
      %2149 = vmatpush2.msra.mxu0 0.0
      %2150 = vmatprep.subr.mxu0 0.0
      %2151 = vmatpush2.msra.mxu0 0.0
      %2152 = vmatprep.subr.mxu0 0.0
      %2153 = vmatpush2.msra.mxu0 0.0
      %2154 = vmatprep.subr.mxu0 0.0
      %2155 = vmatpush2.msra.mxu0 0.0
      %2156 = vmatprep.subr.mxu0 0.0
      %2157 = vmatpush2.msra.mxu0 0.0
      %2158 = vmatprep.subr.mxu0 0.0
      %2159 = vmatpush2.msra.mxu0 0.0
      %2160 = vmatprep.subr.mxu0 0.0
      %2161 = vmatpush2.msra.mxu0 0.0
      %2162 = vmatprep.subr.mxu0 0.0
      %2163 = vmatpush2.msra.mxu0 0.0
      %2164 = vmatprep.subr.mxu0 0.0
      %2165 = vmatpush2.msra.mxu0 0.0
      %2166 = vmatprep.subr.mxu0 0.0
      %2167 = vmatpush2.msra.mxu0 0.0
      %2168 = vmatprep.subr.mxu0 0.0
      %2169 = vmatpush2.msra.mxu0 0.0
      %2170 = vmatprep.subr.mxu0 0.0
      %2171 = vmatpush2.msra.mxu0 0.0
      %2172 = vmatprep.subr.mxu0 0.0
      %2173 = vmatpush2.msra.mxu0 0.0
      %2174 = vmatprep.subr.mxu0 0.0
      %2175 = vmatpush2.msra.mxu0 0.0
      %2176 = vmatprep.subr.mxu0 0.0
      %2177 = vmatpush2.msra.mxu0 0.0
      %2178 = vmatprep.subr.mxu0 0.0
      %2179 = vmatpush2.msra.mxu0 0.0
      %2180 = vmatprep.mubr.f32.mxu0 0.0
      %2181 = vmatmul.mubr.f32.gmra.mxu0 %v2108
      %v2182 = vpop.f32.mrf.mxu0
      %v2183 = vadd.f32 0.0, %v2182
      %v2184 = vpop.f32.mrf.mxu0
      %2185 = vmatprep.mubr.f32.mxu0 0.0
      %2186 = vmatmul.mubr.f32.gmra.mxu0 %v2111
      %v2187 = vpop.f32.mrf.mxu0
      %v2188 = vadd.f32 0.0, %v2187
      %v2189 = vpop.f32.mrf.mxu0
      %2190 = vmatprep.mubr.f32.mxu0 0.0
      %2191 = vmatmul.mubr.f32.gmra.mxu0 %v2114
      %v2192 = vpop.f32.mrf.mxu0
      %v2193 = vadd.f32 0.0, %v2192
      %v2194 = vpop.f32.mrf.mxu0
      %2195 = vdwg.mxu0
      %v2196 = vadd.f32 %v1858, %v2183
      %v2197 = vadd.f32 %v1863, %v2188
      %v2198 = vadd.f32 %v1868, %v2193
      %2199 = vrot.lane.b32.xlu0 %v1203, 104
      %v2200 = vpop.permute.xlu0 %2199
      %2201 = vrot.lane.b32.xlu0 %v1208, 104
      %v2202 = vpop.permute.xlu0 %2201
      %2203 = vrot.lane.b32.xlu0 %v1213, 104
      %v2204 = vpop.permute.xlu0 %2203
      %2205 = vrot.lane.b32.xlu0 %v1203, 72
      %v2206 = vpop.permute.xlu0 %2205
      %2207 = vrot.lane.b32.xlu0 %v1208, 72
      %v2208 = vpop.permute.xlu0 %2207
      %2209 = vrot.lane.b32.xlu0 %v1213, 72
      %v2210 = vpop.permute.xlu0 %2209
      %v2211 = vsel %vm1229, %v2200, 0
      %v2213 = vsel %vm1229, %v2202, 0
      %v2215 = vsel %vm1229, %v2204, 0
      %v2217 = vsel %vm1229, %v2206, 0
      %v2219 = vsel %vm1229, %v2208, 0
      %v2221 = vsel %vm1229, %v2210, 0
      %2223 = vmatprep.subr.mxu0 0.0
      %2224 = vmatpush1.xpose.msra.mxu0 0.0
      %2225 = vmatprep.subr.mxu0 0.0
      %2226 = vmatpush1.xpose.msra.mxu0 0.0
      %2227 = vmatprep.subr.mxu0 0.0
      %2228 = vmatpush1.xpose.msra.mxu0 0.0
      %2229 = vmatprep.subr.mxu0 0.0
      %2230 = vmatpush1.xpose.msra.mxu0 0.0
      %2231 = vmatprep.subr.mxu0 0.0
      %2232 = vmatpush1.xpose.msra.mxu0 0.0
      %2233 = vmatprep.subr.mxu0 0.0
      %2234 = vmatpush1.xpose.msra.mxu0 0.0
      %2235 = vmatprep.subr.mxu0 0.0
      %2236 = vmatpush1.xpose.msra.mxu0 0.0
      %2237 = vmatprep.subr.mxu0 0.0
      %2238 = vmatpush1.xpose.msra.mxu0 0.0
      %2239 = vmatprep.subr.mxu0 0.0
      %2240 = vmatpush1.xpose.msra.mxu0 0.0
      %2241 = vmatprep.subr.mxu0 0.0
      %2242 = vmatpush1.xpose.msra.mxu0 0.0
      %2243 = vmatprep.subr.mxu0 0.0
      %2244 = vmatpush1.xpose.msra.mxu0 0.0
      %2245 = vmatprep.subr.mxu0 0.0
      %2246 = vmatpush1.xpose.msra.mxu0 0.0
      %2247 = vmatprep.subr.mxu0 0.0
      %2248 = vmatpush1.xpose.msra.mxu0 0.0
      %2249 = vmatprep.subr.mxu0 0.0
      %2250 = vmatpush1.xpose.msra.mxu0 %v2221
      %2251 = vmatprep.subr.mxu0 0.0
      %2252 = vmatpush1.xpose.msra.mxu0 %v2219
      %2253 = vmatprep.subr.mxu0 0.0
      %2254 = vmatpush1.xpose.msra.mxu0 %v2217
      %2255 = vmatprep.subr.mxu0 0.0
      %2256 = vmatpush2.xpose.msra.mxu0 0.0
      %2257 = vmatprep.subr.mxu0 0.0
      %2258 = vmatpush2.xpose.msra.mxu0 0.0
      %2259 = vmatprep.subr.mxu0 0.0
      %2260 = vmatpush2.xpose.msra.mxu0 0.0
      %2261 = vmatprep.subr.mxu0 0.0
      %2262 = vmatpush2.xpose.msra.mxu0 0.0
      %2263 = vmatprep.subr.mxu0 0.0
      %2264 = vmatpush2.xpose.msra.mxu0 0.0
      %2265 = vmatprep.subr.mxu0 0.0
      %2266 = vmatpush2.xpose.msra.mxu0 0.0
      %2267 = vmatprep.subr.mxu0 0.0
      %2268 = vmatpush2.xpose.msra.mxu0 0.0
      %2269 = vmatprep.subr.mxu0 0.0
      %2270 = vmatpush2.xpose.msra.mxu0 0.0
      %2271 = vmatprep.subr.mxu0 0.0
      %2272 = vmatpush2.xpose.msra.mxu0 0.0
      %2273 = vmatprep.subr.mxu0 0.0
      %2274 = vmatpush2.xpose.msra.mxu0 0.0
      %2275 = vmatprep.subr.mxu0 0.0
      %2276 = vmatpush2.xpose.msra.mxu0 0.0
      %2277 = vmatprep.subr.mxu0 0.0
      %2278 = vmatpush2.xpose.msra.mxu0 0.0
      %2279 = vmatprep.subr.mxu0 0.0
      %2280 = vmatpush2.xpose.msra.mxu0 0.0
      %2281 = vmatprep.subr.mxu0 0.0
      %2282 = vmatpush2.xpose.msra.mxu0 0.0
      %2283 = vmatprep.subr.mxu0 0.0
      %2284 = vmatpush2.xpose.msra.mxu0 0.0
      %2285 = vmatprep.subr.mxu0 0.0
      %2286 = vmatpush2.xpose.msra.mxu0 0.0
      %2287 = vmatprep.mubr.f32.mxu0 0.0
      %2288 = vmatmul.mubr.f32.gmra.mxu0 %v2211
      %v2289 = vpop.f32.mrf.mxu0
      %v2290 = vadd.f32 0.0, %v2289
      %v2291 = vpop.f32.mrf.mxu0
      %2292 = vmatprep.mubr.f32.mxu0 0.0
      %2293 = vmatmul.mubr.f32.gmra.mxu0 %v2213
      %v2294 = vpop.f32.mrf.mxu0
      %v2295 = vadd.f32 0.0, %v2294
      %v2296 = vpop.f32.mrf.mxu0
      %2297 = vmatprep.mubr.f32.mxu0 0.0
      %2298 = vmatmul.mubr.f32.gmra.mxu0 %v2215
      %v2299 = vpop.f32.mrf.mxu0
      %v2300 = vadd.f32 0.0, %v2299
      %v2301 = vpop.f32.mrf.mxu0
      %2302 = vdwg.mxu0
      %v2303 = vsel %vm1322, %v2290, -inf
      %2304 = vmax.xlane.f32.xlu0 %v2303
      %v2305 = vpop.xlane.xlu0 %2304
      %v2306 = vsel %vm1322, %v2295, -inf
      %2307 = vmax.xlane.f32.xlu0 %v2306
      %v2308 = vpop.xlane.xlu0 %2307
      %v2309 = vsel %vm1329, %v2300, -inf
      %2310 = vmax.xlane.f32.xlu0 %v2309
      %v2311 = vpop.xlane.xlu0 %2310
      %v2312 = vsub.f32 %v2290, %v2305
      %v2313 = vsub.f32 %v2295, %v2308
      %v2314 = vsub.f32 %v2300, %v2311
      %v2315 = vmul.f32 %v2312, 1.442695
      %v2316 = vpow.pop %v2315
      %v2317 = vmul.f32 %v2313, 1.442695
      %v2318 = vpow.pop %v2317
      %v2319 = vmul.f32 %v2314, 1.442695
      %v2320 = vpow.pop %v2319
      %v2321 = vsel %vm1322, %v2316, 0.0
      %2322 = vadd.xlane.f32.xlu0 %v2321
      %v2323 = vpop.xlane.xlu0 %2322
      %v2324 = vsel %vm1322, %v2318, 0.0
      %2325 = vadd.xlane.f32.xlu0 %v2324
      %v2326 = vpop.xlane.xlu0 %2325
      %v2327 = vsel %vm1329, %v2320, 0.0
      %2328 = vadd.xlane.f32.xlu0 %v2327
      %v2329 = vpop.xlane.xlu0 %2328
      %v2330 = vrcp.pop %v2323
      %v2331 = vrcp.pop %v2326
      %v2332 = vrcp.pop %v2329
      %v2333 = vmul.f32 %v2316, %v2330
      %v2334 = vmul.f32 %v2318, %v2331
      %v2335 = vmul.f32 %v2320, %v2332
      %2336 = vrot.lane.b32.xlu0 %v1203, 40
      %v2337 = vpop.permute.xlu0 %2336
      %2338 = vrot.lane.b32.xlu0 %v1208, 40
      %v2339 = vpop.permute.xlu0 %2338
      %2340 = vrot.lane.b32.xlu0 %v1213, 40
      %v2341 = vpop.permute.xlu0 %2340
      %v2345 = vsel %vm1322, %v2333, 0
      %v2348 = vsel %vm1322, %v2334, 0
      %v2351 = vsel %vm1322, %v2335, 0
      %v2353 = vsel %vm1374, %v2341, 0
      %2355 = vmatprep.subr.mxu0 0.0
      %2356 = vmatpush1.msra.mxu0 0.0
      %2357 = vmatprep.subr.mxu0 0.0
      %2358 = vmatpush1.msra.mxu0 0.0
      %2359 = vmatprep.subr.mxu0 0.0
      %2360 = vmatpush1.msra.mxu0 0.0
      %2361 = vmatprep.subr.mxu0 0.0
      %2362 = vmatpush1.msra.mxu0 0.0
      %2363 = vmatprep.subr.mxu0 0.0
      %2364 = vmatpush1.msra.mxu0 0.0
      %2365 = vmatprep.subr.mxu0 0.0
      %2366 = vmatpush1.msra.mxu0 0.0
      %2367 = vmatprep.subr.mxu0 0.0
      %2368 = vmatpush1.msra.mxu0 0.0
      %2369 = vmatprep.subr.mxu0 0.0
      %2370 = vmatpush1.msra.mxu0 0.0
      %2371 = vmatprep.subr.mxu0 0.0
      %2372 = vmatpush1.msra.mxu0 0.0
      %2373 = vmatprep.subr.mxu0 0.0
      %2374 = vmatpush1.msra.mxu0 0.0
      %2375 = vmatprep.subr.mxu0 0.0
      %2376 = vmatpush1.msra.mxu0 0.0
      %2377 = vmatprep.subr.mxu0 0.0
      %2378 = vmatpush1.msra.mxu0 0.0
      %2379 = vmatprep.subr.mxu0 0.0
      %2380 = vmatpush1.msra.mxu0 0.0
      %2381 = vmatprep.subr.mxu0 0.0
      %2382 = vmatpush1.msra.mxu0 %v2353
      %2383 = vmatprep.subr.mxu0 0.0
      %2384 = vmatpush1.msra.mxu0 %v2339
      %2385 = vmatprep.subr.mxu0 0.0
      %2386 = vmatpush1.msra.mxu0 %v2337
      %2387 = vmatprep.subr.mxu0 0.0
      %2388 = vmatpush2.msra.mxu0 0.0
      %2389 = vmatprep.subr.mxu0 0.0
      %2390 = vmatpush2.msra.mxu0 0.0
      %2391 = vmatprep.subr.mxu0 0.0
      %2392 = vmatpush2.msra.mxu0 0.0
      %2393 = vmatprep.subr.mxu0 0.0
      %2394 = vmatpush2.msra.mxu0 0.0
      %2395 = vmatprep.subr.mxu0 0.0
      %2396 = vmatpush2.msra.mxu0 0.0
      %2397 = vmatprep.subr.mxu0 0.0
      %2398 = vmatpush2.msra.mxu0 0.0
      %2399 = vmatprep.subr.mxu0 0.0
      %2400 = vmatpush2.msra.mxu0 0.0
      %2401 = vmatprep.subr.mxu0 0.0
      %2402 = vmatpush2.msra.mxu0 0.0
      %2403 = vmatprep.subr.mxu0 0.0
      %2404 = vmatpush2.msra.mxu0 0.0
      %2405 = vmatprep.subr.mxu0 0.0
      %2406 = vmatpush2.msra.mxu0 0.0
      %2407 = vmatprep.subr.mxu0 0.0
      %2408 = vmatpush2.msra.mxu0 0.0
      %2409 = vmatprep.subr.mxu0 0.0
      %2410 = vmatpush2.msra.mxu0 0.0
      %2411 = vmatprep.subr.mxu0 0.0
      %2412 = vmatpush2.msra.mxu0 0.0
      %2413 = vmatprep.subr.mxu0 0.0
      %2414 = vmatpush2.msra.mxu0 0.0
      %2415 = vmatprep.subr.mxu0 0.0
      %2416 = vmatpush2.msra.mxu0 0.0
      %2417 = vmatprep.subr.mxu0 0.0
      %2418 = vmatpush2.msra.mxu0 0.0
      %2419 = vmatprep.mubr.f32.mxu0 0.0
      %2420 = vmatmul.mubr.f32.gmra.mxu0 %v2345
      %v2421 = vpop.f32.mrf.mxu0
      %v2422 = vadd.f32 0.0, %v2421
      %v2423 = vpop.f32.mrf.mxu0
      %2424 = vmatprep.mubr.f32.mxu0 0.0
      %2425 = vmatmul.mubr.f32.gmra.mxu0 %v2348
      %v2426 = vpop.f32.mrf.mxu0
      %v2427 = vadd.f32 0.0, %v2426
      %v2428 = vpop.f32.mrf.mxu0
      %2429 = vmatprep.mubr.f32.mxu0 0.0
      %2430 = vmatmul.mubr.f32.gmra.mxu0 %v2351
      %v2431 = vpop.f32.mrf.mxu0
      %v2432 = vadd.f32 0.0, %v2431
      %v2433 = vpop.f32.mrf.mxu0
      %2434 = vdwg.mxu0
      %v2436 = vsel %vm1229, %v2422, 0
      %v2439 = vsel %vm1229, %v2427, 0
      %v2442 = vsel %vm1229, %v2432, 0
      %2444 = vmatprep.subr.mxu0 0.0
      %2445 = vmatpush1.msra.mxu0 0.0
      %2446 = vmatprep.subr.mxu0 0.0
      %2447 = vmatpush1.msra.mxu0 0.0
      %2448 = vmatprep.subr.mxu0 0.0
      %2449 = vmatpush1.msra.mxu0 0.0
      %2450 = vmatprep.subr.mxu0 0.0
      %2451 = vmatpush1.msra.mxu0 0.0
      %2452 = vmatprep.subr.mxu0 0.0
      %2453 = vmatpush1.msra.mxu0 0.0
      %2454 = vmatprep.subr.mxu0 0.0
      %2455 = vmatpush1.msra.mxu0 0.0
      %2456 = vmatprep.subr.mxu0 0.0
      %2457 = vmatpush1.msra.mxu0 0.0
      %2458 = vmatprep.subr.mxu0 0.0
      %2459 = vmatpush1.msra.mxu0 0.0
      %2460 = vmatprep.subr.mxu0 0.0
      %2461 = vmatpush1.msra.mxu0 0.0
      %2462 = vmatprep.subr.mxu0 0.0
      %2463 = vmatpush1.msra.mxu0 0.0
      %2464 = vmatprep.subr.mxu0 0.0
      %2465 = vmatpush1.msra.mxu0 0.0
      %2466 = vmatprep.subr.mxu0 0.0
      %2467 = vmatpush1.msra.mxu0 0.0
      %2468 = vmatprep.subr.mxu0 0.0
      %2469 = vmatpush1.msra.mxu0 0.0
      %2470 = vmatprep.subr.mxu0 0.0
      %2471 = vmatpush1.msra.mxu0 0.0
      %2472 = vmatprep.subr.mxu0 0.0
      %2473 = vmatpush1.msra.mxu0 0.0
      %2474 = vmatprep.subr.mxu0 0.0
      %2475 = vmatpush1.msra.mxu0 %v1219
      %2476 = vmatprep.subr.mxu0 0.0
      %2477 = vmatpush2.msra.mxu0 0.0
      %2478 = vmatprep.subr.mxu0 0.0
      %2479 = vmatpush2.msra.mxu0 0.0
      %2480 = vmatprep.subr.mxu0 0.0
      %2481 = vmatpush2.msra.mxu0 0.0
      %2482 = vmatprep.subr.mxu0 0.0
      %2483 = vmatpush2.msra.mxu0 0.0
      %2484 = vmatprep.subr.mxu0 0.0
      %2485 = vmatpush2.msra.mxu0 0.0
      %2486 = vmatprep.subr.mxu0 0.0
      %2487 = vmatpush2.msra.mxu0 0.0
      %2488 = vmatprep.subr.mxu0 0.0
      %2489 = vmatpush2.msra.mxu0 0.0
      %2490 = vmatprep.subr.mxu0 0.0
      %2491 = vmatpush2.msra.mxu0 0.0
      %2492 = vmatprep.subr.mxu0 0.0
      %2493 = vmatpush2.msra.mxu0 0.0
      %2494 = vmatprep.subr.mxu0 0.0
      %2495 = vmatpush2.msra.mxu0 0.0
      %2496 = vmatprep.subr.mxu0 0.0
      %2497 = vmatpush2.msra.mxu0 0.0
      %2498 = vmatprep.subr.mxu0 0.0
      %2499 = vmatpush2.msra.mxu0 0.0
      %2500 = vmatprep.subr.mxu0 0.0
      %2501 = vmatpush2.msra.mxu0 0.0
      %2502 = vmatprep.subr.mxu0 0.0
      %2503 = vmatpush2.msra.mxu0 0.0
      %2504 = vmatprep.subr.mxu0 0.0
      %2505 = vmatpush2.msra.mxu0 0.0
      %2506 = vmatprep.subr.mxu0 0.0
      %2507 = vmatpush2.msra.mxu0 0.0
      %2508 = vmatprep.mubr.f32.mxu0 0.0
      %2509 = vmatmul.mubr.f32.gmra.mxu0 %v2436
      %v2510 = vpop.f32.mrf.mxu0
      %v2511 = vadd.f32 0.0, %v2510
      %v2512 = vpop.f32.mrf.mxu0
      %2513 = vmatprep.mubr.f32.mxu0 0.0
      %2514 = vmatmul.mubr.f32.gmra.mxu0 %v2439
      %v2515 = vpop.f32.mrf.mxu0
      %v2516 = vadd.f32 0.0, %v2515
      %v2517 = vpop.f32.mrf.mxu0
      %2518 = vmatprep.mubr.f32.mxu0 0.0
      %2519 = vmatmul.mubr.f32.gmra.mxu0 %v2442
      %v2520 = vpop.f32.mrf.mxu0
      %v2521 = vadd.f32 0.0, %v2520
      %v2522 = vpop.f32.mrf.mxu0
      %2523 = vdwg.mxu0
      %v2524 = vadd.f32 %v2196, %v2511
      %v2525 = vadd.f32 %v2197, %v2516
      %v2526 = vadd.f32 %v2198, %v2521
      %v2527 = vadd.f32 %v1054, %v2524
      %v2528 = vadd.f32 %v1055, %v2525
      %v2529 = vadd.f32 %v1056, %v2526
      %v2530 = vld [vmem:[%s842] sm:$0x1]
      %v2532 = vlaneseq
      %v2533 = vshrl.u32 %v2532, 7
      %v2534 = vsub.s32 0, %v2533
      %v2535 = vrot.slane %v2530, %v2534
      %v2537 = vadd.f32 %v2527, %v2535
      %v2538 = vadd.f32 %v2528, %v2535
      %v2539 = vadd.f32 %v2529, %v2535
      %v2540 = vld [vmem:[%s846] sm:$0x1]
      %v2541 = vld [vmem:[%s850] sm:$0x1]
      %v2542 = vsel %vm987, %v2537, 0.0
      %2543 = vadd.xlane.f32.xlu0 %v2542
      %v2544 = vpop.xlane.xlu0 %2543
      %v2545 = vsel %vm987, %v2538, 0.0
      %2546 = vadd.xlane.f32.xlu0 %v2545
      %v2547 = vpop.xlane.xlu0 %2546
      %v2548 = vsel %vm991, %v2539, 0.0
      %2549 = vadd.xlane.f32.xlu0 %v2548
      %v2550 = vpop.xlane.xlu0 %2549
      %v2551 = vmul.f32 %v2544, %v1008
      %v2552 = vmul.f32 %v2547, %v1008
      %v2553 = vmul.f32 %v2550, %v1008
      %v2554 = vsub.f32 %v2537, %v2551
      %v2555 = vsub.f32 %v2538, %v2552
      %v2556 = vsub.f32 %v2539, %v2553
      %v2557 = vmul.f32 %v2554, %v2554
      %v2558 = vmul.f32 %v2555, %v2555
      %v2559 = vmul.f32 %v2556, %v2556
      %v2560 = vsel %vm987, %v2557, 0.0
      %2561 = vadd.xlane.f32.xlu0 %v2560
      %v2562 = vpop.xlane.xlu0 %2561
      %v2563 = vsel %vm987, %v2558, 0.0
      %2564 = vadd.xlane.f32.xlu0 %v2563
      %v2565 = vpop.xlane.xlu0 %2564
      %v2566 = vsel %vm991, %v2559, 0.0
      %2567 = vadd.xlane.f32.xlu0 %v2566
      %v2568 = vpop.xlane.xlu0 %2567
      %v2569 = vmul.f32 %v2562, %v1008
      %v2570 = vmul.f32 %v2565, %v1008
      %v2571 = vmul.f32 %v2568, %v1008
      %v2572 = vadd.f32 %v2569, 1e-05
      %v2573 = vadd.f32 %v2570, 1e-05
      %v2574 = vadd.f32 %v2571, 1e-05
      %v2575 = vrsqrt.pop %v2572
      %v2576 = vrsqrt.pop %v2573
      %v2577 = vrsqrt.pop %v2574
      %v2578 = vmul.f32 %v2554, %v2575
      %v2579 = vmul.f32 %v2555, %v2576
      %v2580 = vmul.f32 %v2556, %v2577
      %v2582 = vlaneseq
      %v2583 = vshrl.u32 %v2582, 7
      %v2584 = vsub.s32 0, %v2583
      %v2585 = vrot.slane %v2540, %v2584
      %v2587 = vmul.f32 %v2578, %v2585
      %v2588 = vmul.f32 %v2579, %v2585
      %v2589 = vmul.f32 %v2580, %v2585
      %v2591 = vlaneseq
      %v2592 = vshrl.u32 %v2591, 7
      %v2593 = vsub.s32 0, %v2592
      %v2594 = vrot.slane %v2541, %v2593
      %v2596 = vadd.f32 %v2587, %v2594
      %v2597 = vadd.f32 %v2588, %v2594
      %v2598 = vadd.f32 %v2589, %v2594
      %v2599 = vld [vmem:[%s855] sm:$0xff]
      %v2600 = vld [vmem:[%s855 + $0x8] sm:$0xff]
      %v2601 = vld [vmem:[%s855 + $0x10] sm:$0xff]
      %v2602 = vld [vmem:[%s855 + $0x18] sm:$0xff]
      %v2603 = vld [vmem:[%s859] sm:$0x1]
      %v2605 = vlaneseq
      %v2606 = vshrl.u32 %v2605, 7
      %v2607 = vsub.s32 0, %v2606
      %v2608 = vrot.slane %v2603, %v2607
      %v2611 = vsel %vm987, %v2596, 0
      %v2614 = vsel %vm987, %v2597, 0
      %v2617 = vsel %vm987, %v2598, 0
      %2619 = vmatprep.subr.mxu0 0.0
      %2620 = vmatpush1.msra.mxu0 0.0
      %2621 = vmatprep.subr.mxu0 0.0
      %2622 = vmatpush1.msra.mxu0 0.0
      %2623 = vmatprep.subr.mxu0 0.0
      %2624 = vmatpush1.msra.mxu0 0.0
      %2625 = vmatprep.subr.mxu0 0.0
      %2626 = vmatpush1.msra.mxu0 0.0
      %2627 = vmatprep.subr.mxu0 0.0
      %2628 = vmatpush1.msra.mxu0 0.0
      %2629 = vmatprep.subr.mxu0 0.0
      %2630 = vmatpush1.msra.mxu0 0.0
      %2631 = vmatprep.subr.mxu0 0.0
      %2632 = vmatpush1.msra.mxu0 0.0
      %2633 = vmatprep.subr.mxu0 0.0
      %2634 = vmatpush1.msra.mxu0 0.0
      %2635 = vmatprep.subr.mxu0 0.0
      %2636 = vmatpush1.msra.mxu0 0.0
      %2637 = vmatprep.subr.mxu0 0.0
      %2638 = vmatpush1.msra.mxu0 0.0
      %2639 = vmatprep.subr.mxu0 0.0
      %2640 = vmatpush1.msra.mxu0 0.0
      %2641 = vmatprep.subr.mxu0 0.0
      %2642 = vmatpush1.msra.mxu0 0.0
      %2643 = vmatprep.subr.mxu0 0.0
      %2644 = vmatpush1.msra.mxu0 %v2602
      %2645 = vmatprep.subr.mxu0 0.0
      %2646 = vmatpush1.msra.mxu0 %v2601
      %2647 = vmatprep.subr.mxu0 0.0
      %2648 = vmatpush1.msra.mxu0 %v2600
      %2649 = vmatprep.subr.mxu0 0.0
      %2650 = vmatpush1.msra.mxu0 %v2599
      %2651 = vmatprep.subr.mxu0 0.0
      %2652 = vmatpush2.msra.mxu0 0.0
      %2653 = vmatprep.subr.mxu0 0.0
      %2654 = vmatpush2.msra.mxu0 0.0
      %2655 = vmatprep.subr.mxu0 0.0
      %2656 = vmatpush2.msra.mxu0 0.0
      %2657 = vmatprep.subr.mxu0 0.0
      %2658 = vmatpush2.msra.mxu0 0.0
      %2659 = vmatprep.subr.mxu0 0.0
      %2660 = vmatpush2.msra.mxu0 0.0
      %2661 = vmatprep.subr.mxu0 0.0
      %2662 = vmatpush2.msra.mxu0 0.0
      %2663 = vmatprep.subr.mxu0 0.0
      %2664 = vmatpush2.msra.mxu0 0.0
      %2665 = vmatprep.subr.mxu0 0.0
      %2666 = vmatpush2.msra.mxu0 0.0
      %2667 = vmatprep.subr.mxu0 0.0
      %2668 = vmatpush2.msra.mxu0 0.0
      %2669 = vmatprep.subr.mxu0 0.0
      %2670 = vmatpush2.msra.mxu0 0.0
      %2671 = vmatprep.subr.mxu0 0.0
      %2672 = vmatpush2.msra.mxu0 0.0
      %2673 = vmatprep.subr.mxu0 0.0
      %2674 = vmatpush2.msra.mxu0 0.0
      %2675 = vmatprep.subr.mxu0 0.0
      %2676 = vmatpush2.msra.mxu0 0.0
      %2677 = vmatprep.subr.mxu0 0.0
      %2678 = vmatpush2.msra.mxu0 0.0
      %2679 = vmatprep.subr.mxu0 0.0
      %2680 = vmatpush2.msra.mxu0 0.0
      %2681 = vmatprep.subr.mxu0 0.0
      %2682 = vmatpush2.msra.mxu0 0.0
      %2683 = vmatprep.mubr.f32.mxu0 0.0
      %2684 = vmatmul.mubr.f32.gmra.mxu0 %v2611
      %v2685 = vpop.f32.mrf.mxu0
      %v2686 = vadd.f32 %v2608, %v2685
      %v2687 = vpop.f32.mrf.mxu0
      %2688 = vmatprep.mubr.f32.mxu0 0.0
      %2689 = vmatmul.mubr.f32.gmra.mxu0 %v2614
      %v2690 = vpop.f32.mrf.mxu0
      %v2691 = vadd.f32 %v2608, %v2690
      %v2692 = vpop.f32.mrf.mxu0
      %2693 = vmatprep.mubr.f32.mxu0 0.0
      %2694 = vmatmul.mubr.f32.gmra.mxu0 %v2617
      %v2695 = vpop.f32.mrf.mxu0
      %v2696 = vadd.f32 %v2608, %v2695
      %v2697 = vpop.f32.mrf.mxu0
      %2698 = vdwg.mxu0
      %v2699 = vmul.f32 %v2686, 1.702
      %v2700 = vmul.f32 %v2691, 1.702
      %v2701 = vmul.f32 %v2696, 1.702
      %v2702 = vxor.u32 %v2699, 2147483648
      %v2703 = vxor.u32 %v2700, 2147483648
      %v2704 = vxor.u32 %v2701, 2147483648
      %v2705 = vmul.f32 %v2702, 1.442695
      %v2706 = vpow.pop %v2705
      %v2707 = vmul.f32 %v2703, 1.442695
      %v2708 = vpow.pop %v2707
      %v2709 = vmul.f32 %v2704, 1.442695
      %v2710 = vpow.pop %v2709
      %v2711 = vadd.f32 %v2706, 1.0
      %v2712 = vadd.f32 %v2708, 1.0
      %v2713 = vadd.f32 %v2710, 1.0
      %v2714 = vrcp.pop %v2711
      %v2715 = vmul.f32 1.0, %v2714
      %v2716 = vrcp.pop %v2712
      %v2717 = vmul.f32 1.0, %v2716
      %v2718 = vrcp.pop %v2713
      %v2719 = vmul.f32 1.0, %v2718
      %v2720 = vmul.f32 %v2686, %v2715
      %v2721 = vmul.f32 %v2691, %v2717
      %v2722 = vmul.f32 %v2696, %v2719
      %v2723 = vld [vmem:[%s864] sm:$0xff]
      %v2724 = vld [vmem:[%s864 + $0x8] sm:$0xff]
      %v2725 = vld [vmem:[%s864 + $0x10] sm:$0xff]
      %v2726 = vld [vmem:[%s864 + $0x18] sm:$0xff]
      %v2727 = vld [vmem:[%s864 + $0x20] sm:$0xff]
      %v2728 = vld [vmem:[%s864 + $0x28] sm:$0xff]
      %v2729 = vld [vmem:[%s864 + $0x30] sm:$0xff]
      %v2730 = vld [vmem:[%s864 + $0x38] sm:$0xff]
      %v2731 = vld [vmem:[%s868] sm:$0x1]
      %v2733 = vlaneseq
      %v2734 = vshrl.u32 %v2733, 7
      %v2735 = vsub.s32 0, %v2734
      %v2736 = vrot.slane %v2731, %v2735
      %vm2738 = vcmask 523264
      %v2740 = vsel %vm2738, %v2720, 0
      %v2743 = vsel %vm2738, %v2721, 0
      %v2746 = vsel %vm2738, %v2722, 0
      %2748 = vmatprep.subr.mxu0 0.0
      %2749 = vmatpush1.msra.mxu0 0.0
      %2750 = vmatprep.subr.mxu0 0.0
      %2751 = vmatpush1.msra.mxu0 0.0
      %2752 = vmatprep.subr.mxu0 0.0
      %2753 = vmatpush1.msra.mxu0 0.0
      %2754 = vmatprep.subr.mxu0 0.0
      %2755 = vmatpush1.msra.mxu0 0.0
      %2756 = vmatprep.subr.mxu0 0.0
      %2757 = vmatpush1.msra.mxu0 0.0
      %2758 = vmatprep.subr.mxu0 0.0
      %2759 = vmatpush1.msra.mxu0 0.0
      %2760 = vmatprep.subr.mxu0 0.0
      %2761 = vmatpush1.msra.mxu0 0.0
      %2762 = vmatprep.subr.mxu0 0.0
      %2763 = vmatpush1.msra.mxu0 0.0
      %2764 = vmatprep.subr.mxu0 0.0
      %2765 = vmatpush1.msra.mxu0 %v2730
      %2766 = vmatprep.subr.mxu0 0.0
      %2767 = vmatpush1.msra.mxu0 %v2729
      %2768 = vmatprep.subr.mxu0 0.0
      %2769 = vmatpush1.msra.mxu0 %v2728
      %2770 = vmatprep.subr.mxu0 0.0
      %2771 = vmatpush1.msra.mxu0 %v2727
      %2772 = vmatprep.subr.mxu0 0.0
      %2773 = vmatpush1.msra.mxu0 %v2726
      %2774 = vmatprep.subr.mxu0 0.0
      %2775 = vmatpush1.msra.mxu0 %v2725
      %2776 = vmatprep.subr.mxu0 0.0
      %2777 = vmatpush1.msra.mxu0 %v2724
      %2778 = vmatprep.subr.mxu0 0.0
      %2779 = vmatpush1.msra.mxu0 %v2723
      %2780 = vmatprep.subr.mxu0 0.0
      %2781 = vmatpush2.msra.mxu0 0.0
      %2782 = vmatprep.subr.mxu0 0.0
      %2783 = vmatpush2.msra.mxu0 0.0
      %2784 = vmatprep.subr.mxu0 0.0
      %2785 = vmatpush2.msra.mxu0 0.0
      %2786 = vmatprep.subr.mxu0 0.0
      %2787 = vmatpush2.msra.mxu0 0.0
      %2788 = vmatprep.subr.mxu0 0.0
      %2789 = vmatpush2.msra.mxu0 0.0
      %2790 = vmatprep.subr.mxu0 0.0
      %2791 = vmatpush2.msra.mxu0 0.0
      %2792 = vmatprep.subr.mxu0 0.0
      %2793 = vmatpush2.msra.mxu0 0.0
      %2794 = vmatprep.subr.mxu0 0.0
      %2795 = vmatpush2.msra.mxu0 0.0
      %2796 = vmatprep.subr.mxu0 0.0
      %2797 = vmatpush2.msra.mxu0 0.0
      %2798 = vmatprep.subr.mxu0 0.0
      %2799 = vmatpush2.msra.mxu0 0.0
      %2800 = vmatprep.subr.mxu0 0.0
      %2801 = vmatpush2.msra.mxu0 0.0
      %2802 = vmatprep.subr.mxu0 0.0
      %2803 = vmatpush2.msra.mxu0 0.0
      %2804 = vmatprep.subr.mxu0 0.0
      %2805 = vmatpush2.msra.mxu0 0.0
      %2806 = vmatprep.subr.mxu0 0.0
      %2807 = vmatpush2.msra.mxu0 0.0
      %2808 = vmatprep.subr.mxu0 0.0
      %2809 = vmatpush2.msra.mxu0 0.0
      %2810 = vmatprep.subr.mxu0 0.0
      %2811 = vmatpush2.msra.mxu0 0.0
      %2812 = vmatprep.mubr.f32.mxu0 0.0
      %2813 = vmatmul.mubr.f32.gmra.mxu0 %v2740
      %v2814 = vpop.f32.mrf.mxu0
      %v2815 = vadd.f32 %v2736, %v2814
      %v2816 = vpop.f32.mrf.mxu0
      %2817 = vmatprep.mubr.f32.mxu0 0.0
      %2818 = vmatmul.mubr.f32.gmra.mxu0 %v2743
      %v2819 = vpop.f32.mrf.mxu0
      %v2820 = vadd.f32 %v2736, %v2819
      %v2821 = vpop.f32.mrf.mxu0
      %2822 = vmatprep.mubr.f32.mxu0 0.0
      %2823 = vmatmul.mubr.f32.gmra.mxu0 %v2746
      %v2824 = vpop.f32.mrf.mxu0
      %v2825 = vadd.f32 %v2736, %v2824
      %v2826 = vpop.f32.mrf.mxu0
      %2827 = vdwg.mxu0
      %v2828 = vadd.f32 %v2537, %v2815
      %v2829 = vadd.f32 %v2538, %v2820
      %v2830 = vadd.f32 %v2539, %v2825
      %s2831 = scalar_lea.vmem %s820, 1
      %v2832 = vld [vmem:[%s2831] sm:$0x1]
      %s2833 = scalar_lea.vmem %s824, 1
      %v2834 = vld [vmem:[%s2833] sm:$0x1]
      %v2835 = vsel %vm987, %v2828, 0.0
      %2836 = vadd.xlane.f32.xlu0 %v2835
      %v2837 = vpop.xlane.xlu0 %2836
      %v2838 = vsel %vm987, %v2829, 0.0
      %2839 = vadd.xlane.f32.xlu0 %v2838
      %v2840 = vpop.xlane.xlu0 %2839
      %v2841 = vsel %vm991, %v2830, 0.0
      %2842 = vadd.xlane.f32.xlu0 %v2841
      %v2843 = vpop.xlane.xlu0 %2842
      %v2844 = vmul.f32 %v2837, %v1008
      %v2845 = vmul.f32 %v2840, %v1008
      %v2846 = vmul.f32 %v2843, %v1008
      %v2847 = vsub.f32 %v2828, %v2844
      %v2848 = vsub.f32 %v2829, %v2845
      %v2849 = vsub.f32 %v2830, %v2846
      %v2850 = vmul.f32 %v2847, %v2847
      %v2851 = vmul.f32 %v2848, %v2848
      %v2852 = vmul.f32 %v2849, %v2849
      %v2853 = vsel %vm987, %v2850, 0.0
      %2854 = vadd.xlane.f32.xlu0 %v2853
      %v2855 = vpop.xlane.xlu0 %2854
      %v2856 = vsel %vm987, %v2851, 0.0
      %2857 = vadd.xlane.f32.xlu0 %v2856
      %v2858 = vpop.xlane.xlu0 %2857
      %v2859 = vsel %vm991, %v2852, 0.0
      %2860 = vadd.xlane.f32.xlu0 %v2859
      %v2861 = vpop.xlane.xlu0 %2860
      %v2862 = vmul.f32 %v2855, %v1008
      %v2863 = vmul.f32 %v2858, %v1008
      %v2864 = vmul.f32 %v2861, %v1008
      %v2865 = vadd.f32 %v2862, 1e-05
      %v2866 = vadd.f32 %v2863, 1e-05
      %v2867 = vadd.f32 %v2864, 1e-05
      %v2868 = vrsqrt.pop %v2865
      %v2869 = vrsqrt.pop %v2866
      %v2870 = vrsqrt.pop %v2867
      %v2871 = vmul.f32 %v2847, %v2868
      %v2872 = vmul.f32 %v2848, %v2869
      %v2873 = vmul.f32 %v2849, %v2870
      %v2875 = vlaneseq
      %v2876 = vshrl.u32 %v2875, 7
      %v2877 = vsub.s32 0, %v2876
      %v2878 = vrot.slane %v2832, %v2877
      %v2880 = vmul.f32 %v2871, %v2878
      %v2881 = vmul.f32 %v2872, %v2878
      %v2882 = vmul.f32 %v2873, %v2878
      %v2884 = vlaneseq
      %v2885 = vshrl.u32 %v2884, 7
      %v2886 = vsub.s32 0, %v2885
      %v2887 = vrot.slane %v2834, %v2886
      %v2889 = vadd.f32 %v2880, %v2887
      %v2890 = vadd.f32 %v2881, %v2887
      %v2891 = vadd.f32 %v2882, %v2887
      %s2892 = scalar_lea.vmem %s829, 32
      %v2893 = vld [vmem:[%s2892] sm:$0xff]
      %v2894 = vld [vmem:[%s2892 + $0x8] sm:$0xff]
      %v2895 = vld [vmem:[%s2892 + $0x10] sm:$0xff]
      %v2896 = vld [vmem:[%s2892 + $0x18] sm:$0xff]
      %s2897 = scalar_lea.vmem %s833, 1
      %v2898 = vld [vmem:[%s2897] sm:$0x1]
      %v2900 = vlaneseq
      %v2901 = vshrl.u32 %v2900, 7
      %v2902 = vsub.s32 0, %v2901
      %v2903 = vrot.slane %v2898, %v2902
      %v2906 = vsel %vm987, %v2889, 0
      %v2909 = vsel %vm987, %v2890, 0
      %v2912 = vsel %vm987, %v2891, 0
      %2914 = vmatprep.subr.mxu0 0.0
      %2915 = vmatpush1.msra.mxu0 0.0
      %2916 = vmatprep.subr.mxu0 0.0
      %2917 = vmatpush1.msra.mxu0 0.0
      %2918 = vmatprep.subr.mxu0 0.0
      %2919 = vmatpush1.msra.mxu0 0.0
      %2920 = vmatprep.subr.mxu0 0.0
      %2921 = vmatpush1.msra.mxu0 0.0
      %2922 = vmatprep.subr.mxu0 0.0
      %2923 = vmatpush1.msra.mxu0 0.0
      %2924 = vmatprep.subr.mxu0 0.0
      %2925 = vmatpush1.msra.mxu0 0.0
      %2926 = vmatprep.subr.mxu0 0.0
      %2927 = vmatpush1.msra.mxu0 0.0
      %2928 = vmatprep.subr.mxu0 0.0
      %2929 = vmatpush1.msra.mxu0 0.0
      %2930 = vmatprep.subr.mxu0 0.0
      %2931 = vmatpush1.msra.mxu0 0.0
      %2932 = vmatprep.subr.mxu0 0.0
      %2933 = vmatpush1.msra.mxu0 0.0
      %2934 = vmatprep.subr.mxu0 0.0
      %2935 = vmatpush1.msra.mxu0 0.0
      %2936 = vmatprep.subr.mxu0 0.0
      %2937 = vmatpush1.msra.mxu0 0.0
      %2938 = vmatprep.subr.mxu0 0.0
      %2939 = vmatpush1.msra.mxu0 %v2896
      %2940 = vmatprep.subr.mxu0 0.0
      %2941 = vmatpush1.msra.mxu0 %v2895
      %2942 = vmatprep.subr.mxu0 0.0
      %2943 = vmatpush1.msra.mxu0 %v2894
      %2944 = vmatprep.subr.mxu0 0.0
      %2945 = vmatpush1.msra.mxu0 %v2893
      %2946 = vmatprep.subr.mxu0 0.0
      %2947 = vmatpush2.msra.mxu0 0.0
      %2948 = vmatprep.subr.mxu0 0.0
      %2949 = vmatpush2.msra.mxu0 0.0
      %2950 = vmatprep.subr.mxu0 0.0
      %2951 = vmatpush2.msra.mxu0 0.0
      %2952 = vmatprep.subr.mxu0 0.0
      %2953 = vmatpush2.msra.mxu0 0.0
      %2954 = vmatprep.subr.mxu0 0.0
      %2955 = vmatpush2.msra.mxu0 0.0
      %2956 = vmatprep.subr.mxu0 0.0
      %2957 = vmatpush2.msra.mxu0 0.0
      %2958 = vmatprep.subr.mxu0 0.0
      %2959 = vmatpush2.msra.mxu0 0.0
      %2960 = vmatprep.subr.mxu0 0.0
      %2961 = vmatpush2.msra.mxu0 0.0
      %2962 = vmatprep.subr.mxu0 0.0
      %2963 = vmatpush2.msra.mxu0 0.0
      %2964 = vmatprep.subr.mxu0 0.0
      %2965 = vmatpush2.msra.mxu0 0.0
      %2966 = vmatprep.subr.mxu0 0.0
      %2967 = vmatpush2.msra.mxu0 0.0
      %2968 = vmatprep.subr.mxu0 0.0
      %2969 = vmatpush2.msra.mxu0 0.0
      %2970 = vmatprep.subr.mxu0 0.0
      %2971 = vmatpush2.msra.mxu0 0.0
      %2972 = vmatprep.subr.mxu0 0.0
      %2973 = vmatpush2.msra.mxu0 0.0
      %2974 = vmatprep.subr.mxu0 0.0
      %2975 = vmatpush2.msra.mxu0 0.0
      %2976 = vmatprep.subr.mxu0 0.0
      %2977 = vmatpush2.msra.mxu0 0.0
      %2978 = vmatprep.mubr.f32.mxu0 0.0
      %2979 = vmatmul.mubr.f32.gmra.mxu0 %v2906
      %v2980 = vpop.f32.mrf.mxu0
      %v2981 = vadd.f32 %v2903, %v2980
      %v2982 = vpop.f32.mrf.mxu0
      %2983 = vmatprep.mubr.f32.mxu0 0.0
      %2984 = vmatmul.mubr.f32.gmra.mxu0 %v2909
      %v2985 = vpop.f32.mrf.mxu0
      %v2986 = vadd.f32 %v2903, %v2985
      %v2987 = vpop.f32.mrf.mxu0
      %2988 = vmatprep.mubr.f32.mxu0 0.0
      %2989 = vmatmul.mubr.f32.gmra.mxu0 %v2912
      %v2990 = vpop.f32.mrf.mxu0
      %v2991 = vadd.f32 %v2903, %v2990
      %v2992 = vpop.f32.mrf.mxu0
      %2993 = vdwg.mxu0
      %s2994 = scalar_lea.vmem %s838, 32
      %v2995 = vld [vmem:[%s2994] sm:$0xff]
      %v2996 = vld [vmem:[%s2994 + $0x8] sm:$0xff]
      %v2997 = vld [vmem:[%s2994 + $0x10] sm:$0xff]
      %v2998 = vld [vmem:[%s2994 + $0x18] sm:$0xff]
      %3002 = vrot.lane.b32.xlu0 %v2981, 96
      %v3003 = vpop.permute.xlu0 %3002
      %3004 = vrot.lane.b32.xlu0 %v2986, 96
      %v3005 = vpop.permute.xlu0 %3004
      %3006 = vrot.lane.b32.xlu0 %v2991, 96
      %v3007 = vpop.permute.xlu0 %3006
      %v3008 = vsel %vm1229, %v2981, 0
      %v3010 = vsel %vm1229, %v2986, 0
      %v3012 = vsel %vm1229, %v2991, 0
      %v3014 = vsel %vm1229, %v3003, 0
      %v3016 = vsel %vm1229, %v3005, 0
      %v3018 = vsel %vm1229, %v3007, 0
      %3020 = vmatprep.subr.mxu0 0.0
      %3021 = vmatpush1.xpose.msra.mxu0 0.0
      %3022 = vmatprep.subr.mxu0 0.0
      %3023 = vmatpush1.xpose.msra.mxu0 0.0
      %3024 = vmatprep.subr.mxu0 0.0
      %3025 = vmatpush1.xpose.msra.mxu0 0.0
      %3026 = vmatprep.subr.mxu0 0.0
      %3027 = vmatpush1.xpose.msra.mxu0 0.0
      %3028 = vmatprep.subr.mxu0 0.0
      %3029 = vmatpush1.xpose.msra.mxu0 0.0
      %3030 = vmatprep.subr.mxu0 0.0
      %3031 = vmatpush1.xpose.msra.mxu0 0.0
      %3032 = vmatprep.subr.mxu0 0.0
      %3033 = vmatpush1.xpose.msra.mxu0 0.0
      %3034 = vmatprep.subr.mxu0 0.0
      %3035 = vmatpush1.xpose.msra.mxu0 0.0
      %3036 = vmatprep.subr.mxu0 0.0
      %3037 = vmatpush1.xpose.msra.mxu0 0.0
      %3038 = vmatprep.subr.mxu0 0.0
      %3039 = vmatpush1.xpose.msra.mxu0 0.0
      %3040 = vmatprep.subr.mxu0 0.0
      %3041 = vmatpush1.xpose.msra.mxu0 0.0
      %3042 = vmatprep.subr.mxu0 0.0
      %3043 = vmatpush1.xpose.msra.mxu0 0.0
      %3044 = vmatprep.subr.mxu0 0.0
      %3045 = vmatpush1.xpose.msra.mxu0 0.0
      %3046 = vmatprep.subr.mxu0 0.0
      %3047 = vmatpush1.xpose.msra.mxu0 %v3018
      %3048 = vmatprep.subr.mxu0 0.0
      %3049 = vmatpush1.xpose.msra.mxu0 %v3016
      %3050 = vmatprep.subr.mxu0 0.0
      %3051 = vmatpush1.xpose.msra.mxu0 %v3014
      %3052 = vmatprep.subr.mxu0 0.0
      %3053 = vmatpush2.xpose.msra.mxu0 0.0
      %3054 = vmatprep.subr.mxu0 0.0
      %3055 = vmatpush2.xpose.msra.mxu0 0.0
      %3056 = vmatprep.subr.mxu0 0.0
      %3057 = vmatpush2.xpose.msra.mxu0 0.0
      %3058 = vmatprep.subr.mxu0 0.0
      %3059 = vmatpush2.xpose.msra.mxu0 0.0
      %3060 = vmatprep.subr.mxu0 0.0
      %3061 = vmatpush2.xpose.msra.mxu0 0.0
      %3062 = vmatprep.subr.mxu0 0.0
      %3063 = vmatpush2.xpose.msra.mxu0 0.0
      %3064 = vmatprep.subr.mxu0 0.0
      %3065 = vmatpush2.xpose.msra.mxu0 0.0
      %3066 = vmatprep.subr.mxu0 0.0
      %3067 = vmatpush2.xpose.msra.mxu0 0.0
      %3068 = vmatprep.subr.mxu0 0.0
      %3069 = vmatpush2.xpose.msra.mxu0 0.0
      %3070 = vmatprep.subr.mxu0 0.0
      %3071 = vmatpush2.xpose.msra.mxu0 0.0
      %3072 = vmatprep.subr.mxu0 0.0
      %3073 = vmatpush2.xpose.msra.mxu0 0.0
      %3074 = vmatprep.subr.mxu0 0.0
      %3075 = vmatpush2.xpose.msra.mxu0 0.0
      %3076 = vmatprep.subr.mxu0 0.0
      %3077 = vmatpush2.xpose.msra.mxu0 0.0
      %3078 = vmatprep.subr.mxu0 0.0
      %3079 = vmatpush2.xpose.msra.mxu0 0.0
      %3080 = vmatprep.subr.mxu0 0.0
      %3081 = vmatpush2.xpose.msra.mxu0 0.0
      %3082 = vmatprep.subr.mxu0 0.0
      %3083 = vmatpush2.xpose.msra.mxu0 0.0
      %3084 = vmatprep.mubr.f32.mxu0 0.0
      %3085 = vmatmul.mubr.f32.gmra.mxu0 %v3008
      %v3086 = vpop.f32.mrf.mxu0
      %v3087 = vadd.f32 0.0, %v3086
      %v3088 = vpop.f32.mrf.mxu0
      %3089 = vmatprep.mubr.f32.mxu0 0.0
      %3090 = vmatmul.mubr.f32.gmra.mxu0 %v3010
      %v3091 = vpop.f32.mrf.mxu0
      %v3092 = vadd.f32 0.0, %v3091
      %v3093 = vpop.f32.mrf.mxu0
      %3094 = vmatprep.mubr.f32.mxu0 0.0
      %3095 = vmatmul.mubr.f32.gmra.mxu0 %v3012
      %v3096 = vpop.f32.mrf.mxu0
      %v3097 = vadd.f32 0.0, %v3096
      %v3098 = vpop.f32.mrf.mxu0
      %3099 = vdwg.mxu0
      %v3100 = vsel %vm1322, %v3087, -inf
      %3101 = vmax.xlane.f32.xlu0 %v3100
      %v3102 = vpop.xlane.xlu0 %3101
      %v3103 = vsel %vm1322, %v3092, -inf
      %3104 = vmax.xlane.f32.xlu0 %v3103
      %v3105 = vpop.xlane.xlu0 %3104
      %v3106 = vsel %vm1329, %v3097, -inf
      %3107 = vmax.xlane.f32.xlu0 %v3106
      %v3108 = vpop.xlane.xlu0 %3107
      %v3109 = vsub.f32 %v3087, %v3102
      %v3110 = vsub.f32 %v3092, %v3105
      %v3111 = vsub.f32 %v3097, %v3108
      %v3112 = vmul.f32 %v3109, 1.442695
      %v3113 = vpow.pop %v3112
      %v3114 = vmul.f32 %v3110, 1.442695
      %v3115 = vpow.pop %v3114
      %v3116 = vmul.f32 %v3111, 1.442695
      %v3117 = vpow.pop %v3116
      %v3118 = vsel %vm1322, %v3113, 0.0
      %3119 = vadd.xlane.f32.xlu0 %v3118
      %v3120 = vpop.xlane.xlu0 %3119
      %v3121 = vsel %vm1322, %v3115, 0.0
      %3122 = vadd.xlane.f32.xlu0 %v3121
      %v3123 = vpop.xlane.xlu0 %3122
      %v3124 = vsel %vm1329, %v3117, 0.0
      %3125 = vadd.xlane.f32.xlu0 %v3124
      %v3126 = vpop.xlane.xlu0 %3125
      %v3127 = vrcp.pop %v3120
      %v3128 = vrcp.pop %v3123
      %v3129 = vrcp.pop %v3126
      %v3130 = vmul.f32 %v3113, %v3127
      %v3131 = vmul.f32 %v3115, %v3128
      %v3132 = vmul.f32 %v3117, %v3129
      %3133 = vrot.lane.b32.xlu0 %v2981, 64
      %v3134 = vpop.permute.xlu0 %3133
      %3135 = vrot.lane.b32.xlu0 %v2986, 64
      %v3136 = vpop.permute.xlu0 %3135
      %3137 = vrot.lane.b32.xlu0 %v2991, 64
      %v3138 = vpop.permute.xlu0 %3137
      %v3142 = vsel %vm1322, %v3130, 0
      %v3145 = vsel %vm1322, %v3131, 0
      %v3148 = vsel %vm1322, %v3132, 0
      %v3150 = vsel %vm1374, %v3138, 0
      %3152 = vmatprep.subr.mxu0 0.0
      %3153 = vmatpush1.msra.mxu0 0.0
      %3154 = vmatprep.subr.mxu0 0.0
      %3155 = vmatpush1.msra.mxu0 0.0
      %3156 = vmatprep.subr.mxu0 0.0
      %3157 = vmatpush1.msra.mxu0 0.0
      %3158 = vmatprep.subr.mxu0 0.0
      %3159 = vmatpush1.msra.mxu0 0.0
      %3160 = vmatprep.subr.mxu0 0.0
      %3161 = vmatpush1.msra.mxu0 0.0
      %3162 = vmatprep.subr.mxu0 0.0
      %3163 = vmatpush1.msra.mxu0 0.0
      %3164 = vmatprep.subr.mxu0 0.0
      %3165 = vmatpush1.msra.mxu0 0.0
      %3166 = vmatprep.subr.mxu0 0.0
      %3167 = vmatpush1.msra.mxu0 0.0
      %3168 = vmatprep.subr.mxu0 0.0
      %3169 = vmatpush1.msra.mxu0 0.0
      %3170 = vmatprep.subr.mxu0 0.0
      %3171 = vmatpush1.msra.mxu0 0.0
      %3172 = vmatprep.subr.mxu0 0.0
      %3173 = vmatpush1.msra.mxu0 0.0
      %3174 = vmatprep.subr.mxu0 0.0
      %3175 = vmatpush1.msra.mxu0 0.0
      %3176 = vmatprep.subr.mxu0 0.0
      %3177 = vmatpush1.msra.mxu0 0.0
      %3178 = vmatprep.subr.mxu0 0.0
      %3179 = vmatpush1.msra.mxu0 %v3150
      %3180 = vmatprep.subr.mxu0 0.0
      %3181 = vmatpush1.msra.mxu0 %v3136
      %3182 = vmatprep.subr.mxu0 0.0
      %3183 = vmatpush1.msra.mxu0 %v3134
      %3184 = vmatprep.subr.mxu0 0.0
      %3185 = vmatpush2.msra.mxu0 0.0
      %3186 = vmatprep.subr.mxu0 0.0
      %3187 = vmatpush2.msra.mxu0 0.0
      %3188 = vmatprep.subr.mxu0 0.0
      %3189 = vmatpush2.msra.mxu0 0.0
      %3190 = vmatprep.subr.mxu0 0.0
      %3191 = vmatpush2.msra.mxu0 0.0
      %3192 = vmatprep.subr.mxu0 0.0
      %3193 = vmatpush2.msra.mxu0 0.0
      %3194 = vmatprep.subr.mxu0 0.0
      %3195 = vmatpush2.msra.mxu0 0.0
      %3196 = vmatprep.subr.mxu0 0.0
      %3197 = vmatpush2.msra.mxu0 0.0
      %3198 = vmatprep.subr.mxu0 0.0
      %3199 = vmatpush2.msra.mxu0 0.0
      %3200 = vmatprep.subr.mxu0 0.0
      %3201 = vmatpush2.msra.mxu0 0.0
      %3202 = vmatprep.subr.mxu0 0.0
      %3203 = vmatpush2.msra.mxu0 0.0
      %3204 = vmatprep.subr.mxu0 0.0
      %3205 = vmatpush2.msra.mxu0 0.0
      %3206 = vmatprep.subr.mxu0 0.0
      %3207 = vmatpush2.msra.mxu0 0.0
      %3208 = vmatprep.subr.mxu0 0.0
      %3209 = vmatpush2.msra.mxu0 0.0
      %3210 = vmatprep.subr.mxu0 0.0
      %3211 = vmatpush2.msra.mxu0 0.0
      %3212 = vmatprep.subr.mxu0 0.0
      %3213 = vmatpush2.msra.mxu0 0.0
      %3214 = vmatprep.subr.mxu0 0.0
      %3215 = vmatpush2.msra.mxu0 0.0
      %3216 = vmatprep.mubr.f32.mxu0 0.0
      %3217 = vmatmul.mubr.f32.gmra.mxu0 %v3142
      %v3218 = vpop.f32.mrf.mxu0
      %v3219 = vadd.f32 0.0, %v3218
      %v3220 = vpop.f32.mrf.mxu0
      %3221 = vmatprep.mubr.f32.mxu0 0.0
      %3222 = vmatmul.mubr.f32.gmra.mxu0 %v3145
      %v3223 = vpop.f32.mrf.mxu0
      %v3224 = vadd.f32 0.0, %v3223
      %v3225 = vpop.f32.mrf.mxu0
      %3226 = vmatprep.mubr.f32.mxu0 0.0
      %3227 = vmatmul.mubr.f32.gmra.mxu0 %v3148
      %v3228 = vpop.f32.mrf.mxu0
      %v3229 = vadd.f32 0.0, %v3228
      %v3230 = vpop.f32.mrf.mxu0
      %3231 = vdwg.mxu0
      %3232 = vrot.lane.b32.xlu0 %v2981, 120
      %v3233 = vpop.permute.xlu0 %3232
      %3234 = vrot.lane.b32.xlu0 %v2986, 120
      %v3235 = vpop.permute.xlu0 %3234
      %3236 = vrot.lane.b32.xlu0 %v2991, 120
      %v3237 = vpop.permute.xlu0 %3236
      %3238 = vrot.lane.b32.xlu0 %v2981, 88
      %v3239 = vpop.permute.xlu0 %3238
      %3240 = vrot.lane.b32.xlu0 %v2986, 88
      %v3241 = vpop.permute.xlu0 %3240
      %3242 = vrot.lane.b32.xlu0 %v2991, 88
      %v3243 = vpop.permute.xlu0 %3242
      %v3244 = vsel %vm1229, %v3233, 0
      %v3246 = vsel %vm1229, %v3235, 0
      %v3248 = vsel %vm1229, %v3237, 0
      %v3250 = vsel %vm1229, %v3239, 0
      %v3252 = vsel %vm1229, %v3241, 0
      %v3254 = vsel %vm1229, %v3243, 0
      %3256 = vmatprep.subr.mxu0 0.0
      %3257 = vmatpush1.xpose.msra.mxu0 0.0
      %3258 = vmatprep.subr.mxu0 0.0
      %3259 = vmatpush1.xpose.msra.mxu0 0.0
      %3260 = vmatprep.subr.mxu0 0.0
      %3261 = vmatpush1.xpose.msra.mxu0 0.0
      %3262 = vmatprep.subr.mxu0 0.0
      %3263 = vmatpush1.xpose.msra.mxu0 0.0
      %3264 = vmatprep.subr.mxu0 0.0
      %3265 = vmatpush1.xpose.msra.mxu0 0.0
      %3266 = vmatprep.subr.mxu0 0.0
      %3267 = vmatpush1.xpose.msra.mxu0 0.0
      %3268 = vmatprep.subr.mxu0 0.0
      %3269 = vmatpush1.xpose.msra.mxu0 0.0
      %3270 = vmatprep.subr.mxu0 0.0
      %3271 = vmatpush1.xpose.msra.mxu0 0.0
      %3272 = vmatprep.subr.mxu0 0.0
      %3273 = vmatpush1.xpose.msra.mxu0 0.0
      %3274 = vmatprep.subr.mxu0 0.0
      %3275 = vmatpush1.xpose.msra.mxu0 0.0
      %3276 = vmatprep.subr.mxu0 0.0
      %3277 = vmatpush1.xpose.msra.mxu0 0.0
      %3278 = vmatprep.subr.mxu0 0.0
      %3279 = vmatpush1.xpose.msra.mxu0 0.0
      %3280 = vmatprep.subr.mxu0 0.0
      %3281 = vmatpush1.xpose.msra.mxu0 0.0
      %3282 = vmatprep.subr.mxu0 0.0
      %3283 = vmatpush1.xpose.msra.mxu0 %v3254
      %3284 = vmatprep.subr.mxu0 0.0
      %3285 = vmatpush1.xpose.msra.mxu0 %v3252
      %3286 = vmatprep.subr.mxu0 0.0
      %3287 = vmatpush1.xpose.msra.mxu0 %v3250
      %3288 = vmatprep.subr.mxu0 0.0
      %3289 = vmatpush2.xpose.msra.mxu0 0.0
      %3290 = vmatprep.subr.mxu0 0.0
      %3291 = vmatpush2.xpose.msra.mxu0 0.0
      %3292 = vmatprep.subr.mxu0 0.0
      %3293 = vmatpush2.xpose.msra.mxu0 0.0
      %3294 = vmatprep.subr.mxu0 0.0
      %3295 = vmatpush2.xpose.msra.mxu0 0.0
      %3296 = vmatprep.subr.mxu0 0.0
      %3297 = vmatpush2.xpose.msra.mxu0 0.0
      %3298 = vmatprep.subr.mxu0 0.0
      %3299 = vmatpush2.xpose.msra.mxu0 0.0
      %3300 = vmatprep.subr.mxu0 0.0
      %3301 = vmatpush2.xpose.msra.mxu0 0.0
      %3302 = vmatprep.subr.mxu0 0.0
      %3303 = vmatpush2.xpose.msra.mxu0 0.0
      %3304 = vmatprep.subr.mxu0 0.0
      %3305 = vmatpush2.xpose.msra.mxu0 0.0
      %3306 = vmatprep.subr.mxu0 0.0
      %3307 = vmatpush2.xpose.msra.mxu0 0.0
      %3308 = vmatprep.subr.mxu0 0.0
      %3309 = vmatpush2.xpose.msra.mxu0 0.0
      %3310 = vmatprep.subr.mxu0 0.0
      %3311 = vmatpush2.xpose.msra.mxu0 0.0
      %3312 = vmatprep.subr.mxu0 0.0
      %3313 = vmatpush2.xpose.msra.mxu0 0.0
      %3314 = vmatprep.subr.mxu0 0.0
      %3315 = vmatpush2.xpose.msra.mxu0 0.0
      %3316 = vmatprep.subr.mxu0 0.0
      %3317 = vmatpush2.xpose.msra.mxu0 0.0
      %3318 = vmatprep.subr.mxu0 0.0
      %3319 = vmatpush2.xpose.msra.mxu0 0.0
      %3320 = vmatprep.mubr.f32.mxu0 0.0
      %3321 = vmatmul.mubr.f32.gmra.mxu0 %v3244
      %v3322 = vpop.f32.mrf.mxu0
      %v3323 = vadd.f32 0.0, %v3322
      %v3324 = vpop.f32.mrf.mxu0
      %3325 = vmatprep.mubr.f32.mxu0 0.0
      %3326 = vmatmul.mubr.f32.gmra.mxu0 %v3246
      %v3327 = vpop.f32.mrf.mxu0
      %v3328 = vadd.f32 0.0, %v3327
      %v3329 = vpop.f32.mrf.mxu0
      %3330 = vmatprep.mubr.f32.mxu0 0.0
      %3331 = vmatmul.mubr.f32.gmra.mxu0 %v3248
      %v3332 = vpop.f32.mrf.mxu0
      %v3333 = vadd.f32 0.0, %v3332
      %v3334 = vpop.f32.mrf.mxu0
      %3335 = vdwg.mxu0
      %v3336 = vsel %vm1322, %v3323, -inf
      %3337 = vmax.xlane.f32.xlu0 %v3336
      %v3338 = vpop.xlane.xlu0 %3337
      %v3339 = vsel %vm1322, %v3328, -inf
      %3340 = vmax.xlane.f32.xlu0 %v3339
      %v3341 = vpop.xlane.xlu0 %3340
      %v3342 = vsel %vm1329, %v3333, -inf
      %3343 = vmax.xlane.f32.xlu0 %v3342
      %v3344 = vpop.xlane.xlu0 %3343
      %v3345 = vsub.f32 %v3323, %v3338
      %v3346 = vsub.f32 %v3328, %v3341
      %v3347 = vsub.f32 %v3333, %v3344
      %v3348 = vmul.f32 %v3345, 1.442695
      %v3349 = vpow.pop %v3348
      %v3350 = vmul.f32 %v3346, 1.442695
      %v3351 = vpow.pop %v3350
      %v3352 = vmul.f32 %v3347, 1.442695
      %v3353 = vpow.pop %v3352
      %v3354 = vsel %vm1322, %v3349, 0.0
      %3355 = vadd.xlane.f32.xlu0 %v3354
      %v3356 = vpop.xlane.xlu0 %3355
      %v3357 = vsel %vm1322, %v3351, 0.0
      %3358 = vadd.xlane.f32.xlu0 %v3357
      %v3359 = vpop.xlane.xlu0 %3358
      %v3360 = vsel %vm1329, %v3353, 0.0
      %3361 = vadd.xlane.f32.xlu0 %v3360
      %v3362 = vpop.xlane.xlu0 %3361
      %v3363 = vrcp.pop %v3356
      %v3364 = vrcp.pop %v3359
      %v3365 = vrcp.pop %v3362
      %v3366 = vmul.f32 %v3349, %v3363
      %v3367 = vmul.f32 %v3351, %v3364
      %v3368 = vmul.f32 %v3353, %v3365
      %3369 = vrot.lane.b32.xlu0 %v2981, 56
      %v3370 = vpop.permute.xlu0 %3369
      %3371 = vrot.lane.b32.xlu0 %v2986, 56
      %v3372 = vpop.permute.xlu0 %3371
      %3373 = vrot.lane.b32.xlu0 %v2991, 56
      %v3374 = vpop.permute.xlu0 %3373
      %v3378 = vsel %vm1322, %v3366, 0
      %v3381 = vsel %vm1322, %v3367, 0
      %v3384 = vsel %vm1322, %v3368, 0
      %v3386 = vsel %vm1374, %v3374, 0
      %3388 = vmatprep.subr.mxu0 0.0
      %3389 = vmatpush1.msra.mxu0 0.0
      %3390 = vmatprep.subr.mxu0 0.0
      %3391 = vmatpush1.msra.mxu0 0.0
      %3392 = vmatprep.subr.mxu0 0.0
      %3393 = vmatpush1.msra.mxu0 0.0
      %3394 = vmatprep.subr.mxu0 0.0
      %3395 = vmatpush1.msra.mxu0 0.0
      %3396 = vmatprep.subr.mxu0 0.0
      %3397 = vmatpush1.msra.mxu0 0.0
      %3398 = vmatprep.subr.mxu0 0.0
      %3399 = vmatpush1.msra.mxu0 0.0
      %3400 = vmatprep.subr.mxu0 0.0
      %3401 = vmatpush1.msra.mxu0 0.0
      %3402 = vmatprep.subr.mxu0 0.0
      %3403 = vmatpush1.msra.mxu0 0.0
      %3404 = vmatprep.subr.mxu0 0.0
      %3405 = vmatpush1.msra.mxu0 0.0
      %3406 = vmatprep.subr.mxu0 0.0
      %3407 = vmatpush1.msra.mxu0 0.0
      %3408 = vmatprep.subr.mxu0 0.0
      %3409 = vmatpush1.msra.mxu0 0.0
      %3410 = vmatprep.subr.mxu0 0.0
      %3411 = vmatpush1.msra.mxu0 0.0
      %3412 = vmatprep.subr.mxu0 0.0
      %3413 = vmatpush1.msra.mxu0 0.0
      %3414 = vmatprep.subr.mxu0 0.0
      %3415 = vmatpush1.msra.mxu0 %v3386
      %3416 = vmatprep.subr.mxu0 0.0
      %3417 = vmatpush1.msra.mxu0 %v3372
      %3418 = vmatprep.subr.mxu0 0.0
      %3419 = vmatpush1.msra.mxu0 %v3370
      %3420 = vmatprep.subr.mxu0 0.0
      %3421 = vmatpush2.msra.mxu0 0.0
      %3422 = vmatprep.subr.mxu0 0.0
      %3423 = vmatpush2.msra.mxu0 0.0
      %3424 = vmatprep.subr.mxu0 0.0
      %3425 = vmatpush2.msra.mxu0 0.0
      %3426 = vmatprep.subr.mxu0 0.0
      %3427 = vmatpush2.msra.mxu0 0.0
      %3428 = vmatprep.subr.mxu0 0.0
      %3429 = vmatpush2.msra.mxu0 0.0
      %3430 = vmatprep.subr.mxu0 0.0
      %3431 = vmatpush2.msra.mxu0 0.0
      %3432 = vmatprep.subr.mxu0 0.0
      %3433 = vmatpush2.msra.mxu0 0.0
      %3434 = vmatprep.subr.mxu0 0.0
      %3435 = vmatpush2.msra.mxu0 0.0
      %3436 = vmatprep.subr.mxu0 0.0
      %3437 = vmatpush2.msra.mxu0 0.0
      %3438 = vmatprep.subr.mxu0 0.0
      %3439 = vmatpush2.msra.mxu0 0.0
      %3440 = vmatprep.subr.mxu0 0.0
      %3441 = vmatpush2.msra.mxu0 0.0
      %3442 = vmatprep.subr.mxu0 0.0
      %3443 = vmatpush2.msra.mxu0 0.0
      %3444 = vmatprep.subr.mxu0 0.0
      %3445 = vmatpush2.msra.mxu0 0.0
      %3446 = vmatprep.subr.mxu0 0.0
      %3447 = vmatpush2.msra.mxu0 0.0
      %3448 = vmatprep.subr.mxu0 0.0
      %3449 = vmatpush2.msra.mxu0 0.0
      %3450 = vmatprep.subr.mxu0 0.0
      %3451 = vmatpush2.msra.mxu0 0.0
      %3452 = vmatprep.mubr.f32.mxu0 0.0
      %3453 = vmatmul.mubr.f32.gmra.mxu0 %v3378
      %v3454 = vpop.f32.mrf.mxu0
      %v3455 = vadd.f32 0.0, %v3454
      %v3456 = vpop.f32.mrf.mxu0
      %3457 = vmatprep.mubr.f32.mxu0 0.0
      %3458 = vmatmul.mubr.f32.gmra.mxu0 %v3381
      %v3459 = vpop.f32.mrf.mxu0
      %v3460 = vadd.f32 0.0, %v3459
      %v3461 = vpop.f32.mrf.mxu0
      %3462 = vmatprep.mubr.f32.mxu0 0.0
      %3463 = vmatmul.mubr.f32.gmra.mxu0 %v3384
      %v3464 = vpop.f32.mrf.mxu0
      %v3465 = vadd.f32 0.0, %v3464
      %v3466 = vpop.f32.mrf.mxu0
      %3467 = vdwg.mxu0
      %v3469 = vsel %vm1229, %v3455, 0
      %v3472 = vsel %vm1229, %v3460, 0
      %v3475 = vsel %vm1229, %v3465, 0
      %3477 = vmatprep.subr.mxu0 0.0
      %3478 = vmatpush1.msra.mxu0 0.0
      %3479 = vmatprep.subr.mxu0 0.0
      %3480 = vmatpush1.msra.mxu0 0.0
      %3481 = vmatprep.subr.mxu0 0.0
      %3482 = vmatpush1.msra.mxu0 0.0
      %3483 = vmatprep.subr.mxu0 0.0
      %3484 = vmatpush1.msra.mxu0 0.0
      %3485 = vmatprep.subr.mxu0 0.0
      %3486 = vmatpush1.msra.mxu0 0.0
      %3487 = vmatprep.subr.mxu0 0.0
      %3488 = vmatpush1.msra.mxu0 0.0
      %3489 = vmatprep.subr.mxu0 0.0
      %3490 = vmatpush1.msra.mxu0 0.0
      %3491 = vmatprep.subr.mxu0 0.0
      %3492 = vmatpush1.msra.mxu0 0.0
      %3493 = vmatprep.subr.mxu0 0.0
      %3494 = vmatpush1.msra.mxu0 0.0
      %3495 = vmatprep.subr.mxu0 0.0
      %3496 = vmatpush1.msra.mxu0 0.0
      %3497 = vmatprep.subr.mxu0 0.0
      %3498 = vmatpush1.msra.mxu0 0.0
      %3499 = vmatprep.subr.mxu0 0.0
      %3500 = vmatpush1.msra.mxu0 0.0
      %3501 = vmatprep.subr.mxu0 0.0
      %3502 = vmatpush1.msra.mxu0 0.0
      %3503 = vmatprep.subr.mxu0 0.0
      %3504 = vmatpush1.msra.mxu0 0.0
      %3505 = vmatprep.subr.mxu0 0.0
      %3506 = vmatpush1.msra.mxu0 0.0
      %3507 = vmatprep.subr.mxu0 0.0
      %3508 = vmatpush1.msra.mxu0 %v2996
      %3509 = vmatprep.subr.mxu0 0.0
      %3510 = vmatpush2.msra.mxu0 0.0
      %3511 = vmatprep.subr.mxu0 0.0
      %3512 = vmatpush2.msra.mxu0 0.0
      %3513 = vmatprep.subr.mxu0 0.0
      %3514 = vmatpush2.msra.mxu0 0.0
      %3515 = vmatprep.subr.mxu0 0.0
      %3516 = vmatpush2.msra.mxu0 0.0
      %3517 = vmatprep.subr.mxu0 0.0
      %3518 = vmatpush2.msra.mxu0 0.0
      %3519 = vmatprep.subr.mxu0 0.0
      %3520 = vmatpush2.msra.mxu0 0.0
      %3521 = vmatprep.subr.mxu0 0.0
      %3522 = vmatpush2.msra.mxu0 0.0
      %3523 = vmatprep.subr.mxu0 0.0
      %3524 = vmatpush2.msra.mxu0 0.0
      %3525 = vmatprep.subr.mxu0 0.0
      %3526 = vmatpush2.msra.mxu0 0.0
      %3527 = vmatprep.subr.mxu0 0.0
      %3528 = vmatpush2.msra.mxu0 0.0
      %3529 = vmatprep.subr.mxu0 0.0
      %3530 = vmatpush2.msra.mxu0 0.0
      %3531 = vmatprep.subr.mxu0 0.0
      %3532 = vmatpush2.msra.mxu0 0.0
      %3533 = vmatprep.subr.mxu0 0.0
      %3534 = vmatpush2.msra.mxu0 0.0
      %3535 = vmatprep.subr.mxu0 0.0
      %3536 = vmatpush2.msra.mxu0 0.0
      %3537 = vmatprep.subr.mxu0 0.0
      %3538 = vmatpush2.msra.mxu0 0.0
      %3539 = vmatprep.subr.mxu0 0.0
      %3540 = vmatpush2.msra.mxu0 0.0
      %3541 = vmatprep.mubr.f32.mxu0 0.0
      %3542 = vmatmul.mubr.f32.gmra.mxu0 %v3469
      %v3543 = vpop.f32.mrf.mxu0
      %v3544 = vadd.f32 0.0, %v3543
      %v3545 = vpop.f32.mrf.mxu0
      %3546 = vmatprep.mubr.f32.mxu0 0.0
      %3547 = vmatmul.mubr.f32.gmra.mxu0 %v3472
      %v3548 = vpop.f32.mrf.mxu0
      %v3549 = vadd.f32 0.0, %v3548
      %v3550 = vpop.f32.mrf.mxu0
      %3551 = vmatprep.mubr.f32.mxu0 0.0
      %3552 = vmatmul.mubr.f32.gmra.mxu0 %v3475
      %v3553 = vpop.f32.mrf.mxu0
      %v3554 = vadd.f32 0.0, %v3553
      %v3555 = vpop.f32.mrf.mxu0
      %3556 = vdwg.mxu0
      %v3558 = vsel %vm1229, %v3219, 0
      %v3561 = vsel %vm1229, %v3224, 0
      %v3564 = vsel %vm1229, %v3229, 0
      %3566 = vmatprep.subr.mxu0 0.0
      %3567 = vmatpush1.msra.mxu0 0.0
      %3568 = vmatprep.subr.mxu0 0.0
      %3569 = vmatpush1.msra.mxu0 0.0
      %3570 = vmatprep.subr.mxu0 0.0
      %3571 = vmatpush1.msra.mxu0 0.0
      %3572 = vmatprep.subr.mxu0 0.0
      %3573 = vmatpush1.msra.mxu0 0.0
      %3574 = vmatprep.subr.mxu0 0.0
      %3575 = vmatpush1.msra.mxu0 0.0
      %3576 = vmatprep.subr.mxu0 0.0
      %3577 = vmatpush1.msra.mxu0 0.0
      %3578 = vmatprep.subr.mxu0 0.0
      %3579 = vmatpush1.msra.mxu0 0.0
      %3580 = vmatprep.subr.mxu0 0.0
      %3581 = vmatpush1.msra.mxu0 0.0
      %3582 = vmatprep.subr.mxu0 0.0
      %3583 = vmatpush1.msra.mxu0 0.0
      %3584 = vmatprep.subr.mxu0 0.0
      %3585 = vmatpush1.msra.mxu0 0.0
      %3586 = vmatprep.subr.mxu0 0.0
      %3587 = vmatpush1.msra.mxu0 0.0
      %3588 = vmatprep.subr.mxu0 0.0
      %3589 = vmatpush1.msra.mxu0 0.0
      %3590 = vmatprep.subr.mxu0 0.0
      %3591 = vmatpush1.msra.mxu0 0.0
      %3592 = vmatprep.subr.mxu0 0.0
      %3593 = vmatpush1.msra.mxu0 0.0
      %3594 = vmatprep.subr.mxu0 0.0
      %3595 = vmatpush1.msra.mxu0 0.0
      %3596 = vmatprep.subr.mxu0 0.0
      %3597 = vmatpush1.msra.mxu0 %v2995
      %3598 = vmatprep.subr.mxu0 0.0
      %3599 = vmatpush2.msra.mxu0 0.0
      %3600 = vmatprep.subr.mxu0 0.0
      %3601 = vmatpush2.msra.mxu0 0.0
      %3602 = vmatprep.subr.mxu0 0.0
      %3603 = vmatpush2.msra.mxu0 0.0
      %3604 = vmatprep.subr.mxu0 0.0
      %3605 = vmatpush2.msra.mxu0 0.0
      %3606 = vmatprep.subr.mxu0 0.0
      %3607 = vmatpush2.msra.mxu0 0.0
      %3608 = vmatprep.subr.mxu0 0.0
      %3609 = vmatpush2.msra.mxu0 0.0
      %3610 = vmatprep.subr.mxu0 0.0
      %3611 = vmatpush2.msra.mxu0 0.0
      %3612 = vmatprep.subr.mxu0 0.0
      %3613 = vmatpush2.msra.mxu0 0.0
      %3614 = vmatprep.subr.mxu0 0.0
      %3615 = vmatpush2.msra.mxu0 0.0
      %3616 = vmatprep.subr.mxu0 0.0
      %3617 = vmatpush2.msra.mxu0 0.0
      %3618 = vmatprep.subr.mxu0 0.0
      %3619 = vmatpush2.msra.mxu0 0.0
      %3620 = vmatprep.subr.mxu0 0.0
      %3621 = vmatpush2.msra.mxu0 0.0
      %3622 = vmatprep.subr.mxu0 0.0
      %3623 = vmatpush2.msra.mxu0 0.0
      %3624 = vmatprep.subr.mxu0 0.0
      %3625 = vmatpush2.msra.mxu0 0.0
      %3626 = vmatprep.subr.mxu0 0.0
      %3627 = vmatpush2.msra.mxu0 0.0
      %3628 = vmatprep.subr.mxu0 0.0
      %3629 = vmatpush2.msra.mxu0 0.0
      %3630 = vmatprep.mubr.f32.mxu0 0.0
      %3631 = vmatmul.mubr.f32.gmra.mxu0 %v3558
      %v3632 = vpop.f32.mrf.mxu0
      %v3633 = vadd.f32 %v3544, %v3632
      %v3634 = vpop.f32.mrf.mxu0
      %3635 = vmatprep.mubr.f32.mxu0 0.0
      %3636 = vmatmul.mubr.f32.gmra.mxu0 %v3561
      %v3637 = vpop.f32.mrf.mxu0
      %v3638 = vadd.f32 %v3549, %v3637
      %v3639 = vpop.f32.mrf.mxu0
      %3640 = vmatprep.mubr.f32.mxu0 0.0
      %3641 = vmatmul.mubr.f32.gmra.mxu0 %v3564
      %v3642 = vpop.f32.mrf.mxu0
      %v3643 = vadd.f32 %v3554, %v3642
      %v3644 = vpop.f32.mrf.mxu0
      %3645 = vdwg.mxu0
      %3646 = vrot.lane.b32.xlu0 %v2981, 112
      %v3647 = vpop.permute.xlu0 %3646
      %3648 = vrot.lane.b32.xlu0 %v2986, 112
      %v3649 = vpop.permute.xlu0 %3648
      %3650 = vrot.lane.b32.xlu0 %v2991, 112
      %v3651 = vpop.permute.xlu0 %3650
      %3652 = vrot.lane.b32.xlu0 %v2981, 80
      %v3653 = vpop.permute.xlu0 %3652
      %3654 = vrot.lane.b32.xlu0 %v2986, 80
      %v3655 = vpop.permute.xlu0 %3654
      %3656 = vrot.lane.b32.xlu0 %v2991, 80
      %v3657 = vpop.permute.xlu0 %3656
      %v3658 = vsel %vm1229, %v3647, 0
      %v3660 = vsel %vm1229, %v3649, 0
      %v3662 = vsel %vm1229, %v3651, 0
      %v3664 = vsel %vm1229, %v3653, 0
      %v3666 = vsel %vm1229, %v3655, 0
      %v3668 = vsel %vm1229, %v3657, 0
      %3670 = vmatprep.subr.mxu0 0.0
      %3671 = vmatpush1.xpose.msra.mxu0 0.0
      %3672 = vmatprep.subr.mxu0 0.0
      %3673 = vmatpush1.xpose.msra.mxu0 0.0
      %3674 = vmatprep.subr.mxu0 0.0
      %3675 = vmatpush1.xpose.msra.mxu0 0.0
      %3676 = vmatprep.subr.mxu0 0.0
      %3677 = vmatpush1.xpose.msra.mxu0 0.0
      %3678 = vmatprep.subr.mxu0 0.0
      %3679 = vmatpush1.xpose.msra.mxu0 0.0
      %3680 = vmatprep.subr.mxu0 0.0
      %3681 = vmatpush1.xpose.msra.mxu0 0.0
      %3682 = vmatprep.subr.mxu0 0.0
      %3683 = vmatpush1.xpose.msra.mxu0 0.0
      %3684 = vmatprep.subr.mxu0 0.0
      %3685 = vmatpush1.xpose.msra.mxu0 0.0
      %3686 = vmatprep.subr.mxu0 0.0
      %3687 = vmatpush1.xpose.msra.mxu0 0.0
      %3688 = vmatprep.subr.mxu0 0.0
      %3689 = vmatpush1.xpose.msra.mxu0 0.0
      %3690 = vmatprep.subr.mxu0 0.0
      %3691 = vmatpush1.xpose.msra.mxu0 0.0
      %3692 = vmatprep.subr.mxu0 0.0
      %3693 = vmatpush1.xpose.msra.mxu0 0.0
      %3694 = vmatprep.subr.mxu0 0.0
      %3695 = vmatpush1.xpose.msra.mxu0 0.0
      %3696 = vmatprep.subr.mxu0 0.0
      %3697 = vmatpush1.xpose.msra.mxu0 %v3668
      %3698 = vmatprep.subr.mxu0 0.0
      %3699 = vmatpush1.xpose.msra.mxu0 %v3666
      %3700 = vmatprep.subr.mxu0 0.0
      %3701 = vmatpush1.xpose.msra.mxu0 %v3664
      %3702 = vmatprep.subr.mxu0 0.0
      %3703 = vmatpush2.xpose.msra.mxu0 0.0
      %3704 = vmatprep.subr.mxu0 0.0
      %3705 = vmatpush2.xpose.msra.mxu0 0.0
      %3706 = vmatprep.subr.mxu0 0.0
      %3707 = vmatpush2.xpose.msra.mxu0 0.0
      %3708 = vmatprep.subr.mxu0 0.0
      %3709 = vmatpush2.xpose.msra.mxu0 0.0
      %3710 = vmatprep.subr.mxu0 0.0
      %3711 = vmatpush2.xpose.msra.mxu0 0.0
      %3712 = vmatprep.subr.mxu0 0.0
      %3713 = vmatpush2.xpose.msra.mxu0 0.0
      %3714 = vmatprep.subr.mxu0 0.0
      %3715 = vmatpush2.xpose.msra.mxu0 0.0
      %3716 = vmatprep.subr.mxu0 0.0
      %3717 = vmatpush2.xpose.msra.mxu0 0.0
      %3718 = vmatprep.subr.mxu0 0.0
      %3719 = vmatpush2.xpose.msra.mxu0 0.0
      %3720 = vmatprep.subr.mxu0 0.0
      %3721 = vmatpush2.xpose.msra.mxu0 0.0
      %3722 = vmatprep.subr.mxu0 0.0
      %3723 = vmatpush2.xpose.msra.mxu0 0.0
      %3724 = vmatprep.subr.mxu0 0.0
      %3725 = vmatpush2.xpose.msra.mxu0 0.0
      %3726 = vmatprep.subr.mxu0 0.0
      %3727 = vmatpush2.xpose.msra.mxu0 0.0
      %3728 = vmatprep.subr.mxu0 0.0
      %3729 = vmatpush2.xpose.msra.mxu0 0.0
      %3730 = vmatprep.subr.mxu0 0.0
      %3731 = vmatpush2.xpose.msra.mxu0 0.0
      %3732 = vmatprep.subr.mxu0 0.0
      %3733 = vmatpush2.xpose.msra.mxu0 0.0
      %3734 = vmatprep.mubr.f32.mxu0 0.0
      %3735 = vmatmul.mubr.f32.gmra.mxu0 %v3658
      %v3736 = vpop.f32.mrf.mxu0
      %v3737 = vadd.f32 0.0, %v3736
      %v3738 = vpop.f32.mrf.mxu0
      %3739 = vmatprep.mubr.f32.mxu0 0.0
      %3740 = vmatmul.mubr.f32.gmra.mxu0 %v3660
      %v3741 = vpop.f32.mrf.mxu0
      %v3742 = vadd.f32 0.0, %v3741
      %v3743 = vpop.f32.mrf.mxu0
      %3744 = vmatprep.mubr.f32.mxu0 0.0
      %3745 = vmatmul.mubr.f32.gmra.mxu0 %v3662
      %v3746 = vpop.f32.mrf.mxu0
      %v3747 = vadd.f32 0.0, %v3746
      %v3748 = vpop.f32.mrf.mxu0
      %3749 = vdwg.mxu0
      %v3750 = vsel %vm1322, %v3737, -inf
      %3751 = vmax.xlane.f32.xlu0 %v3750
      %v3752 = vpop.xlane.xlu0 %3751
      %v3753 = vsel %vm1322, %v3742, -inf
      %3754 = vmax.xlane.f32.xlu0 %v3753
      %v3755 = vpop.xlane.xlu0 %3754
      %v3756 = vsel %vm1329, %v3747, -inf
      %3757 = vmax.xlane.f32.xlu0 %v3756
      %v3758 = vpop.xlane.xlu0 %3757
      %v3759 = vsub.f32 %v3737, %v3752
      %v3760 = vsub.f32 %v3742, %v3755
      %v3761 = vsub.f32 %v3747, %v3758
      %v3762 = vmul.f32 %v3759, 1.442695
      %v3763 = vpow.pop %v3762
      %v3764 = vmul.f32 %v3760, 1.442695
      %v3765 = vpow.pop %v3764
      %v3766 = vmul.f32 %v3761, 1.442695
      %v3767 = vpow.pop %v3766
      %v3768 = vsel %vm1322, %v3763, 0.0
      %3769 = vadd.xlane.f32.xlu0 %v3768
      %v3770 = vpop.xlane.xlu0 %3769
      %v3771 = vsel %vm1322, %v3765, 0.0
      %3772 = vadd.xlane.f32.xlu0 %v3771
      %v3773 = vpop.xlane.xlu0 %3772
      %v3774 = vsel %vm1329, %v3767, 0.0
      %3775 = vadd.xlane.f32.xlu0 %v3774
      %v3776 = vpop.xlane.xlu0 %3775
      %v3777 = vrcp.pop %v3770
      %v3778 = vrcp.pop %v3773
      %v3779 = vrcp.pop %v3776
      %v3780 = vmul.f32 %v3763, %v3777
      %v3781 = vmul.f32 %v3765, %v3778
      %v3782 = vmul.f32 %v3767, %v3779
      %3783 = vrot.lane.b32.xlu0 %v2981, 48
      %v3784 = vpop.permute.xlu0 %3783
      %3785 = vrot.lane.b32.xlu0 %v2986, 48
      %v3786 = vpop.permute.xlu0 %3785
      %3787 = vrot.lane.b32.xlu0 %v2991, 48
      %v3788 = vpop.permute.xlu0 %3787
      %v3792 = vsel %vm1322, %v3780, 0
      %v3795 = vsel %vm1322, %v3781, 0
      %v3798 = vsel %vm1322, %v3782, 0
      %v3800 = vsel %vm1374, %v3788, 0
      %3802 = vmatprep.subr.mxu0 0.0
      %3803 = vmatpush1.msra.mxu0 0.0
      %3804 = vmatprep.subr.mxu0 0.0
      %3805 = vmatpush1.msra.mxu0 0.0
      %3806 = vmatprep.subr.mxu0 0.0
      %3807 = vmatpush1.msra.mxu0 0.0
      %3808 = vmatprep.subr.mxu0 0.0
      %3809 = vmatpush1.msra.mxu0 0.0
      %3810 = vmatprep.subr.mxu0 0.0
      %3811 = vmatpush1.msra.mxu0 0.0
      %3812 = vmatprep.subr.mxu0 0.0
      %3813 = vmatpush1.msra.mxu0 0.0
      %3814 = vmatprep.subr.mxu0 0.0
      %3815 = vmatpush1.msra.mxu0 0.0
      %3816 = vmatprep.subr.mxu0 0.0
      %3817 = vmatpush1.msra.mxu0 0.0
      %3818 = vmatprep.subr.mxu0 0.0
      %3819 = vmatpush1.msra.mxu0 0.0
      %3820 = vmatprep.subr.mxu0 0.0
      %3821 = vmatpush1.msra.mxu0 0.0
      %3822 = vmatprep.subr.mxu0 0.0
      %3823 = vmatpush1.msra.mxu0 0.0
      %3824 = vmatprep.subr.mxu0 0.0
      %3825 = vmatpush1.msra.mxu0 0.0
      %3826 = vmatprep.subr.mxu0 0.0
      %3827 = vmatpush1.msra.mxu0 0.0
      %3828 = vmatprep.subr.mxu0 0.0
      %3829 = vmatpush1.msra.mxu0 %v3800
      %3830 = vmatprep.subr.mxu0 0.0
      %3831 = vmatpush1.msra.mxu0 %v3786
      %3832 = vmatprep.subr.mxu0 0.0
      %3833 = vmatpush1.msra.mxu0 %v3784
      %3834 = vmatprep.subr.mxu0 0.0
      %3835 = vmatpush2.msra.mxu0 0.0
      %3836 = vmatprep.subr.mxu0 0.0
      %3837 = vmatpush2.msra.mxu0 0.0
      %3838 = vmatprep.subr.mxu0 0.0
      %3839 = vmatpush2.msra.mxu0 0.0
      %3840 = vmatprep.subr.mxu0 0.0
      %3841 = vmatpush2.msra.mxu0 0.0
      %3842 = vmatprep.subr.mxu0 0.0
      %3843 = vmatpush2.msra.mxu0 0.0
      %3844 = vmatprep.subr.mxu0 0.0
      %3845 = vmatpush2.msra.mxu0 0.0
      %3846 = vmatprep.subr.mxu0 0.0
      %3847 = vmatpush2.msra.mxu0 0.0
      %3848 = vmatprep.subr.mxu0 0.0
      %3849 = vmatpush2.msra.mxu0 0.0
      %3850 = vmatprep.subr.mxu0 0.0
      %3851 = vmatpush2.msra.mxu0 0.0
      %3852 = vmatprep.subr.mxu0 0.0
      %3853 = vmatpush2.msra.mxu0 0.0
      %3854 = vmatprep.subr.mxu0 0.0
      %3855 = vmatpush2.msra.mxu0 0.0
      %3856 = vmatprep.subr.mxu0 0.0
      %3857 = vmatpush2.msra.mxu0 0.0
      %3858 = vmatprep.subr.mxu0 0.0
      %3859 = vmatpush2.msra.mxu0 0.0
      %3860 = vmatprep.subr.mxu0 0.0
      %3861 = vmatpush2.msra.mxu0 0.0
      %3862 = vmatprep.subr.mxu0 0.0
      %3863 = vmatpush2.msra.mxu0 0.0
      %3864 = vmatprep.subr.mxu0 0.0
      %3865 = vmatpush2.msra.mxu0 0.0
      %3866 = vmatprep.mubr.f32.mxu0 0.0
      %3867 = vmatmul.mubr.f32.gmra.mxu0 %v3792
      %v3868 = vpop.f32.mrf.mxu0
      %v3869 = vadd.f32 0.0, %v3868
      %v3870 = vpop.f32.mrf.mxu0
      %3871 = vmatprep.mubr.f32.mxu0 0.0
      %3872 = vmatmul.mubr.f32.gmra.mxu0 %v3795
      %v3873 = vpop.f32.mrf.mxu0
      %v3874 = vadd.f32 0.0, %v3873
      %v3875 = vpop.f32.mrf.mxu0
      %3876 = vmatprep.mubr.f32.mxu0 0.0
      %3877 = vmatmul.mubr.f32.gmra.mxu0 %v3798
      %v3878 = vpop.f32.mrf.mxu0
      %v3879 = vadd.f32 0.0, %v3878
      %v3880 = vpop.f32.mrf.mxu0
      %3881 = vdwg.mxu0
      %v3883 = vsel %vm1229, %v3869, 0
      %v3886 = vsel %vm1229, %v3874, 0
      %v3889 = vsel %vm1229, %v3879, 0
      %3891 = vmatprep.subr.mxu0 0.0
      %3892 = vmatpush1.msra.mxu0 0.0
      %3893 = vmatprep.subr.mxu0 0.0
      %3894 = vmatpush1.msra.mxu0 0.0
      %3895 = vmatprep.subr.mxu0 0.0
      %3896 = vmatpush1.msra.mxu0 0.0
      %3897 = vmatprep.subr.mxu0 0.0
      %3898 = vmatpush1.msra.mxu0 0.0
      %3899 = vmatprep.subr.mxu0 0.0
      %3900 = vmatpush1.msra.mxu0 0.0
      %3901 = vmatprep.subr.mxu0 0.0
      %3902 = vmatpush1.msra.mxu0 0.0
      %3903 = vmatprep.subr.mxu0 0.0
      %3904 = vmatpush1.msra.mxu0 0.0
      %3905 = vmatprep.subr.mxu0 0.0
      %3906 = vmatpush1.msra.mxu0 0.0
      %3907 = vmatprep.subr.mxu0 0.0
      %3908 = vmatpush1.msra.mxu0 0.0
      %3909 = vmatprep.subr.mxu0 0.0
      %3910 = vmatpush1.msra.mxu0 0.0
      %3911 = vmatprep.subr.mxu0 0.0
      %3912 = vmatpush1.msra.mxu0 0.0
      %3913 = vmatprep.subr.mxu0 0.0
      %3914 = vmatpush1.msra.mxu0 0.0
      %3915 = vmatprep.subr.mxu0 0.0
      %3916 = vmatpush1.msra.mxu0 0.0
      %3917 = vmatprep.subr.mxu0 0.0
      %3918 = vmatpush1.msra.mxu0 0.0
      %3919 = vmatprep.subr.mxu0 0.0
      %3920 = vmatpush1.msra.mxu0 0.0
      %3921 = vmatprep.subr.mxu0 0.0
      %3922 = vmatpush1.msra.mxu0 %v2997
      %3923 = vmatprep.subr.mxu0 0.0
      %3924 = vmatpush2.msra.mxu0 0.0
      %3925 = vmatprep.subr.mxu0 0.0
      %3926 = vmatpush2.msra.mxu0 0.0
      %3927 = vmatprep.subr.mxu0 0.0
      %3928 = vmatpush2.msra.mxu0 0.0
      %3929 = vmatprep.subr.mxu0 0.0
      %3930 = vmatpush2.msra.mxu0 0.0
      %3931 = vmatprep.subr.mxu0 0.0
      %3932 = vmatpush2.msra.mxu0 0.0
      %3933 = vmatprep.subr.mxu0 0.0
      %3934 = vmatpush2.msra.mxu0 0.0
      %3935 = vmatprep.subr.mxu0 0.0
      %3936 = vmatpush2.msra.mxu0 0.0
      %3937 = vmatprep.subr.mxu0 0.0
      %3938 = vmatpush2.msra.mxu0 0.0
      %3939 = vmatprep.subr.mxu0 0.0
      %3940 = vmatpush2.msra.mxu0 0.0
      %3941 = vmatprep.subr.mxu0 0.0
      %3942 = vmatpush2.msra.mxu0 0.0
      %3943 = vmatprep.subr.mxu0 0.0
      %3944 = vmatpush2.msra.mxu0 0.0
      %3945 = vmatprep.subr.mxu0 0.0
      %3946 = vmatpush2.msra.mxu0 0.0
      %3947 = vmatprep.subr.mxu0 0.0
      %3948 = vmatpush2.msra.mxu0 0.0
      %3949 = vmatprep.subr.mxu0 0.0
      %3950 = vmatpush2.msra.mxu0 0.0
      %3951 = vmatprep.subr.mxu0 0.0
      %3952 = vmatpush2.msra.mxu0 0.0
      %3953 = vmatprep.subr.mxu0 0.0
      %3954 = vmatpush2.msra.mxu0 0.0
      %3955 = vmatprep.mubr.f32.mxu0 0.0
      %3956 = vmatmul.mubr.f32.gmra.mxu0 %v3883
      %v3957 = vpop.f32.mrf.mxu0
      %v3958 = vadd.f32 0.0, %v3957
      %v3959 = vpop.f32.mrf.mxu0
      %3960 = vmatprep.mubr.f32.mxu0 0.0
      %3961 = vmatmul.mubr.f32.gmra.mxu0 %v3886
      %v3962 = vpop.f32.mrf.mxu0
      %v3963 = vadd.f32 0.0, %v3962
      %v3964 = vpop.f32.mrf.mxu0
      %3965 = vmatprep.mubr.f32.mxu0 0.0
      %3966 = vmatmul.mubr.f32.gmra.mxu0 %v3889
      %v3967 = vpop.f32.mrf.mxu0
      %v3968 = vadd.f32 0.0, %v3967
      %v3969 = vpop.f32.mrf.mxu0
      %3970 = vdwg.mxu0
      %v3971 = vadd.f32 %v3633, %v3958
      %v3972 = vadd.f32 %v3638, %v3963
      %v3973 = vadd.f32 %v3643, %v3968
      %3974 = vrot.lane.b32.xlu0 %v2981, 104
      %v3975 = vpop.permute.xlu0 %3974
      %3976 = vrot.lane.b32.xlu0 %v2986, 104
      %v3977 = vpop.permute.xlu0 %3976
      %3978 = vrot.lane.b32.xlu0 %v2991, 104
      %v3979 = vpop.permute.xlu0 %3978
      %3980 = vrot.lane.b32.xlu0 %v2981, 72
      %v3981 = vpop.permute.xlu0 %3980
      %3982 = vrot.lane.b32.xlu0 %v2986, 72
      %v3983 = vpop.permute.xlu0 %3982
      %3984 = vrot.lane.b32.xlu0 %v2991, 72
      %v3985 = vpop.permute.xlu0 %3984
      %v3986 = vsel %vm1229, %v3975, 0
      %v3988 = vsel %vm1229, %v3977, 0
      %v3990 = vsel %vm1229, %v3979, 0
      %v3992 = vsel %vm1229, %v3981, 0
      %v3994 = vsel %vm1229, %v3983, 0
      %v3996 = vsel %vm1229, %v3985, 0
      %3998 = vmatprep.subr.mxu0 0.0
      %3999 = vmatpush1.xpose.msra.mxu0 0.0
      %4000 = vmatprep.subr.mxu0 0.0
      %4001 = vmatpush1.xpose.msra.mxu0 0.0
      %4002 = vmatprep.subr.mxu0 0.0
      %4003 = vmatpush1.xpose.msra.mxu0 0.0
      %4004 = vmatprep.subr.mxu0 0.0
      %4005 = vmatpush1.xpose.msra.mxu0 0.0
      %4006 = vmatprep.subr.mxu0 0.0
      %4007 = vmatpush1.xpose.msra.mxu0 0.0
      %4008 = vmatprep.subr.mxu0 0.0
      %4009 = vmatpush1.xpose.msra.mxu0 0.0
      %4010 = vmatprep.subr.mxu0 0.0
      %4011 = vmatpush1.xpose.msra.mxu0 0.0
      %4012 = vmatprep.subr.mxu0 0.0
      %4013 = vmatpush1.xpose.msra.mxu0 0.0
      %4014 = vmatprep.subr.mxu0 0.0
      %4015 = vmatpush1.xpose.msra.mxu0 0.0
      %4016 = vmatprep.subr.mxu0 0.0
      %4017 = vmatpush1.xpose.msra.mxu0 0.0
      %4018 = vmatprep.subr.mxu0 0.0
      %4019 = vmatpush1.xpose.msra.mxu0 0.0
      %4020 = vmatprep.subr.mxu0 0.0
      %4021 = vmatpush1.xpose.msra.mxu0 0.0
      %4022 = vmatprep.subr.mxu0 0.0
      %4023 = vmatpush1.xpose.msra.mxu0 0.0
      %4024 = vmatprep.subr.mxu0 0.0
      %4025 = vmatpush1.xpose.msra.mxu0 %v3996
      %4026 = vmatprep.subr.mxu0 0.0
      %4027 = vmatpush1.xpose.msra.mxu0 %v3994
      %4028 = vmatprep.subr.mxu0 0.0
      %4029 = vmatpush1.xpose.msra.mxu0 %v3992
      %4030 = vmatprep.subr.mxu0 0.0
      %4031 = vmatpush2.xpose.msra.mxu0 0.0
      %4032 = vmatprep.subr.mxu0 0.0
      %4033 = vmatpush2.xpose.msra.mxu0 0.0
      %4034 = vmatprep.subr.mxu0 0.0
      %4035 = vmatpush2.xpose.msra.mxu0 0.0
      %4036 = vmatprep.subr.mxu0 0.0
      %4037 = vmatpush2.xpose.msra.mxu0 0.0
      %4038 = vmatprep.subr.mxu0 0.0
      %4039 = vmatpush2.xpose.msra.mxu0 0.0
      %4040 = vmatprep.subr.mxu0 0.0
      %4041 = vmatpush2.xpose.msra.mxu0 0.0
      %4042 = vmatprep.subr.mxu0 0.0
      %4043 = vmatpush2.xpose.msra.mxu0 0.0
      %4044 = vmatprep.subr.mxu0 0.0
      %4045 = vmatpush2.xpose.msra.mxu0 0.0
      %4046 = vmatprep.subr.mxu0 0.0
      %4047 = vmatpush2.xpose.msra.mxu0 0.0
      %4048 = vmatprep.subr.mxu0 0.0
      %4049 = vmatpush2.xpose.msra.mxu0 0.0
      %4050 = vmatprep.subr.mxu0 0.0
      %4051 = vmatpush2.xpose.msra.mxu0 0.0
      %4052 = vmatprep.subr.mxu0 0.0
      %4053 = vmatpush2.xpose.msra.mxu0 0.0
      %4054 = vmatprep.subr.mxu0 0.0
      %4055 = vmatpush2.xpose.msra.mxu0 0.0
      %4056 = vmatprep.subr.mxu0 0.0
      %4057 = vmatpush2.xpose.msra.mxu0 0.0
      %4058 = vmatprep.subr.mxu0 0.0
      %4059 = vmatpush2.xpose.msra.mxu0 0.0
      %4060 = vmatprep.subr.mxu0 0.0
      %4061 = vmatpush2.xpose.msra.mxu0 0.0
      %4062 = vmatprep.mubr.f32.mxu0 0.0
      %4063 = vmatmul.mubr.f32.gmra.mxu0 %v3986
      %v4064 = vpop.f32.mrf.mxu0
      %v4065 = vadd.f32 0.0, %v4064
      %v4066 = vpop.f32.mrf.mxu0
      %4067 = vmatprep.mubr.f32.mxu0 0.0
      %4068 = vmatmul.mubr.f32.gmra.mxu0 %v3988
      %v4069 = vpop.f32.mrf.mxu0
      %v4070 = vadd.f32 0.0, %v4069
      %v4071 = vpop.f32.mrf.mxu0
      %4072 = vmatprep.mubr.f32.mxu0 0.0
      %4073 = vmatmul.mubr.f32.gmra.mxu0 %v3990
      %v4074 = vpop.f32.mrf.mxu0
      %v4075 = vadd.f32 0.0, %v4074
      %v4076 = vpop.f32.mrf.mxu0
      %4077 = vdwg.mxu0
      %v4078 = vsel %vm1322, %v4065, -inf
      %4079 = vmax.xlane.f32.xlu0 %v4078
      %v4080 = vpop.xlane.xlu0 %4079
      %v4081 = vsel %vm1322, %v4070, -inf
      %4082 = vmax.xlane.f32.xlu0 %v4081
      %v4083 = vpop.xlane.xlu0 %4082
      %v4084 = vsel %vm1329, %v4075, -inf
      %4085 = vmax.xlane.f32.xlu0 %v4084
      %v4086 = vpop.xlane.xlu0 %4085
      %v4087 = vsub.f32 %v4065, %v4080
      %v4088 = vsub.f32 %v4070, %v4083
      %v4089 = vsub.f32 %v4075, %v4086
      %v4090 = vmul.f32 %v4087, 1.442695
      %v4091 = vpow.pop %v4090
      %v4092 = vmul.f32 %v4088, 1.442695
      %v4093 = vpow.pop %v4092
      %v4094 = vmul.f32 %v4089, 1.442695
      %v4095 = vpow.pop %v4094
      %v4096 = vsel %vm1322, %v4091, 0.0
      %4097 = vadd.xlane.f32.xlu0 %v4096
      %v4098 = vpop.xlane.xlu0 %4097
      %v4099 = vsel %vm1322, %v4093, 0.0
      %4100 = vadd.xlane.f32.xlu0 %v4099
      %v4101 = vpop.xlane.xlu0 %4100
      %v4102 = vsel %vm1329, %v4095, 0.0
      %4103 = vadd.xlane.f32.xlu0 %v4102
      %v4104 = vpop.xlane.xlu0 %4103
      %v4105 = vrcp.pop %v4098
      %v4106 = vrcp.pop %v4101
      %v4107 = vrcp.pop %v4104
      %v4108 = vmul.f32 %v4091, %v4105
      %v4109 = vmul.f32 %v4093, %v4106
      %v4110 = vmul.f32 %v4095, %v4107
      %4111 = vrot.lane.b32.xlu0 %v2981, 40
      %v4112 = vpop.permute.xlu0 %4111
      %4113 = vrot.lane.b32.xlu0 %v2986, 40
      %v4114 = vpop.permute.xlu0 %4113
      %4115 = vrot.lane.b32.xlu0 %v2991, 40
      %v4116 = vpop.permute.xlu0 %4115
      %v4120 = vsel %vm1322, %v4108, 0
      %v4123 = vsel %vm1322, %v4109, 0
      %v4126 = vsel %vm1322, %v4110, 0
      %v4128 = vsel %vm1374, %v4116, 0
      %4130 = vmatprep.subr.mxu0 0.0
      %4131 = vmatpush1.msra.mxu0 0.0
      %4132 = vmatprep.subr.mxu0 0.0
      %4133 = vmatpush1.msra.mxu0 0.0
      %4134 = vmatprep.subr.mxu0 0.0
      %4135 = vmatpush1.msra.mxu0 0.0
      %4136 = vmatprep.subr.mxu0 0.0
      %4137 = vmatpush1.msra.mxu0 0.0
      %4138 = vmatprep.subr.mxu0 0.0
      %4139 = vmatpush1.msra.mxu0 0.0
      %4140 = vmatprep.subr.mxu0 0.0
      %4141 = vmatpush1.msra.mxu0 0.0
      %4142 = vmatprep.subr.mxu0 0.0
      %4143 = vmatpush1.msra.mxu0 0.0
      %4144 = vmatprep.subr.mxu0 0.0
      %4145 = vmatpush1.msra.mxu0 0.0
      %4146 = vmatprep.subr.mxu0 0.0
      %4147 = vmatpush1.msra.mxu0 0.0
      %4148 = vmatprep.subr.mxu0 0.0
      %4149 = vmatpush1.msra.mxu0 0.0
      %4150 = vmatprep.subr.mxu0 0.0
      %4151 = vmatpush1.msra.mxu0 0.0
      %4152 = vmatprep.subr.mxu0 0.0
      %4153 = vmatpush1.msra.mxu0 0.0
      %4154 = vmatprep.subr.mxu0 0.0
      %4155 = vmatpush1.msra.mxu0 0.0
      %4156 = vmatprep.subr.mxu0 0.0
      %4157 = vmatpush1.msra.mxu0 %v4128
      %4158 = vmatprep.subr.mxu0 0.0
      %4159 = vmatpush1.msra.mxu0 %v4114
      %4160 = vmatprep.subr.mxu0 0.0
      %4161 = vmatpush1.msra.mxu0 %v4112
      %4162 = vmatprep.subr.mxu0 0.0
      %4163 = vmatpush2.msra.mxu0 0.0
      %4164 = vmatprep.subr.mxu0 0.0
      %4165 = vmatpush2.msra.mxu0 0.0
      %4166 = vmatprep.subr.mxu0 0.0
      %4167 = vmatpush2.msra.mxu0 0.0
      %4168 = vmatprep.subr.mxu0 0.0
      %4169 = vmatpush2.msra.mxu0 0.0
      %4170 = vmatprep.subr.mxu0 0.0
      %4171 = vmatpush2.msra.mxu0 0.0
      %4172 = vmatprep.subr.mxu0 0.0
      %4173 = vmatpush2.msra.mxu0 0.0
      %4174 = vmatprep.subr.mxu0 0.0
      %4175 = vmatpush2.msra.mxu0 0.0
      %4176 = vmatprep.subr.mxu0 0.0
      %4177 = vmatpush2.msra.mxu0 0.0
      %4178 = vmatprep.subr.mxu0 0.0
      %4179 = vmatpush2.msra.mxu0 0.0
      %4180 = vmatprep.subr.mxu0 0.0
      %4181 = vmatpush2.msra.mxu0 0.0
      %4182 = vmatprep.subr.mxu0 0.0
      %4183 = vmatpush2.msra.mxu0 0.0
      %4184 = vmatprep.subr.mxu0 0.0
      %4185 = vmatpush2.msra.mxu0 0.0
      %4186 = vmatprep.subr.mxu0 0.0
      %4187 = vmatpush2.msra.mxu0 0.0
      %4188 = vmatprep.subr.mxu0 0.0
      %4189 = vmatpush2.msra.mxu0 0.0
      %4190 = vmatprep.subr.mxu0 0.0
      %4191 = vmatpush2.msra.mxu0 0.0
      %4192 = vmatprep.subr.mxu0 0.0
      %4193 = vmatpush2.msra.mxu0 0.0
      %4194 = vmatprep.mubr.f32.mxu0 0.0
      %4195 = vmatmul.mubr.f32.gmra.mxu0 %v4120
      %v4196 = vpop.f32.mrf.mxu0
      %v4197 = vadd.f32 0.0, %v4196
      %v4198 = vpop.f32.mrf.mxu0
      %4199 = vmatprep.mubr.f32.mxu0 0.0
      %4200 = vmatmul.mubr.f32.gmra.mxu0 %v4123
      %v4201 = vpop.f32.mrf.mxu0
      %v4202 = vadd.f32 0.0, %v4201
      %v4203 = vpop.f32.mrf.mxu0
      %4204 = vmatprep.mubr.f32.mxu0 0.0
      %4205 = vmatmul.mubr.f32.gmra.mxu0 %v4126
      %v4206 = vpop.f32.mrf.mxu0
      %v4207 = vadd.f32 0.0, %v4206
      %v4208 = vpop.f32.mrf.mxu0
      %4209 = vdwg.mxu0
      %v4211 = vsel %vm1229, %v4197, 0
      %v4214 = vsel %vm1229, %v4202, 0
      %v4217 = vsel %vm1229, %v4207, 0
      %4219 = vmatprep.subr.mxu0 0.0
      %4220 = vmatpush1.msra.mxu0 0.0
      %4221 = vmatprep.subr.mxu0 0.0
      %4222 = vmatpush1.msra.mxu0 0.0
      %4223 = vmatprep.subr.mxu0 0.0
      %4224 = vmatpush1.msra.mxu0 0.0
      %4225 = vmatprep.subr.mxu0 0.0
      %4226 = vmatpush1.msra.mxu0 0.0
      %4227 = vmatprep.subr.mxu0 0.0
      %4228 = vmatpush1.msra.mxu0 0.0
      %4229 = vmatprep.subr.mxu0 0.0
      %4230 = vmatpush1.msra.mxu0 0.0
      %4231 = vmatprep.subr.mxu0 0.0
      %4232 = vmatpush1.msra.mxu0 0.0
      %4233 = vmatprep.subr.mxu0 0.0
      %4234 = vmatpush1.msra.mxu0 0.0
      %4235 = vmatprep.subr.mxu0 0.0
      %4236 = vmatpush1.msra.mxu0 0.0
      %4237 = vmatprep.subr.mxu0 0.0
      %4238 = vmatpush1.msra.mxu0 0.0
      %4239 = vmatprep.subr.mxu0 0.0
      %4240 = vmatpush1.msra.mxu0 0.0
      %4241 = vmatprep.subr.mxu0 0.0
      %4242 = vmatpush1.msra.mxu0 0.0
      %4243 = vmatprep.subr.mxu0 0.0
      %4244 = vmatpush1.msra.mxu0 0.0
      %4245 = vmatprep.subr.mxu0 0.0
      %4246 = vmatpush1.msra.mxu0 0.0
      %4247 = vmatprep.subr.mxu0 0.0
      %4248 = vmatpush1.msra.mxu0 0.0
      %4249 = vmatprep.subr.mxu0 0.0
      %4250 = vmatpush1.msra.mxu0 %v2998
      %4251 = vmatprep.subr.mxu0 0.0
      %4252 = vmatpush2.msra.mxu0 0.0
      %4253 = vmatprep.subr.mxu0 0.0
      %4254 = vmatpush2.msra.mxu0 0.0
      %4255 = vmatprep.subr.mxu0 0.0
      %4256 = vmatpush2.msra.mxu0 0.0
      %4257 = vmatprep.subr.mxu0 0.0
      %4258 = vmatpush2.msra.mxu0 0.0
      %4259 = vmatprep.subr.mxu0 0.0
      %4260 = vmatpush2.msra.mxu0 0.0
      %4261 = vmatprep.subr.mxu0 0.0
      %4262 = vmatpush2.msra.mxu0 0.0
      %4263 = vmatprep.subr.mxu0 0.0
      %4264 = vmatpush2.msra.mxu0 0.0
      %4265 = vmatprep.subr.mxu0 0.0
      %4266 = vmatpush2.msra.mxu0 0.0
      %4267 = vmatprep.subr.mxu0 0.0
      %4268 = vmatpush2.msra.mxu0 0.0
      %4269 = vmatprep.subr.mxu0 0.0
      %4270 = vmatpush2.msra.mxu0 0.0
      %4271 = vmatprep.subr.mxu0 0.0
      %4272 = vmatpush2.msra.mxu0 0.0
      %4273 = vmatprep.subr.mxu0 0.0
      %4274 = vmatpush2.msra.mxu0 0.0
      %4275 = vmatprep.subr.mxu0 0.0
      %4276 = vmatpush2.msra.mxu0 0.0
      %4277 = vmatprep.subr.mxu0 0.0
      %4278 = vmatpush2.msra.mxu0 0.0
      %4279 = vmatprep.subr.mxu0 0.0
      %4280 = vmatpush2.msra.mxu0 0.0
      %4281 = vmatprep.subr.mxu0 0.0
      %4282 = vmatpush2.msra.mxu0 0.0
      %4283 = vmatprep.mubr.f32.mxu0 0.0
      %4284 = vmatmul.mubr.f32.gmra.mxu0 %v4211
      %v4285 = vpop.f32.mrf.mxu0
      %v4286 = vadd.f32 0.0, %v4285
      %v4287 = vpop.f32.mrf.mxu0
      %4288 = vmatprep.mubr.f32.mxu0 0.0
      %4289 = vmatmul.mubr.f32.gmra.mxu0 %v4214
      %v4290 = vpop.f32.mrf.mxu0
      %v4291 = vadd.f32 0.0, %v4290
      %v4292 = vpop.f32.mrf.mxu0
      %4293 = vmatprep.mubr.f32.mxu0 0.0
      %4294 = vmatmul.mubr.f32.gmra.mxu0 %v4217
      %v4295 = vpop.f32.mrf.mxu0
      %v4296 = vadd.f32 0.0, %v4295
      %v4297 = vpop.f32.mrf.mxu0
      %4298 = vdwg.mxu0
      %v4299 = vadd.f32 %v3971, %v4286
      %v4300 = vadd.f32 %v3972, %v4291
      %v4301 = vadd.f32 %v3973, %v4296
      %v4302 = vadd.f32 %v2828, %v4299
      %v4303 = vadd.f32 %v2829, %v4300
      %v4304 = vadd.f32 %v2830, %v4301
      %s4305 = scalar_lea.vmem %s842, 1
      %v4306 = vld [vmem:[%s4305] sm:$0x1]
      %v4308 = vlaneseq
      %v4309 = vshrl.u32 %v4308, 7
      %v4310 = vsub.s32 0, %v4309
      %v4311 = vrot.slane %v4306, %v4310
      %v4313 = vadd.f32 %v4302, %v4311
      %v4314 = vadd.f32 %v4303, %v4311
      %v4315 = vadd.f32 %v4304, %v4311
      %s4316 = scalar_lea.vmem %s846, 1
      %v4317 = vld [vmem:[%s4316] sm:$0x1]
      %s4318 = scalar_lea.vmem %s850, 1
      %v4319 = vld [vmem:[%s4318] sm:$0x1]
      %v4320 = vsel %vm987, %v4313, 0.0
      %4321 = vadd.xlane.f32.xlu0 %v4320
      %v4322 = vpop.xlane.xlu0 %4321
      %v4323 = vsel %vm987, %v4314, 0.0
      %4324 = vadd.xlane.f32.xlu0 %v4323
      %v4325 = vpop.xlane.xlu0 %4324
      %v4326 = vsel %vm991, %v4315, 0.0
      %4327 = vadd.xlane.f32.xlu0 %v4326
      %v4328 = vpop.xlane.xlu0 %4327
      %v4329 = vmul.f32 %v4322, %v1008
      %v4330 = vmul.f32 %v4325, %v1008
      %v4331 = vmul.f32 %v4328, %v1008
      %v4332 = vsub.f32 %v4313, %v4329
      %v4333 = vsub.f32 %v4314, %v4330
      %v4334 = vsub.f32 %v4315, %v4331
      %v4335 = vmul.f32 %v4332, %v4332
      %v4336 = vmul.f32 %v4333, %v4333
      %v4337 = vmul.f32 %v4334, %v4334
      %v4338 = vsel %vm987, %v4335, 0.0
      %4339 = vadd.xlane.f32.xlu0 %v4338
      %v4340 = vpop.xlane.xlu0 %4339
      %v4341 = vsel %vm987, %v4336, 0.0
      %4342 = vadd.xlane.f32.xlu0 %v4341
      %v4343 = vpop.xlane.xlu0 %4342
      %v4344 = vsel %vm991, %v4337, 0.0
      %4345 = vadd.xlane.f32.xlu0 %v4344
      %v4346 = vpop.xlane.xlu0 %4345
      %v4347 = vmul.f32 %v4340, %v1008
      %v4348 = vmul.f32 %v4343, %v1008
      %v4349 = vmul.f32 %v4346, %v1008
      %v4350 = vadd.f32 %v4347, 1e-05
      %v4351 = vadd.f32 %v4348, 1e-05
      %v4352 = vadd.f32 %v4349, 1e-05
      %v4353 = vrsqrt.pop %v4350
      %v4354 = vrsqrt.pop %v4351
      %v4355 = vrsqrt.pop %v4352
      %v4356 = vmul.f32 %v4332, %v4353
      %v4357 = vmul.f32 %v4333, %v4354
      %v4358 = vmul.f32 %v4334, %v4355
      %v4360 = vlaneseq
      %v4361 = vshrl.u32 %v4360, 7
      %v4362 = vsub.s32 0, %v4361
      %v4363 = vrot.slane %v4317, %v4362
      %v4365 = vmul.f32 %v4356, %v4363
      %v4366 = vmul.f32 %v4357, %v4363
      %v4367 = vmul.f32 %v4358, %v4363
      %v4369 = vlaneseq
      %v4370 = vshrl.u32 %v4369, 7
      %v4371 = vsub.s32 0, %v4370
      %v4372 = vrot.slane %v4319, %v4371
      %v4374 = vadd.f32 %v4365, %v4372
      %v4375 = vadd.f32 %v4366, %v4372
      %v4376 = vadd.f32 %v4367, %v4372
      %s4377 = scalar_lea.vmem %s855, 32
      %v4378 = vld [vmem:[%s4377] sm:$0xff]
      %v4379 = vld [vmem:[%s4377 + $0x8] sm:$0xff]
      %v4380 = vld [vmem:[%s4377 + $0x10] sm:$0xff]
      %v4381 = vld [vmem:[%s4377 + $0x18] sm:$0xff]
      %s4382 = scalar_lea.vmem %s859, 1
      %v4383 = vld [vmem:[%s4382] sm:$0x1]
      %v4385 = vlaneseq
      %v4386 = vshrl.u32 %v4385, 7
      %v4387 = vsub.s32 0, %v4386
      %v4388 = vrot.slane %v4383, %v4387
      %v4391 = vsel %vm987, %v4374, 0
      %v4394 = vsel %vm987, %v4375, 0
      %v4397 = vsel %vm987, %v4376, 0
      %4399 = vmatprep.subr.mxu0 0.0
      %4400 = vmatpush1.msra.mxu0 0.0
      %4401 = vmatprep.subr.mxu0 0.0
      %4402 = vmatpush1.msra.mxu0 0.0
      %4403 = vmatprep.subr.mxu0 0.0
      %4404 = vmatpush1.msra.mxu0 0.0
      %4405 = vmatprep.subr.mxu0 0.0
      %4406 = vmatpush1.msra.mxu0 0.0
      %4407 = vmatprep.subr.mxu0 0.0
      %4408 = vmatpush1.msra.mxu0 0.0
      %4409 = vmatprep.subr.mxu0 0.0
      %4410 = vmatpush1.msra.mxu0 0.0
      %4411 = vmatprep.subr.mxu0 0.0
      %4412 = vmatpush1.msra.mxu0 0.0
      %4413 = vmatprep.subr.mxu0 0.0
      %4414 = vmatpush1.msra.mxu0 0.0
      %4415 = vmatprep.subr.mxu0 0.0
      %4416 = vmatpush1.msra.mxu0 0.0
      %4417 = vmatprep.subr.mxu0 0.0
      %4418 = vmatpush1.msra.mxu0 0.0
      %4419 = vmatprep.subr.mxu0 0.0
      %4420 = vmatpush1.msra.mxu0 0.0
      %4421 = vmatprep.subr.mxu0 0.0
      %4422 = vmatpush1.msra.mxu0 0.0
      %4423 = vmatprep.subr.mxu0 0.0
      %4424 = vmatpush1.msra.mxu0 %v4381
      %4425 = vmatprep.subr.mxu0 0.0
      %4426 = vmatpush1.msra.mxu0 %v4380
      %4427 = vmatprep.subr.mxu0 0.0
      %4428 = vmatpush1.msra.mxu0 %v4379
      %4429 = vmatprep.subr.mxu0 0.0
      %4430 = vmatpush1.msra.mxu0 %v4378
      %4431 = vmatprep.subr.mxu0 0.0
      %4432 = vmatpush2.msra.mxu0 0.0
      %4433 = vmatprep.subr.mxu0 0.0
      %4434 = vmatpush2.msra.mxu0 0.0
      %4435 = vmatprep.subr.mxu0 0.0
      %4436 = vmatpush2.msra.mxu0 0.0
      %4437 = vmatprep.subr.mxu0 0.0
      %4438 = vmatpush2.msra.mxu0 0.0
      %4439 = vmatprep.subr.mxu0 0.0
      %4440 = vmatpush2.msra.mxu0 0.0
      %4441 = vmatprep.subr.mxu0 0.0
      %4442 = vmatpush2.msra.mxu0 0.0
      %4443 = vmatprep.subr.mxu0 0.0
      %4444 = vmatpush2.msra.mxu0 0.0
      %4445 = vmatprep.subr.mxu0 0.0
      %4446 = vmatpush2.msra.mxu0 0.0
      %4447 = vmatprep.subr.mxu0 0.0
      %4448 = vmatpush2.msra.mxu0 0.0
      %4449 = vmatprep.subr.mxu0 0.0
      %4450 = vmatpush2.msra.mxu0 0.0
      %4451 = vmatprep.subr.mxu0 0.0
      %4452 = vmatpush2.msra.mxu0 0.0
      %4453 = vmatprep.subr.mxu0 0.0
      %4454 = vmatpush2.msra.mxu0 0.0
      %4455 = vmatprep.subr.mxu0 0.0
      %4456 = vmatpush2.msra.mxu0 0.0
      %4457 = vmatprep.subr.mxu0 0.0
      %4458 = vmatpush2.msra.mxu0 0.0
      %4459 = vmatprep.subr.mxu0 0.0
      %4460 = vmatpush2.msra.mxu0 0.0
      %4461 = vmatprep.subr.mxu0 0.0
      %4462 = vmatpush2.msra.mxu0 0.0
      %4463 = vmatprep.mubr.f32.mxu0 0.0
      %4464 = vmatmul.mubr.f32.gmra.mxu0 %v4391
      %v4465 = vpop.f32.mrf.mxu0
      %v4466 = vadd.f32 %v4388, %v4465
      %v4467 = vpop.f32.mrf.mxu0
      %4468 = vmatprep.mubr.f32.mxu0 0.0
      %4469 = vmatmul.mubr.f32.gmra.mxu0 %v4394
      %v4470 = vpop.f32.mrf.mxu0
      %v4471 = vadd.f32 %v4388, %v4470
      %v4472 = vpop.f32.mrf.mxu0
      %4473 = vmatprep.mubr.f32.mxu0 0.0
      %4474 = vmatmul.mubr.f32.gmra.mxu0 %v4397
      %v4475 = vpop.f32.mrf.mxu0
      %v4476 = vadd.f32 %v4388, %v4475
      %v4477 = vpop.f32.mrf.mxu0
      %4478 = vdwg.mxu0
      %v4479 = vmul.f32 %v4466, 1.702
      %v4480 = vmul.f32 %v4471, 1.702
      %v4481 = vmul.f32 %v4476, 1.702
      %v4482 = vxor.u32 %v4479, 2147483648
      %v4483 = vxor.u32 %v4480, 2147483648
      %v4484 = vxor.u32 %v4481, 2147483648
      %v4485 = vmul.f32 %v4482, 1.442695
      %v4486 = vpow.pop %v4485
      %v4487 = vmul.f32 %v4483, 1.442695
      %v4488 = vpow.pop %v4487
      %v4489 = vmul.f32 %v4484, 1.442695
      %v4490 = vpow.pop %v4489
      %v4491 = vadd.f32 %v4486, 1.0
      %v4492 = vadd.f32 %v4488, 1.0
      %v4493 = vadd.f32 %v4490, 1.0
      %v4494 = vrcp.pop %v4491
      %v4495 = vmul.f32 1.0, %v4494
      %v4496 = vrcp.pop %v4492
      %v4497 = vmul.f32 1.0, %v4496
      %v4498 = vrcp.pop %v4493
      %v4499 = vmul.f32 1.0, %v4498
      %v4500 = vmul.f32 %v4466, %v4495
      %v4501 = vmul.f32 %v4471, %v4497
      %v4502 = vmul.f32 %v4476, %v4499
      %s4503 = scalar_lea.vmem %s864, 64
      %v4504 = vld [vmem:[%s4503] sm:$0xff]
      %v4505 = vld [vmem:[%s4503 + $0x8] sm:$0xff]
      %v4506 = vld [vmem:[%s4503 + $0x10] sm:$0xff]
      %v4507 = vld [vmem:[%s4503 + $0x18] sm:$0xff]
      %v4508 = vld [vmem:[%s4503 + $0x20] sm:$0xff]
      %v4509 = vld [vmem:[%s4503 + $0x28] sm:$0xff]
      %v4510 = vld [vmem:[%s4503 + $0x30] sm:$0xff]
      %v4511 = vld [vmem:[%s4503 + $0x38] sm:$0xff]
      %s4512 = scalar_lea.vmem %s868, 1
      %v4513 = vld [vmem:[%s4512] sm:$0x1]
      %v4515 = vlaneseq
      %v4516 = vshrl.u32 %v4515, 7
      %v4517 = vsub.s32 0, %v4516
      %v4518 = vrot.slane %v4513, %v4517
      %v4521 = vsel %vm2738, %v4500, 0
      %v4524 = vsel %vm2738, %v4501, 0
      %v4527 = vsel %vm2738, %v4502, 0
      %4529 = vmatprep.subr.mxu0 0.0
      %4530 = vmatpush1.msra.mxu0 0.0
      %4531 = vmatprep.subr.mxu0 0.0
      %4532 = vmatpush1.msra.mxu0 0.0
      %4533 = vmatprep.subr.mxu0 0.0
      %4534 = vmatpush1.msra.mxu0 0.0
      %4535 = vmatprep.subr.mxu0 0.0
      %4536 = vmatpush1.msra.mxu0 0.0
      %4537 = vmatprep.subr.mxu0 0.0
      %4538 = vmatpush1.msra.mxu0 0.0
      %4539 = vmatprep.subr.mxu0 0.0
      %4540 = vmatpush1.msra.mxu0 0.0
      %4541 = vmatprep.subr.mxu0 0.0
      %4542 = vmatpush1.msra.mxu0 0.0
      %4543 = vmatprep.subr.mxu0 0.0
      %4544 = vmatpush1.msra.mxu0 0.0
      %4545 = vmatprep.subr.mxu0 0.0
      %4546 = vmatpush1.msra.mxu0 %v4511
      %4547 = vmatprep.subr.mxu0 0.0
      %4548 = vmatpush1.msra.mxu0 %v4510
      %4549 = vmatprep.subr.mxu0 0.0
      %4550 = vmatpush1.msra.mxu0 %v4509
      %4551 = vmatprep.subr.mxu0 0.0
      %4552 = vmatpush1.msra.mxu0 %v4508
      %4553 = vmatprep.subr.mxu0 0.0
      %4554 = vmatpush1.msra.mxu0 %v4507
      %4555 = vmatprep.subr.mxu0 0.0
      %4556 = vmatpush1.msra.mxu0 %v4506
      %4557 = vmatprep.subr.mxu0 0.0
      %4558 = vmatpush1.msra.mxu0 %v4505
      %4559 = vmatprep.subr.mxu0 0.0
      %4560 = vmatpush1.msra.mxu0 %v4504
      %4561 = vmatprep.subr.mxu0 0.0
      %4562 = vmatpush2.msra.mxu0 0.0
      %4563 = vmatprep.subr.mxu0 0.0
      %4564 = vmatpush2.msra.mxu0 0.0
      %4565 = vmatprep.subr.mxu0 0.0
      %4566 = vmatpush2.msra.mxu0 0.0
      %4567 = vmatprep.subr.mxu0 0.0
      %4568 = vmatpush2.msra.mxu0 0.0
      %4569 = vmatprep.subr.mxu0 0.0
      %4570 = vmatpush2.msra.mxu0 0.0
      %4571 = vmatprep.subr.mxu0 0.0
      %4572 = vmatpush2.msra.mxu0 0.0
      %4573 = vmatprep.subr.mxu0 0.0
      %4574 = vmatpush2.msra.mxu0 0.0
      %4575 = vmatprep.subr.mxu0 0.0
      %4576 = vmatpush2.msra.mxu0 0.0
      %4577 = vmatprep.subr.mxu0 0.0
      %4578 = vmatpush2.msra.mxu0 0.0
      %4579 = vmatprep.subr.mxu0 0.0
      %4580 = vmatpush2.msra.mxu0 0.0
      %4581 = vmatprep.subr.mxu0 0.0
      %4582 = vmatpush2.msra.mxu0 0.0
      %4583 = vmatprep.subr.mxu0 0.0
      %4584 = vmatpush2.msra.mxu0 0.0
      %4585 = vmatprep.subr.mxu0 0.0
      %4586 = vmatpush2.msra.mxu0 0.0
      %4587 = vmatprep.subr.mxu0 0.0
      %4588 = vmatpush2.msra.mxu0 0.0
      %4589 = vmatprep.subr.mxu0 0.0
      %4590 = vmatpush2.msra.mxu0 0.0
      %4591 = vmatprep.subr.mxu0 0.0
      %4592 = vmatpush2.msra.mxu0 0.0
      %4593 = vmatprep.mubr.f32.mxu0 0.0
      %4594 = vmatmul.mubr.f32.gmra.mxu0 %v4521
      %v4595 = vpop.f32.mrf.mxu0
      %v4596 = vadd.f32 %v4518, %v4595
      %v4597 = vpop.f32.mrf.mxu0
      %4598 = vmatprep.mubr.f32.mxu0 0.0
      %4599 = vmatmul.mubr.f32.gmra.mxu0 %v4524
      %v4600 = vpop.f32.mrf.mxu0
      %v4601 = vadd.f32 %v4518, %v4600
      %v4602 = vpop.f32.mrf.mxu0
      %4603 = vmatprep.mubr.f32.mxu0 0.0
      %4604 = vmatmul.mubr.f32.gmra.mxu0 %v4527
      %v4605 = vpop.f32.mrf.mxu0
      %v4606 = vpop.f32.mrf.mxu0
      %4607 = vdwg.mxu0
      %v4608 = vadd.f32 %v4313, %v4596
      %v4609 = vadd.f32 %v4314, %v4601
      %4610 = vst.msk [vmem:[%s873] sm:$0xff] %vm987, %v4608
      %4611 = vst.msk [vmem:[%s873 + $0x8] sm:$0xff] %vm987, %v4609
      %4612 = vst.msk [vmem:[#allocation2] sm:$0xff] %vm987, %v974
      %4613 = vst.msk [vmem:[#allocation2 + $0x8] sm:$0xff] %vm987, %v979
      %v4614 = vld [vmem:[%s805] sm:$0x1]
      %4615 = vst.msk [vmem:[#allocation2 + $0x10] sm:$0x1] %vm991, %v4614
      %v4616 = vld [vmem:[#allocation2] sm:$0xff]
      %v4617 = vld [vmem:[#allocation2 + $0x8] sm:$0xff]
      %v4618 = vld [vmem:[#allocation2 + $0x10] sm:$0x1]
      %v4619 = vadd.f32 %v4616, %v982
      %v4620 = vadd.f32 %v4617, %v983
      %v4621 = vadd.f32 %v4618, %v984
      %v4622 = vsel %vm987, %v4619, 0.0
      %4623 = vadd.xlane.f32.xlu0 %v4622
      %v4624 = vpop.xlane.xlu0 %4623
      %v4625 = vsel %vm987, %v4620, 0.0
      %4626 = vadd.xlane.f32.xlu0 %v4625
      %v4627 = vpop.xlane.xlu0 %4626
      %v4628 = vsel %vm991, %v4621, 0.0
      %4629 = vadd.xlane.f32.xlu0 %v4628
      %v4630 = vpop.xlane.xlu0 %4629
      %v4631 = vmul.f32 %v4624, %v1008
      %v4632 = vmul.f32 %v4627, %v1008
      %v4633 = vmul.f32 %v4630, %v1008
      %v4634 = vsub.f32 %v4619, %v4631
      %v4635 = vsub.f32 %v4620, %v4632
      %v4636 = vsub.f32 %v4621, %v4633
      %v4637 = vmul.f32 %v4634, %v4634
      %v4638 = vmul.f32 %v4635, %v4635
      %v4639 = vmul.f32 %v4636, %v4636
      %v4640 = vsel %vm987, %v4637, 0.0
      %4641 = vadd.xlane.f32.xlu0 %v4640
      %v4642 = vpop.xlane.xlu0 %4641
      %v4643 = vsel %vm987, %v4638, 0.0
      %4644 = vadd.xlane.f32.xlu0 %v4643
      %v4645 = vpop.xlane.xlu0 %4644
      %v4646 = vsel %vm991, %v4639, 0.0
      %4647 = vadd.xlane.f32.xlu0 %v4646
      %v4648 = vpop.xlane.xlu0 %4647
      %v4649 = vmul.f32 %v4642, %v1008
      %v4650 = vmul.f32 %v4645, %v1008
      %v4651 = vmul.f32 %v4648, %v1008
      %v4652 = vadd.f32 %v4649, 1e-05
      %v4653 = vadd.f32 %v4650, 1e-05
      %v4654 = vadd.f32 %v4651, 1e-05
      %v4655 = vrsqrt.pop %v4652
      %v4656 = vrsqrt.pop %v4653
      %v4657 = vrsqrt.pop %v4654
      %v4658 = vmul.f32 %v4634, %v4655
      %v4659 = vmul.f32 %v4635, %v4656
      %v4660 = vmul.f32 %v4636, %v4657
      %v4661 = vmul.f32 %v4658, %v1043
      %v4662 = vmul.f32 %v4659, %v1043
      %v4663 = vmul.f32 %v4660, %v1043
      %v4664 = vadd.f32 %v4661, %v1052
      %v4665 = vadd.f32 %v4662, %v1052
      %v4666 = vadd.f32 %v4663, %v1052
      %v4667 = vld [vmem:[%s820] sm:$0x1]
      %v4668 = vld [vmem:[%s824] sm:$0x1]
      %v4669 = vsel %vm987, %v4664, 0.0
      %4670 = vadd.xlane.f32.xlu0 %v4669
      %v4671 = vpop.xlane.xlu0 %4670
      %v4672 = vsel %vm987, %v4665, 0.0
      %4673 = vadd.xlane.f32.xlu0 %v4672
      %v4674 = vpop.xlane.xlu0 %4673
      %v4675 = vsel %vm991, %v4666, 0.0
      %4676 = vadd.xlane.f32.xlu0 %v4675
      %v4677 = vpop.xlane.xlu0 %4676
      %v4678 = vmul.f32 %v4671, %v1008
      %v4679 = vmul.f32 %v4674, %v1008
      %v4680 = vmul.f32 %v4677, %v1008
      %v4681 = vsub.f32 %v4664, %v4678
      %v4682 = vsub.f32 %v4665, %v4679
      %v4683 = vsub.f32 %v4666, %v4680
      %v4684 = vmul.f32 %v4681, %v4681
      %v4685 = vmul.f32 %v4682, %v4682
      %v4686 = vmul.f32 %v4683, %v4683
      %v4687 = vsel %vm987, %v4684, 0.0
      %4688 = vadd.xlane.f32.xlu0 %v4687
      %v4689 = vpop.xlane.xlu0 %4688
      %v4690 = vsel %vm987, %v4685, 0.0
      %4691 = vadd.xlane.f32.xlu0 %v4690
      %v4692 = vpop.xlane.xlu0 %4691
      %v4693 = vsel %vm991, %v4686, 0.0
      %4694 = vadd.xlane.f32.xlu0 %v4693
      %v4695 = vpop.xlane.xlu0 %4694
      %v4696 = vmul.f32 %v4689, %v1008
      %v4697 = vmul.f32 %v4692, %v1008
      %v4698 = vmul.f32 %v4695, %v1008
      %v4699 = vadd.f32 %v4696, 1e-05
      %v4700 = vadd.f32 %v4697, 1e-05
      %v4701 = vadd.f32 %v4698, 1e-05
      %v4702 = vrsqrt.pop %v4699
      %v4703 = vrsqrt.pop %v4700
      %v4704 = vrsqrt.pop %v4701
      %v4705 = vmul.f32 %v4681, %v4702
      %v4706 = vmul.f32 %v4682, %v4703
      %v4707 = vmul.f32 %v4683, %v4704
      %v4709 = vlaneseq
      %v4710 = vshrl.u32 %v4709, 7
      %v4711 = vsub.s32 0, %v4710
      %v4712 = vrot.slane %v4667, %v4711
      %v4714 = vmul.f32 %v4705, %v4712
      %v4715 = vmul.f32 %v4706, %v4712
      %v4716 = vmul.f32 %v4707, %v4712
      %v4718 = vlaneseq
      %v4719 = vshrl.u32 %v4718, 7
      %v4720 = vsub.s32 0, %v4719
      %v4721 = vrot.slane %v4668, %v4720
      %v4723 = vadd.f32 %v4714, %v4721
      %v4724 = vadd.f32 %v4715, %v4721
      %v4725 = vadd.f32 %v4716, %v4721
      %v4726 = vld [vmem:[%s829] sm:$0xff]
      %v4727 = vld [vmem:[%s829 + $0x8] sm:$0xff]
      %v4728 = vld [vmem:[%s829 + $0x10] sm:$0xff]
      %v4729 = vld [vmem:[%s829 + $0x18] sm:$0xff]
      %v4730 = vld [vmem:[%s833] sm:$0x1]
      %v4732 = vlaneseq
      %v4733 = vshrl.u32 %v4732, 7
      %v4734 = vsub.s32 0, %v4733
      %v4735 = vrot.slane %v4730, %v4734
      %v4738 = vsel %vm987, %v4723, 0
      %v4741 = vsel %vm987, %v4724, 0
      %v4744 = vsel %vm987, %v4725, 0
      %4746 = vmatprep.subr.mxu0 0.0
      %4747 = vmatpush1.msra.mxu0 0.0
      %4748 = vmatprep.subr.mxu0 0.0
      %4749 = vmatpush1.msra.mxu0 0.0
      %4750 = vmatprep.subr.mxu0 0.0
      %4751 = vmatpush1.msra.mxu0 0.0
      %4752 = vmatprep.subr.mxu0 0.0
      %4753 = vmatpush1.msra.mxu0 0.0
      %4754 = vmatprep.subr.mxu0 0.0
      %4755 = vmatpush1.msra.mxu0 0.0
      %4756 = vmatprep.subr.mxu0 0.0
      %4757 = vmatpush1.msra.mxu0 0.0
      %4758 = vmatprep.subr.mxu0 0.0
      %4759 = vmatpush1.msra.mxu0 0.0
      %4760 = vmatprep.subr.mxu0 0.0
      %4761 = vmatpush1.msra.mxu0 0.0
      %4762 = vmatprep.subr.mxu0 0.0
      %4763 = vmatpush1.msra.mxu0 0.0
      %4764 = vmatprep.subr.mxu0 0.0
      %4765 = vmatpush1.msra.mxu0 0.0
      %4766 = vmatprep.subr.mxu0 0.0
      %4767 = vmatpush1.msra.mxu0 0.0
      %4768 = vmatprep.subr.mxu0 0.0
      %4769 = vmatpush1.msra.mxu0 0.0
      %4770 = vmatprep.subr.mxu0 0.0
      %4771 = vmatpush1.msra.mxu0 %v4729
      %4772 = vmatprep.subr.mxu0 0.0
      %4773 = vmatpush1.msra.mxu0 %v4728
      %4774 = vmatprep.subr.mxu0 0.0
      %4775 = vmatpush1.msra.mxu0 %v4727
      %4776 = vmatprep.subr.mxu0 0.0
      %4777 = vmatpush1.msra.mxu0 %v4726
      %4778 = vmatprep.subr.mxu0 0.0
      %4779 = vmatpush2.msra.mxu0 0.0
      %4780 = vmatprep.subr.mxu0 0.0
      %4781 = vmatpush2.msra.mxu0 0.0
      %4782 = vmatprep.subr.mxu0 0.0
      %4783 = vmatpush2.msra.mxu0 0.0
      %4784 = vmatprep.subr.mxu0 0.0
      %4785 = vmatpush2.msra.mxu0 0.0
      %4786 = vmatprep.subr.mxu0 0.0
      %4787 = vmatpush2.msra.mxu0 0.0
      %4788 = vmatprep.subr.mxu0 0.0
      %4789 = vmatpush2.msra.mxu0 0.0
      %4790 = vmatprep.subr.mxu0 0.0
      %4791 = vmatpush2.msra.mxu0 0.0
      %4792 = vmatprep.subr.mxu0 0.0
      %4793 = vmatpush2.msra.mxu0 0.0
      %4794 = vmatprep.subr.mxu0 0.0
      %4795 = vmatpush2.msra.mxu0 0.0
      %4796 = vmatprep.subr.mxu0 0.0
      %4797 = vmatpush2.msra.mxu0 0.0
      %4798 = vmatprep.subr.mxu0 0.0
      %4799 = vmatpush2.msra.mxu0 0.0
      %4800 = vmatprep.subr.mxu0 0.0
      %4801 = vmatpush2.msra.mxu0 0.0
      %4802 = vmatprep.subr.mxu0 0.0
      %4803 = vmatpush2.msra.mxu0 0.0
      %4804 = vmatprep.subr.mxu0 0.0
      %4805 = vmatpush2.msra.mxu0 0.0
      %4806 = vmatprep.subr.mxu0 0.0
      %4807 = vmatpush2.msra.mxu0 0.0
      %4808 = vmatprep.subr.mxu0 0.0
      %4809 = vmatpush2.msra.mxu0 0.0
      %4810 = vmatprep.mubr.f32.mxu0 0.0
      %4811 = vmatmul.mubr.f32.gmra.mxu0 %v4738
      %v4812 = vpop.f32.mrf.mxu0
      %v4813 = vadd.f32 %v4735, %v4812
      %v4814 = vpop.f32.mrf.mxu0
      %4815 = vmatprep.mubr.f32.mxu0 0.0
      %4816 = vmatmul.mubr.f32.gmra.mxu0 %v4741
      %v4817 = vpop.f32.mrf.mxu0
      %v4818 = vadd.f32 %v4735, %v4817
      %v4819 = vpop.f32.mrf.mxu0
      %4820 = vmatprep.mubr.f32.mxu0 0.0
      %4821 = vmatmul.mubr.f32.gmra.mxu0 %v4744
      %v4822 = vpop.f32.mrf.mxu0
      %v4823 = vadd.f32 %v4735, %v4822
      %v4824 = vpop.f32.mrf.mxu0
      %4825 = vdwg.mxu0
      %v4826 = vld [vmem:[%s838] sm:$0xff]
      %v4827 = vld [vmem:[%s838 + $0x8] sm:$0xff]
      %v4828 = vld [vmem:[%s838 + $0x10] sm:$0xff]
      %v4829 = vld [vmem:[%s838 + $0x18] sm:$0xff]
      %4833 = vrot.lane.b32.xlu0 %v4813, 96
      %v4834 = vpop.permute.xlu0 %4833
      %4835 = vrot.lane.b32.xlu0 %v4818, 96
      %v4836 = vpop.permute.xlu0 %4835
      %4837 = vrot.lane.b32.xlu0 %v4823, 96
      %v4838 = vpop.permute.xlu0 %4837
      %v4839 = vsel %vm1229, %v4813, 0
      %v4841 = vsel %vm1229, %v4818, 0
      %v4843 = vsel %vm1229, %v4823, 0
      %v4845 = vsel %vm1229, %v4834, 0
      %v4847 = vsel %vm1229, %v4836, 0
      %v4849 = vsel %vm1229, %v4838, 0
      %4851 = vmatprep.subr.mxu0 0.0
      %4852 = vmatpush1.xpose.msra.mxu0 0.0
      %4853 = vmatprep.subr.mxu0 0.0
      %4854 = vmatpush1.xpose.msra.mxu0 0.0
      %4855 = vmatprep.subr.mxu0 0.0
      %4856 = vmatpush1.xpose.msra.mxu0 0.0
      %4857 = vmatprep.subr.mxu0 0.0
      %4858 = vmatpush1.xpose.msra.mxu0 0.0
      %4859 = vmatprep.subr.mxu0 0.0
      %4860 = vmatpush1.xpose.msra.mxu0 0.0
      %4861 = vmatprep.subr.mxu0 0.0
      %4862 = vmatpush1.xpose.msra.mxu0 0.0
      %4863 = vmatprep.subr.mxu0 0.0
      %4864 = vmatpush1.xpose.msra.mxu0 0.0
      %4865 = vmatprep.subr.mxu0 0.0
      %4866 = vmatpush1.xpose.msra.mxu0 0.0
      %4867 = vmatprep.subr.mxu0 0.0
      %4868 = vmatpush1.xpose.msra.mxu0 0.0
      %4869 = vmatprep.subr.mxu0 0.0
      %4870 = vmatpush1.xpose.msra.mxu0 0.0
      %4871 = vmatprep.subr.mxu0 0.0
      %4872 = vmatpush1.xpose.msra.mxu0 0.0
      %4873 = vmatprep.subr.mxu0 0.0
      %4874 = vmatpush1.xpose.msra.mxu0 0.0
      %4875 = vmatprep.subr.mxu0 0.0
      %4876 = vmatpush1.xpose.msra.mxu0 0.0
      %4877 = vmatprep.subr.mxu0 0.0
      %4878 = vmatpush1.xpose.msra.mxu0 %v4849
      %4879 = vmatprep.subr.mxu0 0.0
      %4880 = vmatpush1.xpose.msra.mxu0 %v4847
      %4881 = vmatprep.subr.mxu0 0.0
      %4882 = vmatpush1.xpose.msra.mxu0 %v4845
      %4883 = vmatprep.subr.mxu0 0.0
      %4884 = vmatpush2.xpose.msra.mxu0 0.0
      %4885 = vmatprep.subr.mxu0 0.0
      %4886 = vmatpush2.xpose.msra.mxu0 0.0
      %4887 = vmatprep.subr.mxu0 0.0
      %4888 = vmatpush2.xpose.msra.mxu0 0.0
      %4889 = vmatprep.subr.mxu0 0.0
      %4890 = vmatpush2.xpose.msra.mxu0 0.0
      %4891 = vmatprep.subr.mxu0 0.0
      %4892 = vmatpush2.xpose.msra.mxu0 0.0
      %4893 = vmatprep.subr.mxu0 0.0
      %4894 = vmatpush2.xpose.msra.mxu0 0.0
      %4895 = vmatprep.subr.mxu0 0.0
      %4896 = vmatpush2.xpose.msra.mxu0 0.0
      %4897 = vmatprep.subr.mxu0 0.0
      %4898 = vmatpush2.xpose.msra.mxu0 0.0
      %4899 = vmatprep.subr.mxu0 0.0
      %4900 = vmatpush2.xpose.msra.mxu0 0.0
      %4901 = vmatprep.subr.mxu0 0.0
      %4902 = vmatpush2.xpose.msra.mxu0 0.0
      %4903 = vmatprep.subr.mxu0 0.0
      %4904 = vmatpush2.xpose.msra.mxu0 0.0
      %4905 = vmatprep.subr.mxu0 0.0
      %4906 = vmatpush2.xpose.msra.mxu0 0.0
      %4907 = vmatprep.subr.mxu0 0.0
      %4908 = vmatpush2.xpose.msra.mxu0 0.0
      %4909 = vmatprep.subr.mxu0 0.0
      %4910 = vmatpush2.xpose.msra.mxu0 0.0
      %4911 = vmatprep.subr.mxu0 0.0
      %4912 = vmatpush2.xpose.msra.mxu0 0.0
      %4913 = vmatprep.subr.mxu0 0.0
      %4914 = vmatpush2.xpose.msra.mxu0 0.0
      %4915 = vmatprep.mubr.f32.mxu0 0.0
      %4916 = vmatmul.mubr.f32.gmra.mxu0 %v4839
      %v4917 = vpop.f32.mrf.mxu0
      %v4918 = vadd.f32 0.0, %v4917
      %v4919 = vpop.f32.mrf.mxu0
      %4920 = vmatprep.mubr.f32.mxu0 0.0
      %4921 = vmatmul.mubr.f32.gmra.mxu0 %v4841
      %v4922 = vpop.f32.mrf.mxu0
      %v4923 = vadd.f32 0.0, %v4922
      %v4924 = vpop.f32.mrf.mxu0
      %4925 = vmatprep.mubr.f32.mxu0 0.0
      %4926 = vmatmul.mubr.f32.gmra.mxu0 %v4843
      %v4927 = vpop.f32.mrf.mxu0
      %v4928 = vadd.f32 0.0, %v4927
      %v4929 = vpop.f32.mrf.mxu0
      %4930 = vdwg.mxu0
      %v4931 = vsel %vm1322, %v4918, -inf
      %4932 = vmax.xlane.f32.xlu0 %v4931
      %v4933 = vpop.xlane.xlu0 %4932
      %v4934 = vsel %vm1322, %v4923, -inf
      %4935 = vmax.xlane.f32.xlu0 %v4934
      %v4936 = vpop.xlane.xlu0 %4935
      %v4937 = vsel %vm1329, %v4928, -inf
      %4938 = vmax.xlane.f32.xlu0 %v4937
      %v4939 = vpop.xlane.xlu0 %4938
      %v4940 = vsub.f32 %v4918, %v4933
      %v4941 = vsub.f32 %v4923, %v4936
      %v4942 = vsub.f32 %v4928, %v4939
      %v4943 = vmul.f32 %v4940, 1.442695
      %v4944 = vpow.pop %v4943
      %v4945 = vmul.f32 %v4941, 1.442695
      %v4946 = vpow.pop %v4945
      %v4947 = vmul.f32 %v4942, 1.442695
      %v4948 = vpow.pop %v4947
      %v4949 = vsel %vm1322, %v4944, 0.0
      %4950 = vadd.xlane.f32.xlu0 %v4949
      %v4951 = vpop.xlane.xlu0 %4950
      %v4952 = vsel %vm1322, %v4946, 0.0
      %4953 = vadd.xlane.f32.xlu0 %v4952
      %v4954 = vpop.xlane.xlu0 %4953
      %v4955 = vsel %vm1329, %v4948, 0.0
      %4956 = vadd.xlane.f32.xlu0 %v4955
      %v4957 = vpop.xlane.xlu0 %4956
      %v4958 = vrcp.pop %v4951
      %v4959 = vrcp.pop %v4954
      %v4960 = vrcp.pop %v4957
      %v4961 = vmul.f32 %v4944, %v4958
      %v4962 = vmul.f32 %v4946, %v4959
      %v4963 = vmul.f32 %v4948, %v4960
      %4964 = vrot.lane.b32.xlu0 %v4813, 64
      %v4965 = vpop.permute.xlu0 %4964
      %4966 = vrot.lane.b32.xlu0 %v4818, 64
      %v4967 = vpop.permute.xlu0 %4966
      %4968 = vrot.lane.b32.xlu0 %v4823, 64
      %v4969 = vpop.permute.xlu0 %4968
      %v4973 = vsel %vm1322, %v4961, 0
      %v4976 = vsel %vm1322, %v4962, 0
      %v4979 = vsel %vm1322, %v4963, 0
      %v4981 = vsel %vm1374, %v4969, 0
      %4983 = vmatprep.subr.mxu0 0.0
      %4984 = vmatpush1.msra.mxu0 0.0
      %4985 = vmatprep.subr.mxu0 0.0
      %4986 = vmatpush1.msra.mxu0 0.0
      %4987 = vmatprep.subr.mxu0 0.0
      %4988 = vmatpush1.msra.mxu0 0.0
      %4989 = vmatprep.subr.mxu0 0.0
      %4990 = vmatpush1.msra.mxu0 0.0
      %4991 = vmatprep.subr.mxu0 0.0
      %4992 = vmatpush1.msra.mxu0 0.0
      %4993 = vmatprep.subr.mxu0 0.0
      %4994 = vmatpush1.msra.mxu0 0.0
      %4995 = vmatprep.subr.mxu0 0.0
      %4996 = vmatpush1.msra.mxu0 0.0
      %4997 = vmatprep.subr.mxu0 0.0
      %4998 = vmatpush1.msra.mxu0 0.0
      %4999 = vmatprep.subr.mxu0 0.0
      %5000 = vmatpush1.msra.mxu0 0.0
      %5001 = vmatprep.subr.mxu0 0.0
      %5002 = vmatpush1.msra.mxu0 0.0
      %5003 = vmatprep.subr.mxu0 0.0
      %5004 = vmatpush1.msra.mxu0 0.0
      %5005 = vmatprep.subr.mxu0 0.0
      %5006 = vmatpush1.msra.mxu0 0.0
      %5007 = vmatprep.subr.mxu0 0.0
      %5008 = vmatpush1.msra.mxu0 0.0
      %5009 = vmatprep.subr.mxu0 0.0
      %5010 = vmatpush1.msra.mxu0 %v4981
      %5011 = vmatprep.subr.mxu0 0.0
      %5012 = vmatpush1.msra.mxu0 %v4967
      %5013 = vmatprep.subr.mxu0 0.0
      %5014 = vmatpush1.msra.mxu0 %v4965
      %5015 = vmatprep.subr.mxu0 0.0
      %5016 = vmatpush2.msra.mxu0 0.0
      %5017 = vmatprep.subr.mxu0 0.0
      %5018 = vmatpush2.msra.mxu0 0.0
      %5019 = vmatprep.subr.mxu0 0.0
      %5020 = vmatpush2.msra.mxu0 0.0
      %5021 = vmatprep.subr.mxu0 0.0
      %5022 = vmatpush2.msra.mxu0 0.0
      %5023 = vmatprep.subr.mxu0 0.0
      %5024 = vmatpush2.msra.mxu0 0.0
      %5025 = vmatprep.subr.mxu0 0.0
      %5026 = vmatpush2.msra.mxu0 0.0
      %5027 = vmatprep.subr.mxu0 0.0
      %5028 = vmatpush2.msra.mxu0 0.0
      %5029 = vmatprep.subr.mxu0 0.0
      %5030 = vmatpush2.msra.mxu0 0.0
      %5031 = vmatprep.subr.mxu0 0.0
      %5032 = vmatpush2.msra.mxu0 0.0
      %5033 = vmatprep.subr.mxu0 0.0
      %5034 = vmatpush2.msra.mxu0 0.0
      %5035 = vmatprep.subr.mxu0 0.0
      %5036 = vmatpush2.msra.mxu0 0.0
      %5037 = vmatprep.subr.mxu0 0.0
      %5038 = vmatpush2.msra.mxu0 0.0
      %5039 = vmatprep.subr.mxu0 0.0
      %5040 = vmatpush2.msra.mxu0 0.0
      %5041 = vmatprep.subr.mxu0 0.0
      %5042 = vmatpush2.msra.mxu0 0.0
      %5043 = vmatprep.subr.mxu0 0.0
      %5044 = vmatpush2.msra.mxu0 0.0
      %5045 = vmatprep.subr.mxu0 0.0
      %5046 = vmatpush2.msra.mxu0 0.0
      %5047 = vmatprep.mubr.f32.mxu0 0.0
      %5048 = vmatmul.mubr.f32.gmra.mxu0 %v4973
      %v5049 = vpop.f32.mrf.mxu0
      %v5050 = vadd.f32 0.0, %v5049
      %v5051 = vpop.f32.mrf.mxu0
      %5052 = vmatprep.mubr.f32.mxu0 0.0
      %5053 = vmatmul.mubr.f32.gmra.mxu0 %v4976
      %v5054 = vpop.f32.mrf.mxu0
      %v5055 = vadd.f32 0.0, %v5054
      %v5056 = vpop.f32.mrf.mxu0
      %5057 = vmatprep.mubr.f32.mxu0 0.0
      %5058 = vmatmul.mubr.f32.gmra.mxu0 %v4979
      %v5059 = vpop.f32.mrf.mxu0
      %v5060 = vadd.f32 0.0, %v5059
      %v5061 = vpop.f32.mrf.mxu0
      %5062 = vdwg.mxu0
      %5063 = vrot.lane.b32.xlu0 %v4813, 120
      %v5064 = vpop.permute.xlu0 %5063
      %5065 = vrot.lane.b32.xlu0 %v4818, 120
      %v5066 = vpop.permute.xlu0 %5065
      %5067 = vrot.lane.b32.xlu0 %v4823, 120
      %v5068 = vpop.permute.xlu0 %5067
      %5069 = vrot.lane.b32.xlu0 %v4813, 88
      %v5070 = vpop.permute.xlu0 %5069
      %5071 = vrot.lane.b32.xlu0 %v4818, 88
      %v5072 = vpop.permute.xlu0 %5071
      %5073 = vrot.lane.b32.xlu0 %v4823, 88
      %v5074 = vpop.permute.xlu0 %5073
      %v5075 = vsel %vm1229, %v5064, 0
      %v5077 = vsel %vm1229, %v5066, 0
      %v5079 = vsel %vm1229, %v5068, 0
      %v5081 = vsel %vm1229, %v5070, 0
      %v5083 = vsel %vm1229, %v5072, 0
      %v5085 = vsel %vm1229, %v5074, 0
      %5087 = vmatprep.subr.mxu0 0.0
      %5088 = vmatpush1.xpose.msra.mxu0 0.0
      %5089 = vmatprep.subr.mxu0 0.0
      %5090 = vmatpush1.xpose.msra.mxu0 0.0
      %5091 = vmatprep.subr.mxu0 0.0
      %5092 = vmatpush1.xpose.msra.mxu0 0.0
      %5093 = vmatprep.subr.mxu0 0.0
      %5094 = vmatpush1.xpose.msra.mxu0 0.0
      %5095 = vmatprep.subr.mxu0 0.0
      %5096 = vmatpush1.xpose.msra.mxu0 0.0
      %5097 = vmatprep.subr.mxu0 0.0
      %5098 = vmatpush1.xpose.msra.mxu0 0.0
      %5099 = vmatprep.subr.mxu0 0.0
      %5100 = vmatpush1.xpose.msra.mxu0 0.0
      %5101 = vmatprep.subr.mxu0 0.0
      %5102 = vmatpush1.xpose.msra.mxu0 0.0
      %5103 = vmatprep.subr.mxu0 0.0
      %5104 = vmatpush1.xpose.msra.mxu0 0.0
      %5105 = vmatprep.subr.mxu0 0.0
      %5106 = vmatpush1.xpose.msra.mxu0 0.0
      %5107 = vmatprep.subr.mxu0 0.0
      %5108 = vmatpush1.xpose.msra.mxu0 0.0
      %5109 = vmatprep.subr.mxu0 0.0
      %5110 = vmatpush1.xpose.msra.mxu0 0.0
      %5111 = vmatprep.subr.mxu0 0.0
      %5112 = vmatpush1.xpose.msra.mxu0 0.0
      %5113 = vmatprep.subr.mxu0 0.0
      %5114 = vmatpush1.xpose.msra.mxu0 %v5085
      %5115 = vmatprep.subr.mxu0 0.0
      %5116 = vmatpush1.xpose.msra.mxu0 %v5083
      %5117 = vmatprep.subr.mxu0 0.0
      %5118 = vmatpush1.xpose.msra.mxu0 %v5081
      %5119 = vmatprep.subr.mxu0 0.0
      %5120 = vmatpush2.xpose.msra.mxu0 0.0
      %5121 = vmatprep.subr.mxu0 0.0
      %5122 = vmatpush2.xpose.msra.mxu0 0.0
      %5123 = vmatprep.subr.mxu0 0.0
      %5124 = vmatpush2.xpose.msra.mxu0 0.0
      %5125 = vmatprep.subr.mxu0 0.0
      %5126 = vmatpush2.xpose.msra.mxu0 0.0
      %5127 = vmatprep.subr.mxu0 0.0
      %5128 = vmatpush2.xpose.msra.mxu0 0.0
      %5129 = vmatprep.subr.mxu0 0.0
      %5130 = vmatpush2.xpose.msra.mxu0 0.0
      %5131 = vmatprep.subr.mxu0 0.0
      %5132 = vmatpush2.xpose.msra.mxu0 0.0
      %5133 = vmatprep.subr.mxu0 0.0
      %5134 = vmatpush2.xpose.msra.mxu0 0.0
      %5135 = vmatprep.subr.mxu0 0.0
      %5136 = vmatpush2.xpose.msra.mxu0 0.0
      %5137 = vmatprep.subr.mxu0 0.0
      %5138 = vmatpush2.xpose.msra.mxu0 0.0
      %5139 = vmatprep.subr.mxu0 0.0
      %5140 = vmatpush2.xpose.msra.mxu0 0.0
      %5141 = vmatprep.subr.mxu0 0.0
      %5142 = vmatpush2.xpose.msra.mxu0 0.0
      %5143 = vmatprep.subr.mxu0 0.0
      %5144 = vmatpush2.xpose.msra.mxu0 0.0
      %5145 = vmatprep.subr.mxu0 0.0
      %5146 = vmatpush2.xpose.msra.mxu0 0.0
      %5147 = vmatprep.subr.mxu0 0.0
      %5148 = vmatpush2.xpose.msra.mxu0 0.0
      %5149 = vmatprep.subr.mxu0 0.0
      %5150 = vmatpush2.xpose.msra.mxu0 0.0
      %5151 = vmatprep.mubr.f32.mxu0 0.0
      %5152 = vmatmul.mubr.f32.gmra.mxu0 %v5075
      %v5153 = vpop.f32.mrf.mxu0
      %v5154 = vadd.f32 0.0, %v5153
      %v5155 = vpop.f32.mrf.mxu0
      %5156 = vmatprep.mubr.f32.mxu0 0.0
      %5157 = vmatmul.mubr.f32.gmra.mxu0 %v5077
      %v5158 = vpop.f32.mrf.mxu0
      %v5159 = vadd.f32 0.0, %v5158
      %v5160 = vpop.f32.mrf.mxu0
      %5161 = vmatprep.mubr.f32.mxu0 0.0
      %5162 = vmatmul.mubr.f32.gmra.mxu0 %v5079
      %v5163 = vpop.f32.mrf.mxu0
      %v5164 = vadd.f32 0.0, %v5163
      %v5165 = vpop.f32.mrf.mxu0
      %5166 = vdwg.mxu0
      %v5167 = vsel %vm1322, %v5154, -inf
      %5168 = vmax.xlane.f32.xlu0 %v5167
      %v5169 = vpop.xlane.xlu0 %5168
      %v5170 = vsel %vm1322, %v5159, -inf
      %5171 = vmax.xlane.f32.xlu0 %v5170
      %v5172 = vpop.xlane.xlu0 %5171
      %v5173 = vsel %vm1329, %v5164, -inf
      %5174 = vmax.xlane.f32.xlu0 %v5173
      %v5175 = vpop.xlane.xlu0 %5174
      %v5176 = vsub.f32 %v5154, %v5169
      %v5177 = vsub.f32 %v5159, %v5172
      %v5178 = vsub.f32 %v5164, %v5175
      %v5179 = vmul.f32 %v5176, 1.442695
      %v5180 = vpow.pop %v5179
      %v5181 = vmul.f32 %v5177, 1.442695
      %v5182 = vpow.pop %v5181
      %v5183 = vmul.f32 %v5178, 1.442695
      %v5184 = vpow.pop %v5183
      %v5185 = vsel %vm1322, %v5180, 0.0
      %5186 = vadd.xlane.f32.xlu0 %v5185
      %v5187 = vpop.xlane.xlu0 %5186
      %v5188 = vsel %vm1322, %v5182, 0.0
      %5189 = vadd.xlane.f32.xlu0 %v5188
      %v5190 = vpop.xlane.xlu0 %5189
      %v5191 = vsel %vm1329, %v5184, 0.0
      %5192 = vadd.xlane.f32.xlu0 %v5191
      %v5193 = vpop.xlane.xlu0 %5192
      %v5194 = vrcp.pop %v5187
      %v5195 = vrcp.pop %v5190
      %v5196 = vrcp.pop %v5193
      %v5197 = vmul.f32 %v5180, %v5194
      %v5198 = vmul.f32 %v5182, %v5195
      %v5199 = vmul.f32 %v5184, %v5196
      %5200 = vrot.lane.b32.xlu0 %v4813, 56
      %v5201 = vpop.permute.xlu0 %5200
      %5202 = vrot.lane.b32.xlu0 %v4818, 56
      %v5203 = vpop.permute.xlu0 %5202
      %5204 = vrot.lane.b32.xlu0 %v4823, 56
      %v5205 = vpop.permute.xlu0 %5204
      %v5209 = vsel %vm1322, %v5197, 0
      %v5212 = vsel %vm1322, %v5198, 0
      %v5215 = vsel %vm1322, %v5199, 0
      %v5217 = vsel %vm1374, %v5205, 0
      %5219 = vmatprep.subr.mxu0 0.0
      %5220 = vmatpush1.msra.mxu0 0.0
      %5221 = vmatprep.subr.mxu0 0.0
      %5222 = vmatpush1.msra.mxu0 0.0
      %5223 = vmatprep.subr.mxu0 0.0
      %5224 = vmatpush1.msra.mxu0 0.0
      %5225 = vmatprep.subr.mxu0 0.0
      %5226 = vmatpush1.msra.mxu0 0.0
      %5227 = vmatprep.subr.mxu0 0.0
      %5228 = vmatpush1.msra.mxu0 0.0
      %5229 = vmatprep.subr.mxu0 0.0
      %5230 = vmatpush1.msra.mxu0 0.0
      %5231 = vmatprep.subr.mxu0 0.0
      %5232 = vmatpush1.msra.mxu0 0.0
      %5233 = vmatprep.subr.mxu0 0.0
      %5234 = vmatpush1.msra.mxu0 0.0
      %5235 = vmatprep.subr.mxu0 0.0
      %5236 = vmatpush1.msra.mxu0 0.0
      %5237 = vmatprep.subr.mxu0 0.0
      %5238 = vmatpush1.msra.mxu0 0.0
      %5239 = vmatprep.subr.mxu0 0.0
      %5240 = vmatpush1.msra.mxu0 0.0
      %5241 = vmatprep.subr.mxu0 0.0
      %5242 = vmatpush1.msra.mxu0 0.0
      %5243 = vmatprep.subr.mxu0 0.0
      %5244 = vmatpush1.msra.mxu0 0.0
      %5245 = vmatprep.subr.mxu0 0.0
      %5246 = vmatpush1.msra.mxu0 %v5217
      %5247 = vmatprep.subr.mxu0 0.0
      %5248 = vmatpush1.msra.mxu0 %v5203
      %5249 = vmatprep.subr.mxu0 0.0
      %5250 = vmatpush1.msra.mxu0 %v5201
      %5251 = vmatprep.subr.mxu0 0.0
      %5252 = vmatpush2.msra.mxu0 0.0
      %5253 = vmatprep.subr.mxu0 0.0
      %5254 = vmatpush2.msra.mxu0 0.0
      %5255 = vmatprep.subr.mxu0 0.0
      %5256 = vmatpush2.msra.mxu0 0.0
      %5257 = vmatprep.subr.mxu0 0.0
      %5258 = vmatpush2.msra.mxu0 0.0
      %5259 = vmatprep.subr.mxu0 0.0
      %5260 = vmatpush2.msra.mxu0 0.0
      %5261 = vmatprep.subr.mxu0 0.0
      %5262 = vmatpush2.msra.mxu0 0.0
      %5263 = vmatprep.subr.mxu0 0.0
      %5264 = vmatpush2.msra.mxu0 0.0
      %5265 = vmatprep.subr.mxu0 0.0
      %5266 = vmatpush2.msra.mxu0 0.0
      %5267 = vmatprep.subr.mxu0 0.0
      %5268 = vmatpush2.msra.mxu0 0.0
      %5269 = vmatprep.subr.mxu0 0.0
      %5270 = vmatpush2.msra.mxu0 0.0
      %5271 = vmatprep.subr.mxu0 0.0
      %5272 = vmatpush2.msra.mxu0 0.0
      %5273 = vmatprep.subr.mxu0 0.0
      %5274 = vmatpush2.msra.mxu0 0.0
      %5275 = vmatprep.subr.mxu0 0.0
      %5276 = vmatpush2.msra.mxu0 0.0
      %5277 = vmatprep.subr.mxu0 0.0
      %5278 = vmatpush2.msra.mxu0 0.0
      %5279 = vmatprep.subr.mxu0 0.0
      %5280 = vmatpush2.msra.mxu0 0.0
      %5281 = vmatprep.subr.mxu0 0.0
      %5282 = vmatpush2.msra.mxu0 0.0
      %5283 = vmatprep.mubr.f32.mxu0 0.0
      %5284 = vmatmul.mubr.f32.gmra.mxu0 %v5209
      %v5285 = vpop.f32.mrf.mxu0
      %v5286 = vadd.f32 0.0, %v5285
      %v5287 = vpop.f32.mrf.mxu0
      %5288 = vmatprep.mubr.f32.mxu0 0.0
      %5289 = vmatmul.mubr.f32.gmra.mxu0 %v5212
      %v5290 = vpop.f32.mrf.mxu0
      %v5291 = vadd.f32 0.0, %v5290
      %v5292 = vpop.f32.mrf.mxu0
      %5293 = vmatprep.mubr.f32.mxu0 0.0
      %5294 = vmatmul.mubr.f32.gmra.mxu0 %v5215
      %v5295 = vpop.f32.mrf.mxu0
      %v5296 = vadd.f32 0.0, %v5295
      %v5297 = vpop.f32.mrf.mxu0
      %5298 = vdwg.mxu0
      %v5300 = vsel %vm1229, %v5286, 0
      %v5303 = vsel %vm1229, %v5291, 0
      %v5306 = vsel %vm1229, %v5296, 0
      %5308 = vmatprep.subr.mxu0 0.0
      %5309 = vmatpush1.msra.mxu0 0.0
      %5310 = vmatprep.subr.mxu0 0.0
      %5311 = vmatpush1.msra.mxu0 0.0
      %5312 = vmatprep.subr.mxu0 0.0
      %5313 = vmatpush1.msra.mxu0 0.0
      %5314 = vmatprep.subr.mxu0 0.0
      %5315 = vmatpush1.msra.mxu0 0.0
      %5316 = vmatprep.subr.mxu0 0.0
      %5317 = vmatpush1.msra.mxu0 0.0
      %5318 = vmatprep.subr.mxu0 0.0
      %5319 = vmatpush1.msra.mxu0 0.0
      %5320 = vmatprep.subr.mxu0 0.0
      %5321 = vmatpush1.msra.mxu0 0.0
      %5322 = vmatprep.subr.mxu0 0.0
      %5323 = vmatpush1.msra.mxu0 0.0
      %5324 = vmatprep.subr.mxu0 0.0
      %5325 = vmatpush1.msra.mxu0 0.0
      %5326 = vmatprep.subr.mxu0 0.0
      %5327 = vmatpush1.msra.mxu0 0.0
      %5328 = vmatprep.subr.mxu0 0.0
      %5329 = vmatpush1.msra.mxu0 0.0
      %5330 = vmatprep.subr.mxu0 0.0
      %5331 = vmatpush1.msra.mxu0 0.0
      %5332 = vmatprep.subr.mxu0 0.0
      %5333 = vmatpush1.msra.mxu0 0.0
      %5334 = vmatprep.subr.mxu0 0.0
      %5335 = vmatpush1.msra.mxu0 0.0
      %5336 = vmatprep.subr.mxu0 0.0
      %5337 = vmatpush1.msra.mxu0 0.0
      %5338 = vmatprep.subr.mxu0 0.0
      %5339 = vmatpush1.msra.mxu0 %v4827
      %5340 = vmatprep.subr.mxu0 0.0
      %5341 = vmatpush2.msra.mxu0 0.0
      %5342 = vmatprep.subr.mxu0 0.0
      %5343 = vmatpush2.msra.mxu0 0.0
      %5344 = vmatprep.subr.mxu0 0.0
      %5345 = vmatpush2.msra.mxu0 0.0
      %5346 = vmatprep.subr.mxu0 0.0
      %5347 = vmatpush2.msra.mxu0 0.0
      %5348 = vmatprep.subr.mxu0 0.0
      %5349 = vmatpush2.msra.mxu0 0.0
      %5350 = vmatprep.subr.mxu0 0.0
      %5351 = vmatpush2.msra.mxu0 0.0
      %5352 = vmatprep.subr.mxu0 0.0
      %5353 = vmatpush2.msra.mxu0 0.0
      %5354 = vmatprep.subr.mxu0 0.0
      %5355 = vmatpush2.msra.mxu0 0.0
      %5356 = vmatprep.subr.mxu0 0.0
      %5357 = vmatpush2.msra.mxu0 0.0
      %5358 = vmatprep.subr.mxu0 0.0
      %5359 = vmatpush2.msra.mxu0 0.0
      %5360 = vmatprep.subr.mxu0 0.0
      %5361 = vmatpush2.msra.mxu0 0.0
      %5362 = vmatprep.subr.mxu0 0.0
      %5363 = vmatpush2.msra.mxu0 0.0
      %5364 = vmatprep.subr.mxu0 0.0
      %5365 = vmatpush2.msra.mxu0 0.0
      %5366 = vmatprep.subr.mxu0 0.0
      %5367 = vmatpush2.msra.mxu0 0.0
      %5368 = vmatprep.subr.mxu0 0.0
      %5369 = vmatpush2.msra.mxu0 0.0
      %5370 = vmatprep.subr.mxu0 0.0
      %5371 = vmatpush2.msra.mxu0 0.0
      %5372 = vmatprep.mubr.f32.mxu0 0.0
      %5373 = vmatmul.mubr.f32.gmra.mxu0 %v5300
      %v5374 = vpop.f32.mrf.mxu0
      %v5375 = vadd.f32 0.0, %v5374
      %v5376 = vpop.f32.mrf.mxu0
      %5377 = vmatprep.mubr.f32.mxu0 0.0
      %5378 = vmatmul.mubr.f32.gmra.mxu0 %v5303
      %v5379 = vpop.f32.mrf.mxu0
      %v5380 = vadd.f32 0.0, %v5379
      %v5381 = vpop.f32.mrf.mxu0
      %5382 = vmatprep.mubr.f32.mxu0 0.0
      %5383 = vmatmul.mubr.f32.gmra.mxu0 %v5306
      %v5384 = vpop.f32.mrf.mxu0
      %v5385 = vadd.f32 0.0, %v5384
      %v5386 = vpop.f32.mrf.mxu0
      %5387 = vdwg.mxu0
      %v5389 = vsel %vm1229, %v5050, 0
      %v5392 = vsel %vm1229, %v5055, 0
      %v5395 = vsel %vm1229, %v5060, 0
      %5397 = vmatprep.subr.mxu0 0.0
      %5398 = vmatpush1.msra.mxu0 0.0
      %5399 = vmatprep.subr.mxu0 0.0
      %5400 = vmatpush1.msra.mxu0 0.0
      %5401 = vmatprep.subr.mxu0 0.0
      %5402 = vmatpush1.msra.mxu0 0.0
      %5403 = vmatprep.subr.mxu0 0.0
      %5404 = vmatpush1.msra.mxu0 0.0
      %5405 = vmatprep.subr.mxu0 0.0
      %5406 = vmatpush1.msra.mxu0 0.0
      %5407 = vmatprep.subr.mxu0 0.0
      %5408 = vmatpush1.msra.mxu0 0.0
      %5409 = vmatprep.subr.mxu0 0.0
      %5410 = vmatpush1.msra.mxu0 0.0
      %5411 = vmatprep.subr.mxu0 0.0
      %5412 = vmatpush1.msra.mxu0 0.0
      %5413 = vmatprep.subr.mxu0 0.0
      %5414 = vmatpush1.msra.mxu0 0.0
      %5415 = vmatprep.subr.mxu0 0.0
      %5416 = vmatpush1.msra.mxu0 0.0
      %5417 = vmatprep.subr.mxu0 0.0
      %5418 = vmatpush1.msra.mxu0 0.0
      %5419 = vmatprep.subr.mxu0 0.0
      %5420 = vmatpush1.msra.mxu0 0.0
      %5421 = vmatprep.subr.mxu0 0.0
      %5422 = vmatpush1.msra.mxu0 0.0
      %5423 = vmatprep.subr.mxu0 0.0
      %5424 = vmatpush1.msra.mxu0 0.0
      %5425 = vmatprep.subr.mxu0 0.0
      %5426 = vmatpush1.msra.mxu0 0.0
      %5427 = vmatprep.subr.mxu0 0.0
      %5428 = vmatpush1.msra.mxu0 %v4826
      %5429 = vmatprep.subr.mxu0 0.0
      %5430 = vmatpush2.msra.mxu0 0.0
      %5431 = vmatprep.subr.mxu0 0.0
      %5432 = vmatpush2.msra.mxu0 0.0
      %5433 = vmatprep.subr.mxu0 0.0
      %5434 = vmatpush2.msra.mxu0 0.0
      %5435 = vmatprep.subr.mxu0 0.0
      %5436 = vmatpush2.msra.mxu0 0.0
      %5437 = vmatprep.subr.mxu0 0.0
      %5438 = vmatpush2.msra.mxu0 0.0
      %5439 = vmatprep.subr.mxu0 0.0
      %5440 = vmatpush2.msra.mxu0 0.0
      %5441 = vmatprep.subr.mxu0 0.0
      %5442 = vmatpush2.msra.mxu0 0.0
      %5443 = vmatprep.subr.mxu0 0.0
      %5444 = vmatpush2.msra.mxu0 0.0
      %5445 = vmatprep.subr.mxu0 0.0
      %5446 = vmatpush2.msra.mxu0 0.0
      %5447 = vmatprep.subr.mxu0 0.0
      %5448 = vmatpush2.msra.mxu0 0.0
      %5449 = vmatprep.subr.mxu0 0.0
      %5450 = vmatpush2.msra.mxu0 0.0
      %5451 = vmatprep.subr.mxu0 0.0
      %5452 = vmatpush2.msra.mxu0 0.0
      %5453 = vmatprep.subr.mxu0 0.0
      %5454 = vmatpush2.msra.mxu0 0.0
      %5455 = vmatprep.subr.mxu0 0.0
      %5456 = vmatpush2.msra.mxu0 0.0
      %5457 = vmatprep.subr.mxu0 0.0
      %5458 = vmatpush2.msra.mxu0 0.0
      %5459 = vmatprep.subr.mxu0 0.0
      %5460 = vmatpush2.msra.mxu0 0.0
      %5461 = vmatprep.mubr.f32.mxu0 0.0
      %5462 = vmatmul.mubr.f32.gmra.mxu0 %v5389
      %v5463 = vpop.f32.mrf.mxu0
      %v5464 = vadd.f32 %v5375, %v5463
      %v5465 = vpop.f32.mrf.mxu0
      %5466 = vmatprep.mubr.f32.mxu0 0.0
      %5467 = vmatmul.mubr.f32.gmra.mxu0 %v5392
      %v5468 = vpop.f32.mrf.mxu0
      %v5469 = vadd.f32 %v5380, %v5468
      %v5470 = vpop.f32.mrf.mxu0
      %5471 = vmatprep.mubr.f32.mxu0 0.0
      %5472 = vmatmul.mubr.f32.gmra.mxu0 %v5395
      %v5473 = vpop.f32.mrf.mxu0
      %v5474 = vadd.f32 %v5385, %v5473
      %v5475 = vpop.f32.mrf.mxu0
      %5476 = vdwg.mxu0
      %5477 = vrot.lane.b32.xlu0 %v4813, 112
      %v5478 = vpop.permute.xlu0 %5477
      %5479 = vrot.lane.b32.xlu0 %v4818, 112
      %v5480 = vpop.permute.xlu0 %5479
      %5481 = vrot.lane.b32.xlu0 %v4823, 112
      %v5482 = vpop.permute.xlu0 %5481
      %5483 = vrot.lane.b32.xlu0 %v4813, 80
      %v5484 = vpop.permute.xlu0 %5483
      %5485 = vrot.lane.b32.xlu0 %v4818, 80
      %v5486 = vpop.permute.xlu0 %5485
      %5487 = vrot.lane.b32.xlu0 %v4823, 80
      %v5488 = vpop.permute.xlu0 %5487
      %v5489 = vsel %vm1229, %v5478, 0
      %v5491 = vsel %vm1229, %v5480, 0
      %v5493 = vsel %vm1229, %v5482, 0
      %v5495 = vsel %vm1229, %v5484, 0
      %v5497 = vsel %vm1229, %v5486, 0
      %v5499 = vsel %vm1229, %v5488, 0
      %5501 = vmatprep.subr.mxu0 0.0
      %5502 = vmatpush1.xpose.msra.mxu0 0.0
      %5503 = vmatprep.subr.mxu0 0.0
      %5504 = vmatpush1.xpose.msra.mxu0 0.0
      %5505 = vmatprep.subr.mxu0 0.0
      %5506 = vmatpush1.xpose.msra.mxu0 0.0
      %5507 = vmatprep.subr.mxu0 0.0
      %5508 = vmatpush1.xpose.msra.mxu0 0.0
      %5509 = vmatprep.subr.mxu0 0.0
      %5510 = vmatpush1.xpose.msra.mxu0 0.0
      %5511 = vmatprep.subr.mxu0 0.0
      %5512 = vmatpush1.xpose.msra.mxu0 0.0
      %5513 = vmatprep.subr.mxu0 0.0
      %5514 = vmatpush1.xpose.msra.mxu0 0.0
      %5515 = vmatprep.subr.mxu0 0.0
      %5516 = vmatpush1.xpose.msra.mxu0 0.0
      %5517 = vmatprep.subr.mxu0 0.0
      %5518 = vmatpush1.xpose.msra.mxu0 0.0
      %5519 = vmatprep.subr.mxu0 0.0
      %5520 = vmatpush1.xpose.msra.mxu0 0.0
      %5521 = vmatprep.subr.mxu0 0.0
      %5522 = vmatpush1.xpose.msra.mxu0 0.0
      %5523 = vmatprep.subr.mxu0 0.0
      %5524 = vmatpush1.xpose.msra.mxu0 0.0
      %5525 = vmatprep.subr.mxu0 0.0
      %5526 = vmatpush1.xpose.msra.mxu0 0.0
      %5527 = vmatprep.subr.mxu0 0.0
      %5528 = vmatpush1.xpose.msra.mxu0 %v5499
      %5529 = vmatprep.subr.mxu0 0.0
      %5530 = vmatpush1.xpose.msra.mxu0 %v5497
      %5531 = vmatprep.subr.mxu0 0.0
      %5532 = vmatpush1.xpose.msra.mxu0 %v5495
      %5533 = vmatprep.subr.mxu0 0.0
      %5534 = vmatpush2.xpose.msra.mxu0 0.0
      %5535 = vmatprep.subr.mxu0 0.0
      %5536 = vmatpush2.xpose.msra.mxu0 0.0
      %5537 = vmatprep.subr.mxu0 0.0
      %5538 = vmatpush2.xpose.msra.mxu0 0.0
      %5539 = vmatprep.subr.mxu0 0.0
      %5540 = vmatpush2.xpose.msra.mxu0 0.0
      %5541 = vmatprep.subr.mxu0 0.0
      %5542 = vmatpush2.xpose.msra.mxu0 0.0
      %5543 = vmatprep.subr.mxu0 0.0
      %5544 = vmatpush2.xpose.msra.mxu0 0.0
      %5545 = vmatprep.subr.mxu0 0.0
      %5546 = vmatpush2.xpose.msra.mxu0 0.0
      %5547 = vmatprep.subr.mxu0 0.0
      %5548 = vmatpush2.xpose.msra.mxu0 0.0
      %5549 = vmatprep.subr.mxu0 0.0
      %5550 = vmatpush2.xpose.msra.mxu0 0.0
      %5551 = vmatprep.subr.mxu0 0.0
      %5552 = vmatpush2.xpose.msra.mxu0 0.0
      %5553 = vmatprep.subr.mxu0 0.0
      %5554 = vmatpush2.xpose.msra.mxu0 0.0
      %5555 = vmatprep.subr.mxu0 0.0
      %5556 = vmatpush2.xpose.msra.mxu0 0.0
      %5557 = vmatprep.subr.mxu0 0.0
      %5558 = vmatpush2.xpose.msra.mxu0 0.0
      %5559 = vmatprep.subr.mxu0 0.0
      %5560 = vmatpush2.xpose.msra.mxu0 0.0
      %5561 = vmatprep.subr.mxu0 0.0
      %5562 = vmatpush2.xpose.msra.mxu0 0.0
      %5563 = vmatprep.subr.mxu0 0.0
      %5564 = vmatpush2.xpose.msra.mxu0 0.0
      %5565 = vmatprep.mubr.f32.mxu0 0.0
      %5566 = vmatmul.mubr.f32.gmra.mxu0 %v5489
      %v5567 = vpop.f32.mrf.mxu0
      %v5568 = vadd.f32 0.0, %v5567
      %v5569 = vpop.f32.mrf.mxu0
      %5570 = vmatprep.mubr.f32.mxu0 0.0
      %5571 = vmatmul.mubr.f32.gmra.mxu0 %v5491
      %v5572 = vpop.f32.mrf.mxu0
      %v5573 = vadd.f32 0.0, %v5572
      %v5574 = vpop.f32.mrf.mxu0
      %5575 = vmatprep.mubr.f32.mxu0 0.0
      %5576 = vmatmul.mubr.f32.gmra.mxu0 %v5493
      %v5577 = vpop.f32.mrf.mxu0
      %v5578 = vadd.f32 0.0, %v5577
      %v5579 = vpop.f32.mrf.mxu0
      %5580 = vdwg.mxu0
      %v5581 = vsel %vm1322, %v5568, -inf
      %5582 = vmax.xlane.f32.xlu0 %v5581
      %v5583 = vpop.xlane.xlu0 %5582
      %v5584 = vsel %vm1322, %v5573, -inf
      %5585 = vmax.xlane.f32.xlu0 %v5584
      %v5586 = vpop.xlane.xlu0 %5585
      %v5587 = vsel %vm1329, %v5578, -inf
      %5588 = vmax.xlane.f32.xlu0 %v5587
      %v5589 = vpop.xlane.xlu0 %5588
      %v5590 = vsub.f32 %v5568, %v5583
      %v5591 = vsub.f32 %v5573, %v5586
      %v5592 = vsub.f32 %v5578, %v5589
      %v5593 = vmul.f32 %v5590, 1.442695
      %v5594 = vpow.pop %v5593
      %v5595 = vmul.f32 %v5591, 1.442695
      %v5596 = vpow.pop %v5595
      %v5597 = vmul.f32 %v5592, 1.442695
      %v5598 = vpow.pop %v5597
      %v5599 = vsel %vm1322, %v5594, 0.0
      %5600 = vadd.xlane.f32.xlu0 %v5599
      %v5601 = vpop.xlane.xlu0 %5600
      %v5602 = vsel %vm1322, %v5596, 0.0
      %5603 = vadd.xlane.f32.xlu0 %v5602
      %v5604 = vpop.xlane.xlu0 %5603
      %v5605 = vsel %vm1329, %v5598, 0.0
      %5606 = vadd.xlane.f32.xlu0 %v5605
      %v5607 = vpop.xlane.xlu0 %5606
      %v5608 = vrcp.pop %v5601
      %v5609 = vrcp.pop %v5604
      %v5610 = vrcp.pop %v5607
      %v5611 = vmul.f32 %v5594, %v5608
      %v5612 = vmul.f32 %v5596, %v5609
      %v5613 = vmul.f32 %v5598, %v5610
      %5614 = vrot.lane.b32.xlu0 %v4813, 48
      %v5615 = vpop.permute.xlu0 %5614
      %5616 = vrot.lane.b32.xlu0 %v4818, 48
      %v5617 = vpop.permute.xlu0 %5616
      %5618 = vrot.lane.b32.xlu0 %v4823, 48
      %v5619 = vpop.permute.xlu0 %5618
      %v5623 = vsel %vm1322, %v5611, 0
      %v5626 = vsel %vm1322, %v5612, 0
      %v5629 = vsel %vm1322, %v5613, 0
      %v5631 = vsel %vm1374, %v5619, 0
      %5633 = vmatprep.subr.mxu0 0.0
      %5634 = vmatpush1.msra.mxu0 0.0
      %5635 = vmatprep.subr.mxu0 0.0
      %5636 = vmatpush1.msra.mxu0 0.0
      %5637 = vmatprep.subr.mxu0 0.0
      %5638 = vmatpush1.msra.mxu0 0.0
      %5639 = vmatprep.subr.mxu0 0.0
      %5640 = vmatpush1.msra.mxu0 0.0
      %5641 = vmatprep.subr.mxu0 0.0
      %5642 = vmatpush1.msra.mxu0 0.0
      %5643 = vmatprep.subr.mxu0 0.0
      %5644 = vmatpush1.msra.mxu0 0.0
      %5645 = vmatprep.subr.mxu0 0.0
      %5646 = vmatpush1.msra.mxu0 0.0
      %5647 = vmatprep.subr.mxu0 0.0
      %5648 = vmatpush1.msra.mxu0 0.0
      %5649 = vmatprep.subr.mxu0 0.0
      %5650 = vmatpush1.msra.mxu0 0.0
      %5651 = vmatprep.subr.mxu0 0.0
      %5652 = vmatpush1.msra.mxu0 0.0
      %5653 = vmatprep.subr.mxu0 0.0
      %5654 = vmatpush1.msra.mxu0 0.0
      %5655 = vmatprep.subr.mxu0 0.0
      %5656 = vmatpush1.msra.mxu0 0.0
      %5657 = vmatprep.subr.mxu0 0.0
      %5658 = vmatpush1.msra.mxu0 0.0
      %5659 = vmatprep.subr.mxu0 0.0
      %5660 = vmatpush1.msra.mxu0 %v5631
      %5661 = vmatprep.subr.mxu0 0.0
      %5662 = vmatpush1.msra.mxu0 %v5617
      %5663 = vmatprep.subr.mxu0 0.0
      %5664 = vmatpush1.msra.mxu0 %v5615
      %5665 = vmatprep.subr.mxu0 0.0
      %5666 = vmatpush2.msra.mxu0 0.0
      %5667 = vmatprep.subr.mxu0 0.0
      %5668 = vmatpush2.msra.mxu0 0.0
      %5669 = vmatprep.subr.mxu0 0.0
      %5670 = vmatpush2.msra.mxu0 0.0
      %5671 = vmatprep.subr.mxu0 0.0
      %5672 = vmatpush2.msra.mxu0 0.0
      %5673 = vmatprep.subr.mxu0 0.0
      %5674 = vmatpush2.msra.mxu0 0.0
      %5675 = vmatprep.subr.mxu0 0.0
      %5676 = vmatpush2.msra.mxu0 0.0
      %5677 = vmatprep.subr.mxu0 0.0
      %5678 = vmatpush2.msra.mxu0 0.0
      %5679 = vmatprep.subr.mxu0 0.0
      %5680 = vmatpush2.msra.mxu0 0.0
      %5681 = vmatprep.subr.mxu0 0.0
      %5682 = vmatpush2.msra.mxu0 0.0
      %5683 = vmatprep.subr.mxu0 0.0
      %5684 = vmatpush2.msra.mxu0 0.0
      %5685 = vmatprep.subr.mxu0 0.0
      %5686 = vmatpush2.msra.mxu0 0.0
      %5687 = vmatprep.subr.mxu0 0.0
      %5688 = vmatpush2.msra.mxu0 0.0
      %5689 = vmatprep.subr.mxu0 0.0
      %5690 = vmatpush2.msra.mxu0 0.0
      %5691 = vmatprep.subr.mxu0 0.0
      %5692 = vmatpush2.msra.mxu0 0.0
      %5693 = vmatprep.subr.mxu0 0.0
      %5694 = vmatpush2.msra.mxu0 0.0
      %5695 = vmatprep.subr.mxu0 0.0
      %5696 = vmatpush2.msra.mxu0 0.0
      %5697 = vmatprep.mubr.f32.mxu0 0.0
      %5698 = vmatmul.mubr.f32.gmra.mxu0 %v5623
      %v5699 = vpop.f32.mrf.mxu0
      %v5700 = vadd.f32 0.0, %v5699
      %v5701 = vpop.f32.mrf.mxu0
      %5702 = vmatprep.mubr.f32.mxu0 0.0
      %5703 = vmatmul.mubr.f32.gmra.mxu0 %v5626
      %v5704 = vpop.f32.mrf.mxu0
      %v5705 = vadd.f32 0.0, %v5704
      %v5706 = vpop.f32.mrf.mxu0
      %5707 = vmatprep.mubr.f32.mxu0 0.0
      %5708 = vmatmul.mubr.f32.gmra.mxu0 %v5629
      %v5709 = vpop.f32.mrf.mxu0
      %v5710 = vadd.f32 0.0, %v5709
      %v5711 = vpop.f32.mrf.mxu0
      %5712 = vdwg.mxu0
      %v5714 = vsel %vm1229, %v5700, 0
      %v5717 = vsel %vm1229, %v5705, 0
      %v5720 = vsel %vm1229, %v5710, 0
      %5722 = vmatprep.subr.mxu0 0.0
      %5723 = vmatpush1.msra.mxu0 0.0
      %5724 = vmatprep.subr.mxu0 0.0
      %5725 = vmatpush1.msra.mxu0 0.0
      %5726 = vmatprep.subr.mxu0 0.0
      %5727 = vmatpush1.msra.mxu0 0.0
      %5728 = vmatprep.subr.mxu0 0.0
      %5729 = vmatpush1.msra.mxu0 0.0
      %5730 = vmatprep.subr.mxu0 0.0
      %5731 = vmatpush1.msra.mxu0 0.0
      %5732 = vmatprep.subr.mxu0 0.0
      %5733 = vmatpush1.msra.mxu0 0.0
      %5734 = vmatprep.subr.mxu0 0.0
      %5735 = vmatpush1.msra.mxu0 0.0
      %5736 = vmatprep.subr.mxu0 0.0
      %5737 = vmatpush1.msra.mxu0 0.0
      %5738 = vmatprep.subr.mxu0 0.0
      %5739 = vmatpush1.msra.mxu0 0.0
      %5740 = vmatprep.subr.mxu0 0.0
      %5741 = vmatpush1.msra.mxu0 0.0
      %5742 = vmatprep.subr.mxu0 0.0
      %5743 = vmatpush1.msra.mxu0 0.0
      %5744 = vmatprep.subr.mxu0 0.0
      %5745 = vmatpush1.msra.mxu0 0.0
      %5746 = vmatprep.subr.mxu0 0.0
      %5747 = vmatpush1.msra.mxu0 0.0
      %5748 = vmatprep.subr.mxu0 0.0
      %5749 = vmatpush1.msra.mxu0 0.0
      %5750 = vmatprep.subr.mxu0 0.0
      %5751 = vmatpush1.msra.mxu0 0.0
      %5752 = vmatprep.subr.mxu0 0.0
      %5753 = vmatpush1.msra.mxu0 %v4828
      %5754 = vmatprep.subr.mxu0 0.0
      %5755 = vmatpush2.msra.mxu0 0.0
      %5756 = vmatprep.subr.mxu0 0.0
      %5757 = vmatpush2.msra.mxu0 0.0
      %5758 = vmatprep.subr.mxu0 0.0
      %5759 = vmatpush2.msra.mxu0 0.0
      %5760 = vmatprep.subr.mxu0 0.0
      %5761 = vmatpush2.msra.mxu0 0.0
      %5762 = vmatprep.subr.mxu0 0.0
      %5763 = vmatpush2.msra.mxu0 0.0
      %5764 = vmatprep.subr.mxu0 0.0
      %5765 = vmatpush2.msra.mxu0 0.0
      %5766 = vmatprep.subr.mxu0 0.0
      %5767 = vmatpush2.msra.mxu0 0.0
      %5768 = vmatprep.subr.mxu0 0.0
      %5769 = vmatpush2.msra.mxu0 0.0
      %5770 = vmatprep.subr.mxu0 0.0
      %5771 = vmatpush2.msra.mxu0 0.0
      %5772 = vmatprep.subr.mxu0 0.0
      %5773 = vmatpush2.msra.mxu0 0.0
      %5774 = vmatprep.subr.mxu0 0.0
      %5775 = vmatpush2.msra.mxu0 0.0
      %5776 = vmatprep.subr.mxu0 0.0
      %5777 = vmatpush2.msra.mxu0 0.0
      %5778 = vmatprep.subr.mxu0 0.0
      %5779 = vmatpush2.msra.mxu0 0.0
      %5780 = vmatprep.subr.mxu0 0.0
      %5781 = vmatpush2.msra.mxu0 0.0
      %5782 = vmatprep.subr.mxu0 0.0
      %5783 = vmatpush2.msra.mxu0 0.0
      %5784 = vmatprep.subr.mxu0 0.0
      %5785 = vmatpush2.msra.mxu0 0.0
      %5786 = vmatprep.mubr.f32.mxu0 0.0
      %5787 = vmatmul.mubr.f32.gmra.mxu0 %v5714
      %v5788 = vpop.f32.mrf.mxu0
      %v5789 = vadd.f32 0.0, %v5788
      %v5790 = vpop.f32.mrf.mxu0
      %5791 = vmatprep.mubr.f32.mxu0 0.0
      %5792 = vmatmul.mubr.f32.gmra.mxu0 %v5717
      %v5793 = vpop.f32.mrf.mxu0
      %v5794 = vadd.f32 0.0, %v5793
      %v5795 = vpop.f32.mrf.mxu0
      %5796 = vmatprep.mubr.f32.mxu0 0.0
      %5797 = vmatmul.mubr.f32.gmra.mxu0 %v5720
      %v5798 = vpop.f32.mrf.mxu0
      %v5799 = vadd.f32 0.0, %v5798
      %v5800 = vpop.f32.mrf.mxu0
      %5801 = vdwg.mxu0
      %v5802 = vadd.f32 %v5464, %v5789
      %v5803 = vadd.f32 %v5469, %v5794
      %v5804 = vadd.f32 %v5474, %v5799
      %5805 = vrot.lane.b32.xlu0 %v4813, 104
      %v5806 = vpop.permute.xlu0 %5805
      %5807 = vrot.lane.b32.xlu0 %v4818, 104
      %v5808 = vpop.permute.xlu0 %5807
      %5809 = vrot.lane.b32.xlu0 %v4823, 104
      %v5810 = vpop.permute.xlu0 %5809
      %5811 = vrot.lane.b32.xlu0 %v4813, 72
      %v5812 = vpop.permute.xlu0 %5811
      %5813 = vrot.lane.b32.xlu0 %v4818, 72
      %v5814 = vpop.permute.xlu0 %5813
      %5815 = vrot.lane.b32.xlu0 %v4823, 72
      %v5816 = vpop.permute.xlu0 %5815
      %v5817 = vsel %vm1229, %v5806, 0
      %v5819 = vsel %vm1229, %v5808, 0
      %v5821 = vsel %vm1229, %v5810, 0
      %v5823 = vsel %vm1229, %v5812, 0
      %v5825 = vsel %vm1229, %v5814, 0
      %v5827 = vsel %vm1229, %v5816, 0
      %5829 = vmatprep.subr.mxu0 0.0
      %5830 = vmatpush1.xpose.msra.mxu0 0.0
      %5831 = vmatprep.subr.mxu0 0.0
      %5832 = vmatpush1.xpose.msra.mxu0 0.0
      %5833 = vmatprep.subr.mxu0 0.0
      %5834 = vmatpush1.xpose.msra.mxu0 0.0
      %5835 = vmatprep.subr.mxu0 0.0
      %5836 = vmatpush1.xpose.msra.mxu0 0.0
      %5837 = vmatprep.subr.mxu0 0.0
      %5838 = vmatpush1.xpose.msra.mxu0 0.0
      %5839 = vmatprep.subr.mxu0 0.0
      %5840 = vmatpush1.xpose.msra.mxu0 0.0
      %5841 = vmatprep.subr.mxu0 0.0
      %5842 = vmatpush1.xpose.msra.mxu0 0.0
      %5843 = vmatprep.subr.mxu0 0.0
      %5844 = vmatpush1.xpose.msra.mxu0 0.0
      %5845 = vmatprep.subr.mxu0 0.0
      %5846 = vmatpush1.xpose.msra.mxu0 0.0
      %5847 = vmatprep.subr.mxu0 0.0
      %5848 = vmatpush1.xpose.msra.mxu0 0.0
      %5849 = vmatprep.subr.mxu0 0.0
      %5850 = vmatpush1.xpose.msra.mxu0 0.0
      %5851 = vmatprep.subr.mxu0 0.0
      %5852 = vmatpush1.xpose.msra.mxu0 0.0
      %5853 = vmatprep.subr.mxu0 0.0
      %5854 = vmatpush1.xpose.msra.mxu0 0.0
      %5855 = vmatprep.subr.mxu0 0.0
      %5856 = vmatpush1.xpose.msra.mxu0 %v5827
      %5857 = vmatprep.subr.mxu0 0.0
      %5858 = vmatpush1.xpose.msra.mxu0 %v5825
      %5859 = vmatprep.subr.mxu0 0.0
      %5860 = vmatpush1.xpose.msra.mxu0 %v5823
      %5861 = vmatprep.subr.mxu0 0.0
      %5862 = vmatpush2.xpose.msra.mxu0 0.0
      %5863 = vmatprep.subr.mxu0 0.0
      %5864 = vmatpush2.xpose.msra.mxu0 0.0
      %5865 = vmatprep.subr.mxu0 0.0
      %5866 = vmatpush2.xpose.msra.mxu0 0.0
      %5867 = vmatprep.subr.mxu0 0.0
      %5868 = vmatpush2.xpose.msra.mxu0 0.0
      %5869 = vmatprep.subr.mxu0 0.0
      %5870 = vmatpush2.xpose.msra.mxu0 0.0
      %5871 = vmatprep.subr.mxu0 0.0
      %5872 = vmatpush2.xpose.msra.mxu0 0.0
      %5873 = vmatprep.subr.mxu0 0.0
      %5874 = vmatpush2.xpose.msra.mxu0 0.0
      %5875 = vmatprep.subr.mxu0 0.0
      %5876 = vmatpush2.xpose.msra.mxu0 0.0
      %5877 = vmatprep.subr.mxu0 0.0
      %5878 = vmatpush2.xpose.msra.mxu0 0.0
      %5879 = vmatprep.subr.mxu0 0.0
      %5880 = vmatpush2.xpose.msra.mxu0 0.0
      %5881 = vmatprep.subr.mxu0 0.0
      %5882 = vmatpush2.xpose.msra.mxu0 0.0
      %5883 = vmatprep.subr.mxu0 0.0
      %5884 = vmatpush2.xpose.msra.mxu0 0.0
      %5885 = vmatprep.subr.mxu0 0.0
      %5886 = vmatpush2.xpose.msra.mxu0 0.0
      %5887 = vmatprep.subr.mxu0 0.0
      %5888 = vmatpush2.xpose.msra.mxu0 0.0
      %5889 = vmatprep.subr.mxu0 0.0
      %5890 = vmatpush2.xpose.msra.mxu0 0.0
      %5891 = vmatprep.subr.mxu0 0.0
      %5892 = vmatpush2.xpose.msra.mxu0 0.0
      %5893 = vmatprep.mubr.f32.mxu0 0.0
      %5894 = vmatmul.mubr.f32.gmra.mxu0 %v5817
      %v5895 = vpop.f32.mrf.mxu0
      %v5896 = vadd.f32 0.0, %v5895
      %v5897 = vpop.f32.mrf.mxu0
      %5898 = vmatprep.mubr.f32.mxu0 0.0
      %5899 = vmatmul.mubr.f32.gmra.mxu0 %v5819
      %v5900 = vpop.f32.mrf.mxu0
      %v5901 = vadd.f32 0.0, %v5900
      %v5902 = vpop.f32.mrf.mxu0
      %5903 = vmatprep.mubr.f32.mxu0 0.0
      %5904 = vmatmul.mubr.f32.gmra.mxu0 %v5821
      %v5905 = vpop.f32.mrf.mxu0
      %v5906 = vadd.f32 0.0, %v5905
      %v5907 = vpop.f32.mrf.mxu0
      %5908 = vdwg.mxu0
      %v5909 = vsel %vm1322, %v5896, -inf
      %5910 = vmax.xlane.f32.xlu0 %v5909
      %v5911 = vpop.xlane.xlu0 %5910
      %v5912 = vsel %vm1322, %v5901, -inf
      %5913 = vmax.xlane.f32.xlu0 %v5912
      %v5914 = vpop.xlane.xlu0 %5913
      %v5915 = vsel %vm1329, %v5906, -inf
      %5916 = vmax.xlane.f32.xlu0 %v5915
      %v5917 = vpop.xlane.xlu0 %5916
      %v5918 = vsub.f32 %v5896, %v5911
      %v5919 = vsub.f32 %v5901, %v5914
      %v5920 = vsub.f32 %v5906, %v5917
      %v5921 = vmul.f32 %v5918, 1.442695
      %v5922 = vpow.pop %v5921
      %v5923 = vmul.f32 %v5919, 1.442695
      %v5924 = vpow.pop %v5923
      %v5925 = vmul.f32 %v5920, 1.442695
      %v5926 = vpow.pop %v5925
      %v5927 = vsel %vm1322, %v5922, 0.0
      %5928 = vadd.xlane.f32.xlu0 %v5927
      %v5929 = vpop.xlane.xlu0 %5928
      %v5930 = vsel %vm1322, %v5924, 0.0
      %5931 = vadd.xlane.f32.xlu0 %v5930
      %v5932 = vpop.xlane.xlu0 %5931
      %v5933 = vsel %vm1329, %v5926, 0.0
      %5934 = vadd.xlane.f32.xlu0 %v5933
      %v5935 = vpop.xlane.xlu0 %5934
      %v5936 = vrcp.pop %v5929
      %v5937 = vrcp.pop %v5932
      %v5938 = vrcp.pop %v5935
      %v5939 = vmul.f32 %v5922, %v5936
      %v5940 = vmul.f32 %v5924, %v5937
      %v5941 = vmul.f32 %v5926, %v5938
      %5942 = vrot.lane.b32.xlu0 %v4813, 40
      %v5943 = vpop.permute.xlu0 %5942
      %5944 = vrot.lane.b32.xlu0 %v4818, 40
      %v5945 = vpop.permute.xlu0 %5944
      %5946 = vrot.lane.b32.xlu0 %v4823, 40
      %v5947 = vpop.permute.xlu0 %5946
      %v5951 = vsel %vm1322, %v5939, 0
      %v5954 = vsel %vm1322, %v5940, 0
      %v5957 = vsel %vm1322, %v5941, 0
      %v5959 = vsel %vm1374, %v5947, 0
      %5961 = vmatprep.subr.mxu0 0.0
      %5962 = vmatpush1.msra.mxu0 0.0
      %5963 = vmatprep.subr.mxu0 0.0
      %5964 = vmatpush1.msra.mxu0 0.0
      %5965 = vmatprep.subr.mxu0 0.0
      %5966 = vmatpush1.msra.mxu0 0.0
      %5967 = vmatprep.subr.mxu0 0.0
      %5968 = vmatpush1.msra.mxu0 0.0
      %5969 = vmatprep.subr.mxu0 0.0
      %5970 = vmatpush1.msra.mxu0 0.0
      %5971 = vmatprep.subr.mxu0 0.0
      %5972 = vmatpush1.msra.mxu0 0.0
      %5973 = vmatprep.subr.mxu0 0.0
      %5974 = vmatpush1.msra.mxu0 0.0
      %5975 = vmatprep.subr.mxu0 0.0
      %5976 = vmatpush1.msra.mxu0 0.0
      %5977 = vmatprep.subr.mxu0 0.0
      %5978 = vmatpush1.msra.mxu0 0.0
      %5979 = vmatprep.subr.mxu0 0.0
      %5980 = vmatpush1.msra.mxu0 0.0
      %5981 = vmatprep.subr.mxu0 0.0
      %5982 = vmatpush1.msra.mxu0 0.0
      %5983 = vmatprep.subr.mxu0 0.0
      %5984 = vmatpush1.msra.mxu0 0.0
      %5985 = vmatprep.subr.mxu0 0.0
      %5986 = vmatpush1.msra.mxu0 0.0
      %5987 = vmatprep.subr.mxu0 0.0
      %5988 = vmatpush1.msra.mxu0 %v5959
      %5989 = vmatprep.subr.mxu0 0.0
      %5990 = vmatpush1.msra.mxu0 %v5945
      %5991 = vmatprep.subr.mxu0 0.0
      %5992 = vmatpush1.msra.mxu0 %v5943
      %5993 = vmatprep.subr.mxu0 0.0
      %5994 = vmatpush2.msra.mxu0 0.0
      %5995 = vmatprep.subr.mxu0 0.0
      %5996 = vmatpush2.msra.mxu0 0.0
      %5997 = vmatprep.subr.mxu0 0.0
      %5998 = vmatpush2.msra.mxu0 0.0
      %5999 = vmatprep.subr.mxu0 0.0
      %6000 = vmatpush2.msra.mxu0 0.0
      %6001 = vmatprep.subr.mxu0 0.0
      %6002 = vmatpush2.msra.mxu0 0.0
      %6003 = vmatprep.subr.mxu0 0.0
      %6004 = vmatpush2.msra.mxu0 0.0
      %6005 = vmatprep.subr.mxu0 0.0
      %6006 = vmatpush2.msra.mxu0 0.0
      %6007 = vmatprep.subr.mxu0 0.0
      %6008 = vmatpush2.msra.mxu0 0.0
      %6009 = vmatprep.subr.mxu0 0.0
      %6010 = vmatpush2.msra.mxu0 0.0
      %6011 = vmatprep.subr.mxu0 0.0
      %6012 = vmatpush2.msra.mxu0 0.0
      %6013 = vmatprep.subr.mxu0 0.0
      %6014 = vmatpush2.msra.mxu0 0.0
      %6015 = vmatprep.subr.mxu0 0.0
      %6016 = vmatpush2.msra.mxu0 0.0
      %6017 = vmatprep.subr.mxu0 0.0
      %6018 = vmatpush2.msra.mxu0 0.0
      %6019 = vmatprep.subr.mxu0 0.0
      %6020 = vmatpush2.msra.mxu0 0.0
      %6021 = vmatprep.subr.mxu0 0.0
      %6022 = vmatpush2.msra.mxu0 0.0
      %6023 = vmatprep.subr.mxu0 0.0
      %6024 = vmatpush2.msra.mxu0 0.0
      %6025 = vmatprep.mubr.f32.mxu0 0.0
      %6026 = vmatmul.mubr.f32.gmra.mxu0 %v5951
      %v6027 = vpop.f32.mrf.mxu0
      %v6028 = vadd.f32 0.0, %v6027
      %v6029 = vpop.f32.mrf.mxu0
      %6030 = vmatprep.mubr.f32.mxu0 0.0
      %6031 = vmatmul.mubr.f32.gmra.mxu0 %v5954
      %v6032 = vpop.f32.mrf.mxu0
      %v6033 = vadd.f32 0.0, %v6032
      %v6034 = vpop.f32.mrf.mxu0
      %6035 = vmatprep.mubr.f32.mxu0 0.0
      %6036 = vmatmul.mubr.f32.gmra.mxu0 %v5957
      %v6037 = vpop.f32.mrf.mxu0
      %v6038 = vadd.f32 0.0, %v6037
      %v6039 = vpop.f32.mrf.mxu0
      %6040 = vdwg.mxu0
      %v6042 = vsel %vm1229, %v6028, 0
      %v6045 = vsel %vm1229, %v6033, 0
      %v6048 = vsel %vm1229, %v6038, 0
      %6050 = vmatprep.subr.mxu0 0.0
      %6051 = vmatpush1.msra.mxu0 0.0
      %6052 = vmatprep.subr.mxu0 0.0
      %6053 = vmatpush1.msra.mxu0 0.0
      %6054 = vmatprep.subr.mxu0 0.0
      %6055 = vmatpush1.msra.mxu0 0.0
      %6056 = vmatprep.subr.mxu0 0.0
      %6057 = vmatpush1.msra.mxu0 0.0
      %6058 = vmatprep.subr.mxu0 0.0
      %6059 = vmatpush1.msra.mxu0 0.0
      %6060 = vmatprep.subr.mxu0 0.0
      %6061 = vmatpush1.msra.mxu0 0.0
      %6062 = vmatprep.subr.mxu0 0.0
      %6063 = vmatpush1.msra.mxu0 0.0
      %6064 = vmatprep.subr.mxu0 0.0
      %6065 = vmatpush1.msra.mxu0 0.0
      %6066 = vmatprep.subr.mxu0 0.0
      %6067 = vmatpush1.msra.mxu0 0.0
      %6068 = vmatprep.subr.mxu0 0.0
      %6069 = vmatpush1.msra.mxu0 0.0
      %6070 = vmatprep.subr.mxu0 0.0
      %6071 = vmatpush1.msra.mxu0 0.0
      %6072 = vmatprep.subr.mxu0 0.0
      %6073 = vmatpush1.msra.mxu0 0.0
      %6074 = vmatprep.subr.mxu0 0.0
      %6075 = vmatpush1.msra.mxu0 0.0
      %6076 = vmatprep.subr.mxu0 0.0
      %6077 = vmatpush1.msra.mxu0 0.0
      %6078 = vmatprep.subr.mxu0 0.0
      %6079 = vmatpush1.msra.mxu0 0.0
      %6080 = vmatprep.subr.mxu0 0.0
      %6081 = vmatpush1.msra.mxu0 %v4829
      %6082 = vmatprep.subr.mxu0 0.0
      %6083 = vmatpush2.msra.mxu0 0.0
      %6084 = vmatprep.subr.mxu0 0.0
      %6085 = vmatpush2.msra.mxu0 0.0
      %6086 = vmatprep.subr.mxu0 0.0
      %6087 = vmatpush2.msra.mxu0 0.0
      %6088 = vmatprep.subr.mxu0 0.0
      %6089 = vmatpush2.msra.mxu0 0.0
      %6090 = vmatprep.subr.mxu0 0.0
      %6091 = vmatpush2.msra.mxu0 0.0
      %6092 = vmatprep.subr.mxu0 0.0
      %6093 = vmatpush2.msra.mxu0 0.0
      %6094 = vmatprep.subr.mxu0 0.0
      %6095 = vmatpush2.msra.mxu0 0.0
      %6096 = vmatprep.subr.mxu0 0.0
      %6097 = vmatpush2.msra.mxu0 0.0
      %6098 = vmatprep.subr.mxu0 0.0
      %6099 = vmatpush2.msra.mxu0 0.0
      %6100 = vmatprep.subr.mxu0 0.0
      %6101 = vmatpush2.msra.mxu0 0.0
      %6102 = vmatprep.subr.mxu0 0.0
      %6103 = vmatpush2.msra.mxu0 0.0
      %6104 = vmatprep.subr.mxu0 0.0
      %6105 = vmatpush2.msra.mxu0 0.0
      %6106 = vmatprep.subr.mxu0 0.0
      %6107 = vmatpush2.msra.mxu0 0.0
      %6108 = vmatprep.subr.mxu0 0.0
      %6109 = vmatpush2.msra.mxu0 0.0
      %6110 = vmatprep.subr.mxu0 0.0
      %6111 = vmatpush2.msra.mxu0 0.0
      %6112 = vmatprep.subr.mxu0 0.0
      %6113 = vmatpush2.msra.mxu0 0.0
      %6114 = vmatprep.mubr.f32.mxu0 0.0
      %6115 = vmatmul.mubr.f32.gmra.mxu0 %v6042
      %v6116 = vpop.f32.mrf.mxu0
      %v6117 = vadd.f32 0.0, %v6116
      %v6118 = vpop.f32.mrf.mxu0
      %6119 = vmatprep.mubr.f32.mxu0 0.0
      %6120 = vmatmul.mubr.f32.gmra.mxu0 %v6045
      %v6121 = vpop.f32.mrf.mxu0
      %v6122 = vadd.f32 0.0, %v6121
      %v6123 = vpop.f32.mrf.mxu0
      %6124 = vmatprep.mubr.f32.mxu0 0.0
      %6125 = vmatmul.mubr.f32.gmra.mxu0 %v6048
      %v6126 = vpop.f32.mrf.mxu0
      %v6127 = vadd.f32 0.0, %v6126
      %v6128 = vpop.f32.mrf.mxu0
      %6129 = vdwg.mxu0
      %v6130 = vadd.f32 %v5802, %v6117
      %v6131 = vadd.f32 %v5803, %v6122
      %v6132 = vadd.f32 %v5804, %v6127
      %v6133 = vadd.f32 %v4664, %v6130
      %v6134 = vadd.f32 %v4665, %v6131
      %v6135 = vadd.f32 %v4666, %v6132
      %v6136 = vld [vmem:[%s842] sm:$0x1]
      %v6138 = vlaneseq
      %v6139 = vshrl.u32 %v6138, 7
      %v6140 = vsub.s32 0, %v6139
      %v6141 = vrot.slane %v6136, %v6140
      %v6143 = vadd.f32 %v6133, %v6141
      %v6144 = vadd.f32 %v6134, %v6141
      %v6145 = vadd.f32 %v6135, %v6141
      %v6146 = vld [vmem:[%s846] sm:$0x1]
      %v6147 = vld [vmem:[%s850] sm:$0x1]
      %v6148 = vsel %vm987, %v6143, 0.0
      %6149 = vadd.xlane.f32.xlu0 %v6148
      %v6150 = vpop.xlane.xlu0 %6149
      %v6151 = vsel %vm987, %v6144, 0.0
      %6152 = vadd.xlane.f32.xlu0 %v6151
      %v6153 = vpop.xlane.xlu0 %6152
      %v6154 = vsel %vm991, %v6145, 0.0
      %6155 = vadd.xlane.f32.xlu0 %v6154
      %v6156 = vpop.xlane.xlu0 %6155
      %v6157 = vmul.f32 %v6150, %v1008
      %v6158 = vmul.f32 %v6153, %v1008
      %v6159 = vmul.f32 %v6156, %v1008
      %v6160 = vsub.f32 %v6143, %v6157
      %v6161 = vsub.f32 %v6144, %v6158
      %v6162 = vsub.f32 %v6145, %v6159
      %v6163 = vmul.f32 %v6160, %v6160
      %v6164 = vmul.f32 %v6161, %v6161
      %v6165 = vmul.f32 %v6162, %v6162
      %v6166 = vsel %vm987, %v6163, 0.0
      %6167 = vadd.xlane.f32.xlu0 %v6166
      %v6168 = vpop.xlane.xlu0 %6167
      %v6169 = vsel %vm987, %v6164, 0.0
      %6170 = vadd.xlane.f32.xlu0 %v6169
      %v6171 = vpop.xlane.xlu0 %6170
      %v6172 = vsel %vm991, %v6165, 0.0
      %6173 = vadd.xlane.f32.xlu0 %v6172
      %v6174 = vpop.xlane.xlu0 %6173
      %v6175 = vmul.f32 %v6168, %v1008
      %v6176 = vmul.f32 %v6171, %v1008
      %v6177 = vmul.f32 %v6174, %v1008
      %v6178 = vadd.f32 %v6175, 1e-05
      %v6179 = vadd.f32 %v6176, 1e-05
      %v6180 = vadd.f32 %v6177, 1e-05
      %v6181 = vrsqrt.pop %v6178
      %v6182 = vrsqrt.pop %v6179
      %v6183 = vrsqrt.pop %v6180
      %v6184 = vmul.f32 %v6160, %v6181
      %v6185 = vmul.f32 %v6161, %v6182
      %v6186 = vmul.f32 %v6162, %v6183
      %v6188 = vlaneseq
      %v6189 = vshrl.u32 %v6188, 7
      %v6190 = vsub.s32 0, %v6189
      %v6191 = vrot.slane %v6146, %v6190
      %v6193 = vmul.f32 %v6184, %v6191
      %v6194 = vmul.f32 %v6185, %v6191
      %v6195 = vmul.f32 %v6186, %v6191
      %v6197 = vlaneseq
      %v6198 = vshrl.u32 %v6197, 7
      %v6199 = vsub.s32 0, %v6198
      %v6200 = vrot.slane %v6147, %v6199
      %v6202 = vadd.f32 %v6193, %v6200
      %v6203 = vadd.f32 %v6194, %v6200
      %v6204 = vadd.f32 %v6195, %v6200
      %v6205 = vld [vmem:[%s855] sm:$0xff]
      %v6206 = vld [vmem:[%s855 + $0x8] sm:$0xff]
      %v6207 = vld [vmem:[%s855 + $0x10] sm:$0xff]
      %v6208 = vld [vmem:[%s855 + $0x18] sm:$0xff]
      %v6209 = vld [vmem:[%s859] sm:$0x1]
      %v6211 = vlaneseq
      %v6212 = vshrl.u32 %v6211, 7
      %v6213 = vsub.s32 0, %v6212
      %v6214 = vrot.slane %v6209, %v6213
      %v6217 = vsel %vm987, %v6202, 0
      %v6220 = vsel %vm987, %v6203, 0
      %v6223 = vsel %vm987, %v6204, 0
      %6225 = vmatprep.subr.mxu0 0.0
      %6226 = vmatpush1.msra.mxu0 0.0
      %6227 = vmatprep.subr.mxu0 0.0
      %6228 = vmatpush1.msra.mxu0 0.0
      %6229 = vmatprep.subr.mxu0 0.0
      %6230 = vmatpush1.msra.mxu0 0.0
      %6231 = vmatprep.subr.mxu0 0.0
      %6232 = vmatpush1.msra.mxu0 0.0
      %6233 = vmatprep.subr.mxu0 0.0
      %6234 = vmatpush1.msra.mxu0 0.0
      %6235 = vmatprep.subr.mxu0 0.0
      %6236 = vmatpush1.msra.mxu0 0.0
      %6237 = vmatprep.subr.mxu0 0.0
      %6238 = vmatpush1.msra.mxu0 0.0
      %6239 = vmatprep.subr.mxu0 0.0
      %6240 = vmatpush1.msra.mxu0 0.0
      %6241 = vmatprep.subr.mxu0 0.0
      %6242 = vmatpush1.msra.mxu0 0.0
      %6243 = vmatprep.subr.mxu0 0.0
      %6244 = vmatpush1.msra.mxu0 0.0
      %6245 = vmatprep.subr.mxu0 0.0
      %6246 = vmatpush1.msra.mxu0 0.0
      %6247 = vmatprep.subr.mxu0 0.0
      %6248 = vmatpush1.msra.mxu0 0.0
      %6249 = vmatprep.subr.mxu0 0.0
      %6250 = vmatpush1.msra.mxu0 %v6208
      %6251 = vmatprep.subr.mxu0 0.0
      %6252 = vmatpush1.msra.mxu0 %v6207
      %6253 = vmatprep.subr.mxu0 0.0
      %6254 = vmatpush1.msra.mxu0 %v6206
      %6255 = vmatprep.subr.mxu0 0.0
      %6256 = vmatpush1.msra.mxu0 %v6205
      %6257 = vmatprep.subr.mxu0 0.0
      %6258 = vmatpush2.msra.mxu0 0.0
      %6259 = vmatprep.subr.mxu0 0.0
      %6260 = vmatpush2.msra.mxu0 0.0
      %6261 = vmatprep.subr.mxu0 0.0
      %6262 = vmatpush2.msra.mxu0 0.0
      %6263 = vmatprep.subr.mxu0 0.0
      %6264 = vmatpush2.msra.mxu0 0.0
      %6265 = vmatprep.subr.mxu0 0.0
      %6266 = vmatpush2.msra.mxu0 0.0
      %6267 = vmatprep.subr.mxu0 0.0
      %6268 = vmatpush2.msra.mxu0 0.0
      %6269 = vmatprep.subr.mxu0 0.0
      %6270 = vmatpush2.msra.mxu0 0.0
      %6271 = vmatprep.subr.mxu0 0.0
      %6272 = vmatpush2.msra.mxu0 0.0
      %6273 = vmatprep.subr.mxu0 0.0
      %6274 = vmatpush2.msra.mxu0 0.0
      %6275 = vmatprep.subr.mxu0 0.0
      %6276 = vmatpush2.msra.mxu0 0.0
      %6277 = vmatprep.subr.mxu0 0.0
      %6278 = vmatpush2.msra.mxu0 0.0
      %6279 = vmatprep.subr.mxu0 0.0
      %6280 = vmatpush2.msra.mxu0 0.0
      %6281 = vmatprep.subr.mxu0 0.0
      %6282 = vmatpush2.msra.mxu0 0.0
      %6283 = vmatprep.subr.mxu0 0.0
      %6284 = vmatpush2.msra.mxu0 0.0
      %6285 = vmatprep.subr.mxu0 0.0
      %6286 = vmatpush2.msra.mxu0 0.0
      %6287 = vmatprep.subr.mxu0 0.0
      %6288 = vmatpush2.msra.mxu0 0.0
      %6289 = vmatprep.mubr.f32.mxu0 0.0
      %6290 = vmatmul.mubr.f32.gmra.mxu0 %v6217
      %v6291 = vpop.f32.mrf.mxu0
      %v6292 = vadd.f32 %v6214, %v6291
      %v6293 = vpop.f32.mrf.mxu0
      %6294 = vmatprep.mubr.f32.mxu0 0.0
      %6295 = vmatmul.mubr.f32.gmra.mxu0 %v6220
      %v6296 = vpop.f32.mrf.mxu0
      %v6297 = vadd.f32 %v6214, %v6296
      %v6298 = vpop.f32.mrf.mxu0
      %6299 = vmatprep.mubr.f32.mxu0 0.0
      %6300 = vmatmul.mubr.f32.gmra.mxu0 %v6223
      %v6301 = vpop.f32.mrf.mxu0
      %v6302 = vadd.f32 %v6214, %v6301
      %v6303 = vpop.f32.mrf.mxu0
      %6304 = vdwg.mxu0
      %v6305 = vmul.f32 %v6292, 1.702
      %v6306 = vmul.f32 %v6297, 1.702
      %v6307 = vmul.f32 %v6302, 1.702
      %v6308 = vxor.u32 %v6305, 2147483648
      %v6309 = vxor.u32 %v6306, 2147483648
      %v6310 = vxor.u32 %v6307, 2147483648
      %v6311 = vmul.f32 %v6308, 1.442695
      %v6312 = vpow.pop %v6311
      %v6313 = vmul.f32 %v6309, 1.442695
      %v6314 = vpow.pop %v6313
      %v6315 = vmul.f32 %v6310, 1.442695
      %v6316 = vpow.pop %v6315
      %v6317 = vadd.f32 %v6312, 1.0
      %v6318 = vadd.f32 %v6314, 1.0
      %v6319 = vadd.f32 %v6316, 1.0
      %v6320 = vrcp.pop %v6317
      %v6321 = vmul.f32 1.0, %v6320
      %v6322 = vrcp.pop %v6318
      %v6323 = vmul.f32 1.0, %v6322
      %v6324 = vrcp.pop %v6319
      %v6325 = vmul.f32 1.0, %v6324
      %v6326 = vmul.f32 %v6292, %v6321
      %v6327 = vmul.f32 %v6297, %v6323
      %v6328 = vmul.f32 %v6302, %v6325
      %v6329 = vld [vmem:[%s864] sm:$0xff]
      %v6330 = vld [vmem:[%s864 + $0x8] sm:$0xff]
      %v6331 = vld [vmem:[%s864 + $0x10] sm:$0xff]
      %v6332 = vld [vmem:[%s864 + $0x18] sm:$0xff]
      %v6333 = vld [vmem:[%s864 + $0x20] sm:$0xff]
      %v6334 = vld [vmem:[%s864 + $0x28] sm:$0xff]
      %v6335 = vld [vmem:[%s864 + $0x30] sm:$0xff]
      %v6336 = vld [vmem:[%s864 + $0x38] sm:$0xff]
      %v6337 = vld [vmem:[%s868] sm:$0x1]
      %v6339 = vlaneseq
      %v6340 = vshrl.u32 %v6339, 7
      %v6341 = vsub.s32 0, %v6340
      %v6342 = vrot.slane %v6337, %v6341
      %v6345 = vsel %vm2738, %v6326, 0
      %v6348 = vsel %vm2738, %v6327, 0
      %v6351 = vsel %vm2738, %v6328, 0
      %6353 = vmatprep.subr.mxu0 0.0
      %6354 = vmatpush1.msra.mxu0 0.0
      %6355 = vmatprep.subr.mxu0 0.0
      %6356 = vmatpush1.msra.mxu0 0.0
      %6357 = vmatprep.subr.mxu0 0.0
      %6358 = vmatpush1.msra.mxu0 0.0
      %6359 = vmatprep.subr.mxu0 0.0
      %6360 = vmatpush1.msra.mxu0 0.0
      %6361 = vmatprep.subr.mxu0 0.0
      %6362 = vmatpush1.msra.mxu0 0.0
      %6363 = vmatprep.subr.mxu0 0.0
      %6364 = vmatpush1.msra.mxu0 0.0
      %6365 = vmatprep.subr.mxu0 0.0
      %6366 = vmatpush1.msra.mxu0 0.0
      %6367 = vmatprep.subr.mxu0 0.0
      %6368 = vmatpush1.msra.mxu0 0.0
      %6369 = vmatprep.subr.mxu0 0.0
      %6370 = vmatpush1.msra.mxu0 %v6336
      %6371 = vmatprep.subr.mxu0 0.0
      %6372 = vmatpush1.msra.mxu0 %v6335
      %6373 = vmatprep.subr.mxu0 0.0
      %6374 = vmatpush1.msra.mxu0 %v6334
      %6375 = vmatprep.subr.mxu0 0.0
      %6376 = vmatpush1.msra.mxu0 %v6333
      %6377 = vmatprep.subr.mxu0 0.0
      %6378 = vmatpush1.msra.mxu0 %v6332
      %6379 = vmatprep.subr.mxu0 0.0
      %6380 = vmatpush1.msra.mxu0 %v6331
      %6381 = vmatprep.subr.mxu0 0.0
      %6382 = vmatpush1.msra.mxu0 %v6330
      %6383 = vmatprep.subr.mxu0 0.0
      %6384 = vmatpush1.msra.mxu0 %v6329
      %6385 = vmatprep.subr.mxu0 0.0
      %6386 = vmatpush2.msra.mxu0 0.0
      %6387 = vmatprep.subr.mxu0 0.0
      %6388 = vmatpush2.msra.mxu0 0.0
      %6389 = vmatprep.subr.mxu0 0.0
      %6390 = vmatpush2.msra.mxu0 0.0
      %6391 = vmatprep.subr.mxu0 0.0
      %6392 = vmatpush2.msra.mxu0 0.0
      %6393 = vmatprep.subr.mxu0 0.0
      %6394 = vmatpush2.msra.mxu0 0.0
      %6395 = vmatprep.subr.mxu0 0.0
      %6396 = vmatpush2.msra.mxu0 0.0
      %6397 = vmatprep.subr.mxu0 0.0
      %6398 = vmatpush2.msra.mxu0 0.0
      %6399 = vmatprep.subr.mxu0 0.0
      %6400 = vmatpush2.msra.mxu0 0.0
      %6401 = vmatprep.subr.mxu0 0.0
      %6402 = vmatpush2.msra.mxu0 0.0
      %6403 = vmatprep.subr.mxu0 0.0
      %6404 = vmatpush2.msra.mxu0 0.0
      %6405 = vmatprep.subr.mxu0 0.0
      %6406 = vmatpush2.msra.mxu0 0.0
      %6407 = vmatprep.subr.mxu0 0.0
      %6408 = vmatpush2.msra.mxu0 0.0
      %6409 = vmatprep.subr.mxu0 0.0
      %6410 = vmatpush2.msra.mxu0 0.0
      %6411 = vmatprep.subr.mxu0 0.0
      %6412 = vmatpush2.msra.mxu0 0.0
      %6413 = vmatprep.subr.mxu0 0.0
      %6414 = vmatpush2.msra.mxu0 0.0
      %6415 = vmatprep.subr.mxu0 0.0
      %6416 = vmatpush2.msra.mxu0 0.0
      %6417 = vmatprep.mubr.f32.mxu0 0.0
      %6418 = vmatmul.mubr.f32.gmra.mxu0 %v6345
      %v6419 = vpop.f32.mrf.mxu0
      %v6420 = vadd.f32 %v6342, %v6419
      %v6421 = vpop.f32.mrf.mxu0
      %6422 = vmatprep.mubr.f32.mxu0 0.0
      %6423 = vmatmul.mubr.f32.gmra.mxu0 %v6348
      %v6424 = vpop.f32.mrf.mxu0
      %v6425 = vadd.f32 %v6342, %v6424
      %v6426 = vpop.f32.mrf.mxu0
      %6427 = vmatprep.mubr.f32.mxu0 0.0
      %6428 = vmatmul.mubr.f32.gmra.mxu0 %v6351
      %v6429 = vpop.f32.mrf.mxu0
      %v6430 = vadd.f32 %v6342, %v6429
      %v6431 = vpop.f32.mrf.mxu0
      %6432 = vdwg.mxu0
      %v6433 = vadd.f32 %v6143, %v6420
      %v6434 = vadd.f32 %v6144, %v6425
      %v6435 = vadd.f32 %v6145, %v6430
      %v6436 = vld [vmem:[%s2831] sm:$0x1]
      %v6437 = vld [vmem:[%s2833] sm:$0x1]
      %v6438 = vsel %vm987, %v6433, 0.0
      %6439 = vadd.xlane.f32.xlu0 %v6438
      %v6440 = vpop.xlane.xlu0 %6439
      %v6441 = vsel %vm987, %v6434, 0.0
      %6442 = vadd.xlane.f32.xlu0 %v6441
      %v6443 = vpop.xlane.xlu0 %6442
      %v6444 = vsel %vm991, %v6435, 0.0
      %6445 = vadd.xlane.f32.xlu0 %v6444
      %v6446 = vpop.xlane.xlu0 %6445
      %v6447 = vmul.f32 %v6440, %v1008
      %v6448 = vmul.f32 %v6443, %v1008
      %v6449 = vmul.f32 %v6446, %v1008
      %v6450 = vsub.f32 %v6433, %v6447
      %v6451 = vsub.f32 %v6434, %v6448
      %v6452 = vsub.f32 %v6435, %v6449
      %v6453 = vmul.f32 %v6450, %v6450
      %v6454 = vmul.f32 %v6451, %v6451
      %v6455 = vmul.f32 %v6452, %v6452
      %v6456 = vsel %vm987, %v6453, 0.0
      %6457 = vadd.xlane.f32.xlu0 %v6456
      %v6458 = vpop.xlane.xlu0 %6457
      %v6459 = vsel %vm987, %v6454, 0.0
      %6460 = vadd.xlane.f32.xlu0 %v6459
      %v6461 = vpop.xlane.xlu0 %6460
      %v6462 = vsel %vm991, %v6455, 0.0
      %6463 = vadd.xlane.f32.xlu0 %v6462
      %v6464 = vpop.xlane.xlu0 %6463
      %v6465 = vmul.f32 %v6458, %v1008
      %v6466 = vmul.f32 %v6461, %v1008
      %v6467 = vmul.f32 %v6464, %v1008
      %v6468 = vadd.f32 %v6465, 1e-05
      %v6469 = vadd.f32 %v6466, 1e-05
      %v6470 = vadd.f32 %v6467, 1e-05
      %v6471 = vrsqrt.pop %v6468
      %v6472 = vrsqrt.pop %v6469
      %v6473 = vrsqrt.pop %v6470
      %v6474 = vmul.f32 %v6450, %v6471
      %v6475 = vmul.f32 %v6451, %v6472
      %v6476 = vmul.f32 %v6452, %v6473
      %v6478 = vlaneseq
      %v6479 = vshrl.u32 %v6478, 7
      %v6480 = vsub.s32 0, %v6479
      %v6481 = vrot.slane %v6436, %v6480
      %v6483 = vmul.f32 %v6474, %v6481
      %v6484 = vmul.f32 %v6475, %v6481
      %v6485 = vmul.f32 %v6476, %v6481
      %v6487 = vlaneseq
      %v6488 = vshrl.u32 %v6487, 7
      %v6489 = vsub.s32 0, %v6488
      %v6490 = vrot.slane %v6437, %v6489
      %v6492 = vadd.f32 %v6483, %v6490
      %v6493 = vadd.f32 %v6484, %v6490
      %v6494 = vadd.f32 %v6485, %v6490
      %v6495 = vld [vmem:[%s2892] sm:$0xff]
      %v6496 = vld [vmem:[%s2892 + $0x8] sm:$0xff]
      %v6497 = vld [vmem:[%s2892 + $0x10] sm:$0xff]
      %v6498 = vld [vmem:[%s2892 + $0x18] sm:$0xff]
      %v6499 = vld [vmem:[%s2897] sm:$0x1]
      %v6501 = vlaneseq
      %v6502 = vshrl.u32 %v6501, 7
      %v6503 = vsub.s32 0, %v6502
      %v6504 = vrot.slane %v6499, %v6503
      %v6507 = vsel %vm987, %v6492, 0
      %v6510 = vsel %vm987, %v6493, 0
      %v6513 = vsel %vm987, %v6494, 0
      %6515 = vmatprep.subr.mxu0 0.0
      %6516 = vmatpush1.msra.mxu0 0.0
      %6517 = vmatprep.subr.mxu0 0.0
      %6518 = vmatpush1.msra.mxu0 0.0
      %6519 = vmatprep.subr.mxu0 0.0
      %6520 = vmatpush1.msra.mxu0 0.0
      %6521 = vmatprep.subr.mxu0 0.0
      %6522 = vmatpush1.msra.mxu0 0.0
      %6523 = vmatprep.subr.mxu0 0.0
      %6524 = vmatpush1.msra.mxu0 0.0
      %6525 = vmatprep.subr.mxu0 0.0
      %6526 = vmatpush1.msra.mxu0 0.0
      %6527 = vmatprep.subr.mxu0 0.0
      %6528 = vmatpush1.msra.mxu0 0.0
      %6529 = vmatprep.subr.mxu0 0.0
      %6530 = vmatpush1.msra.mxu0 0.0
      %6531 = vmatprep.subr.mxu0 0.0
      %6532 = vmatpush1.msra.mxu0 0.0
      %6533 = vmatprep.subr.mxu0 0.0
      %6534 = vmatpush1.msra.mxu0 0.0
      %6535 = vmatprep.subr.mxu0 0.0
      %6536 = vmatpush1.msra.mxu0 0.0
      %6537 = vmatprep.subr.mxu0 0.0
      %6538 = vmatpush1.msra.mxu0 0.0
      %6539 = vmatprep.subr.mxu0 0.0
      %6540 = vmatpush1.msra.mxu0 %v6498
      %6541 = vmatprep.subr.mxu0 0.0
      %6542 = vmatpush1.msra.mxu0 %v6497
      %6543 = vmatprep.subr.mxu0 0.0
      %6544 = vmatpush1.msra.mxu0 %v6496
      %6545 = vmatprep.subr.mxu0 0.0
      %6546 = vmatpush1.msra.mxu0 %v6495
      %6547 = vmatprep.subr.mxu0 0.0
      %6548 = vmatpush2.msra.mxu0 0.0
      %6549 = vmatprep.subr.mxu0 0.0
      %6550 = vmatpush2.msra.mxu0 0.0
      %6551 = vmatprep.subr.mxu0 0.0
      %6552 = vmatpush2.msra.mxu0 0.0
      %6553 = vmatprep.subr.mxu0 0.0
      %6554 = vmatpush2.msra.mxu0 0.0
      %6555 = vmatprep.subr.mxu0 0.0
      %6556 = vmatpush2.msra.mxu0 0.0
      %6557 = vmatprep.subr.mxu0 0.0
      %6558 = vmatpush2.msra.mxu0 0.0
      %6559 = vmatprep.subr.mxu0 0.0
      %6560 = vmatpush2.msra.mxu0 0.0
      %6561 = vmatprep.subr.mxu0 0.0
      %6562 = vmatpush2.msra.mxu0 0.0
      %6563 = vmatprep.subr.mxu0 0.0
      %6564 = vmatpush2.msra.mxu0 0.0
      %6565 = vmatprep.subr.mxu0 0.0
      %6566 = vmatpush2.msra.mxu0 0.0
      %6567 = vmatprep.subr.mxu0 0.0
      %6568 = vmatpush2.msra.mxu0 0.0
      %6569 = vmatprep.subr.mxu0 0.0
      %6570 = vmatpush2.msra.mxu0 0.0
      %6571 = vmatprep.subr.mxu0 0.0
      %6572 = vmatpush2.msra.mxu0 0.0
      %6573 = vmatprep.subr.mxu0 0.0
      %6574 = vmatpush2.msra.mxu0 0.0
      %6575 = vmatprep.subr.mxu0 0.0
      %6576 = vmatpush2.msra.mxu0 0.0
      %6577 = vmatprep.subr.mxu0 0.0
      %6578 = vmatpush2.msra.mxu0 0.0
      %6579 = vmatprep.mubr.f32.mxu0 0.0
      %6580 = vmatmul.mubr.f32.gmra.mxu0 %v6507
      %v6581 = vpop.f32.mrf.mxu0
      %v6582 = vadd.f32 %v6504, %v6581
      %v6583 = vpop.f32.mrf.mxu0
      %6584 = vmatprep.mubr.f32.mxu0 0.0
      %6585 = vmatmul.mubr.f32.gmra.mxu0 %v6510
      %v6586 = vpop.f32.mrf.mxu0
      %v6587 = vadd.f32 %v6504, %v6586
      %v6588 = vpop.f32.mrf.mxu0
      %6589 = vmatprep.mubr.f32.mxu0 0.0
      %6590 = vmatmul.mubr.f32.gmra.mxu0 %v6513
      %v6591 = vpop.f32.mrf.mxu0
      %v6592 = vadd.f32 %v6504, %v6591
      %v6593 = vpop.f32.mrf.mxu0
      %6594 = vdwg.mxu0
      %v6595 = vld [vmem:[%s2994] sm:$0xff]
      %v6596 = vld [vmem:[%s2994 + $0x8] sm:$0xff]
      %v6597 = vld [vmem:[%s2994 + $0x10] sm:$0xff]
      %v6598 = vld [vmem:[%s2994 + $0x18] sm:$0xff]
      %6602 = vrot.lane.b32.xlu0 %v6582, 96
      %v6603 = vpop.permute.xlu0 %6602
      %6604 = vrot.lane.b32.xlu0 %v6587, 96
      %v6605 = vpop.permute.xlu0 %6604
      %6606 = vrot.lane.b32.xlu0 %v6592, 96
      %v6607 = vpop.permute.xlu0 %6606
      %v6608 = vsel %vm1229, %v6582, 0
      %v6610 = vsel %vm1229, %v6587, 0
      %v6612 = vsel %vm1229, %v6592, 0
      %v6614 = vsel %vm1229, %v6603, 0
      %v6616 = vsel %vm1229, %v6605, 0
      %v6618 = vsel %vm1229, %v6607, 0
      %6620 = vmatprep.subr.mxu0 0.0
      %6621 = vmatpush1.xpose.msra.mxu0 0.0
      %6622 = vmatprep.subr.mxu0 0.0
      %6623 = vmatpush1.xpose.msra.mxu0 0.0
      %6624 = vmatprep.subr.mxu0 0.0
      %6625 = vmatpush1.xpose.msra.mxu0 0.0
      %6626 = vmatprep.subr.mxu0 0.0
      %6627 = vmatpush1.xpose.msra.mxu0 0.0
      %6628 = vmatprep.subr.mxu0 0.0
      %6629 = vmatpush1.xpose.msra.mxu0 0.0
      %6630 = vmatprep.subr.mxu0 0.0
      %6631 = vmatpush1.xpose.msra.mxu0 0.0
      %6632 = vmatprep.subr.mxu0 0.0
      %6633 = vmatpush1.xpose.msra.mxu0 0.0
      %6634 = vmatprep.subr.mxu0 0.0
      %6635 = vmatpush1.xpose.msra.mxu0 0.0
      %6636 = vmatprep.subr.mxu0 0.0
      %6637 = vmatpush1.xpose.msra.mxu0 0.0
      %6638 = vmatprep.subr.mxu0 0.0
      %6639 = vmatpush1.xpose.msra.mxu0 0.0
      %6640 = vmatprep.subr.mxu0 0.0
      %6641 = vmatpush1.xpose.msra.mxu0 0.0
      %6642 = vmatprep.subr.mxu0 0.0
      %6643 = vmatpush1.xpose.msra.mxu0 0.0
      %6644 = vmatprep.subr.mxu0 0.0
      %6645 = vmatpush1.xpose.msra.mxu0 0.0
      %6646 = vmatprep.subr.mxu0 0.0
      %6647 = vmatpush1.xpose.msra.mxu0 %v6618
      %6648 = vmatprep.subr.mxu0 0.0
      %6649 = vmatpush1.xpose.msra.mxu0 %v6616
      %6650 = vmatprep.subr.mxu0 0.0
      %6651 = vmatpush1.xpose.msra.mxu0 %v6614
      %6652 = vmatprep.subr.mxu0 0.0
      %6653 = vmatpush2.xpose.msra.mxu0 0.0
      %6654 = vmatprep.subr.mxu0 0.0
      %6655 = vmatpush2.xpose.msra.mxu0 0.0
      %6656 = vmatprep.subr.mxu0 0.0
      %6657 = vmatpush2.xpose.msra.mxu0 0.0
      %6658 = vmatprep.subr.mxu0 0.0
      %6659 = vmatpush2.xpose.msra.mxu0 0.0
      %6660 = vmatprep.subr.mxu0 0.0
      %6661 = vmatpush2.xpose.msra.mxu0 0.0
      %6662 = vmatprep.subr.mxu0 0.0
      %6663 = vmatpush2.xpose.msra.mxu0 0.0
      %6664 = vmatprep.subr.mxu0 0.0
      %6665 = vmatpush2.xpose.msra.mxu0 0.0
      %6666 = vmatprep.subr.mxu0 0.0
      %6667 = vmatpush2.xpose.msra.mxu0 0.0
      %6668 = vmatprep.subr.mxu0 0.0
      %6669 = vmatpush2.xpose.msra.mxu0 0.0
      %6670 = vmatprep.subr.mxu0 0.0
      %6671 = vmatpush2.xpose.msra.mxu0 0.0
      %6672 = vmatprep.subr.mxu0 0.0
      %6673 = vmatpush2.xpose.msra.mxu0 0.0
      %6674 = vmatprep.subr.mxu0 0.0
      %6675 = vmatpush2.xpose.msra.mxu0 0.0
      %6676 = vmatprep.subr.mxu0 0.0
      %6677 = vmatpush2.xpose.msra.mxu0 0.0
      %6678 = vmatprep.subr.mxu0 0.0
      %6679 = vmatpush2.xpose.msra.mxu0 0.0
      %6680 = vmatprep.subr.mxu0 0.0
      %6681 = vmatpush2.xpose.msra.mxu0 0.0
      %6682 = vmatprep.subr.mxu0 0.0
      %6683 = vmatpush2.xpose.msra.mxu0 0.0
      %6684 = vmatprep.mubr.f32.mxu0 0.0
      %6685 = vmatmul.mubr.f32.gmra.mxu0 %v6608
      %v6686 = vpop.f32.mrf.mxu0
      %v6687 = vadd.f32 0.0, %v6686
      %v6688 = vpop.f32.mrf.mxu0
      %6689 = vmatprep.mubr.f32.mxu0 0.0
      %6690 = vmatmul.mubr.f32.gmra.mxu0 %v6610
      %v6691 = vpop.f32.mrf.mxu0
      %v6692 = vadd.f32 0.0, %v6691
      %v6693 = vpop.f32.mrf.mxu0
      %6694 = vmatprep.mubr.f32.mxu0 0.0
      %6695 = vmatmul.mubr.f32.gmra.mxu0 %v6612
      %v6696 = vpop.f32.mrf.mxu0
      %v6697 = vadd.f32 0.0, %v6696
      %v6698 = vpop.f32.mrf.mxu0
      %6699 = vdwg.mxu0
      %v6700 = vsel %vm1322, %v6687, -inf
      %6701 = vmax.xlane.f32.xlu0 %v6700
      %v6702 = vpop.xlane.xlu0 %6701
      %v6703 = vsel %vm1322, %v6692, -inf
      %6704 = vmax.xlane.f32.xlu0 %v6703
      %v6705 = vpop.xlane.xlu0 %6704
      %v6706 = vsel %vm1329, %v6697, -inf
      %6707 = vmax.xlane.f32.xlu0 %v6706
      %v6708 = vpop.xlane.xlu0 %6707
      %v6709 = vsub.f32 %v6687, %v6702
      %v6710 = vsub.f32 %v6692, %v6705
      %v6711 = vsub.f32 %v6697, %v6708
      %v6712 = vmul.f32 %v6709, 1.442695
      %v6713 = vpow.pop %v6712
      %v6714 = vmul.f32 %v6710, 1.442695
      %v6715 = vpow.pop %v6714
      %v6716 = vmul.f32 %v6711, 1.442695
      %v6717 = vpow.pop %v6716
      %v6718 = vsel %vm1322, %v6713, 0.0
      %6719 = vadd.xlane.f32.xlu0 %v6718
      %v6720 = vpop.xlane.xlu0 %6719
      %v6721 = vsel %vm1322, %v6715, 0.0
      %6722 = vadd.xlane.f32.xlu0 %v6721
      %v6723 = vpop.xlane.xlu0 %6722
      %v6724 = vsel %vm1329, %v6717, 0.0
      %6725 = vadd.xlane.f32.xlu0 %v6724
      %v6726 = vpop.xlane.xlu0 %6725
      %v6727 = vrcp.pop %v6720
      %v6728 = vrcp.pop %v6723
      %v6729 = vrcp.pop %v6726
      %v6730 = vmul.f32 %v6713, %v6727
      %v6731 = vmul.f32 %v6715, %v6728
      %v6732 = vmul.f32 %v6717, %v6729
      %6733 = vrot.lane.b32.xlu0 %v6582, 64
      %v6734 = vpop.permute.xlu0 %6733
      %6735 = vrot.lane.b32.xlu0 %v6587, 64
      %v6736 = vpop.permute.xlu0 %6735
      %6737 = vrot.lane.b32.xlu0 %v6592, 64
      %v6738 = vpop.permute.xlu0 %6737
      %v6742 = vsel %vm1322, %v6730, 0
      %v6745 = vsel %vm1322, %v6731, 0
      %v6748 = vsel %vm1322, %v6732, 0
      %v6750 = vsel %vm1374, %v6738, 0
      %6752 = vmatprep.subr.mxu0 0.0
      %6753 = vmatpush1.msra.mxu0 0.0
      %6754 = vmatprep.subr.mxu0 0.0
      %6755 = vmatpush1.msra.mxu0 0.0
      %6756 = vmatprep.subr.mxu0 0.0
      %6757 = vmatpush1.msra.mxu0 0.0
      %6758 = vmatprep.subr.mxu0 0.0
      %6759 = vmatpush1.msra.mxu0 0.0
      %6760 = vmatprep.subr.mxu0 0.0
      %6761 = vmatpush1.msra.mxu0 0.0
      %6762 = vmatprep.subr.mxu0 0.0
      %6763 = vmatpush1.msra.mxu0 0.0
      %6764 = vmatprep.subr.mxu0 0.0
      %6765 = vmatpush1.msra.mxu0 0.0
      %6766 = vmatprep.subr.mxu0 0.0
      %6767 = vmatpush1.msra.mxu0 0.0
      %6768 = vmatprep.subr.mxu0 0.0
      %6769 = vmatpush1.msra.mxu0 0.0
      %6770 = vmatprep.subr.mxu0 0.0
      %6771 = vmatpush1.msra.mxu0 0.0
      %6772 = vmatprep.subr.mxu0 0.0
      %6773 = vmatpush1.msra.mxu0 0.0
      %6774 = vmatprep.subr.mxu0 0.0
      %6775 = vmatpush1.msra.mxu0 0.0
      %6776 = vmatprep.subr.mxu0 0.0
      %6777 = vmatpush1.msra.mxu0 0.0
      %6778 = vmatprep.subr.mxu0 0.0
      %6779 = vmatpush1.msra.mxu0 %v6750
      %6780 = vmatprep.subr.mxu0 0.0
      %6781 = vmatpush1.msra.mxu0 %v6736
      %6782 = vmatprep.subr.mxu0 0.0
      %6783 = vmatpush1.msra.mxu0 %v6734
      %6784 = vmatprep.subr.mxu0 0.0
      %6785 = vmatpush2.msra.mxu0 0.0
      %6786 = vmatprep.subr.mxu0 0.0
      %6787 = vmatpush2.msra.mxu0 0.0
      %6788 = vmatprep.subr.mxu0 0.0
      %6789 = vmatpush2.msra.mxu0 0.0
      %6790 = vmatprep.subr.mxu0 0.0
      %6791 = vmatpush2.msra.mxu0 0.0
      %6792 = vmatprep.subr.mxu0 0.0
      %6793 = vmatpush2.msra.mxu0 0.0
      %6794 = vmatprep.subr.mxu0 0.0
      %6795 = vmatpush2.msra.mxu0 0.0
      %6796 = vmatprep.subr.mxu0 0.0
      %6797 = vmatpush2.msra.mxu0 0.0
      %6798 = vmatprep.subr.mxu0 0.0
      %6799 = vmatpush2.msra.mxu0 0.0
      %6800 = vmatprep.subr.mxu0 0.0
      %6801 = vmatpush2.msra.mxu0 0.0
      %6802 = vmatprep.subr.mxu0 0.0
      %6803 = vmatpush2.msra.mxu0 0.0
      %6804 = vmatprep.subr.mxu0 0.0
      %6805 = vmatpush2.msra.mxu0 0.0
      %6806 = vmatprep.subr.mxu0 0.0
      %6807 = vmatpush2.msra.mxu0 0.0
      %6808 = vmatprep.subr.mxu0 0.0
      %6809 = vmatpush2.msra.mxu0 0.0
      %6810 = vmatprep.subr.mxu0 0.0
      %6811 = vmatpush2.msra.mxu0 0.0
      %6812 = vmatprep.subr.mxu0 0.0
      %6813 = vmatpush2.msra.mxu0 0.0
      %6814 = vmatprep.subr.mxu0 0.0
      %6815 = vmatpush2.msra.mxu0 0.0
      %6816 = vmatprep.mubr.f32.mxu0 0.0
      %6817 = vmatmul.mubr.f32.gmra.mxu0 %v6742
      %v6818 = vpop.f32.mrf.mxu0
      %v6819 = vadd.f32 0.0, %v6818
      %v6820 = vpop.f32.mrf.mxu0
      %6821 = vmatprep.mubr.f32.mxu0 0.0
      %6822 = vmatmul.mubr.f32.gmra.mxu0 %v6745
      %v6823 = vpop.f32.mrf.mxu0
      %v6824 = vadd.f32 0.0, %v6823
      %v6825 = vpop.f32.mrf.mxu0
      %6826 = vmatprep.mubr.f32.mxu0 0.0
      %6827 = vmatmul.mubr.f32.gmra.mxu0 %v6748
      %v6828 = vpop.f32.mrf.mxu0
      %v6829 = vadd.f32 0.0, %v6828
      %v6830 = vpop.f32.mrf.mxu0
      %6831 = vdwg.mxu0
      %6832 = vrot.lane.b32.xlu0 %v6582, 120
      %v6833 = vpop.permute.xlu0 %6832
      %6834 = vrot.lane.b32.xlu0 %v6587, 120
      %v6835 = vpop.permute.xlu0 %6834
      %6836 = vrot.lane.b32.xlu0 %v6592, 120
      %v6837 = vpop.permute.xlu0 %6836
      %6838 = vrot.lane.b32.xlu0 %v6582, 88
      %v6839 = vpop.permute.xlu0 %6838
      %6840 = vrot.lane.b32.xlu0 %v6587, 88
      %v6841 = vpop.permute.xlu0 %6840
      %6842 = vrot.lane.b32.xlu0 %v6592, 88
      %v6843 = vpop.permute.xlu0 %6842
      %v6844 = vsel %vm1229, %v6833, 0
      %v6846 = vsel %vm1229, %v6835, 0
      %v6848 = vsel %vm1229, %v6837, 0
      %v6850 = vsel %vm1229, %v6839, 0
      %v6852 = vsel %vm1229, %v6841, 0
      %v6854 = vsel %vm1229, %v6843, 0
      %6856 = vmatprep.subr.mxu0 0.0
      %6857 = vmatpush1.xpose.msra.mxu0 0.0
      %6858 = vmatprep.subr.mxu0 0.0
      %6859 = vmatpush1.xpose.msra.mxu0 0.0
      %6860 = vmatprep.subr.mxu0 0.0
      %6861 = vmatpush1.xpose.msra.mxu0 0.0
      %6862 = vmatprep.subr.mxu0 0.0
      %6863 = vmatpush1.xpose.msra.mxu0 0.0
      %6864 = vmatprep.subr.mxu0 0.0
      %6865 = vmatpush1.xpose.msra.mxu0 0.0
      %6866 = vmatprep.subr.mxu0 0.0
      %6867 = vmatpush1.xpose.msra.mxu0 0.0
      %6868 = vmatprep.subr.mxu0 0.0
      %6869 = vmatpush1.xpose.msra.mxu0 0.0
      %6870 = vmatprep.subr.mxu0 0.0
      %6871 = vmatpush1.xpose.msra.mxu0 0.0
      %6872 = vmatprep.subr.mxu0 0.0
      %6873 = vmatpush1.xpose.msra.mxu0 0.0
      %6874 = vmatprep.subr.mxu0 0.0
      %6875 = vmatpush1.xpose.msra.mxu0 0.0
      %6876 = vmatprep.subr.mxu0 0.0
      %6877 = vmatpush1.xpose.msra.mxu0 0.0
      %6878 = vmatprep.subr.mxu0 0.0
      %6879 = vmatpush1.xpose.msra.mxu0 0.0
      %6880 = vmatprep.subr.mxu0 0.0
      %6881 = vmatpush1.xpose.msra.mxu0 0.0
      %6882 = vmatprep.subr.mxu0 0.0
      %6883 = vmatpush1.xpose.msra.mxu0 %v6854
      %6884 = vmatprep.subr.mxu0 0.0
      %6885 = vmatpush1.xpose.msra.mxu0 %v6852
      %6886 = vmatprep.subr.mxu0 0.0
      %6887 = vmatpush1.xpose.msra.mxu0 %v6850
      %6888 = vmatprep.subr.mxu0 0.0
      %6889 = vmatpush2.xpose.msra.mxu0 0.0
      %6890 = vmatprep.subr.mxu0 0.0
      %6891 = vmatpush2.xpose.msra.mxu0 0.0
      %6892 = vmatprep.subr.mxu0 0.0
      %6893 = vmatpush2.xpose.msra.mxu0 0.0
      %6894 = vmatprep.subr.mxu0 0.0
      %6895 = vmatpush2.xpose.msra.mxu0 0.0
      %6896 = vmatprep.subr.mxu0 0.0
      %6897 = vmatpush2.xpose.msra.mxu0 0.0
      %6898 = vmatprep.subr.mxu0 0.0
      %6899 = vmatpush2.xpose.msra.mxu0 0.0
      %6900 = vmatprep.subr.mxu0 0.0
      %6901 = vmatpush2.xpose.msra.mxu0 0.0
      %6902 = vmatprep.subr.mxu0 0.0
      %6903 = vmatpush2.xpose.msra.mxu0 0.0
      %6904 = vmatprep.subr.mxu0 0.0
      %6905 = vmatpush2.xpose.msra.mxu0 0.0
      %6906 = vmatprep.subr.mxu0 0.0
      %6907 = vmatpush2.xpose.msra.mxu0 0.0
      %6908 = vmatprep.subr.mxu0 0.0
      %6909 = vmatpush2.xpose.msra.mxu0 0.0
      %6910 = vmatprep.subr.mxu0 0.0
      %6911 = vmatpush2.xpose.msra.mxu0 0.0
      %6912 = vmatprep.subr.mxu0 0.0
      %6913 = vmatpush2.xpose.msra.mxu0 0.0
      %6914 = vmatprep.subr.mxu0 0.0
      %6915 = vmatpush2.xpose.msra.mxu0 0.0
      %6916 = vmatprep.subr.mxu0 0.0
      %6917 = vmatpush2.xpose.msra.mxu0 0.0
      %6918 = vmatprep.subr.mxu0 0.0
      %6919 = vmatpush2.xpose.msra.mxu0 0.0
      %6920 = vmatprep.mubr.f32.mxu0 0.0
      %6921 = vmatmul.mubr.f32.gmra.mxu0 %v6844
      %v6922 = vpop.f32.mrf.mxu0
      %v6923 = vadd.f32 0.0, %v6922
      %v6924 = vpop.f32.mrf.mxu0
      %6925 = vmatprep.mubr.f32.mxu0 0.0
      %6926 = vmatmul.mubr.f32.gmra.mxu0 %v6846
      %v6927 = vpop.f32.mrf.mxu0
      %v6928 = vadd.f32 0.0, %v6927
      %v6929 = vpop.f32.mrf.mxu0
      %6930 = vmatprep.mubr.f32.mxu0 0.0
      %6931 = vmatmul.mubr.f32.gmra.mxu0 %v6848
      %v6932 = vpop.f32.mrf.mxu0
      %v6933 = vadd.f32 0.0, %v6932
      %v6934 = vpop.f32.mrf.mxu0
      %6935 = vdwg.mxu0
      %v6936 = vsel %vm1322, %v6923, -inf
      %6937 = vmax.xlane.f32.xlu0 %v6936
      %v6938 = vpop.xlane.xlu0 %6937
      %v6939 = vsel %vm1322, %v6928, -inf
      %6940 = vmax.xlane.f32.xlu0 %v6939
      %v6941 = vpop.xlane.xlu0 %6940
      %v6942 = vsel %vm1329, %v6933, -inf
      %6943 = vmax.xlane.f32.xlu0 %v6942
      %v6944 = vpop.xlane.xlu0 %6943
      %v6945 = vsub.f32 %v6923, %v6938
      %v6946 = vsub.f32 %v6928, %v6941
      %v6947 = vsub.f32 %v6933, %v6944
      %v6948 = vmul.f32 %v6945, 1.442695
      %v6949 = vpow.pop %v6948
      %v6950 = vmul.f32 %v6946, 1.442695
      %v6951 = vpow.pop %v6950
      %v6952 = vmul.f32 %v6947, 1.442695
      %v6953 = vpow.pop %v6952
      %v6954 = vsel %vm1322, %v6949, 0.0
      %6955 = vadd.xlane.f32.xlu0 %v6954
      %v6956 = vpop.xlane.xlu0 %6955
      %v6957 = vsel %vm1322, %v6951, 0.0
      %6958 = vadd.xlane.f32.xlu0 %v6957
      %v6959 = vpop.xlane.xlu0 %6958
      %v6960 = vsel %vm1329, %v6953, 0.0
      %6961 = vadd.xlane.f32.xlu0 %v6960
      %v6962 = vpop.xlane.xlu0 %6961
      %v6963 = vrcp.pop %v6956
      %v6964 = vrcp.pop %v6959
      %v6965 = vrcp.pop %v6962
      %v6966 = vmul.f32 %v6949, %v6963
      %v6967 = vmul.f32 %v6951, %v6964
      %v6968 = vmul.f32 %v6953, %v6965
      %6969 = vrot.lane.b32.xlu0 %v6582, 56
      %v6970 = vpop.permute.xlu0 %6969
      %6971 = vrot.lane.b32.xlu0 %v6587, 56
      %v6972 = vpop.permute.xlu0 %6971
      %6973 = vrot.lane.b32.xlu0 %v6592, 56
      %v6974 = vpop.permute.xlu0 %6973
      %v6978 = vsel %vm1322, %v6966, 0
      %v6981 = vsel %vm1322, %v6967, 0
      %v6984 = vsel %vm1322, %v6968, 0
      %v6986 = vsel %vm1374, %v6974, 0
      %6988 = vmatprep.subr.mxu0 0.0
      %6989 = vmatpush1.msra.mxu0 0.0
      %6990 = vmatprep.subr.mxu0 0.0
      %6991 = vmatpush1.msra.mxu0 0.0
      %6992 = vmatprep.subr.mxu0 0.0
      %6993 = vmatpush1.msra.mxu0 0.0
      %6994 = vmatprep.subr.mxu0 0.0
      %6995 = vmatpush1.msra.mxu0 0.0
      %6996 = vmatprep.subr.mxu0 0.0
      %6997 = vmatpush1.msra.mxu0 0.0
      %6998 = vmatprep.subr.mxu0 0.0
      %6999 = vmatpush1.msra.mxu0 0.0
      %7000 = vmatprep.subr.mxu0 0.0
      %7001 = vmatpush1.msra.mxu0 0.0
      %7002 = vmatprep.subr.mxu0 0.0
      %7003 = vmatpush1.msra.mxu0 0.0
      %7004 = vmatprep.subr.mxu0 0.0
      %7005 = vmatpush1.msra.mxu0 0.0
      %7006 = vmatprep.subr.mxu0 0.0
      %7007 = vmatpush1.msra.mxu0 0.0
      %7008 = vmatprep.subr.mxu0 0.0
      %7009 = vmatpush1.msra.mxu0 0.0
      %7010 = vmatprep.subr.mxu0 0.0
      %7011 = vmatpush1.msra.mxu0 0.0
      %7012 = vmatprep.subr.mxu0 0.0
      %7013 = vmatpush1.msra.mxu0 0.0
      %7014 = vmatprep.subr.mxu0 0.0
      %7015 = vmatpush1.msra.mxu0 %v6986
      %7016 = vmatprep.subr.mxu0 0.0
      %7017 = vmatpush1.msra.mxu0 %v6972
      %7018 = vmatprep.subr.mxu0 0.0
      %7019 = vmatpush1.msra.mxu0 %v6970
      %7020 = vmatprep.subr.mxu0 0.0
      %7021 = vmatpush2.msra.mxu0 0.0
      %7022 = vmatprep.subr.mxu0 0.0
      %7023 = vmatpush2.msra.mxu0 0.0
      %7024 = vmatprep.subr.mxu0 0.0
      %7025 = vmatpush2.msra.mxu0 0.0
      %7026 = vmatprep.subr.mxu0 0.0
      %7027 = vmatpush2.msra.mxu0 0.0
      %7028 = vmatprep.subr.mxu0 0.0
      %7029 = vmatpush2.msra.mxu0 0.0
      %7030 = vmatprep.subr.mxu0 0.0
      %7031 = vmatpush2.msra.mxu0 0.0
      %7032 = vmatprep.subr.mxu0 0.0
      %7033 = vmatpush2.msra.mxu0 0.0
      %7034 = vmatprep.subr.mxu0 0.0
      %7035 = vmatpush2.msra.mxu0 0.0
      %7036 = vmatprep.subr.mxu0 0.0
      %7037 = vmatpush2.msra.mxu0 0.0
      %7038 = vmatprep.subr.mxu0 0.0
      %7039 = vmatpush2.msra.mxu0 0.0
      %7040 = vmatprep.subr.mxu0 0.0
      %7041 = vmatpush2.msra.mxu0 0.0
      %7042 = vmatprep.subr.mxu0 0.0
      %7043 = vmatpush2.msra.mxu0 0.0
      %7044 = vmatprep.subr.mxu0 0.0
      %7045 = vmatpush2.msra.mxu0 0.0
      %7046 = vmatprep.subr.mxu0 0.0
      %7047 = vmatpush2.msra.mxu0 0.0
      %7048 = vmatprep.subr.mxu0 0.0
      %7049 = vmatpush2.msra.mxu0 0.0
      %7050 = vmatprep.subr.mxu0 0.0
      %7051 = vmatpush2.msra.mxu0 0.0
      %7052 = vmatprep.mubr.f32.mxu0 0.0
      %7053 = vmatmul.mubr.f32.gmra.mxu0 %v6978
      %v7054 = vpop.f32.mrf.mxu0
      %v7055 = vadd.f32 0.0, %v7054
      %v7056 = vpop.f32.mrf.mxu0
      %7057 = vmatprep.mubr.f32.mxu0 0.0
      %7058 = vmatmul.mubr.f32.gmra.mxu0 %v6981
      %v7059 = vpop.f32.mrf.mxu0
      %v7060 = vadd.f32 0.0, %v7059
      %v7061 = vpop.f32.mrf.mxu0
      %7062 = vmatprep.mubr.f32.mxu0 0.0
      %7063 = vmatmul.mubr.f32.gmra.mxu0 %v6984
      %v7064 = vpop.f32.mrf.mxu0
      %v7065 = vadd.f32 0.0, %v7064
      %v7066 = vpop.f32.mrf.mxu0
      %7067 = vdwg.mxu0
      %v7069 = vsel %vm1229, %v7055, 0
      %v7072 = vsel %vm1229, %v7060, 0
      %v7075 = vsel %vm1229, %v7065, 0
      %7077 = vmatprep.subr.mxu0 0.0
      %7078 = vmatpush1.msra.mxu0 0.0
      %7079 = vmatprep.subr.mxu0 0.0
      %7080 = vmatpush1.msra.mxu0 0.0
      %7081 = vmatprep.subr.mxu0 0.0
      %7082 = vmatpush1.msra.mxu0 0.0
      %7083 = vmatprep.subr.mxu0 0.0
      %7084 = vmatpush1.msra.mxu0 0.0
      %7085 = vmatprep.subr.mxu0 0.0
      %7086 = vmatpush1.msra.mxu0 0.0
      %7087 = vmatprep.subr.mxu0 0.0
      %7088 = vmatpush1.msra.mxu0 0.0
      %7089 = vmatprep.subr.mxu0 0.0
      %7090 = vmatpush1.msra.mxu0 0.0
      %7091 = vmatprep.subr.mxu0 0.0
      %7092 = vmatpush1.msra.mxu0 0.0
      %7093 = vmatprep.subr.mxu0 0.0
      %7094 = vmatpush1.msra.mxu0 0.0
      %7095 = vmatprep.subr.mxu0 0.0
      %7096 = vmatpush1.msra.mxu0 0.0
      %7097 = vmatprep.subr.mxu0 0.0
      %7098 = vmatpush1.msra.mxu0 0.0
      %7099 = vmatprep.subr.mxu0 0.0
      %7100 = vmatpush1.msra.mxu0 0.0
      %7101 = vmatprep.subr.mxu0 0.0
      %7102 = vmatpush1.msra.mxu0 0.0
      %7103 = vmatprep.subr.mxu0 0.0
      %7104 = vmatpush1.msra.mxu0 0.0
      %7105 = vmatprep.subr.mxu0 0.0
      %7106 = vmatpush1.msra.mxu0 0.0
      %7107 = vmatprep.subr.mxu0 0.0
      %7108 = vmatpush1.msra.mxu0 %v6596
      %7109 = vmatprep.subr.mxu0 0.0
      %7110 = vmatpush2.msra.mxu0 0.0
      %7111 = vmatprep.subr.mxu0 0.0
      %7112 = vmatpush2.msra.mxu0 0.0
      %7113 = vmatprep.subr.mxu0 0.0
      %7114 = vmatpush2.msra.mxu0 0.0
      %7115 = vmatprep.subr.mxu0 0.0
      %7116 = vmatpush2.msra.mxu0 0.0
      %7117 = vmatprep.subr.mxu0 0.0
      %7118 = vmatpush2.msra.mxu0 0.0
      %7119 = vmatprep.subr.mxu0 0.0
      %7120 = vmatpush2.msra.mxu0 0.0
      %7121 = vmatprep.subr.mxu0 0.0
      %7122 = vmatpush2.msra.mxu0 0.0
      %7123 = vmatprep.subr.mxu0 0.0
      %7124 = vmatpush2.msra.mxu0 0.0
      %7125 = vmatprep.subr.mxu0 0.0
      %7126 = vmatpush2.msra.mxu0 0.0
      %7127 = vmatprep.subr.mxu0 0.0
      %7128 = vmatpush2.msra.mxu0 0.0
      %7129 = vmatprep.subr.mxu0 0.0
      %7130 = vmatpush2.msra.mxu0 0.0
      %7131 = vmatprep.subr.mxu0 0.0
      %7132 = vmatpush2.msra.mxu0 0.0
      %7133 = vmatprep.subr.mxu0 0.0
      %7134 = vmatpush2.msra.mxu0 0.0
      %7135 = vmatprep.subr.mxu0 0.0
      %7136 = vmatpush2.msra.mxu0 0.0
      %7137 = vmatprep.subr.mxu0 0.0
      %7138 = vmatpush2.msra.mxu0 0.0
      %7139 = vmatprep.subr.mxu0 0.0
      %7140 = vmatpush2.msra.mxu0 0.0
      %7141 = vmatprep.mubr.f32.mxu0 0.0
      %7142 = vmatmul.mubr.f32.gmra.mxu0 %v7069
      %v7143 = vpop.f32.mrf.mxu0
      %v7144 = vadd.f32 0.0, %v7143
      %v7145 = vpop.f32.mrf.mxu0
      %7146 = vmatprep.mubr.f32.mxu0 0.0
      %7147 = vmatmul.mubr.f32.gmra.mxu0 %v7072
      %v7148 = vpop.f32.mrf.mxu0
      %v7149 = vadd.f32 0.0, %v7148
      %v7150 = vpop.f32.mrf.mxu0
      %7151 = vmatprep.mubr.f32.mxu0 0.0
      %7152 = vmatmul.mubr.f32.gmra.mxu0 %v7075
      %v7153 = vpop.f32.mrf.mxu0
      %v7154 = vadd.f32 0.0, %v7153
      %v7155 = vpop.f32.mrf.mxu0
      %7156 = vdwg.mxu0
      %v7158 = vsel %vm1229, %v6819, 0
      %v7161 = vsel %vm1229, %v6824, 0
      %v7164 = vsel %vm1229, %v6829, 0
      %7166 = vmatprep.subr.mxu0 0.0
      %7167 = vmatpush1.msra.mxu0 0.0
      %7168 = vmatprep.subr.mxu0 0.0
      %7169 = vmatpush1.msra.mxu0 0.0
      %7170 = vmatprep.subr.mxu0 0.0
      %7171 = vmatpush1.msra.mxu0 0.0
      %7172 = vmatprep.subr.mxu0 0.0
      %7173 = vmatpush1.msra.mxu0 0.0
      %7174 = vmatprep.subr.mxu0 0.0
      %7175 = vmatpush1.msra.mxu0 0.0
      %7176 = vmatprep.subr.mxu0 0.0
      %7177 = vmatpush1.msra.mxu0 0.0
      %7178 = vmatprep.subr.mxu0 0.0
      %7179 = vmatpush1.msra.mxu0 0.0
      %7180 = vmatprep.subr.mxu0 0.0
      %7181 = vmatpush1.msra.mxu0 0.0
      %7182 = vmatprep.subr.mxu0 0.0
      %7183 = vmatpush1.msra.mxu0 0.0
      %7184 = vmatprep.subr.mxu0 0.0
      %7185 = vmatpush1.msra.mxu0 0.0
      %7186 = vmatprep.subr.mxu0 0.0
      %7187 = vmatpush1.msra.mxu0 0.0
      %7188 = vmatprep.subr.mxu0 0.0
      %7189 = vmatpush1.msra.mxu0 0.0
      %7190 = vmatprep.subr.mxu0 0.0
      %7191 = vmatpush1.msra.mxu0 0.0
      %7192 = vmatprep.subr.mxu0 0.0
      %7193 = vmatpush1.msra.mxu0 0.0
      %7194 = vmatprep.subr.mxu0 0.0
      %7195 = vmatpush1.msra.mxu0 0.0
      %7196 = vmatprep.subr.mxu0 0.0
      %7197 = vmatpush1.msra.mxu0 %v6595
      %7198 = vmatprep.subr.mxu0 0.0
      %7199 = vmatpush2.msra.mxu0 0.0
      %7200 = vmatprep.subr.mxu0 0.0
      %7201 = vmatpush2.msra.mxu0 0.0
      %7202 = vmatprep.subr.mxu0 0.0
      %7203 = vmatpush2.msra.mxu0 0.0
      %7204 = vmatprep.subr.mxu0 0.0
      %7205 = vmatpush2.msra.mxu0 0.0
      %7206 = vmatprep.subr.mxu0 0.0
      %7207 = vmatpush2.msra.mxu0 0.0
      %7208 = vmatprep.subr.mxu0 0.0
      %7209 = vmatpush2.msra.mxu0 0.0
      %7210 = vmatprep.subr.mxu0 0.0
      %7211 = vmatpush2.msra.mxu0 0.0
      %7212 = vmatprep.subr.mxu0 0.0
      %7213 = vmatpush2.msra.mxu0 0.0
      %7214 = vmatprep.subr.mxu0 0.0
      %7215 = vmatpush2.msra.mxu0 0.0
      %7216 = vmatprep.subr.mxu0 0.0
      %7217 = vmatpush2.msra.mxu0 0.0
      %7218 = vmatprep.subr.mxu0 0.0
      %7219 = vmatpush2.msra.mxu0 0.0
      %7220 = vmatprep.subr.mxu0 0.0
      %7221 = vmatpush2.msra.mxu0 0.0
      %7222 = vmatprep.subr.mxu0 0.0
      %7223 = vmatpush2.msra.mxu0 0.0
      %7224 = vmatprep.subr.mxu0 0.0
      %7225 = vmatpush2.msra.mxu0 0.0
      %7226 = vmatprep.subr.mxu0 0.0
      %7227 = vmatpush2.msra.mxu0 0.0
      %7228 = vmatprep.subr.mxu0 0.0
      %7229 = vmatpush2.msra.mxu0 0.0
      %7230 = vmatprep.mubr.f32.mxu0 0.0
      %7231 = vmatmul.mubr.f32.gmra.mxu0 %v7158
      %v7232 = vpop.f32.mrf.mxu0
      %v7233 = vadd.f32 %v7144, %v7232
      %v7234 = vpop.f32.mrf.mxu0
      %7235 = vmatprep.mubr.f32.mxu0 0.0
      %7236 = vmatmul.mubr.f32.gmra.mxu0 %v7161
      %v7237 = vpop.f32.mrf.mxu0
      %v7238 = vadd.f32 %v7149, %v7237
      %v7239 = vpop.f32.mrf.mxu0
      %7240 = vmatprep.mubr.f32.mxu0 0.0
      %7241 = vmatmul.mubr.f32.gmra.mxu0 %v7164
      %v7242 = vpop.f32.mrf.mxu0
      %v7243 = vadd.f32 %v7154, %v7242
      %v7244 = vpop.f32.mrf.mxu0
      %7245 = vdwg.mxu0
      %7246 = vrot.lane.b32.xlu0 %v6582, 112
      %v7247 = vpop.permute.xlu0 %7246
      %7248 = vrot.lane.b32.xlu0 %v6587, 112
      %v7249 = vpop.permute.xlu0 %7248
      %7250 = vrot.lane.b32.xlu0 %v6592, 112
      %v7251 = vpop.permute.xlu0 %7250
      %7252 = vrot.lane.b32.xlu0 %v6582, 80
      %v7253 = vpop.permute.xlu0 %7252
      %7254 = vrot.lane.b32.xlu0 %v6587, 80
      %v7255 = vpop.permute.xlu0 %7254
      %7256 = vrot.lane.b32.xlu0 %v6592, 80
      %v7257 = vpop.permute.xlu0 %7256
      %v7258 = vsel %vm1229, %v7247, 0
      %v7260 = vsel %vm1229, %v7249, 0
      %v7262 = vsel %vm1229, %v7251, 0
      %v7264 = vsel %vm1229, %v7253, 0
      %v7266 = vsel %vm1229, %v7255, 0
      %v7268 = vsel %vm1229, %v7257, 0
      %7270 = vmatprep.subr.mxu0 0.0
      %7271 = vmatpush1.xpose.msra.mxu0 0.0
      %7272 = vmatprep.subr.mxu0 0.0
      %7273 = vmatpush1.xpose.msra.mxu0 0.0
      %7274 = vmatprep.subr.mxu0 0.0
      %7275 = vmatpush1.xpose.msra.mxu0 0.0
      %7276 = vmatprep.subr.mxu0 0.0
      %7277 = vmatpush1.xpose.msra.mxu0 0.0
      %7278 = vmatprep.subr.mxu0 0.0
      %7279 = vmatpush1.xpose.msra.mxu0 0.0
      %7280 = vmatprep.subr.mxu0 0.0
      %7281 = vmatpush1.xpose.msra.mxu0 0.0
      %7282 = vmatprep.subr.mxu0 0.0
      %7283 = vmatpush1.xpose.msra.mxu0 0.0
      %7284 = vmatprep.subr.mxu0 0.0
      %7285 = vmatpush1.xpose.msra.mxu0 0.0
      %7286 = vmatprep.subr.mxu0 0.0
      %7287 = vmatpush1.xpose.msra.mxu0 0.0
      %7288 = vmatprep.subr.mxu0 0.0
      %7289 = vmatpush1.xpose.msra.mxu0 0.0
      %7290 = vmatprep.subr.mxu0 0.0
      %7291 = vmatpush1.xpose.msra.mxu0 0.0
      %7292 = vmatprep.subr.mxu0 0.0
      %7293 = vmatpush1.xpose.msra.mxu0 0.0
      %7294 = vmatprep.subr.mxu0 0.0
      %7295 = vmatpush1.xpose.msra.mxu0 0.0
      %7296 = vmatprep.subr.mxu0 0.0
      %7297 = vmatpush1.xpose.msra.mxu0 %v7268
      %7298 = vmatprep.subr.mxu0 0.0
      %7299 = vmatpush1.xpose.msra.mxu0 %v7266
      %7300 = vmatprep.subr.mxu0 0.0
      %7301 = vmatpush1.xpose.msra.mxu0 %v7264
      %7302 = vmatprep.subr.mxu0 0.0
      %7303 = vmatpush2.xpose.msra.mxu0 0.0
      %7304 = vmatprep.subr.mxu0 0.0
      %7305 = vmatpush2.xpose.msra.mxu0 0.0
      %7306 = vmatprep.subr.mxu0 0.0
      %7307 = vmatpush2.xpose.msra.mxu0 0.0
      %7308 = vmatprep.subr.mxu0 0.0
      %7309 = vmatpush2.xpose.msra.mxu0 0.0
      %7310 = vmatprep.subr.mxu0 0.0
      %7311 = vmatpush2.xpose.msra.mxu0 0.0
      %7312 = vmatprep.subr.mxu0 0.0
      %7313 = vmatpush2.xpose.msra.mxu0 0.0
      %7314 = vmatprep.subr.mxu0 0.0
      %7315 = vmatpush2.xpose.msra.mxu0 0.0
      %7316 = vmatprep.subr.mxu0 0.0
      %7317 = vmatpush2.xpose.msra.mxu0 0.0
      %7318 = vmatprep.subr.mxu0 0.0
      %7319 = vmatpush2.xpose.msra.mxu0 0.0
      %7320 = vmatprep.subr.mxu0 0.0
      %7321 = vmatpush2.xpose.msra.mxu0 0.0
      %7322 = vmatprep.subr.mxu0 0.0
      %7323 = vmatpush2.xpose.msra.mxu0 0.0
      %7324 = vmatprep.subr.mxu0 0.0
      %7325 = vmatpush2.xpose.msra.mxu0 0.0
      %7326 = vmatprep.subr.mxu0 0.0
      %7327 = vmatpush2.xpose.msra.mxu0 0.0
      %7328 = vmatprep.subr.mxu0 0.0
      %7329 = vmatpush2.xpose.msra.mxu0 0.0
      %7330 = vmatprep.subr.mxu0 0.0
      %7331 = vmatpush2.xpose.msra.mxu0 0.0
      %7332 = vmatprep.subr.mxu0 0.0
      %7333 = vmatpush2.xpose.msra.mxu0 0.0
      %7334 = vmatprep.mubr.f32.mxu0 0.0
      %7335 = vmatmul.mubr.f32.gmra.mxu0 %v7258
      %v7336 = vpop.f32.mrf.mxu0
      %v7337 = vadd.f32 0.0, %v7336
      %v7338 = vpop.f32.mrf.mxu0
      %7339 = vmatprep.mubr.f32.mxu0 0.0
      %7340 = vmatmul.mubr.f32.gmra.mxu0 %v7260
      %v7341 = vpop.f32.mrf.mxu0
      %v7342 = vadd.f32 0.0, %v7341
      %v7343 = vpop.f32.mrf.mxu0
      %7344 = vmatprep.mubr.f32.mxu0 0.0
      %7345 = vmatmul.mubr.f32.gmra.mxu0 %v7262
      %v7346 = vpop.f32.mrf.mxu0
      %v7347 = vadd.f32 0.0, %v7346
      %v7348 = vpop.f32.mrf.mxu0
      %7349 = vdwg.mxu0
      %v7350 = vsel %vm1322, %v7337, -inf
      %7351 = vmax.xlane.f32.xlu0 %v7350
      %v7352 = vpop.xlane.xlu0 %7351
      %v7353 = vsel %vm1322, %v7342, -inf
      %7354 = vmax.xlane.f32.xlu0 %v7353
      %v7355 = vpop.xlane.xlu0 %7354
      %v7356 = vsel %vm1329, %v7347, -inf
      %7357 = vmax.xlane.f32.xlu0 %v7356
      %v7358 = vpop.xlane.xlu0 %7357
      %v7359 = vsub.f32 %v7337, %v7352
      %v7360 = vsub.f32 %v7342, %v7355
      %v7361 = vsub.f32 %v7347, %v7358
      %v7362 = vmul.f32 %v7359, 1.442695
      %v7363 = vpow.pop %v7362
      %v7364 = vmul.f32 %v7360, 1.442695
      %v7365 = vpow.pop %v7364
      %v7366 = vmul.f32 %v7361, 1.442695
      %v7367 = vpow.pop %v7366
      %v7368 = vsel %vm1322, %v7363, 0.0
      %7369 = vadd.xlane.f32.xlu0 %v7368
      %v7370 = vpop.xlane.xlu0 %7369
      %v7371 = vsel %vm1322, %v7365, 0.0
      %7372 = vadd.xlane.f32.xlu0 %v7371
      %v7373 = vpop.xlane.xlu0 %7372
      %v7374 = vsel %vm1329, %v7367, 0.0
      %7375 = vadd.xlane.f32.xlu0 %v7374
      %v7376 = vpop.xlane.xlu0 %7375
      %v7377 = vrcp.pop %v7370
      %v7378 = vrcp.pop %v7373
      %v7379 = vrcp.pop %v7376
      %v7380 = vmul.f32 %v7363, %v7377
      %v7381 = vmul.f32 %v7365, %v7378
      %v7382 = vmul.f32 %v7367, %v7379
      %7383 = vrot.lane.b32.xlu0 %v6582, 48
      %v7384 = vpop.permute.xlu0 %7383
      %7385 = vrot.lane.b32.xlu0 %v6587, 48
      %v7386 = vpop.permute.xlu0 %7385
      %7387 = vrot.lane.b32.xlu0 %v6592, 48
      %v7388 = vpop.permute.xlu0 %7387
      %v7392 = vsel %vm1322, %v7380, 0
      %v7395 = vsel %vm1322, %v7381, 0
      %v7398 = vsel %vm1322, %v7382, 0
      %v7400 = vsel %vm1374, %v7388, 0
      %7402 = vmatprep.subr.mxu0 0.0
      %7403 = vmatpush1.msra.mxu0 0.0
      %7404 = vmatprep.subr.mxu0 0.0
      %7405 = vmatpush1.msra.mxu0 0.0
      %7406 = vmatprep.subr.mxu0 0.0
      %7407 = vmatpush1.msra.mxu0 0.0
      %7408 = vmatprep.subr.mxu0 0.0
      %7409 = vmatpush1.msra.mxu0 0.0
      %7410 = vmatprep.subr.mxu0 0.0
      %7411 = vmatpush1.msra.mxu0 0.0
      %7412 = vmatprep.subr.mxu0 0.0
      %7413 = vmatpush1.msra.mxu0 0.0
      %7414 = vmatprep.subr.mxu0 0.0
      %7415 = vmatpush1.msra.mxu0 0.0
      %7416 = vmatprep.subr.mxu0 0.0
      %7417 = vmatpush1.msra.mxu0 0.0
      %7418 = vmatprep.subr.mxu0 0.0
      %7419 = vmatpush1.msra.mxu0 0.0
      %7420 = vmatprep.subr.mxu0 0.0
      %7421 = vmatpush1.msra.mxu0 0.0
      %7422 = vmatprep.subr.mxu0 0.0
      %7423 = vmatpush1.msra.mxu0 0.0
      %7424 = vmatprep.subr.mxu0 0.0
      %7425 = vmatpush1.msra.mxu0 0.0
      %7426 = vmatprep.subr.mxu0 0.0
      %7427 = vmatpush1.msra.mxu0 0.0
      %7428 = vmatprep.subr.mxu0 0.0
      %7429 = vmatpush1.msra.mxu0 %v7400
      %7430 = vmatprep.subr.mxu0 0.0
      %7431 = vmatpush1.msra.mxu0 %v7386
      %7432 = vmatprep.subr.mxu0 0.0
      %7433 = vmatpush1.msra.mxu0 %v7384
      %7434 = vmatprep.subr.mxu0 0.0
      %7435 = vmatpush2.msra.mxu0 0.0
      %7436 = vmatprep.subr.mxu0 0.0
      %7437 = vmatpush2.msra.mxu0 0.0
      %7438 = vmatprep.subr.mxu0 0.0
      %7439 = vmatpush2.msra.mxu0 0.0
      %7440 = vmatprep.subr.mxu0 0.0
      %7441 = vmatpush2.msra.mxu0 0.0
      %7442 = vmatprep.subr.mxu0 0.0
      %7443 = vmatpush2.msra.mxu0 0.0
      %7444 = vmatprep.subr.mxu0 0.0
      %7445 = vmatpush2.msra.mxu0 0.0
      %7446 = vmatprep.subr.mxu0 0.0
      %7447 = vmatpush2.msra.mxu0 0.0
      %7448 = vmatprep.subr.mxu0 0.0
      %7449 = vmatpush2.msra.mxu0 0.0
      %7450 = vmatprep.subr.mxu0 0.0
      %7451 = vmatpush2.msra.mxu0 0.0
      %7452 = vmatprep.subr.mxu0 0.0
      %7453 = vmatpush2.msra.mxu0 0.0
      %7454 = vmatprep.subr.mxu0 0.0
      %7455 = vmatpush2.msra.mxu0 0.0
      %7456 = vmatprep.subr.mxu0 0.0
      %7457 = vmatpush2.msra.mxu0 0.0
      %7458 = vmatprep.subr.mxu0 0.0
      %7459 = vmatpush2.msra.mxu0 0.0
      %7460 = vmatprep.subr.mxu0 0.0
      %7461 = vmatpush2.msra.mxu0 0.0
      %7462 = vmatprep.subr.mxu0 0.0
      %7463 = vmatpush2.msra.mxu0 0.0
      %7464 = vmatprep.subr.mxu0 0.0
      %7465 = vmatpush2.msra.mxu0 0.0
      %7466 = vmatprep.mubr.f32.mxu0 0.0
      %7467 = vmatmul.mubr.f32.gmra.mxu0 %v7392
      %v7468 = vpop.f32.mrf.mxu0
      %v7469 = vadd.f32 0.0, %v7468
      %v7470 = vpop.f32.mrf.mxu0
      %7471 = vmatprep.mubr.f32.mxu0 0.0
      %7472 = vmatmul.mubr.f32.gmra.mxu0 %v7395
      %v7473 = vpop.f32.mrf.mxu0
      %v7474 = vadd.f32 0.0, %v7473
      %v7475 = vpop.f32.mrf.mxu0
      %7476 = vmatprep.mubr.f32.mxu0 0.0
      %7477 = vmatmul.mubr.f32.gmra.mxu0 %v7398
      %v7478 = vpop.f32.mrf.mxu0
      %v7479 = vadd.f32 0.0, %v7478
      %v7480 = vpop.f32.mrf.mxu0
      %7481 = vdwg.mxu0
      %v7483 = vsel %vm1229, %v7469, 0
      %v7486 = vsel %vm1229, %v7474, 0
      %v7489 = vsel %vm1229, %v7479, 0
      %7491 = vmatprep.subr.mxu0 0.0
      %7492 = vmatpush1.msra.mxu0 0.0
      %7493 = vmatprep.subr.mxu0 0.0
      %7494 = vmatpush1.msra.mxu0 0.0
      %7495 = vmatprep.subr.mxu0 0.0
      %7496 = vmatpush1.msra.mxu0 0.0
      %7497 = vmatprep.subr.mxu0 0.0
      %7498 = vmatpush1.msra.mxu0 0.0
      %7499 = vmatprep.subr.mxu0 0.0
      %7500 = vmatpush1.msra.mxu0 0.0
      %7501 = vmatprep.subr.mxu0 0.0
      %7502 = vmatpush1.msra.mxu0 0.0
      %7503 = vmatprep.subr.mxu0 0.0
      %7504 = vmatpush1.msra.mxu0 0.0
      %7505 = vmatprep.subr.mxu0 0.0
      %7506 = vmatpush1.msra.mxu0 0.0
      %7507 = vmatprep.subr.mxu0 0.0
      %7508 = vmatpush1.msra.mxu0 0.0
      %7509 = vmatprep.subr.mxu0 0.0
      %7510 = vmatpush1.msra.mxu0 0.0
      %7511 = vmatprep.subr.mxu0 0.0
      %7512 = vmatpush1.msra.mxu0 0.0
      %7513 = vmatprep.subr.mxu0 0.0
      %7514 = vmatpush1.msra.mxu0 0.0
      %7515 = vmatprep.subr.mxu0 0.0
      %7516 = vmatpush1.msra.mxu0 0.0
      %7517 = vmatprep.subr.mxu0 0.0
      %7518 = vmatpush1.msra.mxu0 0.0
      %7519 = vmatprep.subr.mxu0 0.0
      %7520 = vmatpush1.msra.mxu0 0.0
      %7521 = vmatprep.subr.mxu0 0.0
      %7522 = vmatpush1.msra.mxu0 %v6597
      %7523 = vmatprep.subr.mxu0 0.0
      %7524 = vmatpush2.msra.mxu0 0.0
      %7525 = vmatprep.subr.mxu0 0.0
      %7526 = vmatpush2.msra.mxu0 0.0
      %7527 = vmatprep.subr.mxu0 0.0
      %7528 = vmatpush2.msra.mxu0 0.0
      %7529 = vmatprep.subr.mxu0 0.0
      %7530 = vmatpush2.msra.mxu0 0.0
      %7531 = vmatprep.subr.mxu0 0.0
      %7532 = vmatpush2.msra.mxu0 0.0
      %7533 = vmatprep.subr.mxu0 0.0
      %7534 = vmatpush2.msra.mxu0 0.0
      %7535 = vmatprep.subr.mxu0 0.0
      %7536 = vmatpush2.msra.mxu0 0.0
      %7537 = vmatprep.subr.mxu0 0.0
      %7538 = vmatpush2.msra.mxu0 0.0
      %7539 = vmatprep.subr.mxu0 0.0
      %7540 = vmatpush2.msra.mxu0 0.0
      %7541 = vmatprep.subr.mxu0 0.0
      %7542 = vmatpush2.msra.mxu0 0.0
      %7543 = vmatprep.subr.mxu0 0.0
      %7544 = vmatpush2.msra.mxu0 0.0
      %7545 = vmatprep.subr.mxu0 0.0
      %7546 = vmatpush2.msra.mxu0 0.0
      %7547 = vmatprep.subr.mxu0 0.0
      %7548 = vmatpush2.msra.mxu0 0.0
      %7549 = vmatprep.subr.mxu0 0.0
      %7550 = vmatpush2.msra.mxu0 0.0
      %7551 = vmatprep.subr.mxu0 0.0
      %7552 = vmatpush2.msra.mxu0 0.0
      %7553 = vmatprep.subr.mxu0 0.0
      %7554 = vmatpush2.msra.mxu0 0.0
      %7555 = vmatprep.mubr.f32.mxu0 0.0
      %7556 = vmatmul.mubr.f32.gmra.mxu0 %v7483
      %v7557 = vpop.f32.mrf.mxu0
      %v7558 = vadd.f32 0.0, %v7557
      %v7559 = vpop.f32.mrf.mxu0
      %7560 = vmatprep.mubr.f32.mxu0 0.0
      %7561 = vmatmul.mubr.f32.gmra.mxu0 %v7486
      %v7562 = vpop.f32.mrf.mxu0
      %v7563 = vadd.f32 0.0, %v7562
      %v7564 = vpop.f32.mrf.mxu0
      %7565 = vmatprep.mubr.f32.mxu0 0.0
      %7566 = vmatmul.mubr.f32.gmra.mxu0 %v7489
      %v7567 = vpop.f32.mrf.mxu0
      %v7568 = vadd.f32 0.0, %v7567
      %v7569 = vpop.f32.mrf.mxu0
      %7570 = vdwg.mxu0
      %v7571 = vadd.f32 %v7233, %v7558
      %v7572 = vadd.f32 %v7238, %v7563
      %v7573 = vadd.f32 %v7243, %v7568
      %7574 = vrot.lane.b32.xlu0 %v6582, 104
      %v7575 = vpop.permute.xlu0 %7574
      %7576 = vrot.lane.b32.xlu0 %v6587, 104
      %v7577 = vpop.permute.xlu0 %7576
      %7578 = vrot.lane.b32.xlu0 %v6592, 104
      %v7579 = vpop.permute.xlu0 %7578
      %7580 = vrot.lane.b32.xlu0 %v6582, 72
      %v7581 = vpop.permute.xlu0 %7580
      %7582 = vrot.lane.b32.xlu0 %v6587, 72
      %v7583 = vpop.permute.xlu0 %7582
      %7584 = vrot.lane.b32.xlu0 %v6592, 72
      %v7585 = vpop.permute.xlu0 %7584
      %v7586 = vsel %vm1229, %v7575, 0
      %v7588 = vsel %vm1229, %v7577, 0
      %v7590 = vsel %vm1229, %v7579, 0
      %v7592 = vsel %vm1229, %v7581, 0
      %v7594 = vsel %vm1229, %v7583, 0
      %v7596 = vsel %vm1229, %v7585, 0
      %7598 = vmatprep.subr.mxu0 0.0
      %7599 = vmatpush1.xpose.msra.mxu0 0.0
      %7600 = vmatprep.subr.mxu0 0.0
      %7601 = vmatpush1.xpose.msra.mxu0 0.0
      %7602 = vmatprep.subr.mxu0 0.0
      %7603 = vmatpush1.xpose.msra.mxu0 0.0
      %7604 = vmatprep.subr.mxu0 0.0
      %7605 = vmatpush1.xpose.msra.mxu0 0.0
      %7606 = vmatprep.subr.mxu0 0.0
      %7607 = vmatpush1.xpose.msra.mxu0 0.0
      %7608 = vmatprep.subr.mxu0 0.0
      %7609 = vmatpush1.xpose.msra.mxu0 0.0
      %7610 = vmatprep.subr.mxu0 0.0
      %7611 = vmatpush1.xpose.msra.mxu0 0.0
      %7612 = vmatprep.subr.mxu0 0.0
      %7613 = vmatpush1.xpose.msra.mxu0 0.0
      %7614 = vmatprep.subr.mxu0 0.0
      %7615 = vmatpush1.xpose.msra.mxu0 0.0
      %7616 = vmatprep.subr.mxu0 0.0
      %7617 = vmatpush1.xpose.msra.mxu0 0.0
      %7618 = vmatprep.subr.mxu0 0.0
      %7619 = vmatpush1.xpose.msra.mxu0 0.0
      %7620 = vmatprep.subr.mxu0 0.0
      %7621 = vmatpush1.xpose.msra.mxu0 0.0
      %7622 = vmatprep.subr.mxu0 0.0
      %7623 = vmatpush1.xpose.msra.mxu0 0.0
      %7624 = vmatprep.subr.mxu0 0.0
      %7625 = vmatpush1.xpose.msra.mxu0 %v7596
      %7626 = vmatprep.subr.mxu0 0.0
      %7627 = vmatpush1.xpose.msra.mxu0 %v7594
      %7628 = vmatprep.subr.mxu0 0.0
      %7629 = vmatpush1.xpose.msra.mxu0 %v7592
      %7630 = vmatprep.subr.mxu0 0.0
      %7631 = vmatpush2.xpose.msra.mxu0 0.0
      %7632 = vmatprep.subr.mxu0 0.0
      %7633 = vmatpush2.xpose.msra.mxu0 0.0
      %7634 = vmatprep.subr.mxu0 0.0
      %7635 = vmatpush2.xpose.msra.mxu0 0.0
      %7636 = vmatprep.subr.mxu0 0.0
      %7637 = vmatpush2.xpose.msra.mxu0 0.0
      %7638 = vmatprep.subr.mxu0 0.0
      %7639 = vmatpush2.xpose.msra.mxu0 0.0
      %7640 = vmatprep.subr.mxu0 0.0
      %7641 = vmatpush2.xpose.msra.mxu0 0.0
      %7642 = vmatprep.subr.mxu0 0.0
      %7643 = vmatpush2.xpose.msra.mxu0 0.0
      %7644 = vmatprep.subr.mxu0 0.0
      %7645 = vmatpush2.xpose.msra.mxu0 0.0
      %7646 = vmatprep.subr.mxu0 0.0
      %7647 = vmatpush2.xpose.msra.mxu0 0.0
      %7648 = vmatprep.subr.mxu0 0.0
      %7649 = vmatpush2.xpose.msra.mxu0 0.0
      %7650 = vmatprep.subr.mxu0 0.0
      %7651 = vmatpush2.xpose.msra.mxu0 0.0
      %7652 = vmatprep.subr.mxu0 0.0
      %7653 = vmatpush2.xpose.msra.mxu0 0.0
      %7654 = vmatprep.subr.mxu0 0.0
      %7655 = vmatpush2.xpose.msra.mxu0 0.0
      %7656 = vmatprep.subr.mxu0 0.0
      %7657 = vmatpush2.xpose.msra.mxu0 0.0
      %7658 = vmatprep.subr.mxu0 0.0
      %7659 = vmatpush2.xpose.msra.mxu0 0.0
      %7660 = vmatprep.subr.mxu0 0.0
      %7661 = vmatpush2.xpose.msra.mxu0 0.0
      %7662 = vmatprep.mubr.f32.mxu0 0.0
      %7663 = vmatmul.mubr.f32.gmra.mxu0 %v7586
      %v7664 = vpop.f32.mrf.mxu0
      %v7665 = vadd.f32 0.0, %v7664
      %v7666 = vpop.f32.mrf.mxu0
      %7667 = vmatprep.mubr.f32.mxu0 0.0
      %7668 = vmatmul.mubr.f32.gmra.mxu0 %v7588
      %v7669 = vpop.f32.mrf.mxu0
      %v7670 = vadd.f32 0.0, %v7669
      %v7671 = vpop.f32.mrf.mxu0
      %7672 = vmatprep.mubr.f32.mxu0 0.0
      %7673 = vmatmul.mubr.f32.gmra.mxu0 %v7590
      %v7674 = vpop.f32.mrf.mxu0
      %v7675 = vadd.f32 0.0, %v7674
      %v7676 = vpop.f32.mrf.mxu0
      %7677 = vdwg.mxu0
      %v7678 = vsel %vm1322, %v7665, -inf
      %7679 = vmax.xlane.f32.xlu0 %v7678
      %v7680 = vpop.xlane.xlu0 %7679
      %v7681 = vsel %vm1322, %v7670, -inf
      %7682 = vmax.xlane.f32.xlu0 %v7681
      %v7683 = vpop.xlane.xlu0 %7682
      %v7684 = vsel %vm1329, %v7675, -inf
      %7685 = vmax.xlane.f32.xlu0 %v7684
      %v7686 = vpop.xlane.xlu0 %7685
      %v7687 = vsub.f32 %v7665, %v7680
      %v7688 = vsub.f32 %v7670, %v7683
      %v7689 = vsub.f32 %v7675, %v7686
      %v7690 = vmul.f32 %v7687, 1.442695
      %v7691 = vpow.pop %v7690
      %v7692 = vmul.f32 %v7688, 1.442695
      %v7693 = vpow.pop %v7692
      %v7694 = vmul.f32 %v7689, 1.442695
      %v7695 = vpow.pop %v7694
      %v7696 = vsel %vm1322, %v7691, 0.0
      %7697 = vadd.xlane.f32.xlu0 %v7696
      %v7698 = vpop.xlane.xlu0 %7697
      %v7699 = vsel %vm1322, %v7693, 0.0
      %7700 = vadd.xlane.f32.xlu0 %v7699
      %v7701 = vpop.xlane.xlu0 %7700
      %v7702 = vsel %vm1329, %v7695, 0.0
      %7703 = vadd.xlane.f32.xlu0 %v7702
      %v7704 = vpop.xlane.xlu0 %7703
      %v7705 = vrcp.pop %v7698
      %v7706 = vrcp.pop %v7701
      %v7707 = vrcp.pop %v7704
      %v7708 = vmul.f32 %v7691, %v7705
      %v7709 = vmul.f32 %v7693, %v7706
      %v7710 = vmul.f32 %v7695, %v7707
      %7711 = vrot.lane.b32.xlu0 %v6582, 40
      %v7712 = vpop.permute.xlu0 %7711
      %7713 = vrot.lane.b32.xlu0 %v6587, 40
      %v7714 = vpop.permute.xlu0 %7713
      %7715 = vrot.lane.b32.xlu0 %v6592, 40
      %v7716 = vpop.permute.xlu0 %7715
      %v7720 = vsel %vm1322, %v7708, 0
      %v7723 = vsel %vm1322, %v7709, 0
      %v7726 = vsel %vm1322, %v7710, 0
      %v7728 = vsel %vm1374, %v7716, 0
      %7730 = vmatprep.subr.mxu0 0.0
      %7731 = vmatpush1.msra.mxu0 0.0
      %7732 = vmatprep.subr.mxu0 0.0
      %7733 = vmatpush1.msra.mxu0 0.0
      %7734 = vmatprep.subr.mxu0 0.0
      %7735 = vmatpush1.msra.mxu0 0.0
      %7736 = vmatprep.subr.mxu0 0.0
      %7737 = vmatpush1.msra.mxu0 0.0
      %7738 = vmatprep.subr.mxu0 0.0
      %7739 = vmatpush1.msra.mxu0 0.0
      %7740 = vmatprep.subr.mxu0 0.0
      %7741 = vmatpush1.msra.mxu0 0.0
      %7742 = vmatprep.subr.mxu0 0.0
      %7743 = vmatpush1.msra.mxu0 0.0
      %7744 = vmatprep.subr.mxu0 0.0
      %7745 = vmatpush1.msra.mxu0 0.0
      %7746 = vmatprep.subr.mxu0 0.0
      %7747 = vmatpush1.msra.mxu0 0.0
      %7748 = vmatprep.subr.mxu0 0.0
      %7749 = vmatpush1.msra.mxu0 0.0
      %7750 = vmatprep.subr.mxu0 0.0
      %7751 = vmatpush1.msra.mxu0 0.0
      %7752 = vmatprep.subr.mxu0 0.0
      %7753 = vmatpush1.msra.mxu0 0.0
      %7754 = vmatprep.subr.mxu0 0.0
      %7755 = vmatpush1.msra.mxu0 0.0
      %7756 = vmatprep.subr.mxu0 0.0
      %7757 = vmatpush1.msra.mxu0 %v7728
      %7758 = vmatprep.subr.mxu0 0.0
      %7759 = vmatpush1.msra.mxu0 %v7714
      %7760 = vmatprep.subr.mxu0 0.0
      %7761 = vmatpush1.msra.mxu0 %v7712
      %7762 = vmatprep.subr.mxu0 0.0
      %7763 = vmatpush2.msra.mxu0 0.0
      %7764 = vmatprep.subr.mxu0 0.0
      %7765 = vmatpush2.msra.mxu0 0.0
      %7766 = vmatprep.subr.mxu0 0.0
      %7767 = vmatpush2.msra.mxu0 0.0
      %7768 = vmatprep.subr.mxu0 0.0
      %7769 = vmatpush2.msra.mxu0 0.0
      %7770 = vmatprep.subr.mxu0 0.0
      %7771 = vmatpush2.msra.mxu0 0.0
      %7772 = vmatprep.subr.mxu0 0.0
      %7773 = vmatpush2.msra.mxu0 0.0
      %7774 = vmatprep.subr.mxu0 0.0
      %7775 = vmatpush2.msra.mxu0 0.0
      %7776 = vmatprep.subr.mxu0 0.0
      %7777 = vmatpush2.msra.mxu0 0.0
      %7778 = vmatprep.subr.mxu0 0.0
      %7779 = vmatpush2.msra.mxu0 0.0
      %7780 = vmatprep.subr.mxu0 0.0
      %7781 = vmatpush2.msra.mxu0 0.0
      %7782 = vmatprep.subr.mxu0 0.0
      %7783 = vmatpush2.msra.mxu0 0.0
      %7784 = vmatprep.subr.mxu0 0.0
      %7785 = vmatpush2.msra.mxu0 0.0
      %7786 = vmatprep.subr.mxu0 0.0
      %7787 = vmatpush2.msra.mxu0 0.0
      %7788 = vmatprep.subr.mxu0 0.0
      %7789 = vmatpush2.msra.mxu0 0.0
      %7790 = vmatprep.subr.mxu0 0.0
      %7791 = vmatpush2.msra.mxu0 0.0
      %7792 = vmatprep.subr.mxu0 0.0
      %7793 = vmatpush2.msra.mxu0 0.0
      %7794 = vmatprep.mubr.f32.mxu0 0.0
      %7795 = vmatmul.mubr.f32.gmra.mxu0 %v7720
      %v7796 = vpop.f32.mrf.mxu0
      %v7797 = vadd.f32 0.0, %v7796
      %v7798 = vpop.f32.mrf.mxu0
      %7799 = vmatprep.mubr.f32.mxu0 0.0
      %7800 = vmatmul.mubr.f32.gmra.mxu0 %v7723
      %v7801 = vpop.f32.mrf.mxu0
      %v7802 = vadd.f32 0.0, %v7801
      %v7803 = vpop.f32.mrf.mxu0
      %7804 = vmatprep.mubr.f32.mxu0 0.0
      %7805 = vmatmul.mubr.f32.gmra.mxu0 %v7726
      %v7806 = vpop.f32.mrf.mxu0
      %v7807 = vadd.f32 0.0, %v7806
      %v7808 = vpop.f32.mrf.mxu0
      %7809 = vdwg.mxu0
      %v7811 = vsel %vm1229, %v7797, 0
      %v7814 = vsel %vm1229, %v7802, 0
      %v7817 = vsel %vm1229, %v7807, 0
      %7819 = vmatprep.subr.mxu0 0.0
      %7820 = vmatpush1.msra.mxu0 0.0
      %7821 = vmatprep.subr.mxu0 0.0
      %7822 = vmatpush1.msra.mxu0 0.0
      %7823 = vmatprep.subr.mxu0 0.0
      %7824 = vmatpush1.msra.mxu0 0.0
      %7825 = vmatprep.subr.mxu0 0.0
      %7826 = vmatpush1.msra.mxu0 0.0
      %7827 = vmatprep.subr.mxu0 0.0
      %7828 = vmatpush1.msra.mxu0 0.0
      %7829 = vmatprep.subr.mxu0 0.0
      %7830 = vmatpush1.msra.mxu0 0.0
      %7831 = vmatprep.subr.mxu0 0.0
      %7832 = vmatpush1.msra.mxu0 0.0
      %7833 = vmatprep.subr.mxu0 0.0
      %7834 = vmatpush1.msra.mxu0 0.0
      %7835 = vmatprep.subr.mxu0 0.0
      %7836 = vmatpush1.msra.mxu0 0.0
      %7837 = vmatprep.subr.mxu0 0.0
      %7838 = vmatpush1.msra.mxu0 0.0
      %7839 = vmatprep.subr.mxu0 0.0
      %7840 = vmatpush1.msra.mxu0 0.0
      %7841 = vmatprep.subr.mxu0 0.0
      %7842 = vmatpush1.msra.mxu0 0.0
      %7843 = vmatprep.subr.mxu0 0.0
      %7844 = vmatpush1.msra.mxu0 0.0
      %7845 = vmatprep.subr.mxu0 0.0
      %7846 = vmatpush1.msra.mxu0 0.0
      %7847 = vmatprep.subr.mxu0 0.0
      %7848 = vmatpush1.msra.mxu0 0.0
      %7849 = vmatprep.subr.mxu0 0.0
      %7850 = vmatpush1.msra.mxu0 %v6598
      %7851 = vmatprep.subr.mxu0 0.0
      %7852 = vmatpush2.msra.mxu0 0.0
      %7853 = vmatprep.subr.mxu0 0.0
      %7854 = vmatpush2.msra.mxu0 0.0
      %7855 = vmatprep.subr.mxu0 0.0
      %7856 = vmatpush2.msra.mxu0 0.0
      %7857 = vmatprep.subr.mxu0 0.0
      %7858 = vmatpush2.msra.mxu0 0.0
      %7859 = vmatprep.subr.mxu0 0.0
      %7860 = vmatpush2.msra.mxu0 0.0
      %7861 = vmatprep.subr.mxu0 0.0
      %7862 = vmatpush2.msra.mxu0 0.0
      %7863 = vmatprep.subr.mxu0 0.0
      %7864 = vmatpush2.msra.mxu0 0.0
      %7865 = vmatprep.subr.mxu0 0.0
      %7866 = vmatpush2.msra.mxu0 0.0
      %7867 = vmatprep.subr.mxu0 0.0
      %7868 = vmatpush2.msra.mxu0 0.0
      %7869 = vmatprep.subr.mxu0 0.0
      %7870 = vmatpush2.msra.mxu0 0.0
      %7871 = vmatprep.subr.mxu0 0.0
      %7872 = vmatpush2.msra.mxu0 0.0
      %7873 = vmatprep.subr.mxu0 0.0
      %7874 = vmatpush2.msra.mxu0 0.0
      %7875 = vmatprep.subr.mxu0 0.0
      %7876 = vmatpush2.msra.mxu0 0.0
      %7877 = vmatprep.subr.mxu0 0.0
      %7878 = vmatpush2.msra.mxu0 0.0
      %7879 = vmatprep.subr.mxu0 0.0
      %7880 = vmatpush2.msra.mxu0 0.0
      %7881 = vmatprep.subr.mxu0 0.0
      %7882 = vmatpush2.msra.mxu0 0.0
      %7883 = vmatprep.mubr.f32.mxu0 0.0
      %7884 = vmatmul.mubr.f32.gmra.mxu0 %v7811
      %v7885 = vpop.f32.mrf.mxu0
      %v7886 = vadd.f32 0.0, %v7885
      %v7887 = vpop.f32.mrf.mxu0
      %7888 = vmatprep.mubr.f32.mxu0 0.0
      %7889 = vmatmul.mubr.f32.gmra.mxu0 %v7814
      %v7890 = vpop.f32.mrf.mxu0
      %v7891 = vadd.f32 0.0, %v7890
      %v7892 = vpop.f32.mrf.mxu0
      %7893 = vmatprep.mubr.f32.mxu0 0.0
      %7894 = vmatmul.mubr.f32.gmra.mxu0 %v7817
      %v7895 = vpop.f32.mrf.mxu0
      %v7896 = vadd.f32 0.0, %v7895
      %v7897 = vpop.f32.mrf.mxu0
      %7898 = vdwg.mxu0
      %v7899 = vadd.f32 %v7571, %v7886
      %v7900 = vadd.f32 %v7572, %v7891
      %v7901 = vadd.f32 %v7573, %v7896
      %v7902 = vadd.f32 %v6433, %v7899
      %v7903 = vadd.f32 %v6434, %v7900
      %v7904 = vadd.f32 %v6435, %v7901
      %v7905 = vld [vmem:[%s4305] sm:$0x1]
      %v7907 = vlaneseq
      %v7908 = vshrl.u32 %v7907, 7
      %v7909 = vsub.s32 0, %v7908
      %v7910 = vrot.slane %v7905, %v7909
      %v7912 = vadd.f32 %v7902, %v7910
      %v7913 = vadd.f32 %v7903, %v7910
      %v7914 = vadd.f32 %v7904, %v7910
      %v7915 = vld [vmem:[%s4316] sm:$0x1]
      %v7916 = vld [vmem:[%s4318] sm:$0x1]
      %v7917 = vsel %vm987, %v7912, 0.0
      %7918 = vadd.xlane.f32.xlu0 %v7917
      %v7919 = vpop.xlane.xlu0 %7918
      %v7920 = vsel %vm987, %v7913, 0.0
      %7921 = vadd.xlane.f32.xlu0 %v7920
      %v7922 = vpop.xlane.xlu0 %7921
      %v7923 = vsel %vm991, %v7914, 0.0
      %7924 = vadd.xlane.f32.xlu0 %v7923
      %v7925 = vpop.xlane.xlu0 %7924
      %v7926 = vmul.f32 %v7919, %v1008
      %v7927 = vmul.f32 %v7922, %v1008
      %v7928 = vmul.f32 %v7925, %v1008
      %v7929 = vsub.f32 %v7912, %v7926
      %v7930 = vsub.f32 %v7913, %v7927
      %v7931 = vsub.f32 %v7914, %v7928
      %v7932 = vmul.f32 %v7929, %v7929
      %v7933 = vmul.f32 %v7930, %v7930
      %v7934 = vmul.f32 %v7931, %v7931
      %v7935 = vsel %vm987, %v7932, 0.0
      %7936 = vadd.xlane.f32.xlu0 %v7935
      %v7937 = vpop.xlane.xlu0 %7936
      %v7938 = vsel %vm987, %v7933, 0.0
      %7939 = vadd.xlane.f32.xlu0 %v7938
      %v7940 = vpop.xlane.xlu0 %7939
      %v7941 = vsel %vm991, %v7934, 0.0
      %7942 = vadd.xlane.f32.xlu0 %v7941
      %v7943 = vpop.xlane.xlu0 %7942
      %v7944 = vmul.f32 %v7937, %v1008
      %v7945 = vmul.f32 %v7940, %v1008
      %v7946 = vmul.f32 %v7943, %v1008
      %v7947 = vadd.f32 %v7944, 1e-05
      %v7948 = vadd.f32 %v7945, 1e-05
      %v7949 = vadd.f32 %v7946, 1e-05
      %v7950 = vrsqrt.pop %v7947
      %v7951 = vrsqrt.pop %v7948
      %v7952 = vrsqrt.pop %v7949
      %v7953 = vmul.f32 %v7929, %v7950
      %v7954 = vmul.f32 %v7930, %v7951
      %v7955 = vmul.f32 %v7931, %v7952
      %v7957 = vlaneseq
      %v7958 = vshrl.u32 %v7957, 7
      %v7959 = vsub.s32 0, %v7958
      %v7960 = vrot.slane %v7915, %v7959
      %v7962 = vmul.f32 %v7953, %v7960
      %v7963 = vmul.f32 %v7954, %v7960
      %v7964 = vmul.f32 %v7955, %v7960
      %v7966 = vlaneseq
      %v7967 = vshrl.u32 %v7966, 7
      %v7968 = vsub.s32 0, %v7967
      %v7969 = vrot.slane %v7916, %v7968
      %v7971 = vadd.f32 %v7962, %v7969
      %v7972 = vadd.f32 %v7963, %v7969
      %v7973 = vadd.f32 %v7964, %v7969
      %v7974 = vld [vmem:[%s4377] sm:$0xff]
      %v7975 = vld [vmem:[%s4377 + $0x8] sm:$0xff]
      %v7976 = vld [vmem:[%s4377 + $0x10] sm:$0xff]
      %v7977 = vld [vmem:[%s4377 + $0x18] sm:$0xff]
      %v7978 = vld [vmem:[%s4382] sm:$0x1]
      %v7980 = vlaneseq
      %v7981 = vshrl.u32 %v7980, 7
      %v7982 = vsub.s32 0, %v7981
      %v7983 = vrot.slane %v7978, %v7982
      %v7986 = vsel %vm987, %v7971, 0
      %v7989 = vsel %vm987, %v7972, 0
      %v7992 = vsel %vm987, %v7973, 0
      %7994 = vmatprep.subr.mxu0 0.0
      %7995 = vmatpush1.msra.mxu0 0.0
      %7996 = vmatprep.subr.mxu0 0.0
      %7997 = vmatpush1.msra.mxu0 0.0
      %7998 = vmatprep.subr.mxu0 0.0
      %7999 = vmatpush1.msra.mxu0 0.0
      %8000 = vmatprep.subr.mxu0 0.0
      %8001 = vmatpush1.msra.mxu0 0.0
      %8002 = vmatprep.subr.mxu0 0.0
      %8003 = vmatpush1.msra.mxu0 0.0
      %8004 = vmatprep.subr.mxu0 0.0
      %8005 = vmatpush1.msra.mxu0 0.0
      %8006 = vmatprep.subr.mxu0 0.0
      %8007 = vmatpush1.msra.mxu0 0.0
      %8008 = vmatprep.subr.mxu0 0.0
      %8009 = vmatpush1.msra.mxu0 0.0
      %8010 = vmatprep.subr.mxu0 0.0
      %8011 = vmatpush1.msra.mxu0 0.0
      %8012 = vmatprep.subr.mxu0 0.0
      %8013 = vmatpush1.msra.mxu0 0.0
      %8014 = vmatprep.subr.mxu0 0.0
      %8015 = vmatpush1.msra.mxu0 0.0
      %8016 = vmatprep.subr.mxu0 0.0
      %8017 = vmatpush1.msra.mxu0 0.0
      %8018 = vmatprep.subr.mxu0 0.0
      %8019 = vmatpush1.msra.mxu0 %v7977
      %8020 = vmatprep.subr.mxu0 0.0
      %8021 = vmatpush1.msra.mxu0 %v7976
      %8022 = vmatprep.subr.mxu0 0.0
      %8023 = vmatpush1.msra.mxu0 %v7975
      %8024 = vmatprep.subr.mxu0 0.0
      %8025 = vmatpush1.msra.mxu0 %v7974
      %8026 = vmatprep.subr.mxu0 0.0
      %8027 = vmatpush2.msra.mxu0 0.0
      %8028 = vmatprep.subr.mxu0 0.0
      %8029 = vmatpush2.msra.mxu0 0.0
      %8030 = vmatprep.subr.mxu0 0.0
      %8031 = vmatpush2.msra.mxu0 0.0
      %8032 = vmatprep.subr.mxu0 0.0
      %8033 = vmatpush2.msra.mxu0 0.0
      %8034 = vmatprep.subr.mxu0 0.0
      %8035 = vmatpush2.msra.mxu0 0.0
      %8036 = vmatprep.subr.mxu0 0.0
      %8037 = vmatpush2.msra.mxu0 0.0
      %8038 = vmatprep.subr.mxu0 0.0
      %8039 = vmatpush2.msra.mxu0 0.0
      %8040 = vmatprep.subr.mxu0 0.0
      %8041 = vmatpush2.msra.mxu0 0.0
      %8042 = vmatprep.subr.mxu0 0.0
      %8043 = vmatpush2.msra.mxu0 0.0
      %8044 = vmatprep.subr.mxu0 0.0
      %8045 = vmatpush2.msra.mxu0 0.0
      %8046 = vmatprep.subr.mxu0 0.0
      %8047 = vmatpush2.msra.mxu0 0.0
      %8048 = vmatprep.subr.mxu0 0.0
      %8049 = vmatpush2.msra.mxu0 0.0
      %8050 = vmatprep.subr.mxu0 0.0
      %8051 = vmatpush2.msra.mxu0 0.0
      %8052 = vmatprep.subr.mxu0 0.0
      %8053 = vmatpush2.msra.mxu0 0.0
      %8054 = vmatprep.subr.mxu0 0.0
      %8055 = vmatpush2.msra.mxu0 0.0
      %8056 = vmatprep.subr.mxu0 0.0
      %8057 = vmatpush2.msra.mxu0 0.0
      %8058 = vmatprep.mubr.f32.mxu0 0.0
      %8059 = vmatmul.mubr.f32.gmra.mxu0 %v7986
      %v8060 = vpop.f32.mrf.mxu0
      %v8061 = vadd.f32 %v7983, %v8060
      %v8062 = vpop.f32.mrf.mxu0
      %8063 = vmatprep.mubr.f32.mxu0 0.0
      %8064 = vmatmul.mubr.f32.gmra.mxu0 %v7989
      %v8065 = vpop.f32.mrf.mxu0
      %v8066 = vadd.f32 %v7983, %v8065
      %v8067 = vpop.f32.mrf.mxu0
      %8068 = vmatprep.mubr.f32.mxu0 0.0
      %8069 = vmatmul.mubr.f32.gmra.mxu0 %v7992
      %v8070 = vpop.f32.mrf.mxu0
      %v8071 = vadd.f32 %v7983, %v8070
      %v8072 = vpop.f32.mrf.mxu0
      %8073 = vdwg.mxu0
      %v8074 = vmul.f32 %v8061, 1.702
      %v8075 = vmul.f32 %v8066, 1.702
      %v8076 = vmul.f32 %v8071, 1.702
      %v8077 = vxor.u32 %v8074, 2147483648
      %v8078 = vxor.u32 %v8075, 2147483648
      %v8079 = vxor.u32 %v8076, 2147483648
      %v8080 = vmul.f32 %v8077, 1.442695
      %v8081 = vpow.pop %v8080
      %v8082 = vmul.f32 %v8078, 1.442695
      %v8083 = vpow.pop %v8082
      %v8084 = vmul.f32 %v8079, 1.442695
      %v8085 = vpow.pop %v8084
      %v8086 = vadd.f32 %v8081, 1.0
      %v8087 = vadd.f32 %v8083, 1.0
      %v8088 = vadd.f32 %v8085, 1.0
      %v8089 = vrcp.pop %v8086
      %v8090 = vmul.f32 1.0, %v8089
      %v8091 = vrcp.pop %v8087
      %v8092 = vmul.f32 1.0, %v8091
      %v8093 = vrcp.pop %v8088
      %v8094 = vmul.f32 1.0, %v8093
      %v8095 = vmul.f32 %v8061, %v8090
      %v8096 = vmul.f32 %v8066, %v8092
      %v8097 = vmul.f32 %v8071, %v8094
      %v8098 = vld [vmem:[%s4503] sm:$0xff]
      %v8099 = vld [vmem:[%s4503 + $0x8] sm:$0xff]
      %v8100 = vld [vmem:[%s4503 + $0x10] sm:$0xff]
      %v8101 = vld [vmem:[%s4503 + $0x18] sm:$0xff]
      %v8102 = vld [vmem:[%s4503 + $0x20] sm:$0xff]
      %v8103 = vld [vmem:[%s4503 + $0x28] sm:$0xff]
      %v8104 = vld [vmem:[%s4503 + $0x30] sm:$0xff]
      %v8105 = vld [vmem:[%s4503 + $0x38] sm:$0xff]
      %v8106 = vld [vmem:[%s4512] sm:$0x1]
      %v8108 = vlaneseq
      %v8109 = vshrl.u32 %v8108, 7
      %v8110 = vsub.s32 0, %v8109
      %v8111 = vrot.slane %v8106, %v8110
      %v8114 = vsel %vm2738, %v8095, 0
      %v8117 = vsel %vm2738, %v8096, 0
      %v8120 = vsel %vm2738, %v8097, 0
      %8122 = vmatprep.subr.mxu0 0.0
      %8123 = vmatpush1.msra.mxu0 0.0
      %8124 = vmatprep.subr.mxu0 0.0
      %8125 = vmatpush1.msra.mxu0 0.0
      %8126 = vmatprep.subr.mxu0 0.0
      %8127 = vmatpush1.msra.mxu0 0.0
      %8128 = vmatprep.subr.mxu0 0.0
      %8129 = vmatpush1.msra.mxu0 0.0
      %8130 = vmatprep.subr.mxu0 0.0
      %8131 = vmatpush1.msra.mxu0 0.0
      %8132 = vmatprep.subr.mxu0 0.0
      %8133 = vmatpush1.msra.mxu0 0.0
      %8134 = vmatprep.subr.mxu0 0.0
      %8135 = vmatpush1.msra.mxu0 0.0
      %8136 = vmatprep.subr.mxu0 0.0
      %8137 = vmatpush1.msra.mxu0 0.0
      %8138 = vmatprep.subr.mxu0 0.0
      %8139 = vmatpush1.msra.mxu0 %v8105
      %8140 = vmatprep.subr.mxu0 0.0
      %8141 = vmatpush1.msra.mxu0 %v8104
      %8142 = vmatprep.subr.mxu0 0.0
      %8143 = vmatpush1.msra.mxu0 %v8103
      %8144 = vmatprep.subr.mxu0 0.0
      %8145 = vmatpush1.msra.mxu0 %v8102
      %8146 = vmatprep.subr.mxu0 0.0
      %8147 = vmatpush1.msra.mxu0 %v8101
      %8148 = vmatprep.subr.mxu0 0.0
      %8149 = vmatpush1.msra.mxu0 %v8100
      %8150 = vmatprep.subr.mxu0 0.0
      %8151 = vmatpush1.msra.mxu0 %v8099
      %8152 = vmatprep.subr.mxu0 0.0
      %8153 = vmatpush1.msra.mxu0 %v8098
      %8154 = vmatprep.subr.mxu0 0.0
      %8155 = vmatpush2.msra.mxu0 0.0
      %8156 = vmatprep.subr.mxu0 0.0
      %8157 = vmatpush2.msra.mxu0 0.0
      %8158 = vmatprep.subr.mxu0 0.0
      %8159 = vmatpush2.msra.mxu0 0.0
      %8160 = vmatprep.subr.mxu0 0.0
      %8161 = vmatpush2.msra.mxu0 0.0
      %8162 = vmatprep.subr.mxu0 0.0
      %8163 = vmatpush2.msra.mxu0 0.0
      %8164 = vmatprep.subr.mxu0 0.0
      %8165 = vmatpush2.msra.mxu0 0.0
      %8166 = vmatprep.subr.mxu0 0.0
      %8167 = vmatpush2.msra.mxu0 0.0
      %8168 = vmatprep.subr.mxu0 0.0
      %8169 = vmatpush2.msra.mxu0 0.0
      %8170 = vmatprep.subr.mxu0 0.0
      %8171 = vmatpush2.msra.mxu0 0.0
      %8172 = vmatprep.subr.mxu0 0.0
      %8173 = vmatpush2.msra.mxu0 0.0
      %8174 = vmatprep.subr.mxu0 0.0
      %8175 = vmatpush2.msra.mxu0 0.0
      %8176 = vmatprep.subr.mxu0 0.0
      %8177 = vmatpush2.msra.mxu0 0.0
      %8178 = vmatprep.subr.mxu0 0.0
      %8179 = vmatpush2.msra.mxu0 0.0
      %8180 = vmatprep.subr.mxu0 0.0
      %8181 = vmatpush2.msra.mxu0 0.0
      %8182 = vmatprep.subr.mxu0 0.0
      %8183 = vmatpush2.msra.mxu0 0.0
      %8184 = vmatprep.subr.mxu0 0.0
      %8185 = vmatpush2.msra.mxu0 0.0
      %8186 = vmatprep.mubr.f32.mxu0 0.0
      %8187 = vmatmul.mubr.f32.gmra.mxu0 %v8114
      %v8188 = vpop.f32.mrf.mxu0
      %v8189 = vadd.f32 %v8111, %v8188
      %v8190 = vpop.f32.mrf.mxu0
      %8191 = vmatprep.mubr.f32.mxu0 0.0
      %8192 = vmatmul.mubr.f32.gmra.mxu0 %v8117
      %v8193 = vpop.f32.mrf.mxu0
      %v8194 = vadd.f32 %v8111, %v8193
      %v8195 = vpop.f32.mrf.mxu0
      %8196 = vmatprep.mubr.f32.mxu0 0.0
      %8197 = vmatmul.mubr.f32.gmra.mxu0 %v8120
      %v8198 = vpop.f32.mrf.mxu0
      %v8199 = vpop.f32.mrf.mxu0
      %8200 = vdwg.mxu0
      %v8201 = vadd.f32 %v7912, %v8189
      %v8202 = vadd.f32 %v7913, %v8194
      %s8203 = scalar_lea.vmem %s873, 16
      %8204 = vst.msk [vmem:[%s8203] sm:$0xff] %vm987, %v8201
      %8205 = vst.msk [vmem:[%s8203 + $0x8] sm:$0xff] %vm987, %v8202
      %p8206 = scmp.lt.s32.totalorder %s29, 1
      %s8207 = scalar_select %p8206, %s29, 1
      %s8208 = smul.addr %s8207, 4
      %s8209 = smul.addr %s8208, 8
      %s8210 = scalar_lea.vmem %s18, %s8209
      // Predicated region
      $region93: #{clip_vision_tower2_forward.1} parent=91 // pred_check
        %p8211 = pneg %p515
      $region94: #{clip_vision_tower2_forward.1} parent=91 // pred_check_branch
        %8213 = sbr.rel (%p8211) target = $region96
      $region95: #{clip_vision_tower2_forward.1} parent=91 // pred_region
        _
      $region96: #{clip_vision_tower2_forward.1} parent=91 // pred_fallthru
        _
    $region92: #{clip_vision_tower2_forward.1} parent=5 // pred_fallthru
      _
    %p8214 = scmp.le.s32.totalorder 2, %s24
    // Predicated region
    $region97: #{clip_vision_tower2_forward.1} parent=5 // pred_check
      %p8215 = pneg %p8214
    $region98: #{clip_vision_tower2_forward.1} parent=5 // pred_check_branch
      %8217 = sbr.rel (%p8215) target = $region100
    $region99: #{clip_vision_tower2_forward.1} parent=5 // pred_region
      %s8218 = ssub.s32 %s24, 2
      // Predicated region
      $region101: #{clip_vision_tower2_forward.1} parent=99 // pred_check
        %p8219 = pneg %p521
      $region102: #{clip_vision_tower2_forward.1} parent=99 // pred_check_branch
        %8221 = sbr.rel (%p8219) target = $region104
      $region103: #{clip_vision_tower2_forward.1} parent=99 // pred_region
        %p8222 = scmp.lt.s32.totalorder %s30, 1
        %s8223 = scalar_select %p8222, %s30, 1
        %s8224 = smul.addr %s8223, 4
        %s8225 = smul.addr %s8224, 8
        %s8226 = scalar_lea.vmem %s18, %s8225
      $region104: #{clip_vision_tower2_forward.1} parent=99 // pred_fallthru
        _
    $region100: #{clip_vision_tower2_forward.1} parent=5 // pred_fallthru
      _
  $region6: #{clip_vision_tower2_forward.1} parent=0 // loop_footer
    %s28 = sadd.s32 1, %s24
  $region7: #{clip_vision_tower2_forward.1} parent=0 // loop_footer_branch
    %23 = sbr.rel target = $region3
  $region8: #{clip_vision_tower2_forward.1} parent=0 // loop_exit
    _

</llo_original>
